<compile_context>
chip_gen: v6e
topology: v6e:2x2x1
jax: 0.10.0
libtpu: 0.0.40
codegen_flags: <defaults>
</compile_context>

<pallas_src>
import functools
import math

import jax
import jax.numpy as jnp
from jax.experimental import pallas as pl
from jax.experimental.pallas import tpu as pltpu


def _fourier_features_kernel(x_ref, bt_ref, o_ref, *, mapping_size):
    # x_ref: (TN, 2)   bt_ref: (2, M) already scaled by 2*pi   o_ref: (TN, 2*M)
    x = x_ref[...].astype(jnp.float32)     # (TN, 2)
    bt = bt_ref[...].astype(jnp.float32)   # (2, M)

    # Rank-2 update on the VPU: proj[r, m] = x[r,0]*bt[0,m] + x[r,1]*bt[1,m]
    proj = x[:, 0:1] * bt[0:1, :] + x[:, 1:2] * bt[1:2, :]   # (TN, M), f32

    # Write the two halves directly; avoids a (TN, 2*M) concat intermediate.
    o_ref[:, :mapping_size] = jnp.sin(proj).astype(o_ref.dtype)
    o_ref[:, mapping_size:] = jnp.cos(proj).astype(o_ref.dtype)


def fourier_features(x, B, *, tile_n=1024):
    """x: (..., 2) float array; B: (mapping_size, 2). Returns (..., 2*mapping_size)."""
    mapping_size, two = B.shape
    assert two == 2 and x.shape[-1] == 2

    lead_shape = x.shape[:-1]
    n = math.prod(lead_shape) if lead_shape else 1
    x_flat = x.reshape(n, 2)

    # Pre-scale by 2*pi and pre-transpose so the kernel does no per-tile scale
    # or transpose. Tiny (2, M) array, resident in VMEM across all grid steps.
    bt = (jnp.float32(2.0 * jnp.pi) * B.astype(jnp.float32)).T   # (2, M)

    # Clamp the tile so its sublane dim is a multiple of 8 (or the full extent)
    # and we don't allocate VMEM far beyond the problem size.
    tile_n_eff = max(8, min(tile_n, ((n + 7) // 8) * 8))
    grid = (pl.cdiv(n, tile_n_eff),)

    kernel = functools.partial(_fourier_features_kernel, mapping_size=mapping_size)

    out_flat = pl.pallas_call(
        kernel,
        out_shape=jax.ShapeDtypeStruct((n, 2 * mapping_size), x.dtype),
        grid_spec=pltpu.PrefetchScalarGridSpec(
            num_scalar_prefetch=0,
            grid=grid,
            in_specs=[
                pl.BlockSpec((tile_n_eff, 2), lambda i: (i, 0)),        # x row-tile
                pl.BlockSpec((2, mapping_size), lambda i: (0, 0)),      # Bt (resident)
            ],
            out_specs=pl.BlockSpec((tile_n_eff, 2 * mapping_size), lambda i: (i, 0)),
        ),
        compiler_params=pltpu.CompilerParams(
            dimension_semantics=("parallel",),
        ),
    )(x_flat, bt)

    return out_flat.reshape(*lead_shape, 2 * mapping_size)


def fourier_features_ref(x, B):
    x_proj = jnp.matmul(2.0 * jnp.pi * x, B.T)
    return jnp.concatenate([jnp.sin(x_proj), jnp.cos(x_proj)], axis=-1)


if __name__ == "__main__":
    key = jax.random.PRNGKey(0)
    k_b, k_x = jax.random.split(key)

    scale = 1.0
    mapping_size = 64

    # Deterministic "randn" init for B, matching the module's __init__ shapes.
    B = scale * jax.random.normal(k_b, (mapping_size, 2), dtype=jnp.float32)

    # Coordinate-style input: batch=2, points=200 (exercises the ragged last block).
    x = jax.random.uniform(k_x, (2, 200, 2), dtype=jnp.float32)

    out = fourier_features(x, B)
    out = jax.block_until_ready(out)

    ref = fourier_features_ref(x, B)
    assert out.shape == (2, 200, 2 * mapping_size), out.shape
    assert jnp.allclose(out, ref, atol=1e-5, rtol=1e-5), float(jnp.max(jnp.abs(out - ref)))

    print("KERNEL_OK")
</pallas_src>

<mosaic_0001>
module attributes {stable_mosaic.version = 11 : i64} {
  func.func @_fourier_features_kernel(%arg0: i32, %arg1: memref<400x2xf32, #tpu.memory_space<vmem>>, %arg2: memref<2x64xf32, #tpu.memory_space<vmem>>, %arg3: memref<400x128xf32, #tpu.memory_space<vmem>>) attributes {dimension_semantics = [#tpu.dimension_semantics<parallel>], iteration_bounds = array<i64: 1>, scalar_prefetch = 0 : i64, scratch_operands = 0 : i64, tpu.core_type = #tpu.core_type<tc>, window_params = [{transform_indices = @transform_0, window_bounds = array<i64: 400, 2>}, {pipeline_mode = #tpu.pipeline_mode<synchronous>, transform_indices = @transform_1, window_bounds = array<i64: 2, 64>}, {transform_indices = @transform_2, window_bounds = array<i64: 400, 128>}]} {
    %c0 = arith.constant 0 : index
    %c0_0 = arith.constant 0 : index
    %0 = vector.load %arg1[%c0, %c0_0] : memref<400x2xf32, #tpu.memory_space<vmem>>, vector<400x2xf32>
    %c0_1 = arith.constant 0 : index
    %c0_2 = arith.constant 0 : index
    %1 = vector.load %arg2[%c0_1, %c0_2] : memref<2x64xf32, #tpu.memory_space<vmem>>, vector<2x64xf32>
    %2 = vector.extract_strided_slice %0 {offsets = [0, 0], sizes = [400, 1], strides = [1, 1]} : vector<400x2xf32> to vector<400x1xf32>
    %3 = vector.extract_strided_slice %1 {offsets = [0, 0], sizes = [1, 64], strides = [1, 1]} : vector<2x64xf32> to vector<1x64xf32>
    %4 = vector.broadcast %2 : vector<400x1xf32> to vector<400x64xf32>
    %5 = vector.broadcast %3 : vector<1x64xf32> to vector<400x64xf32>
    %6 = arith.mulf %4, %5 : vector<400x64xf32>
    %7 = vector.extract_strided_slice %0 {offsets = [0, 1], sizes = [400, 1], strides = [1, 1]} : vector<400x2xf32> to vector<400x1xf32>
    %8 = vector.extract_strided_slice %1 {offsets = [1, 0], sizes = [1, 64], strides = [1, 1]} : vector<2x64xf32> to vector<1x64xf32>
    %9 = vector.broadcast %7 : vector<400x1xf32> to vector<400x64xf32>
    %10 = vector.broadcast %8 : vector<1x64xf32> to vector<400x64xf32>
    %11 = arith.mulf %9, %10 : vector<400x64xf32>
    %12 = arith.addf %6, %11 : vector<400x64xf32>
    %13 = math.sin %12 : vector<400x64xf32>
    %c0_3 = arith.constant 0 : index
    %c0_4 = arith.constant 0 : index
    %14 = vector.load %arg3[%c0_3, %c0_4] : memref<400x128xf32, #tpu.memory_space<vmem>>, vector<400x64xf32>
    tpu.vector_store %arg3[%c0_3, %c0_4], %13 {strides = array<i32>} : memref<400x128xf32, #tpu.memory_space<vmem>>, vector<400x64xf32>,
    %15 = math.cos %12 : vector<400x64xf32>
    %c0_5 = arith.constant 0 : index
    %c64 = arith.constant 64 : index
    %16 = vector.load %arg3[%c0_5, %c64] : memref<400x128xf32, #tpu.memory_space<vmem>>, vector<400x64xf32>
    tpu.vector_store %arg3[%c0_5, %c64], %15 {strides = array<i32>} : memref<400x128xf32, #tpu.memory_space<vmem>>, vector<400x64xf32>,
    return
  }
  func.func @transform_0(%arg0: i32) -> (i32, i32) {
    %c0_i32 = arith.constant 0 : i32
    %c0_i32_0 = arith.constant 0 : i32
    return %arg0, %c0_i32 : i32, i32
  }
  func.func @transform_1(%arg0: i32) -> (i32, i32) {
    %c0_i32 = arith.constant 0 : i32
    %c0_i32_0 = arith.constant 0 : i32
    %c0_i32_1 = arith.constant 0 : i32
    return %c0_i32, %c0_i32_0 : i32, i32
  }
  func.func @transform_2(%arg0: i32) -> (i32, i32) {
    %c0_i32 = arith.constant 0 : i32
    %c0_i32_0 = arith.constant 0 : i32
    return %arg0, %c0_i32 : i32, i32
  }
}

</mosaic_0001>

<llo_original>
// kernel: tpu_custom_call.1
$region0: #{tpu_custom_call.1}
  #allocation0 [shape = 'u32[]', space=smem, size = 0x4, offset = 0x4, fixed_abs, tag = 'smem constant byte address 0x4 - core index']
  #allocation1 [shape = 'u32[144,128]{1,0:T(1,128)}', space=vmem, size = 0x12000, scoped, tag = 'internal scratch']
  %s0 = inlined_call_operand.vmem [shape: f32[400,2], index: 0, kind: input, shape index: {}]
  %s1 = inlined_call_operand.vmem [shape: f32[2,64], index: 1, kind: input, shape index: {}]
  %s2 = inlined_call_operand.hbm [shape: f32[400,128], index: 2, kind: output, shape index: {}]
  %s3 = sld [smem:[#allocation0]]
  $region18: #{tpu_custom_call.1} parent=0
    _
  %s5 = ssub.s32 1, %s3
  %s6 = scalar_select 0, %s5, %s3
  $region1: #{tpu_custom_call.1} parent=0
    #allocation2 [shape = 'u8[204800]{0}', space=vmem, size = 0x32000, scoped, tag = 'output window, operand 0, single buffered']
    #allocation3 [shape = 's32[1]{0}', space=sflag, size = 0x4, scoped, tag = 'scoped memory for tpu_custom_call.1']
    %7 = vsyncpa [#allocation3], 0
    // Predicated region
    $region2: #{tpu_custom_call.1} parent=1 // pred_check
      _
    $region3: #{tpu_custom_call.1} parent=1 // pred_check_branch
      %9 = sbr.rel (0) target = $region5
    $region4: #{tpu_custom_call.1} parent=1 // pred_region
      _
    $region5: #{tpu_custom_call.1} parent=1 // pred_fallthru
      _
    // Predicated region
    $region6: #{tpu_custom_call.1} parent=1 // pred_check
      _
    $region7: #{tpu_custom_call.1} parent=1 // pred_check_branch
      %11 = sbr.rel (0) target = $region9
    $region8: #{tpu_custom_call.1} parent=1 // pred_region
      _
    $region9: #{tpu_custom_call.1} parent=1 // pred_fallthru
      _
    %v12 = vld [vmem:[%s0] sm:$0xff]
    %v13 = vld [vmem:[%s0 + $0x8] sm:$0xff]
    %v14 = vld [vmem:[%s0 + $0x10] sm:$0xff]
    %v15 = vld [vmem:[%s0 + $0x18] sm:$0xff]
    %v16 = vld [vmem:[%s0 + $0x20] sm:$0xff]
    %v17 = vld [vmem:[%s0 + $0x28] sm:$0xff]
    %v18 = vld [vmem:[%s0 + $0x30] sm:$0xff]
    %v19 = vld [vmem:[%s0 + $0x38] sm:$0xff]
    %v20 = vld [vmem:[%s0 + $0x40] sm:$0xff]
    %v21 = vld [vmem:[%s0 + $0x48] sm:$0xff]
    %v22 = vld [vmem:[%s0 + $0x50] sm:$0xff]
    %v23 = vld [vmem:[%s0 + $0x58] sm:$0xff]
    %v24 = vld [vmem:[%s0 + $0x60] sm:$0xff]
    %v25 = vld [vmem:[%s0 + $0x68] sm:$0xff]
    %v26 = vld [vmem:[%s0 + $0x70] sm:$0xff]
    %v27 = vld [vmem:[%s0 + $0x78] sm:$0xff]
    %v28 = vld [vmem:[%s0 + $0x80] sm:$0xff]
    %v29 = vld [vmem:[%s0 + $0x88] sm:$0xff]
    %v30 = vld [vmem:[%s0 + $0x90] sm:$0xff]
    %v31 = vld [vmem:[%s0 + $0x98] sm:$0xff]
    %v32 = vld [vmem:[%s0 + $0xa0] sm:$0xff]
    %v33 = vld [vmem:[%s0 + $0xa8] sm:$0xff]
    %v34 = vld [vmem:[%s0 + $0xb0] sm:$0xff]
    %v35 = vld [vmem:[%s0 + $0xb8] sm:$0xff]
    %v36 = vld [vmem:[%s0 + $0xc0] sm:$0xff]
    %v37 = vld [vmem:[%s0 + $0xc8] sm:$0xff]
    %v38 = vld [vmem:[%s0 + $0xd0] sm:$0xff]
    %v39 = vld [vmem:[%s0 + $0xd8] sm:$0xff]
    %v40 = vld [vmem:[%s0 + $0xe0] sm:$0xff]
    %v41 = vld [vmem:[%s0 + $0xe8] sm:$0xff]
    %v42 = vld [vmem:[%s0 + $0xf0] sm:$0xff]
    %v43 = vld [vmem:[%s0 + $0xf8] sm:$0xff]
    %v44 = vld [vmem:[%s0 + $0x100] sm:$0xff]
    %v45 = vld [vmem:[%s0 + $0x108] sm:$0xff]
    %v46 = vld [vmem:[%s0 + $0x110] sm:$0xff]
    %v47 = vld [vmem:[%s0 + $0x118] sm:$0xff]
    %v48 = vld [vmem:[%s0 + $0x120] sm:$0xff]
    %v49 = vld [vmem:[%s0 + $0x128] sm:$0xff]
    %v50 = vld [vmem:[%s0 + $0x130] sm:$0xff]
    %v51 = vld [vmem:[%s0 + $0x138] sm:$0xff]
    %v52 = vld [vmem:[%s0 + $0x140] sm:$0xff]
    %v53 = vld [vmem:[%s0 + $0x148] sm:$0xff]
    %v54 = vld [vmem:[%s0 + $0x150] sm:$0xff]
    %v55 = vld [vmem:[%s0 + $0x158] sm:$0xff]
    %v56 = vld [vmem:[%s0 + $0x160] sm:$0xff]
    %v57 = vld [vmem:[%s0 + $0x168] sm:$0xff]
    %v58 = vld [vmem:[%s0 + $0x170] sm:$0xff]
    %v59 = vld [vmem:[%s0 + $0x178] sm:$0xff]
    %v60 = vld [vmem:[%s0 + $0x180] sm:$0xff]
    %v61 = vld [vmem:[%s0 + $0x188] sm:$0xff]
    %v62 = vld [vmem:[%s1] sm:$0x3]
    %64 = vset.pattern.permute.xlu0 0
    %65 = vperm.xlu0 %64, %v12
    %v66 = vpop.permute.xlu0 %65
    %69 = vset.pattern.permute.xlu0 0
    %70 = vperm.xlu0 %69, %v13
    %v71 = vpop.permute.xlu0 %70
    %74 = vset.pattern.permute.xlu0 0
    %75 = vperm.xlu0 %74, %v14
    %v76 = vpop.permute.xlu0 %75
    %79 = vset.pattern.permute.xlu0 0
    %80 = vperm.xlu0 %79, %v15
    %v81 = vpop.permute.xlu0 %80
    %84 = vset.pattern.permute.xlu0 0
    %85 = vperm.xlu0 %84, %v16
    %v86 = vpop.permute.xlu0 %85
    %89 = vset.pattern.permute.xlu0 0
    %90 = vperm.xlu0 %89, %v17
    %v91 = vpop.permute.xlu0 %90
    %94 = vset.pattern.permute.xlu0 0
    %95 = vperm.xlu0 %94, %v18
    %v96 = vpop.permute.xlu0 %95
    %99 = vset.pattern.permute.xlu0 0
    %100 = vperm.xlu0 %99, %v19
    %v101 = vpop.permute.xlu0 %100
    %104 = vset.pattern.permute.xlu0 0
    %105 = vperm.xlu0 %104, %v20
    %v106 = vpop.permute.xlu0 %105
    %109 = vset.pattern.permute.xlu0 0
    %110 = vperm.xlu0 %109, %v21
    %v111 = vpop.permute.xlu0 %110
    %114 = vset.pattern.permute.xlu0 0
    %115 = vperm.xlu0 %114, %v22
    %v116 = vpop.permute.xlu0 %115
    %119 = vset.pattern.permute.xlu0 0
    %120 = vperm.xlu0 %119, %v23
    %v121 = vpop.permute.xlu0 %120
    %124 = vset.pattern.permute.xlu0 0
    %125 = vperm.xlu0 %124, %v24
    %v126 = vpop.permute.xlu0 %125
    %129 = vset.pattern.permute.xlu0 0
    %130 = vperm.xlu0 %129, %v25
    %v131 = vpop.permute.xlu0 %130
    %134 = vset.pattern.permute.xlu0 0
    %135 = vperm.xlu0 %134, %v26
    %v136 = vpop.permute.xlu0 %135
    %139 = vset.pattern.permute.xlu0 0
    %140 = vperm.xlu0 %139, %v27
    %v141 = vpop.permute.xlu0 %140
    %144 = vset.pattern.permute.xlu0 0
    %145 = vperm.xlu0 %144, %v28
    %v146 = vpop.permute.xlu0 %145
    %149 = vset.pattern.permute.xlu0 0
    %150 = vperm.xlu0 %149, %v29
    %v151 = vpop.permute.xlu0 %150
    %154 = vset.pattern.permute.xlu0 0
    %155 = vperm.xlu0 %154, %v30
    %v156 = vpop.permute.xlu0 %155
    %159 = vset.pattern.permute.xlu0 0
    %160 = vperm.xlu0 %159, %v31
    %v161 = vpop.permute.xlu0 %160
    %164 = vset.pattern.permute.xlu0 0
    %165 = vperm.xlu0 %164, %v32
    %v166 = vpop.permute.xlu0 %165
    %169 = vset.pattern.permute.xlu0 0
    %170 = vperm.xlu0 %169, %v33
    %v171 = vpop.permute.xlu0 %170
    %174 = vset.pattern.permute.xlu0 0
    %175 = vperm.xlu0 %174, %v34
    %v176 = vpop.permute.xlu0 %175
    %179 = vset.pattern.permute.xlu0 0
    %180 = vperm.xlu0 %179, %v35
    %v181 = vpop.permute.xlu0 %180
    %184 = vset.pattern.permute.xlu0 0
    %185 = vperm.xlu0 %184, %v36
    %v186 = vpop.permute.xlu0 %185
    %189 = vset.pattern.permute.xlu0 0
    %190 = vperm.xlu0 %189, %v37
    %v191 = vpop.permute.xlu0 %190
    %194 = vset.pattern.permute.xlu0 0
    %195 = vperm.xlu0 %194, %v38
    %v196 = vpop.permute.xlu0 %195
    %199 = vset.pattern.permute.xlu0 0
    %200 = vperm.xlu0 %199, %v39
    %v201 = vpop.permute.xlu0 %200
    %204 = vset.pattern.permute.xlu0 0
    %205 = vperm.xlu0 %204, %v40
    %v206 = vpop.permute.xlu0 %205
    %209 = vset.pattern.permute.xlu0 0
    %210 = vperm.xlu0 %209, %v41
    %v211 = vpop.permute.xlu0 %210
    %214 = vset.pattern.permute.xlu0 0
    %215 = vperm.xlu0 %214, %v42
    %v216 = vpop.permute.xlu0 %215
    %219 = vset.pattern.permute.xlu0 0
    %220 = vperm.xlu0 %219, %v43
    %v221 = vpop.permute.xlu0 %220
    %224 = vset.pattern.permute.xlu0 0
    %225 = vperm.xlu0 %224, %v44
    %v226 = vpop.permute.xlu0 %225
    %229 = vset.pattern.permute.xlu0 0
    %230 = vperm.xlu0 %229, %v45
    %v231 = vpop.permute.xlu0 %230
    %234 = vset.pattern.permute.xlu0 0
    %235 = vperm.xlu0 %234, %v46
    %v236 = vpop.permute.xlu0 %235
    %239 = vset.pattern.permute.xlu0 0
    %240 = vperm.xlu0 %239, %v47
    %v241 = vpop.permute.xlu0 %240
    %244 = vset.pattern.permute.xlu0 0
    %245 = vperm.xlu0 %244, %v48
    %v246 = vpop.permute.xlu0 %245
    %249 = vset.pattern.permute.xlu0 0
    %250 = vperm.xlu0 %249, %v49
    %v251 = vpop.permute.xlu0 %250
    %254 = vset.pattern.permute.xlu0 0
    %255 = vperm.xlu0 %254, %v50
    %v256 = vpop.permute.xlu0 %255
    %259 = vset.pattern.permute.xlu0 0
    %260 = vperm.xlu0 %259, %v51
    %v261 = vpop.permute.xlu0 %260
    %264 = vset.pattern.permute.xlu0 0
    %265 = vperm.xlu0 %264, %v52
    %v266 = vpop.permute.xlu0 %265
    %269 = vset.pattern.permute.xlu0 0
    %270 = vperm.xlu0 %269, %v53
    %v271 = vpop.permute.xlu0 %270
    %274 = vset.pattern.permute.xlu0 0
    %275 = vperm.xlu0 %274, %v54
    %v276 = vpop.permute.xlu0 %275
    %279 = vset.pattern.permute.xlu0 0
    %280 = vperm.xlu0 %279, %v55
    %v281 = vpop.permute.xlu0 %280
    %284 = vset.pattern.permute.xlu0 0
    %285 = vperm.xlu0 %284, %v56
    %v286 = vpop.permute.xlu0 %285
    %289 = vset.pattern.permute.xlu0 0
    %290 = vperm.xlu0 %289, %v57
    %v291 = vpop.permute.xlu0 %290
    %294 = vset.pattern.permute.xlu0 0
    %295 = vperm.xlu0 %294, %v58
    %v296 = vpop.permute.xlu0 %295
    %299 = vset.pattern.permute.xlu0 0
    %300 = vperm.xlu0 %299, %v59
    %v301 = vpop.permute.xlu0 %300
    %304 = vset.pattern.permute.xlu0 0
    %305 = vperm.xlu0 %304, %v60
    %v306 = vpop.permute.xlu0 %305
    %309 = vset.pattern.permute.xlu0 0
    %310 = vperm.xlu0 %309, %v61
    %v311 = vpop.permute.xlu0 %310
    %v313 = vlaneseq
    %v314 = vshrl.u32 %v313, 7
    %v315 = vsub.s32 0, %v314
    %v316 = vrot.slane %v62, %v315
    %v317 = vmul.f32 %v66, %v316
    %v318 = vmul.f32 %v71, %v316
    %v319 = vmul.f32 %v76, %v316
    %v320 = vmul.f32 %v81, %v316
    %v321 = vmul.f32 %v86, %v316
    %v322 = vmul.f32 %v91, %v316
    %v323 = vmul.f32 %v96, %v316
    %v324 = vmul.f32 %v101, %v316
    %v325 = vmul.f32 %v106, %v316
    %v326 = vmul.f32 %v111, %v316
    %v327 = vmul.f32 %v116, %v316
    %v328 = vmul.f32 %v121, %v316
    %v329 = vmul.f32 %v126, %v316
    %v330 = vmul.f32 %v131, %v316
    %v331 = vmul.f32 %v136, %v316
    %v332 = vmul.f32 %v141, %v316
    %v333 = vmul.f32 %v146, %v316
    %v334 = vmul.f32 %v151, %v316
    %v335 = vmul.f32 %v156, %v316
    %v336 = vmul.f32 %v161, %v316
    %v337 = vmul.f32 %v166, %v316
    %v338 = vmul.f32 %v171, %v316
    %v339 = vmul.f32 %v176, %v316
    %v340 = vmul.f32 %v181, %v316
    %v341 = vmul.f32 %v186, %v316
    %v342 = vmul.f32 %v191, %v316
    %v343 = vmul.f32 %v196, %v316
    %v344 = vmul.f32 %v201, %v316
    %v345 = vmul.f32 %v206, %v316
    %v346 = vmul.f32 %v211, %v316
    %v347 = vmul.f32 %v216, %v316
    %v348 = vmul.f32 %v221, %v316
    %v349 = vmul.f32 %v226, %v316
    %v350 = vmul.f32 %v231, %v316
    %v351 = vmul.f32 %v236, %v316
    %v352 = vmul.f32 %v241, %v316
    %v353 = vmul.f32 %v246, %v316
    %v354 = vmul.f32 %v251, %v316
    %v355 = vmul.f32 %v256, %v316
    %v356 = vmul.f32 %v261, %v316
    %v357 = vmul.f32 %v266, %v316
    %v358 = vmul.f32 %v271, %v316
    %v359 = vmul.f32 %v276, %v316
    %v360 = vmul.f32 %v281, %v316
    %v361 = vmul.f32 %v286, %v316
    %v362 = vmul.f32 %v291, %v316
    %v363 = vmul.f32 %v296, %v316
    %v364 = vmul.f32 %v301, %v316
    %v365 = vmul.f32 %v306, %v316
    %v366 = vmul.f32 %v311, %v316
    %367 = vset.pattern.permute.xlu0 1
    %368 = vperm.xlu0 %367, %v12
    %v369 = vpop.permute.xlu0 %368
    %371 = vset.pattern.permute.xlu0 1
    %372 = vperm.xlu0 %371, %v13
    %v373 = vpop.permute.xlu0 %372
    %375 = vset.pattern.permute.xlu0 1
    %376 = vperm.xlu0 %375, %v14
    %v377 = vpop.permute.xlu0 %376
    %379 = vset.pattern.permute.xlu0 1
    %380 = vperm.xlu0 %379, %v15
    %v381 = vpop.permute.xlu0 %380
    %383 = vset.pattern.permute.xlu0 1
    %384 = vperm.xlu0 %383, %v16
    %v385 = vpop.permute.xlu0 %384
    %387 = vset.pattern.permute.xlu0 1
    %388 = vperm.xlu0 %387, %v17
    %v389 = vpop.permute.xlu0 %388
    %391 = vset.pattern.permute.xlu0 1
    %392 = vperm.xlu0 %391, %v18
    %v393 = vpop.permute.xlu0 %392
    %395 = vset.pattern.permute.xlu0 1
    %396 = vperm.xlu0 %395, %v19
    %v397 = vpop.permute.xlu0 %396
    %399 = vset.pattern.permute.xlu0 1
    %400 = vperm.xlu0 %399, %v20
    %v401 = vpop.permute.xlu0 %400
    %403 = vset.pattern.permute.xlu0 1
    %404 = vperm.xlu0 %403, %v21
    %v405 = vpop.permute.xlu0 %404
    %407 = vset.pattern.permute.xlu0 1
    %408 = vperm.xlu0 %407, %v22
    %v409 = vpop.permute.xlu0 %408
    %411 = vset.pattern.permute.xlu0 1
    %412 = vperm.xlu0 %411, %v23
    %v413 = vpop.permute.xlu0 %412
    %415 = vset.pattern.permute.xlu0 1
    %416 = vperm.xlu0 %415, %v24
    %v417 = vpop.permute.xlu0 %416
    %419 = vset.pattern.permute.xlu0 1
    %420 = vperm.xlu0 %419, %v25
    %v421 = vpop.permute.xlu0 %420
    %423 = vset.pattern.permute.xlu0 1
    %424 = vperm.xlu0 %423, %v26
    %v425 = vpop.permute.xlu0 %424
    %427 = vset.pattern.permute.xlu0 1
    %428 = vperm.xlu0 %427, %v27
    %v429 = vpop.permute.xlu0 %428
    %431 = vset.pattern.permute.xlu0 1
    %432 = vperm.xlu0 %431, %v28
    %v433 = vpop.permute.xlu0 %432
    %435 = vset.pattern.permute.xlu0 1
    %436 = vperm.xlu0 %435, %v29
    %v437 = vpop.permute.xlu0 %436
    %439 = vset.pattern.permute.xlu0 1
    %440 = vperm.xlu0 %439, %v30
    %v441 = vpop.permute.xlu0 %440
    %443 = vset.pattern.permute.xlu0 1
    %444 = vperm.xlu0 %443, %v31
    %v445 = vpop.permute.xlu0 %444
    %447 = vset.pattern.permute.xlu0 1
    %448 = vperm.xlu0 %447, %v32
    %v449 = vpop.permute.xlu0 %448
    %451 = vset.pattern.permute.xlu0 1
    %452 = vperm.xlu0 %451, %v33
    %v453 = vpop.permute.xlu0 %452
    %455 = vset.pattern.permute.xlu0 1
    %456 = vperm.xlu0 %455, %v34
    %v457 = vpop.permute.xlu0 %456
    %459 = vset.pattern.permute.xlu0 1
    %460 = vperm.xlu0 %459, %v35
    %v461 = vpop.permute.xlu0 %460
    %463 = vset.pattern.permute.xlu0 1
    %464 = vperm.xlu0 %463, %v36
    %v465 = vpop.permute.xlu0 %464
    %467 = vset.pattern.permute.xlu0 1
    %468 = vperm.xlu0 %467, %v37
    %v469 = vpop.permute.xlu0 %468
    %471 = vset.pattern.permute.xlu0 1
    %472 = vperm.xlu0 %471, %v38
    %v473 = vpop.permute.xlu0 %472
    %475 = vset.pattern.permute.xlu0 1
    %476 = vperm.xlu0 %475, %v39
    %v477 = vpop.permute.xlu0 %476
    %479 = vset.pattern.permute.xlu0 1
    %480 = vperm.xlu0 %479, %v40
    %v481 = vpop.permute.xlu0 %480
    %483 = vset.pattern.permute.xlu0 1
    %484 = vperm.xlu0 %483, %v41
    %v485 = vpop.permute.xlu0 %484
    %487 = vset.pattern.permute.xlu0 1
    %488 = vperm.xlu0 %487, %v42
    %v489 = vpop.permute.xlu0 %488
    %491 = vset.pattern.permute.xlu0 1
    %492 = vperm.xlu0 %491, %v43
    %v493 = vpop.permute.xlu0 %492
    %495 = vset.pattern.permute.xlu0 1
    %496 = vperm.xlu0 %495, %v44
    %v497 = vpop.permute.xlu0 %496
    %499 = vset.pattern.permute.xlu0 1
    %500 = vperm.xlu0 %499, %v45
    %v501 = vpop.permute.xlu0 %500
    %503 = vset.pattern.permute.xlu0 1
    %504 = vperm.xlu0 %503, %v46
    %v505 = vpop.permute.xlu0 %504
    %507 = vset.pattern.permute.xlu0 1
    %508 = vperm.xlu0 %507, %v47
    %v509 = vpop.permute.xlu0 %508
    %511 = vset.pattern.permute.xlu0 1
    %512 = vperm.xlu0 %511, %v48
    %v513 = vpop.permute.xlu0 %512
    %515 = vset.pattern.permute.xlu0 1
    %516 = vperm.xlu0 %515, %v49
    %v517 = vpop.permute.xlu0 %516
    %519 = vset.pattern.permute.xlu0 1
    %520 = vperm.xlu0 %519, %v50
    %v521 = vpop.permute.xlu0 %520
    %523 = vset.pattern.permute.xlu0 1
    %524 = vperm.xlu0 %523, %v51
    %v525 = vpop.permute.xlu0 %524
    %527 = vset.pattern.permute.xlu0 1
    %528 = vperm.xlu0 %527, %v52
    %v529 = vpop.permute.xlu0 %528
    %531 = vset.pattern.permute.xlu0 1
    %532 = vperm.xlu0 %531, %v53
    %v533 = vpop.permute.xlu0 %532
    %535 = vset.pattern.permute.xlu0 1
    %536 = vperm.xlu0 %535, %v54
    %v537 = vpop.permute.xlu0 %536
    %539 = vset.pattern.permute.xlu0 1
    %540 = vperm.xlu0 %539, %v55
    %v541 = vpop.permute.xlu0 %540
    %543 = vset.pattern.permute.xlu0 1
    %544 = vperm.xlu0 %543, %v56
    %v545 = vpop.permute.xlu0 %544
    %547 = vset.pattern.permute.xlu0 1
    %548 = vperm.xlu0 %547, %v57
    %v549 = vpop.permute.xlu0 %548
    %551 = vset.pattern.permute.xlu0 1
    %552 = vperm.xlu0 %551, %v58
    %v553 = vpop.permute.xlu0 %552
    %555 = vset.pattern.permute.xlu0 1
    %556 = vperm.xlu0 %555, %v59
    %v557 = vpop.permute.xlu0 %556
    %559 = vset.pattern.permute.xlu0 1
    %560 = vperm.xlu0 %559, %v60
    %v561 = vpop.permute.xlu0 %560
    %563 = vset.pattern.permute.xlu0 1
    %564 = vperm.xlu0 %563, %v61
    %v565 = vpop.permute.xlu0 %564
    %v567 = vlaneseq
    %v568 = vshrl.u32 %v567, 7
    %v569 = vsub.s32 1, %v568
    %v570 = vrot.slane %v62, %v569
    %v571 = vmul.f32 %v369, %v570
    %v572 = vmul.f32 %v373, %v570
    %v573 = vmul.f32 %v377, %v570
    %v574 = vmul.f32 %v381, %v570
    %v575 = vmul.f32 %v385, %v570
    %v576 = vmul.f32 %v389, %v570
    %v577 = vmul.f32 %v393, %v570
    %v578 = vmul.f32 %v397, %v570
    %v579 = vmul.f32 %v401, %v570
    %v580 = vmul.f32 %v405, %v570
    %v581 = vmul.f32 %v409, %v570
    %v582 = vmul.f32 %v413, %v570
    %v583 = vmul.f32 %v417, %v570
    %v584 = vmul.f32 %v421, %v570
    %v585 = vmul.f32 %v425, %v570
    %v586 = vmul.f32 %v429, %v570
    %v587 = vmul.f32 %v433, %v570
    %v588 = vmul.f32 %v437, %v570
    %v589 = vmul.f32 %v441, %v570
    %v590 = vmul.f32 %v445, %v570
    %v591 = vmul.f32 %v449, %v570
    %v592 = vmul.f32 %v453, %v570
    %v593 = vmul.f32 %v457, %v570
    %v594 = vmul.f32 %v461, %v570
    %v595 = vmul.f32 %v465, %v570
    %v596 = vmul.f32 %v469, %v570
    %v597 = vmul.f32 %v473, %v570
    %v598 = vmul.f32 %v477, %v570
    %v599 = vmul.f32 %v481, %v570
    %v600 = vmul.f32 %v485, %v570
    %v601 = vmul.f32 %v489, %v570
    %v602 = vmul.f32 %v493, %v570
    %v603 = vmul.f32 %v497, %v570
    %v604 = vmul.f32 %v501, %v570
    %v605 = vmul.f32 %v505, %v570
    %v606 = vmul.f32 %v509, %v570
    %v607 = vmul.f32 %v513, %v570
    %v608 = vmul.f32 %v517, %v570
    %v609 = vmul.f32 %v521, %v570
    %v610 = vmul.f32 %v525, %v570
    %v611 = vmul.f32 %v529, %v570
    %v612 = vmul.f32 %v533, %v570
    %v613 = vmul.f32 %v537, %v570
    %v614 = vmul.f32 %v541, %v570
    %v615 = vmul.f32 %v545, %v570
    %v616 = vmul.f32 %v549, %v570
    %v617 = vmul.f32 %v553, %v570
    %v618 = vmul.f32 %v557, %v570
    %v619 = vmul.f32 %v561, %v570
    %v620 = vmul.f32 %v565, %v570
    %v621 = vadd.f32 %v317, %v571
    %v622 = vadd.f32 %v318, %v572
    %v623 = vadd.f32 %v319, %v573
    %v624 = vadd.f32 %v320, %v574
    %v625 = vadd.f32 %v321, %v575
    %v626 = vadd.f32 %v322, %v576
    %v627 = vadd.f32 %v323, %v577
    %v628 = vadd.f32 %v324, %v578
    %v629 = vadd.f32 %v325, %v579
    %v630 = vadd.f32 %v326, %v580
    %v631 = vadd.f32 %v327, %v581
    %v632 = vadd.f32 %v328, %v582
    %v633 = vadd.f32 %v329, %v583
    %v634 = vadd.f32 %v330, %v584
    %v635 = vadd.f32 %v331, %v585
    %v636 = vadd.f32 %v332, %v586
    %v637 = vadd.f32 %v333, %v587
    %v638 = vadd.f32 %v334, %v588
    %v639 = vadd.f32 %v335, %v589
    %v640 = vadd.f32 %v336, %v590
    %v641 = vadd.f32 %v337, %v591
    %v642 = vadd.f32 %v338, %v592
    %v643 = vadd.f32 %v339, %v593
    %v644 = vadd.f32 %v340, %v594
    %v645 = vadd.f32 %v341, %v595
    %v646 = vadd.f32 %v342, %v596
    %v647 = vadd.f32 %v343, %v597
    %v648 = vadd.f32 %v344, %v598
    %v649 = vadd.f32 %v345, %v599
    %v650 = vadd.f32 %v346, %v600
    %v651 = vadd.f32 %v347, %v601
    %v652 = vadd.f32 %v348, %v602
    %v653 = vadd.f32 %v349, %v603
    %v654 = vadd.f32 %v350, %v604
    %v655 = vadd.f32 %v351, %v605
    %v656 = vadd.f32 %v352, %v606
    %v657 = vadd.f32 %v353, %v607
    %v658 = vadd.f32 %v354, %v608
    %v659 = vadd.f32 %v355, %v609
    %v660 = vadd.f32 %v356, %v610
    %v661 = vadd.f32 %v357, %v611
    %v662 = vadd.f32 %v358, %v612
    %v663 = vadd.f32 %v359, %v613
    %v664 = vadd.f32 %v360, %v614
    %v665 = vadd.f32 %v361, %v615
    %v666 = vadd.f32 %v362, %v616
    %v667 = vadd.f32 %v363, %v617
    %v668 = vadd.f32 %v364, %v618
    %v669 = vadd.f32 %v365, %v619
    %v670 = vadd.f32 %v366, %v620
    %v671 = vand.u32 2147483647, %v621
    %vm672 = vcmp.le.f32.partialorder %v671, 0.7853982
    %vm673 = vcmp.lt.s32.totalorder %v621, 0
    %v674 = vand.u32 %v621, 2139095040
    %v675 = vshrl.u32 %v674, 23
    %v676 = vsub.s32 %v675, 127
    %v677 = vand.u32 2147483647, %v621
    %v678 = vand.u32 %v677, 8388607
    %v679 = vor.u32 %v678, 8388608
    %v680 = vsub.s32 0, %v679
    %v681 = vadd.s32 %v676, 1
    %vm682 = vcmp.gt.s32.totalorder %v681, 0
    %v683 = vsel %vm682, %v681, 0
    %v684 = vshrl.u32 %v683, 5
    %v685 = vand.u32 %v683, 31
    %v686 = vsub.s32 32, %v685
    %v687 = vshrl.u32 683565275, %v686
    %v688 = vshll.u32 683565275, %v685
    %v689 = vshrl.u32 2475754826, %v686
    %v690 = vor.u32 %v688, %v689
    %v691 = vshll.u32 2475754826, %v685
    %v692 = vshrl.u32 2131351028, %v686
    %v693 = vor.u32 %v691, %v692
    %v694 = vshll.u32 2131351028, %v685
    %v695 = vshrl.u32 2102212464, %v686
    %v696 = vor.u32 %v694, %v695
    %v697 = vshll.u32 2102212464, %v685
    %v698 = vshrl.u32 920167782, %v686
    %v699 = vor.u32 %v697, %v698
    %v700 = vshll.u32 920167782, %v685
    %v701 = vshrl.u32 1326507024, %v686
    %v702 = vor.u32 %v700, %v701
    %vm703 = vcmp.lt.s32.totalorder %v684, 1
    %vm704 = vcmp.lt.s32.totalorder %v684, 2
    %vm705 = vcmp.lt.s32.totalorder %v684, 3
    %vm706 = vcmp.lt.s32.totalorder %v684, 4
    %v707 = vsel %vm703, %v687, %v690
    %v708 = vsel %vm706, %v696, 2102212464
    %v709 = vsel %vm705, %v693, %v708
    %v710 = vsel %vm704, %v707, %v709
    %v711 = vsel %vm703, %v690, %v693
    %v712 = vsel %vm706, %v699, 920167782
    %v713 = vsel %vm705, %v696, %v712
    %v714 = vsel %vm704, %v711, %v713
    %v715 = vsel %vm703, %v693, %v696
    %v716 = vsel %vm706, %v702, 1326507024
    %v717 = vsel %vm705, %v699, %v716
    %v718 = vsel %vm704, %v715, %v717
    %v719 = vshll.u32 %v679, 8
    %v720 = vmul.u32.u64.compose %v719, %v718
    %v721 = vextract.low.u32 %v720
    %v722 = vextract.high.u32 %v720
    %v723 = vmul.u32.u64.compose %v719, %v714
    %v724 = vextract.low.u32 %v723
    %v725 = vextract.high.u32 %v723
    %v726 = vmul.u32 %v719, %v710
    %v727 = vadd.s32 %v722, %v724
    %vm728 = vc.u32 %v722, %v724
    %v729 = vadd.s32 %v725, 1
    %v730 = vsel %vm728, %v729, %v725
    %v731 = vadd.s32 %v726, %v730
    %v732 = vadd.s32 %v731, 536870912
    %v733 = vshrl.u32 %v732, 30
    %v734 = vshll.u32 %v733, 30
    %v735 = vsub.s32 %v731, %v734
    %vm736 = vcmp.lt.s32.totalorder %v735, 0
    %v737 = vsub.s32 0, %v735
    %v738 = vsel %vm736, %v737, %v735
    %v739 = vclz %v738
    %v740 = vsub.s32 %v739, 2
    %vm741 = vcmp.gt.s32.totalorder 0, %v740
    %v742 = vsel %vm741, 0, %v740
    %v743 = vsub.s32 32, %v742
    %v744 = vshll.u32 %v735, %v742
    %v745 = vshrl.u32 %v727, %v743
    %v746 = vor.u32 %v744, %v745
    %v747 = vsub.s32 4294967266, %v742
    %v748 = vadd.s32 %v747, 127
    %v749 = vshll.u32 %v748, 23
    %v750 = vor.u32 4788187, %v749
    %v751 = vand.u32 2147483647, %v750
    %v753 = vcvt.s32.f32 %v746
    %v754 = vmul.f32 %v753, %v751
    %v755 = vxor.u32 %v754, 2147483648
    %v756 = vsel %vm673, %v755, %v754
    %v757 = vsub.s32 4, %v733
    %v758 = vsel %vm673, %v757, %v733
    %v759 = vsel %vm672, %v621, %v756
    %v760 = vsel %vm672, 0, %v758
    %v761 = vcosq.f32.pop %v759
    %v762 = vsinq.f32.pop %v759
    %vm763 = vweird.f32 %v621
    %v764 = vadd.s32 %v760, 3
    %v765 = vand.u32 %v764, 3
    %vm766 = vcmp.lt.s32.totalorder %v765, 2
    %vm767 = vcmp.eq.s32.totalorder %v765, 0
    %v768 = vxor.u32 %v762, 2147483648
    %v769 = vsel %vm767, %v761, %v768
    %vm770 = vcmp.eq.s32.totalorder %v765, 2
    %v771 = vxor.u32 %v761, 2147483648
    %v772 = vsel %vm770, %v771, %v762
    %v773 = vsel %vm766, %v769, %v772
    %v774 = vsel %vm763, nan, %v773
    %v775 = vand.u32 2147483647, %v622
    %vm776 = vcmp.le.f32.partialorder %v775, 0.7853982
    %vm777 = vcmp.lt.s32.totalorder %v622, 0
    %v778 = vand.u32 %v622, 2139095040
    %v779 = vshrl.u32 %v778, 23
    %v780 = vsub.s32 %v779, 127
    %v781 = vand.u32 2147483647, %v622
    %v782 = vand.u32 %v781, 8388607
    %v783 = vor.u32 %v782, 8388608
    %v784 = vsub.s32 0, %v783
    %v785 = vadd.s32 %v780, 1
    %vm786 = vcmp.gt.s32.totalorder %v785, 0
    %v787 = vsel %vm786, %v785, 0
    %v788 = vshrl.u32 %v787, 5
    %v789 = vand.u32 %v787, 31
    %v790 = vsub.s32 32, %v789
    %v791 = vshrl.u32 683565275, %v790
    %v792 = vshll.u32 683565275, %v789
    %v793 = vshrl.u32 2475754826, %v790
    %v794 = vor.u32 %v792, %v793
    %v795 = vshll.u32 2475754826, %v789
    %v796 = vshrl.u32 2131351028, %v790
    %v797 = vor.u32 %v795, %v796
    %v798 = vshll.u32 2131351028, %v789
    %v799 = vshrl.u32 2102212464, %v790
    %v800 = vor.u32 %v798, %v799
    %v801 = vshll.u32 2102212464, %v789
    %v802 = vshrl.u32 920167782, %v790
    %v803 = vor.u32 %v801, %v802
    %v804 = vshll.u32 920167782, %v789
    %v805 = vshrl.u32 1326507024, %v790
    %v806 = vor.u32 %v804, %v805
    %vm807 = vcmp.lt.s32.totalorder %v788, 1
    %vm808 = vcmp.lt.s32.totalorder %v788, 2
    %vm809 = vcmp.lt.s32.totalorder %v788, 3
    %vm810 = vcmp.lt.s32.totalorder %v788, 4
    %v811 = vsel %vm807, %v791, %v794
    %v812 = vsel %vm810, %v800, 2102212464
    %v813 = vsel %vm809, %v797, %v812
    %v814 = vsel %vm808, %v811, %v813
    %v815 = vsel %vm807, %v794, %v797
    %v816 = vsel %vm810, %v803, 920167782
    %v817 = vsel %vm809, %v800, %v816
    %v818 = vsel %vm808, %v815, %v817
    %v819 = vsel %vm807, %v797, %v800
    %v820 = vsel %vm810, %v806, 1326507024
    %v821 = vsel %vm809, %v803, %v820
    %v822 = vsel %vm808, %v819, %v821
    %v823 = vshll.u32 %v783, 8
    %v824 = vmul.u32.u64.compose %v823, %v822
    %v825 = vextract.low.u32 %v824
    %v826 = vextract.high.u32 %v824
    %v827 = vmul.u32.u64.compose %v823, %v818
    %v828 = vextract.low.u32 %v827
    %v829 = vextract.high.u32 %v827
    %v830 = vmul.u32 %v823, %v814
    %v831 = vadd.s32 %v826, %v828
    %vm832 = vc.u32 %v826, %v828
    %v833 = vadd.s32 %v829, 1
    %v834 = vsel %vm832, %v833, %v829
    %v835 = vadd.s32 %v830, %v834
    %v836 = vadd.s32 %v835, 536870912
    %v837 = vshrl.u32 %v836, 30
    %v838 = vshll.u32 %v837, 30
    %v839 = vsub.s32 %v835, %v838
    %vm840 = vcmp.lt.s32.totalorder %v839, 0
    %v841 = vsub.s32 0, %v839
    %v842 = vsel %vm840, %v841, %v839
    %v843 = vclz %v842
    %v844 = vsub.s32 %v843, 2
    %vm845 = vcmp.gt.s32.totalorder 0, %v844
    %v846 = vsel %vm845, 0, %v844
    %v847 = vsub.s32 32, %v846
    %v848 = vshll.u32 %v839, %v846
    %v849 = vshrl.u32 %v831, %v847
    %v850 = vor.u32 %v848, %v849
    %v851 = vsub.s32 4294967266, %v846
    %v852 = vadd.s32 %v851, 127
    %v853 = vshll.u32 %v852, 23
    %v854 = vor.u32 4788187, %v853
    %v855 = vand.u32 2147483647, %v854
    %v857 = vcvt.s32.f32 %v850
    %v858 = vmul.f32 %v857, %v855
    %v859 = vxor.u32 %v858, 2147483648
    %v860 = vsel %vm777, %v859, %v858
    %v861 = vsub.s32 4, %v837
    %v862 = vsel %vm777, %v861, %v837
    %v863 = vsel %vm776, %v622, %v860
    %v864 = vsel %vm776, 0, %v862
    %v865 = vcosq.f32.pop %v863
    %v866 = vsinq.f32.pop %v863
    %vm867 = vweird.f32 %v622
    %v868 = vadd.s32 %v864, 3
    %v869 = vand.u32 %v868, 3
    %vm870 = vcmp.lt.s32.totalorder %v869, 2
    %vm871 = vcmp.eq.s32.totalorder %v869, 0
    %v872 = vxor.u32 %v866, 2147483648
    %v873 = vsel %vm871, %v865, %v872
    %vm874 = vcmp.eq.s32.totalorder %v869, 2
    %v875 = vxor.u32 %v865, 2147483648
    %v876 = vsel %vm874, %v875, %v866
    %v877 = vsel %vm870, %v873, %v876
    %v878 = vsel %vm867, nan, %v877
    %v879 = vand.u32 2147483647, %v623
    %vm880 = vcmp.le.f32.partialorder %v879, 0.7853982
    %vm881 = vcmp.lt.s32.totalorder %v623, 0
    %v882 = vand.u32 %v623, 2139095040
    %v883 = vshrl.u32 %v882, 23
    %v884 = vsub.s32 %v883, 127
    %v885 = vand.u32 2147483647, %v623
    %v886 = vand.u32 %v885, 8388607
    %v887 = vor.u32 %v886, 8388608
    %v888 = vsub.s32 0, %v887
    %v889 = vadd.s32 %v884, 1
    %vm890 = vcmp.gt.s32.totalorder %v889, 0
    %v891 = vsel %vm890, %v889, 0
    %v892 = vshrl.u32 %v891, 5
    %v893 = vand.u32 %v891, 31
    %v894 = vsub.s32 32, %v893
    %v895 = vshrl.u32 683565275, %v894
    %v896 = vshll.u32 683565275, %v893
    %v897 = vshrl.u32 2475754826, %v894
    %v898 = vor.u32 %v896, %v897
    %v899 = vshll.u32 2475754826, %v893
    %v900 = vshrl.u32 2131351028, %v894
    %v901 = vor.u32 %v899, %v900
    %v902 = vshll.u32 2131351028, %v893
    %v903 = vshrl.u32 2102212464, %v894
    %v904 = vor.u32 %v902, %v903
    %v905 = vshll.u32 2102212464, %v893
    %v906 = vshrl.u32 920167782, %v894
    %v907 = vor.u32 %v905, %v906
    %v908 = vshll.u32 920167782, %v893
    %v909 = vshrl.u32 1326507024, %v894
    %v910 = vor.u32 %v908, %v909
    %vm911 = vcmp.lt.s32.totalorder %v892, 1
    %vm912 = vcmp.lt.s32.totalorder %v892, 2
    %vm913 = vcmp.lt.s32.totalorder %v892, 3
    %vm914 = vcmp.lt.s32.totalorder %v892, 4
    %v915 = vsel %vm911, %v895, %v898
    %v916 = vsel %vm914, %v904, 2102212464
    %v917 = vsel %vm913, %v901, %v916
    %v918 = vsel %vm912, %v915, %v917
    %v919 = vsel %vm911, %v898, %v901
    %v920 = vsel %vm914, %v907, 920167782
    %v921 = vsel %vm913, %v904, %v920
    %v922 = vsel %vm912, %v919, %v921
    %v923 = vsel %vm911, %v901, %v904
    %v924 = vsel %vm914, %v910, 1326507024
    %v925 = vsel %vm913, %v907, %v924
    %v926 = vsel %vm912, %v923, %v925
    %v927 = vshll.u32 %v887, 8
    %v928 = vmul.u32.u64.compose %v927, %v926
    %v929 = vextract.low.u32 %v928
    %v930 = vextract.high.u32 %v928
    %v931 = vmul.u32.u64.compose %v927, %v922
    %v932 = vextract.low.u32 %v931
    %v933 = vextract.high.u32 %v931
    %v934 = vmul.u32 %v927, %v918
    %v935 = vadd.s32 %v930, %v932
    %vm936 = vc.u32 %v930, %v932
    %v937 = vadd.s32 %v933, 1
    %v938 = vsel %vm936, %v937, %v933
    %v939 = vadd.s32 %v934, %v938
    %v940 = vadd.s32 %v939, 536870912
    %v941 = vshrl.u32 %v940, 30
    %v942 = vshll.u32 %v941, 30
    %v943 = vsub.s32 %v939, %v942
    %vm944 = vcmp.lt.s32.totalorder %v943, 0
    %v945 = vsub.s32 0, %v943
    %v946 = vsel %vm944, %v945, %v943
    %v947 = vclz %v946
    %v948 = vsub.s32 %v947, 2
    %vm949 = vcmp.gt.s32.totalorder 0, %v948
    %v950 = vsel %vm949, 0, %v948
    %v951 = vsub.s32 32, %v950
    %v952 = vshll.u32 %v943, %v950
    %v953 = vshrl.u32 %v935, %v951
    %v954 = vor.u32 %v952, %v953
    %v955 = vsub.s32 4294967266, %v950
    %v956 = vadd.s32 %v955, 127
    %v957 = vshll.u32 %v956, 23
    %v958 = vor.u32 4788187, %v957
    %v959 = vand.u32 2147483647, %v958
    %v961 = vcvt.s32.f32 %v954
    %v962 = vmul.f32 %v961, %v959
    %v963 = vxor.u32 %v962, 2147483648
    %v964 = vsel %vm881, %v963, %v962
    %v965 = vsub.s32 4, %v941
    %v966 = vsel %vm881, %v965, %v941
    %v967 = vsel %vm880, %v623, %v964
    %v968 = vsel %vm880, 0, %v966
    %v969 = vcosq.f32.pop %v967
    %v970 = vsinq.f32.pop %v967
    %vm971 = vweird.f32 %v623
    %v972 = vadd.s32 %v968, 3
    %v973 = vand.u32 %v972, 3
    %vm974 = vcmp.lt.s32.totalorder %v973, 2
    %vm975 = vcmp.eq.s32.totalorder %v973, 0
    %v976 = vxor.u32 %v970, 2147483648
    %v977 = vsel %vm975, %v969, %v976
    %vm978 = vcmp.eq.s32.totalorder %v973, 2
    %v979 = vxor.u32 %v969, 2147483648
    %v980 = vsel %vm978, %v979, %v970
    %v981 = vsel %vm974, %v977, %v980
    %v982 = vsel %vm971, nan, %v981
    %v983 = vand.u32 2147483647, %v624
    %vm984 = vcmp.le.f32.partialorder %v983, 0.7853982
    %vm985 = vcmp.lt.s32.totalorder %v624, 0
    %v986 = vand.u32 %v624, 2139095040
    %v987 = vshrl.u32 %v986, 23
    %v988 = vsub.s32 %v987, 127
    %v989 = vand.u32 2147483647, %v624
    %v990 = vand.u32 %v989, 8388607
    %v991 = vor.u32 %v990, 8388608
    %v992 = vsub.s32 0, %v991
    %v993 = vadd.s32 %v988, 1
    %vm994 = vcmp.gt.s32.totalorder %v993, 0
    %v995 = vsel %vm994, %v993, 0
    %v996 = vshrl.u32 %v995, 5
    %v997 = vand.u32 %v995, 31
    %v998 = vsub.s32 32, %v997
    %v999 = vshrl.u32 683565275, %v998
    %v1000 = vshll.u32 683565275, %v997
    %v1001 = vshrl.u32 2475754826, %v998
    %v1002 = vor.u32 %v1000, %v1001
    %v1003 = vshll.u32 2475754826, %v997
    %v1004 = vshrl.u32 2131351028, %v998
    %v1005 = vor.u32 %v1003, %v1004
    %v1006 = vshll.u32 2131351028, %v997
    %v1007 = vshrl.u32 2102212464, %v998
    %v1008 = vor.u32 %v1006, %v1007
    %v1009 = vshll.u32 2102212464, %v997
    %v1010 = vshrl.u32 920167782, %v998
    %v1011 = vor.u32 %v1009, %v1010
    %v1012 = vshll.u32 920167782, %v997
    %v1013 = vshrl.u32 1326507024, %v998
    %v1014 = vor.u32 %v1012, %v1013
    %vm1015 = vcmp.lt.s32.totalorder %v996, 1
    %vm1016 = vcmp.lt.s32.totalorder %v996, 2
    %vm1017 = vcmp.lt.s32.totalorder %v996, 3
    %vm1018 = vcmp.lt.s32.totalorder %v996, 4
    %v1019 = vsel %vm1015, %v999, %v1002
    %v1020 = vsel %vm1018, %v1008, 2102212464
    %v1021 = vsel %vm1017, %v1005, %v1020
    %v1022 = vsel %vm1016, %v1019, %v1021
    %v1023 = vsel %vm1015, %v1002, %v1005
    %v1024 = vsel %vm1018, %v1011, 920167782
    %v1025 = vsel %vm1017, %v1008, %v1024
    %v1026 = vsel %vm1016, %v1023, %v1025
    %v1027 = vsel %vm1015, %v1005, %v1008
    %v1028 = vsel %vm1018, %v1014, 1326507024
    %v1029 = vsel %vm1017, %v1011, %v1028
    %v1030 = vsel %vm1016, %v1027, %v1029
    %v1031 = vshll.u32 %v991, 8
    %v1032 = vmul.u32.u64.compose %v1031, %v1030
    %v1033 = vextract.low.u32 %v1032
    %v1034 = vextract.high.u32 %v1032
    %v1035 = vmul.u32.u64.compose %v1031, %v1026
    %v1036 = vextract.low.u32 %v1035
    %v1037 = vextract.high.u32 %v1035
    %v1038 = vmul.u32 %v1031, %v1022
    %v1039 = vadd.s32 %v1034, %v1036
    %vm1040 = vc.u32 %v1034, %v1036
    %v1041 = vadd.s32 %v1037, 1
    %v1042 = vsel %vm1040, %v1041, %v1037
    %v1043 = vadd.s32 %v1038, %v1042
    %v1044 = vadd.s32 %v1043, 536870912
    %v1045 = vshrl.u32 %v1044, 30
    %v1046 = vshll.u32 %v1045, 30
    %v1047 = vsub.s32 %v1043, %v1046
    %vm1048 = vcmp.lt.s32.totalorder %v1047, 0
    %v1049 = vsub.s32 0, %v1047
    %v1050 = vsel %vm1048, %v1049, %v1047
    %v1051 = vclz %v1050
    %v1052 = vsub.s32 %v1051, 2
    %vm1053 = vcmp.gt.s32.totalorder 0, %v1052
    %v1054 = vsel %vm1053, 0, %v1052
    %v1055 = vsub.s32 32, %v1054
    %v1056 = vshll.u32 %v1047, %v1054
    %v1057 = vshrl.u32 %v1039, %v1055
    %v1058 = vor.u32 %v1056, %v1057
    %v1059 = vsub.s32 4294967266, %v1054
    %v1060 = vadd.s32 %v1059, 127
    %v1061 = vshll.u32 %v1060, 23
    %v1062 = vor.u32 4788187, %v1061
    %v1063 = vand.u32 2147483647, %v1062
    %v1065 = vcvt.s32.f32 %v1058
    %v1066 = vmul.f32 %v1065, %v1063
    %v1067 = vxor.u32 %v1066, 2147483648
    %v1068 = vsel %vm985, %v1067, %v1066
    %v1069 = vsub.s32 4, %v1045
    %v1070 = vsel %vm985, %v1069, %v1045
    %v1071 = vsel %vm984, %v624, %v1068
    %v1072 = vsel %vm984, 0, %v1070
    %v1073 = vcosq.f32.pop %v1071
    %v1074 = vsinq.f32.pop %v1071
    %vm1075 = vweird.f32 %v624
    %v1076 = vadd.s32 %v1072, 3
    %v1077 = vand.u32 %v1076, 3
    %vm1078 = vcmp.lt.s32.totalorder %v1077, 2
    %vm1079 = vcmp.eq.s32.totalorder %v1077, 0
    %v1080 = vxor.u32 %v1074, 2147483648
    %v1081 = vsel %vm1079, %v1073, %v1080
    %vm1082 = vcmp.eq.s32.totalorder %v1077, 2
    %v1083 = vxor.u32 %v1073, 2147483648
    %v1084 = vsel %vm1082, %v1083, %v1074
    %v1085 = vsel %vm1078, %v1081, %v1084
    %v1086 = vsel %vm1075, nan, %v1085
    %v1087 = vand.u32 2147483647, %v625
    %vm1088 = vcmp.le.f32.partialorder %v1087, 0.7853982
    %vm1089 = vcmp.lt.s32.totalorder %v625, 0
    %v1090 = vand.u32 %v625, 2139095040
    %v1091 = vshrl.u32 %v1090, 23
    %v1092 = vsub.s32 %v1091, 127
    %v1093 = vand.u32 2147483647, %v625
    %v1094 = vand.u32 %v1093, 8388607
    %v1095 = vor.u32 %v1094, 8388608
    %v1096 = vsub.s32 0, %v1095
    %v1097 = vadd.s32 %v1092, 1
    %vm1098 = vcmp.gt.s32.totalorder %v1097, 0
    %v1099 = vsel %vm1098, %v1097, 0
    %v1100 = vshrl.u32 %v1099, 5
    %v1101 = vand.u32 %v1099, 31
    %v1102 = vsub.s32 32, %v1101
    %v1103 = vshrl.u32 683565275, %v1102
    %v1104 = vshll.u32 683565275, %v1101
    %v1105 = vshrl.u32 2475754826, %v1102
    %v1106 = vor.u32 %v1104, %v1105
    %v1107 = vshll.u32 2475754826, %v1101
    %v1108 = vshrl.u32 2131351028, %v1102
    %v1109 = vor.u32 %v1107, %v1108
    %v1110 = vshll.u32 2131351028, %v1101
    %v1111 = vshrl.u32 2102212464, %v1102
    %v1112 = vor.u32 %v1110, %v1111
    %v1113 = vshll.u32 2102212464, %v1101
    %v1114 = vshrl.u32 920167782, %v1102
    %v1115 = vor.u32 %v1113, %v1114
    %v1116 = vshll.u32 920167782, %v1101
    %v1117 = vshrl.u32 1326507024, %v1102
    %v1118 = vor.u32 %v1116, %v1117
    %vm1119 = vcmp.lt.s32.totalorder %v1100, 1
    %vm1120 = vcmp.lt.s32.totalorder %v1100, 2
    %vm1121 = vcmp.lt.s32.totalorder %v1100, 3
    %vm1122 = vcmp.lt.s32.totalorder %v1100, 4
    %v1123 = vsel %vm1119, %v1103, %v1106
    %v1124 = vsel %vm1122, %v1112, 2102212464
    %v1125 = vsel %vm1121, %v1109, %v1124
    %v1126 = vsel %vm1120, %v1123, %v1125
    %v1127 = vsel %vm1119, %v1106, %v1109
    %v1128 = vsel %vm1122, %v1115, 920167782
    %v1129 = vsel %vm1121, %v1112, %v1128
    %v1130 = vsel %vm1120, %v1127, %v1129
    %v1131 = vsel %vm1119, %v1109, %v1112
    %v1132 = vsel %vm1122, %v1118, 1326507024
    %v1133 = vsel %vm1121, %v1115, %v1132
    %v1134 = vsel %vm1120, %v1131, %v1133
    %v1135 = vshll.u32 %v1095, 8
    %v1136 = vmul.u32.u64.compose %v1135, %v1134
    %v1137 = vextract.low.u32 %v1136
    %v1138 = vextract.high.u32 %v1136
    %v1139 = vmul.u32.u64.compose %v1135, %v1130
    %v1140 = vextract.low.u32 %v1139
    %v1141 = vextract.high.u32 %v1139
    %v1142 = vmul.u32 %v1135, %v1126
    %v1143 = vadd.s32 %v1138, %v1140
    %vm1144 = vc.u32 %v1138, %v1140
    %v1145 = vadd.s32 %v1141, 1
    %v1146 = vsel %vm1144, %v1145, %v1141
    %v1147 = vadd.s32 %v1142, %v1146
    %v1148 = vadd.s32 %v1147, 536870912
    %v1149 = vshrl.u32 %v1148, 30
    %v1150 = vshll.u32 %v1149, 30
    %v1151 = vsub.s32 %v1147, %v1150
    %vm1152 = vcmp.lt.s32.totalorder %v1151, 0
    %v1153 = vsub.s32 0, %v1151
    %v1154 = vsel %vm1152, %v1153, %v1151
    %v1155 = vclz %v1154
    %v1156 = vsub.s32 %v1155, 2
    %vm1157 = vcmp.gt.s32.totalorder 0, %v1156
    %v1158 = vsel %vm1157, 0, %v1156
    %v1159 = vsub.s32 32, %v1158
    %v1160 = vshll.u32 %v1151, %v1158
    %v1161 = vshrl.u32 %v1143, %v1159
    %v1162 = vor.u32 %v1160, %v1161
    %v1163 = vsub.s32 4294967266, %v1158
    %v1164 = vadd.s32 %v1163, 127
    %v1165 = vshll.u32 %v1164, 23
    %v1166 = vor.u32 4788187, %v1165
    %v1167 = vand.u32 2147483647, %v1166
    %v1169 = vcvt.s32.f32 %v1162
    %v1170 = vmul.f32 %v1169, %v1167
    %v1171 = vxor.u32 %v1170, 2147483648
    %v1172 = vsel %vm1089, %v1171, %v1170
    %v1173 = vsub.s32 4, %v1149
    %v1174 = vsel %vm1089, %v1173, %v1149
    %v1175 = vsel %vm1088, %v625, %v1172
    %v1176 = vsel %vm1088, 0, %v1174
    %v1177 = vcosq.f32.pop %v1175
    %v1178 = vsinq.f32.pop %v1175
    %vm1179 = vweird.f32 %v625
    %v1180 = vadd.s32 %v1176, 3
    %v1181 = vand.u32 %v1180, 3
    %vm1182 = vcmp.lt.s32.totalorder %v1181, 2
    %vm1183 = vcmp.eq.s32.totalorder %v1181, 0
    %v1184 = vxor.u32 %v1178, 2147483648
    %v1185 = vsel %vm1183, %v1177, %v1184
    %vm1186 = vcmp.eq.s32.totalorder %v1181, 2
    %v1187 = vxor.u32 %v1177, 2147483648
    %v1188 = vsel %vm1186, %v1187, %v1178
    %v1189 = vsel %vm1182, %v1185, %v1188
    %v1190 = vsel %vm1179, nan, %v1189
    %v1191 = vand.u32 2147483647, %v626
    %vm1192 = vcmp.le.f32.partialorder %v1191, 0.7853982
    %vm1193 = vcmp.lt.s32.totalorder %v626, 0
    %v1194 = vand.u32 %v626, 2139095040
    %v1195 = vshrl.u32 %v1194, 23
    %v1196 = vsub.s32 %v1195, 127
    %v1197 = vand.u32 2147483647, %v626
    %v1198 = vand.u32 %v1197, 8388607
    %v1199 = vor.u32 %v1198, 8388608
    %v1200 = vsub.s32 0, %v1199
    %v1201 = vadd.s32 %v1196, 1
    %vm1202 = vcmp.gt.s32.totalorder %v1201, 0
    %v1203 = vsel %vm1202, %v1201, 0
    %v1204 = vshrl.u32 %v1203, 5
    %v1205 = vand.u32 %v1203, 31
    %v1206 = vsub.s32 32, %v1205
    %v1207 = vshrl.u32 683565275, %v1206
    %v1208 = vshll.u32 683565275, %v1205
    %v1209 = vshrl.u32 2475754826, %v1206
    %v1210 = vor.u32 %v1208, %v1209
    %v1211 = vshll.u32 2475754826, %v1205
    %v1212 = vshrl.u32 2131351028, %v1206
    %v1213 = vor.u32 %v1211, %v1212
    %v1214 = vshll.u32 2131351028, %v1205
    %v1215 = vshrl.u32 2102212464, %v1206
    %v1216 = vor.u32 %v1214, %v1215
    %v1217 = vshll.u32 2102212464, %v1205
    %v1218 = vshrl.u32 920167782, %v1206
    %v1219 = vor.u32 %v1217, %v1218
    %v1220 = vshll.u32 920167782, %v1205
    %v1221 = vshrl.u32 1326507024, %v1206
    %v1222 = vor.u32 %v1220, %v1221
    %vm1223 = vcmp.lt.s32.totalorder %v1204, 1
    %vm1224 = vcmp.lt.s32.totalorder %v1204, 2
    %vm1225 = vcmp.lt.s32.totalorder %v1204, 3
    %vm1226 = vcmp.lt.s32.totalorder %v1204, 4
    %v1227 = vsel %vm1223, %v1207, %v1210
    %v1228 = vsel %vm1226, %v1216, 2102212464
    %v1229 = vsel %vm1225, %v1213, %v1228
    %v1230 = vsel %vm1224, %v1227, %v1229
    %v1231 = vsel %vm1223, %v1210, %v1213
    %v1232 = vsel %vm1226, %v1219, 920167782
    %v1233 = vsel %vm1225, %v1216, %v1232
    %v1234 = vsel %vm1224, %v1231, %v1233
    %v1235 = vsel %vm1223, %v1213, %v1216
    %v1236 = vsel %vm1226, %v1222, 1326507024
    %v1237 = vsel %vm1225, %v1219, %v1236
    %v1238 = vsel %vm1224, %v1235, %v1237
    %v1239 = vshll.u32 %v1199, 8
    %v1240 = vmul.u32.u64.compose %v1239, %v1238
    %v1241 = vextract.low.u32 %v1240
    %v1242 = vextract.high.u32 %v1240
    %v1243 = vmul.u32.u64.compose %v1239, %v1234
    %v1244 = vextract.low.u32 %v1243
    %v1245 = vextract.high.u32 %v1243
    %v1246 = vmul.u32 %v1239, %v1230
    %v1247 = vadd.s32 %v1242, %v1244
    %vm1248 = vc.u32 %v1242, %v1244
    %v1249 = vadd.s32 %v1245, 1
    %v1250 = vsel %vm1248, %v1249, %v1245
    %v1251 = vadd.s32 %v1246, %v1250
    %v1252 = vadd.s32 %v1251, 536870912
    %v1253 = vshrl.u32 %v1252, 30
    %v1254 = vshll.u32 %v1253, 30
    %v1255 = vsub.s32 %v1251, %v1254
    %vm1256 = vcmp.lt.s32.totalorder %v1255, 0
    %v1257 = vsub.s32 0, %v1255
    %v1258 = vsel %vm1256, %v1257, %v1255
    %v1259 = vclz %v1258
    %v1260 = vsub.s32 %v1259, 2
    %vm1261 = vcmp.gt.s32.totalorder 0, %v1260
    %v1262 = vsel %vm1261, 0, %v1260
    %v1263 = vsub.s32 32, %v1262
    %v1264 = vshll.u32 %v1255, %v1262
    %v1265 = vshrl.u32 %v1247, %v1263
    %v1266 = vor.u32 %v1264, %v1265
    %v1267 = vsub.s32 4294967266, %v1262
    %v1268 = vadd.s32 %v1267, 127
    %v1269 = vshll.u32 %v1268, 23
    %v1270 = vor.u32 4788187, %v1269
    %v1271 = vand.u32 2147483647, %v1270
    %v1273 = vcvt.s32.f32 %v1266
    %v1274 = vmul.f32 %v1273, %v1271
    %v1275 = vxor.u32 %v1274, 2147483648
    %v1276 = vsel %vm1193, %v1275, %v1274
    %v1277 = vsub.s32 4, %v1253
    %v1278 = vsel %vm1193, %v1277, %v1253
    %v1279 = vsel %vm1192, %v626, %v1276
    %v1280 = vsel %vm1192, 0, %v1278
    %v1281 = vcosq.f32.pop %v1279
    %v1282 = vsinq.f32.pop %v1279
    %vm1283 = vweird.f32 %v626
    %v1284 = vadd.s32 %v1280, 3
    %v1285 = vand.u32 %v1284, 3
    %vm1286 = vcmp.lt.s32.totalorder %v1285, 2
    %vm1287 = vcmp.eq.s32.totalorder %v1285, 0
    %v1288 = vxor.u32 %v1282, 2147483648
    %v1289 = vsel %vm1287, %v1281, %v1288
    %vm1290 = vcmp.eq.s32.totalorder %v1285, 2
    %v1291 = vxor.u32 %v1281, 2147483648
    %v1292 = vsel %vm1290, %v1291, %v1282
    %v1293 = vsel %vm1286, %v1289, %v1292
    %v1294 = vsel %vm1283, nan, %v1293
    %v1295 = vand.u32 2147483647, %v627
    %vm1296 = vcmp.le.f32.partialorder %v1295, 0.7853982
    %vm1297 = vcmp.lt.s32.totalorder %v627, 0
    %v1298 = vand.u32 %v627, 2139095040
    %v1299 = vshrl.u32 %v1298, 23
    %v1300 = vsub.s32 %v1299, 127
    %v1301 = vand.u32 2147483647, %v627
    %v1302 = vand.u32 %v1301, 8388607
    %v1303 = vor.u32 %v1302, 8388608
    %v1304 = vsub.s32 0, %v1303
    %v1305 = vadd.s32 %v1300, 1
    %vm1306 = vcmp.gt.s32.totalorder %v1305, 0
    %v1307 = vsel %vm1306, %v1305, 0
    %v1308 = vshrl.u32 %v1307, 5
    %v1309 = vand.u32 %v1307, 31
    %v1310 = vsub.s32 32, %v1309
    %v1311 = vshrl.u32 683565275, %v1310
    %v1312 = vshll.u32 683565275, %v1309
    %v1313 = vshrl.u32 2475754826, %v1310
    %v1314 = vor.u32 %v1312, %v1313
    %v1315 = vshll.u32 2475754826, %v1309
    %v1316 = vshrl.u32 2131351028, %v1310
    %v1317 = vor.u32 %v1315, %v1316
    %v1318 = vshll.u32 2131351028, %v1309
    %v1319 = vshrl.u32 2102212464, %v1310
    %v1320 = vor.u32 %v1318, %v1319
    %v1321 = vshll.u32 2102212464, %v1309
    %v1322 = vshrl.u32 920167782, %v1310
    %v1323 = vor.u32 %v1321, %v1322
    %v1324 = vshll.u32 920167782, %v1309
    %v1325 = vshrl.u32 1326507024, %v1310
    %v1326 = vor.u32 %v1324, %v1325
    %vm1327 = vcmp.lt.s32.totalorder %v1308, 1
    %vm1328 = vcmp.lt.s32.totalorder %v1308, 2
    %vm1329 = vcmp.lt.s32.totalorder %v1308, 3
    %vm1330 = vcmp.lt.s32.totalorder %v1308, 4
    %v1331 = vsel %vm1327, %v1311, %v1314
    %v1332 = vsel %vm1330, %v1320, 2102212464
    %v1333 = vsel %vm1329, %v1317, %v1332
    %v1334 = vsel %vm1328, %v1331, %v1333
    %v1335 = vsel %vm1327, %v1314, %v1317
    %v1336 = vsel %vm1330, %v1323, 920167782
    %v1337 = vsel %vm1329, %v1320, %v1336
    %v1338 = vsel %vm1328, %v1335, %v1337
    %v1339 = vsel %vm1327, %v1317, %v1320
    %v1340 = vsel %vm1330, %v1326, 1326507024
    %v1341 = vsel %vm1329, %v1323, %v1340
    %v1342 = vsel %vm1328, %v1339, %v1341
    %v1343 = vshll.u32 %v1303, 8
    %v1344 = vmul.u32.u64.compose %v1343, %v1342
    %v1345 = vextract.low.u32 %v1344
    %v1346 = vextract.high.u32 %v1344
    %v1347 = vmul.u32.u64.compose %v1343, %v1338
    %v1348 = vextract.low.u32 %v1347
    %v1349 = vextract.high.u32 %v1347
    %v1350 = vmul.u32 %v1343, %v1334
    %v1351 = vadd.s32 %v1346, %v1348
    %vm1352 = vc.u32 %v1346, %v1348
    %v1353 = vadd.s32 %v1349, 1
    %v1354 = vsel %vm1352, %v1353, %v1349
    %v1355 = vadd.s32 %v1350, %v1354
    %v1356 = vadd.s32 %v1355, 536870912
    %v1357 = vshrl.u32 %v1356, 30
    %v1358 = vshll.u32 %v1357, 30
    %v1359 = vsub.s32 %v1355, %v1358
    %vm1360 = vcmp.lt.s32.totalorder %v1359, 0
    %v1361 = vsub.s32 0, %v1359
    %v1362 = vsel %vm1360, %v1361, %v1359
    %v1363 = vclz %v1362
    %v1364 = vsub.s32 %v1363, 2
    %vm1365 = vcmp.gt.s32.totalorder 0, %v1364
    %v1366 = vsel %vm1365, 0, %v1364
    %v1367 = vsub.s32 32, %v1366
    %v1368 = vshll.u32 %v1359, %v1366
    %v1369 = vshrl.u32 %v1351, %v1367
    %v1370 = vor.u32 %v1368, %v1369
    %v1371 = vsub.s32 4294967266, %v1366
    %v1372 = vadd.s32 %v1371, 127
    %v1373 = vshll.u32 %v1372, 23
    %v1374 = vor.u32 4788187, %v1373
    %v1375 = vand.u32 2147483647, %v1374
    %v1377 = vcvt.s32.f32 %v1370
    %v1378 = vmul.f32 %v1377, %v1375
    %v1379 = vxor.u32 %v1378, 2147483648
    %v1380 = vsel %vm1297, %v1379, %v1378
    %v1381 = vsub.s32 4, %v1357
    %v1382 = vsel %vm1297, %v1381, %v1357
    %v1383 = vsel %vm1296, %v627, %v1380
    %v1384 = vsel %vm1296, 0, %v1382
    %v1385 = vcosq.f32.pop %v1383
    %v1386 = vsinq.f32.pop %v1383
    %vm1387 = vweird.f32 %v627
    %v1388 = vadd.s32 %v1384, 3
    %v1389 = vand.u32 %v1388, 3
    %vm1390 = vcmp.lt.s32.totalorder %v1389, 2
    %vm1391 = vcmp.eq.s32.totalorder %v1389, 0
    %v1392 = vxor.u32 %v1386, 2147483648
    %v1393 = vsel %vm1391, %v1385, %v1392
    %vm1394 = vcmp.eq.s32.totalorder %v1389, 2
    %v1395 = vxor.u32 %v1385, 2147483648
    %v1396 = vsel %vm1394, %v1395, %v1386
    %v1397 = vsel %vm1390, %v1393, %v1396
    %v1398 = vsel %vm1387, nan, %v1397
    %v1399 = vand.u32 2147483647, %v628
    %vm1400 = vcmp.le.f32.partialorder %v1399, 0.7853982
    %vm1401 = vcmp.lt.s32.totalorder %v628, 0
    %v1402 = vand.u32 %v628, 2139095040
    %v1403 = vshrl.u32 %v1402, 23
    %v1404 = vsub.s32 %v1403, 127
    %v1405 = vand.u32 2147483647, %v628
    %v1406 = vand.u32 %v1405, 8388607
    %v1407 = vor.u32 %v1406, 8388608
    %v1408 = vsub.s32 0, %v1407
    %v1409 = vadd.s32 %v1404, 1
    %vm1410 = vcmp.gt.s32.totalorder %v1409, 0
    %v1411 = vsel %vm1410, %v1409, 0
    %v1412 = vshrl.u32 %v1411, 5
    %v1413 = vand.u32 %v1411, 31
    %v1414 = vsub.s32 32, %v1413
    %v1415 = vshrl.u32 683565275, %v1414
    %v1416 = vshll.u32 683565275, %v1413
    %v1417 = vshrl.u32 2475754826, %v1414
    %v1418 = vor.u32 %v1416, %v1417
    %v1419 = vshll.u32 2475754826, %v1413
    %v1420 = vshrl.u32 2131351028, %v1414
    %v1421 = vor.u32 %v1419, %v1420
    %v1422 = vshll.u32 2131351028, %v1413
    %v1423 = vshrl.u32 2102212464, %v1414
    %v1424 = vor.u32 %v1422, %v1423
    %v1425 = vshll.u32 2102212464, %v1413
    %v1426 = vshrl.u32 920167782, %v1414
    %v1427 = vor.u32 %v1425, %v1426
    %v1428 = vshll.u32 920167782, %v1413
    %v1429 = vshrl.u32 1326507024, %v1414
    %v1430 = vor.u32 %v1428, %v1429
    %vm1431 = vcmp.lt.s32.totalorder %v1412, 1
    %vm1432 = vcmp.lt.s32.totalorder %v1412, 2
    %vm1433 = vcmp.lt.s32.totalorder %v1412, 3
    %vm1434 = vcmp.lt.s32.totalorder %v1412, 4
    %v1435 = vsel %vm1431, %v1415, %v1418
    %v1436 = vsel %vm1434, %v1424, 2102212464
    %v1437 = vsel %vm1433, %v1421, %v1436
    %v1438 = vsel %vm1432, %v1435, %v1437
    %v1439 = vsel %vm1431, %v1418, %v1421
    %v1440 = vsel %vm1434, %v1427, 920167782
    %v1441 = vsel %vm1433, %v1424, %v1440
    %v1442 = vsel %vm1432, %v1439, %v1441
    %v1443 = vsel %vm1431, %v1421, %v1424
    %v1444 = vsel %vm1434, %v1430, 1326507024
    %v1445 = vsel %vm1433, %v1427, %v1444
    %v1446 = vsel %vm1432, %v1443, %v1445
    %v1447 = vshll.u32 %v1407, 8
    %v1448 = vmul.u32.u64.compose %v1447, %v1446
    %v1449 = vextract.low.u32 %v1448
    %v1450 = vextract.high.u32 %v1448
    %v1451 = vmul.u32.u64.compose %v1447, %v1442
    %v1452 = vextract.low.u32 %v1451
    %v1453 = vextract.high.u32 %v1451
    %v1454 = vmul.u32 %v1447, %v1438
    %v1455 = vadd.s32 %v1450, %v1452
    %vm1456 = vc.u32 %v1450, %v1452
    %v1457 = vadd.s32 %v1453, 1
    %v1458 = vsel %vm1456, %v1457, %v1453
    %v1459 = vadd.s32 %v1454, %v1458
    %v1460 = vadd.s32 %v1459, 536870912
    %v1461 = vshrl.u32 %v1460, 30
    %v1462 = vshll.u32 %v1461, 30
    %v1463 = vsub.s32 %v1459, %v1462
    %vm1464 = vcmp.lt.s32.totalorder %v1463, 0
    %v1465 = vsub.s32 0, %v1463
    %v1466 = vsel %vm1464, %v1465, %v1463
    %v1467 = vclz %v1466
    %v1468 = vsub.s32 %v1467, 2
    %vm1469 = vcmp.gt.s32.totalorder 0, %v1468
    %v1470 = vsel %vm1469, 0, %v1468
    %v1471 = vsub.s32 32, %v1470
    %v1472 = vshll.u32 %v1463, %v1470
    %v1473 = vshrl.u32 %v1455, %v1471
    %v1474 = vor.u32 %v1472, %v1473
    %v1475 = vsub.s32 4294967266, %v1470
    %v1476 = vadd.s32 %v1475, 127
    %v1477 = vshll.u32 %v1476, 23
    %v1478 = vor.u32 4788187, %v1477
    %v1479 = vand.u32 2147483647, %v1478
    %v1481 = vcvt.s32.f32 %v1474
    %v1482 = vmul.f32 %v1481, %v1479
    %v1483 = vxor.u32 %v1482, 2147483648
    %v1484 = vsel %vm1401, %v1483, %v1482
    %v1485 = vsub.s32 4, %v1461
    %v1486 = vsel %vm1401, %v1485, %v1461
    %v1487 = vsel %vm1400, %v628, %v1484
    %v1488 = vsel %vm1400, 0, %v1486
    %v1489 = vcosq.f32.pop %v1487
    %v1490 = vsinq.f32.pop %v1487
    %vm1491 = vweird.f32 %v628
    %v1492 = vadd.s32 %v1488, 3
    %v1493 = vand.u32 %v1492, 3
    %vm1494 = vcmp.lt.s32.totalorder %v1493, 2
    %vm1495 = vcmp.eq.s32.totalorder %v1493, 0
    %v1496 = vxor.u32 %v1490, 2147483648
    %v1497 = vsel %vm1495, %v1489, %v1496
    %vm1498 = vcmp.eq.s32.totalorder %v1493, 2
    %v1499 = vxor.u32 %v1489, 2147483648
    %v1500 = vsel %vm1498, %v1499, %v1490
    %v1501 = vsel %vm1494, %v1497, %v1500
    %v1502 = vsel %vm1491, nan, %v1501
    %v1503 = vand.u32 2147483647, %v629
    %vm1504 = vcmp.le.f32.partialorder %v1503, 0.7853982
    %vm1505 = vcmp.lt.s32.totalorder %v629, 0
    %v1506 = vand.u32 %v629, 2139095040
    %v1507 = vshrl.u32 %v1506, 23
    %v1508 = vsub.s32 %v1507, 127
    %v1509 = vand.u32 2147483647, %v629
    %v1510 = vand.u32 %v1509, 8388607
    %v1511 = vor.u32 %v1510, 8388608
    %v1512 = vsub.s32 0, %v1511
    %v1513 = vadd.s32 %v1508, 1
    %vm1514 = vcmp.gt.s32.totalorder %v1513, 0
    %v1515 = vsel %vm1514, %v1513, 0
    %v1516 = vshrl.u32 %v1515, 5
    %v1517 = vand.u32 %v1515, 31
    %v1518 = vsub.s32 32, %v1517
    %v1519 = vshrl.u32 683565275, %v1518
    %v1520 = vshll.u32 683565275, %v1517
    %v1521 = vshrl.u32 2475754826, %v1518
    %v1522 = vor.u32 %v1520, %v1521
    %v1523 = vshll.u32 2475754826, %v1517
    %v1524 = vshrl.u32 2131351028, %v1518
    %v1525 = vor.u32 %v1523, %v1524
    %v1526 = vshll.u32 2131351028, %v1517
    %v1527 = vshrl.u32 2102212464, %v1518
    %v1528 = vor.u32 %v1526, %v1527
    %v1529 = vshll.u32 2102212464, %v1517
    %v1530 = vshrl.u32 920167782, %v1518
    %v1531 = vor.u32 %v1529, %v1530
    %v1532 = vshll.u32 920167782, %v1517
    %v1533 = vshrl.u32 1326507024, %v1518
    %v1534 = vor.u32 %v1532, %v1533
    %vm1535 = vcmp.lt.s32.totalorder %v1516, 1
    %vm1536 = vcmp.lt.s32.totalorder %v1516, 2
    %vm1537 = vcmp.lt.s32.totalorder %v1516, 3
    %vm1538 = vcmp.lt.s32.totalorder %v1516, 4
    %v1539 = vsel %vm1535, %v1519, %v1522
    %v1540 = vsel %vm1538, %v1528, 2102212464
    %v1541 = vsel %vm1537, %v1525, %v1540
    %v1542 = vsel %vm1536, %v1539, %v1541
    %v1543 = vsel %vm1535, %v1522, %v1525
    %v1544 = vsel %vm1538, %v1531, 920167782
    %v1545 = vsel %vm1537, %v1528, %v1544
    %v1546 = vsel %vm1536, %v1543, %v1545
    %v1547 = vsel %vm1535, %v1525, %v1528
    %v1548 = vsel %vm1538, %v1534, 1326507024
    %v1549 = vsel %vm1537, %v1531, %v1548
    %v1550 = vsel %vm1536, %v1547, %v1549
    %v1551 = vshll.u32 %v1511, 8
    %v1552 = vmul.u32.u64.compose %v1551, %v1550
    %v1553 = vextract.low.u32 %v1552
    %v1554 = vextract.high.u32 %v1552
    %v1555 = vmul.u32.u64.compose %v1551, %v1546
    %v1556 = vextract.low.u32 %v1555
    %v1557 = vextract.high.u32 %v1555
    %v1558 = vmul.u32 %v1551, %v1542
    %v1559 = vadd.s32 %v1554, %v1556
    %vm1560 = vc.u32 %v1554, %v1556
    %v1561 = vadd.s32 %v1557, 1
    %v1562 = vsel %vm1560, %v1561, %v1557
    %v1563 = vadd.s32 %v1558, %v1562
    %v1564 = vadd.s32 %v1563, 536870912
    %v1565 = vshrl.u32 %v1564, 30
    %v1566 = vshll.u32 %v1565, 30
    %v1567 = vsub.s32 %v1563, %v1566
    %vm1568 = vcmp.lt.s32.totalorder %v1567, 0
    %v1569 = vsub.s32 0, %v1567
    %v1570 = vsel %vm1568, %v1569, %v1567
    %v1571 = vclz %v1570
    %v1572 = vsub.s32 %v1571, 2
    %vm1573 = vcmp.gt.s32.totalorder 0, %v1572
    %v1574 = vsel %vm1573, 0, %v1572
    %v1575 = vsub.s32 32, %v1574
    %v1576 = vshll.u32 %v1567, %v1574
    %v1577 = vshrl.u32 %v1559, %v1575
    %v1578 = vor.u32 %v1576, %v1577
    %v1579 = vsub.s32 4294967266, %v1574
    %v1580 = vadd.s32 %v1579, 127
    %v1581 = vshll.u32 %v1580, 23
    %v1582 = vor.u32 4788187, %v1581
    %v1583 = vand.u32 2147483647, %v1582
    %v1585 = vcvt.s32.f32 %v1578
    %v1586 = vmul.f32 %v1585, %v1583
    %v1587 = vxor.u32 %v1586, 2147483648
    %v1588 = vsel %vm1505, %v1587, %v1586
    %v1589 = vsub.s32 4, %v1565
    %v1590 = vsel %vm1505, %v1589, %v1565
    %v1591 = vsel %vm1504, %v629, %v1588
    %v1592 = vsel %vm1504, 0, %v1590
    %v1593 = vcosq.f32.pop %v1591
    %v1594 = vsinq.f32.pop %v1591
    %vm1595 = vweird.f32 %v629
    %v1596 = vadd.s32 %v1592, 3
    %v1597 = vand.u32 %v1596, 3
    %vm1598 = vcmp.lt.s32.totalorder %v1597, 2
    %vm1599 = vcmp.eq.s32.totalorder %v1597, 0
    %v1600 = vxor.u32 %v1594, 2147483648
    %v1601 = vsel %vm1599, %v1593, %v1600
    %vm1602 = vcmp.eq.s32.totalorder %v1597, 2
    %v1603 = vxor.u32 %v1593, 2147483648
    %v1604 = vsel %vm1602, %v1603, %v1594
    %v1605 = vsel %vm1598, %v1601, %v1604
    %v1606 = vsel %vm1595, nan, %v1605
    %v1607 = vand.u32 2147483647, %v630
    %vm1608 = vcmp.le.f32.partialorder %v1607, 0.7853982
    %vm1609 = vcmp.lt.s32.totalorder %v630, 0
    %v1610 = vand.u32 %v630, 2139095040
    %v1611 = vshrl.u32 %v1610, 23
    %v1612 = vsub.s32 %v1611, 127
    %v1613 = vand.u32 2147483647, %v630
    %v1614 = vand.u32 %v1613, 8388607
    %v1615 = vor.u32 %v1614, 8388608
    %v1616 = vsub.s32 0, %v1615
    %v1617 = vadd.s32 %v1612, 1
    %vm1618 = vcmp.gt.s32.totalorder %v1617, 0
    %v1619 = vsel %vm1618, %v1617, 0
    %v1620 = vshrl.u32 %v1619, 5
    %v1621 = vand.u32 %v1619, 31
    %v1622 = vsub.s32 32, %v1621
    %v1623 = vshrl.u32 683565275, %v1622
    %v1624 = vshll.u32 683565275, %v1621
    %v1625 = vshrl.u32 2475754826, %v1622
    %v1626 = vor.u32 %v1624, %v1625
    %v1627 = vshll.u32 2475754826, %v1621
    %v1628 = vshrl.u32 2131351028, %v1622
    %v1629 = vor.u32 %v1627, %v1628
    %v1630 = vshll.u32 2131351028, %v1621
    %v1631 = vshrl.u32 2102212464, %v1622
    %v1632 = vor.u32 %v1630, %v1631
    %v1633 = vshll.u32 2102212464, %v1621
    %v1634 = vshrl.u32 920167782, %v1622
    %v1635 = vor.u32 %v1633, %v1634
    %v1636 = vshll.u32 920167782, %v1621
    %v1637 = vshrl.u32 1326507024, %v1622
    %v1638 = vor.u32 %v1636, %v1637
    %vm1639 = vcmp.lt.s32.totalorder %v1620, 1
    %vm1640 = vcmp.lt.s32.totalorder %v1620, 2
    %vm1641 = vcmp.lt.s32.totalorder %v1620, 3
    %vm1642 = vcmp.lt.s32.totalorder %v1620, 4
    %v1643 = vsel %vm1639, %v1623, %v1626
    %v1644 = vsel %vm1642, %v1632, 2102212464
    %v1645 = vsel %vm1641, %v1629, %v1644
    %v1646 = vsel %vm1640, %v1643, %v1645
    %v1647 = vsel %vm1639, %v1626, %v1629
    %v1648 = vsel %vm1642, %v1635, 920167782
    %v1649 = vsel %vm1641, %v1632, %v1648
    %v1650 = vsel %vm1640, %v1647, %v1649
    %v1651 = vsel %vm1639, %v1629, %v1632
    %v1652 = vsel %vm1642, %v1638, 1326507024
    %v1653 = vsel %vm1641, %v1635, %v1652
    %v1654 = vsel %vm1640, %v1651, %v1653
    %v1655 = vshll.u32 %v1615, 8
    %v1656 = vmul.u32.u64.compose %v1655, %v1654
    %v1657 = vextract.low.u32 %v1656
    %v1658 = vextract.high.u32 %v1656
    %v1659 = vmul.u32.u64.compose %v1655, %v1650
    %v1660 = vextract.low.u32 %v1659
    %v1661 = vextract.high.u32 %v1659
    %v1662 = vmul.u32 %v1655, %v1646
    %v1663 = vadd.s32 %v1658, %v1660
    %vm1664 = vc.u32 %v1658, %v1660
    %v1665 = vadd.s32 %v1661, 1
    %v1666 = vsel %vm1664, %v1665, %v1661
    %v1667 = vadd.s32 %v1662, %v1666
    %v1668 = vadd.s32 %v1667, 536870912
    %v1669 = vshrl.u32 %v1668, 30
    %v1670 = vshll.u32 %v1669, 30
    %v1671 = vsub.s32 %v1667, %v1670
    %vm1672 = vcmp.lt.s32.totalorder %v1671, 0
    %v1673 = vsub.s32 0, %v1671
    %v1674 = vsel %vm1672, %v1673, %v1671
    %v1675 = vclz %v1674
    %v1676 = vsub.s32 %v1675, 2
    %vm1677 = vcmp.gt.s32.totalorder 0, %v1676
    %v1678 = vsel %vm1677, 0, %v1676
    %v1679 = vsub.s32 32, %v1678
    %v1680 = vshll.u32 %v1671, %v1678
    %v1681 = vshrl.u32 %v1663, %v1679
    %v1682 = vor.u32 %v1680, %v1681
    %v1683 = vsub.s32 4294967266, %v1678
    %v1684 = vadd.s32 %v1683, 127
    %v1685 = vshll.u32 %v1684, 23
    %v1686 = vor.u32 4788187, %v1685
    %v1687 = vand.u32 2147483647, %v1686
    %v1689 = vcvt.s32.f32 %v1682
    %v1690 = vmul.f32 %v1689, %v1687
    %v1691 = vxor.u32 %v1690, 2147483648
    %v1692 = vsel %vm1609, %v1691, %v1690
    %v1693 = vsub.s32 4, %v1669
    %v1694 = vsel %vm1609, %v1693, %v1669
    %v1695 = vsel %vm1608, %v630, %v1692
    %v1696 = vsel %vm1608, 0, %v1694
    %v1697 = vcosq.f32.pop %v1695
    %v1698 = vsinq.f32.pop %v1695
    %vm1699 = vweird.f32 %v630
    %v1700 = vadd.s32 %v1696, 3
    %v1701 = vand.u32 %v1700, 3
    %vm1702 = vcmp.lt.s32.totalorder %v1701, 2
    %vm1703 = vcmp.eq.s32.totalorder %v1701, 0
    %v1704 = vxor.u32 %v1698, 2147483648
    %v1705 = vsel %vm1703, %v1697, %v1704
    %vm1706 = vcmp.eq.s32.totalorder %v1701, 2
    %v1707 = vxor.u32 %v1697, 2147483648
    %v1708 = vsel %vm1706, %v1707, %v1698
    %v1709 = vsel %vm1702, %v1705, %v1708
    %v1710 = vsel %vm1699, nan, %v1709
    %v1711 = vand.u32 2147483647, %v631
    %vm1712 = vcmp.le.f32.partialorder %v1711, 0.7853982
    %vm1713 = vcmp.lt.s32.totalorder %v631, 0
    %v1714 = vand.u32 %v631, 2139095040
    %v1715 = vshrl.u32 %v1714, 23
    %v1716 = vsub.s32 %v1715, 127
    %v1717 = vand.u32 2147483647, %v631
    %v1718 = vand.u32 %v1717, 8388607
    %v1719 = vor.u32 %v1718, 8388608
    %v1720 = vsub.s32 0, %v1719
    %v1721 = vadd.s32 %v1716, 1
    %vm1722 = vcmp.gt.s32.totalorder %v1721, 0
    %v1723 = vsel %vm1722, %v1721, 0
    %v1724 = vshrl.u32 %v1723, 5
    %v1725 = vand.u32 %v1723, 31
    %v1726 = vsub.s32 32, %v1725
    %v1727 = vshrl.u32 683565275, %v1726
    %v1728 = vshll.u32 683565275, %v1725
    %v1729 = vshrl.u32 2475754826, %v1726
    %v1730 = vor.u32 %v1728, %v1729
    %v1731 = vshll.u32 2475754826, %v1725
    %v1732 = vshrl.u32 2131351028, %v1726
    %v1733 = vor.u32 %v1731, %v1732
    %v1734 = vshll.u32 2131351028, %v1725
    %v1735 = vshrl.u32 2102212464, %v1726
    %v1736 = vor.u32 %v1734, %v1735
    %v1737 = vshll.u32 2102212464, %v1725
    %v1738 = vshrl.u32 920167782, %v1726
    %v1739 = vor.u32 %v1737, %v1738
    %v1740 = vshll.u32 920167782, %v1725
    %v1741 = vshrl.u32 1326507024, %v1726
    %v1742 = vor.u32 %v1740, %v1741
    %vm1743 = vcmp.lt.s32.totalorder %v1724, 1
    %vm1744 = vcmp.lt.s32.totalorder %v1724, 2
    %vm1745 = vcmp.lt.s32.totalorder %v1724, 3
    %vm1746 = vcmp.lt.s32.totalorder %v1724, 4
    %v1747 = vsel %vm1743, %v1727, %v1730
    %v1748 = vsel %vm1746, %v1736, 2102212464
    %v1749 = vsel %vm1745, %v1733, %v1748
    %v1750 = vsel %vm1744, %v1747, %v1749
    %v1751 = vsel %vm1743, %v1730, %v1733
    %v1752 = vsel %vm1746, %v1739, 920167782
    %v1753 = vsel %vm1745, %v1736, %v1752
    %v1754 = vsel %vm1744, %v1751, %v1753
    %v1755 = vsel %vm1743, %v1733, %v1736
    %v1756 = vsel %vm1746, %v1742, 1326507024
    %v1757 = vsel %vm1745, %v1739, %v1756
    %v1758 = vsel %vm1744, %v1755, %v1757
    %v1759 = vshll.u32 %v1719, 8
    %v1760 = vmul.u32.u64.compose %v1759, %v1758
    %v1761 = vextract.low.u32 %v1760
    %v1762 = vextract.high.u32 %v1760
    %v1763 = vmul.u32.u64.compose %v1759, %v1754
    %v1764 = vextract.low.u32 %v1763
    %v1765 = vextract.high.u32 %v1763
    %v1766 = vmul.u32 %v1759, %v1750
    %v1767 = vadd.s32 %v1762, %v1764
    %vm1768 = vc.u32 %v1762, %v1764
    %v1769 = vadd.s32 %v1765, 1
    %v1770 = vsel %vm1768, %v1769, %v1765
    %v1771 = vadd.s32 %v1766, %v1770
    %v1772 = vadd.s32 %v1771, 536870912
    %v1773 = vshrl.u32 %v1772, 30
    %v1774 = vshll.u32 %v1773, 30
    %v1775 = vsub.s32 %v1771, %v1774
    %vm1776 = vcmp.lt.s32.totalorder %v1775, 0
    %v1777 = vsub.s32 0, %v1775
    %v1778 = vsel %vm1776, %v1777, %v1775
    %v1779 = vclz %v1778
    %v1780 = vsub.s32 %v1779, 2
    %vm1781 = vcmp.gt.s32.totalorder 0, %v1780
    %v1782 = vsel %vm1781, 0, %v1780
    %v1783 = vsub.s32 32, %v1782
    %v1784 = vshll.u32 %v1775, %v1782
    %v1785 = vshrl.u32 %v1767, %v1783
    %v1786 = vor.u32 %v1784, %v1785
    %v1787 = vsub.s32 4294967266, %v1782
    %v1788 = vadd.s32 %v1787, 127
    %v1789 = vshll.u32 %v1788, 23
    %v1790 = vor.u32 4788187, %v1789
    %v1791 = vand.u32 2147483647, %v1790
    %v1793 = vcvt.s32.f32 %v1786
    %v1794 = vmul.f32 %v1793, %v1791
    %v1795 = vxor.u32 %v1794, 2147483648
    %v1796 = vsel %vm1713, %v1795, %v1794
    %v1797 = vsub.s32 4, %v1773
    %v1798 = vsel %vm1713, %v1797, %v1773
    %v1799 = vsel %vm1712, %v631, %v1796
    %v1800 = vsel %vm1712, 0, %v1798
    %v1801 = vcosq.f32.pop %v1799
    %v1802 = vsinq.f32.pop %v1799
    %vm1803 = vweird.f32 %v631
    %v1804 = vadd.s32 %v1800, 3
    %v1805 = vand.u32 %v1804, 3
    %vm1806 = vcmp.lt.s32.totalorder %v1805, 2
    %vm1807 = vcmp.eq.s32.totalorder %v1805, 0
    %v1808 = vxor.u32 %v1802, 2147483648
    %v1809 = vsel %vm1807, %v1801, %v1808
    %vm1810 = vcmp.eq.s32.totalorder %v1805, 2
    %v1811 = vxor.u32 %v1801, 2147483648
    %v1812 = vsel %vm1810, %v1811, %v1802
    %v1813 = vsel %vm1806, %v1809, %v1812
    %v1814 = vsel %vm1803, nan, %v1813
    %v1815 = vand.u32 2147483647, %v632
    %vm1816 = vcmp.le.f32.partialorder %v1815, 0.7853982
    %vm1817 = vcmp.lt.s32.totalorder %v632, 0
    %v1818 = vand.u32 %v632, 2139095040
    %v1819 = vshrl.u32 %v1818, 23
    %v1820 = vsub.s32 %v1819, 127
    %v1821 = vand.u32 2147483647, %v632
    %v1822 = vand.u32 %v1821, 8388607
    %v1823 = vor.u32 %v1822, 8388608
    %v1824 = vsub.s32 0, %v1823
    %v1825 = vadd.s32 %v1820, 1
    %vm1826 = vcmp.gt.s32.totalorder %v1825, 0
    %v1827 = vsel %vm1826, %v1825, 0
    %v1828 = vshrl.u32 %v1827, 5
    %v1829 = vand.u32 %v1827, 31
    %v1830 = vsub.s32 32, %v1829
    %v1831 = vshrl.u32 683565275, %v1830
    %v1832 = vshll.u32 683565275, %v1829
    %v1833 = vshrl.u32 2475754826, %v1830
    %v1834 = vor.u32 %v1832, %v1833
    %v1835 = vshll.u32 2475754826, %v1829
    %v1836 = vshrl.u32 2131351028, %v1830
    %v1837 = vor.u32 %v1835, %v1836
    %v1838 = vshll.u32 2131351028, %v1829
    %v1839 = vshrl.u32 2102212464, %v1830
    %v1840 = vor.u32 %v1838, %v1839
    %v1841 = vshll.u32 2102212464, %v1829
    %v1842 = vshrl.u32 920167782, %v1830
    %v1843 = vor.u32 %v1841, %v1842
    %v1844 = vshll.u32 920167782, %v1829
    %v1845 = vshrl.u32 1326507024, %v1830
    %v1846 = vor.u32 %v1844, %v1845
    %vm1847 = vcmp.lt.s32.totalorder %v1828, 1
    %vm1848 = vcmp.lt.s32.totalorder %v1828, 2
    %vm1849 = vcmp.lt.s32.totalorder %v1828, 3
    %vm1850 = vcmp.lt.s32.totalorder %v1828, 4
    %v1851 = vsel %vm1847, %v1831, %v1834
    %v1852 = vsel %vm1850, %v1840, 2102212464
    %v1853 = vsel %vm1849, %v1837, %v1852
    %v1854 = vsel %vm1848, %v1851, %v1853
    %v1855 = vsel %vm1847, %v1834, %v1837
    %v1856 = vsel %vm1850, %v1843, 920167782
    %v1857 = vsel %vm1849, %v1840, %v1856
    %v1858 = vsel %vm1848, %v1855, %v1857
    %v1859 = vsel %vm1847, %v1837, %v1840
    %v1860 = vsel %vm1850, %v1846, 1326507024
    %v1861 = vsel %vm1849, %v1843, %v1860
    %v1862 = vsel %vm1848, %v1859, %v1861
    %v1863 = vshll.u32 %v1823, 8
    %v1864 = vmul.u32.u64.compose %v1863, %v1862
    %v1865 = vextract.low.u32 %v1864
    %v1866 = vextract.high.u32 %v1864
    %v1867 = vmul.u32.u64.compose %v1863, %v1858
    %v1868 = vextract.low.u32 %v1867
    %v1869 = vextract.high.u32 %v1867
    %v1870 = vmul.u32 %v1863, %v1854
    %v1871 = vadd.s32 %v1866, %v1868
    %vm1872 = vc.u32 %v1866, %v1868
    %v1873 = vadd.s32 %v1869, 1
    %v1874 = vsel %vm1872, %v1873, %v1869
    %v1875 = vadd.s32 %v1870, %v1874
    %v1876 = vadd.s32 %v1875, 536870912
    %v1877 = vshrl.u32 %v1876, 30
    %v1878 = vshll.u32 %v1877, 30
    %v1879 = vsub.s32 %v1875, %v1878
    %vm1880 = vcmp.lt.s32.totalorder %v1879, 0
    %v1881 = vsub.s32 0, %v1879
    %v1882 = vsel %vm1880, %v1881, %v1879
    %v1883 = vclz %v1882
    %v1884 = vsub.s32 %v1883, 2
    %vm1885 = vcmp.gt.s32.totalorder 0, %v1884
    %v1886 = vsel %vm1885, 0, %v1884
    %v1887 = vsub.s32 32, %v1886
    %v1888 = vshll.u32 %v1879, %v1886
    %v1889 = vshrl.u32 %v1871, %v1887
    %v1890 = vor.u32 %v1888, %v1889
    %v1891 = vsub.s32 4294967266, %v1886
    %v1892 = vadd.s32 %v1891, 127
    %v1893 = vshll.u32 %v1892, 23
    %v1894 = vor.u32 4788187, %v1893
    %v1895 = vand.u32 2147483647, %v1894
    %v1897 = vcvt.s32.f32 %v1890
    %v1898 = vmul.f32 %v1897, %v1895
    %v1899 = vxor.u32 %v1898, 2147483648
    %v1900 = vsel %vm1817, %v1899, %v1898
    %v1901 = vsub.s32 4, %v1877
    %v1902 = vsel %vm1817, %v1901, %v1877
    %v1903 = vsel %vm1816, %v632, %v1900
    %v1904 = vsel %vm1816, 0, %v1902
    %v1905 = vcosq.f32.pop %v1903
    %v1906 = vsinq.f32.pop %v1903
    %vm1907 = vweird.f32 %v632
    %v1908 = vadd.s32 %v1904, 3
    %v1909 = vand.u32 %v1908, 3
    %vm1910 = vcmp.lt.s32.totalorder %v1909, 2
    %vm1911 = vcmp.eq.s32.totalorder %v1909, 0
    %v1912 = vxor.u32 %v1906, 2147483648
    %v1913 = vsel %vm1911, %v1905, %v1912
    %vm1914 = vcmp.eq.s32.totalorder %v1909, 2
    %v1915 = vxor.u32 %v1905, 2147483648
    %v1916 = vsel %vm1914, %v1915, %v1906
    %v1917 = vsel %vm1910, %v1913, %v1916
    %v1918 = vsel %vm1907, nan, %v1917
    %v1919 = vand.u32 2147483647, %v633
    %vm1920 = vcmp.le.f32.partialorder %v1919, 0.7853982
    %vm1921 = vcmp.lt.s32.totalorder %v633, 0
    %v1922 = vand.u32 %v633, 2139095040
    %v1923 = vshrl.u32 %v1922, 23
    %v1924 = vsub.s32 %v1923, 127
    %v1925 = vand.u32 2147483647, %v633
    %v1926 = vand.u32 %v1925, 8388607
    %v1927 = vor.u32 %v1926, 8388608
    %v1928 = vsub.s32 0, %v1927
    %v1929 = vadd.s32 %v1924, 1
    %vm1930 = vcmp.gt.s32.totalorder %v1929, 0
    %v1931 = vsel %vm1930, %v1929, 0
    %v1932 = vshrl.u32 %v1931, 5
    %v1933 = vand.u32 %v1931, 31
    %v1934 = vsub.s32 32, %v1933
    %v1935 = vshrl.u32 683565275, %v1934
    %v1936 = vshll.u32 683565275, %v1933
    %v1937 = vshrl.u32 2475754826, %v1934
    %v1938 = vor.u32 %v1936, %v1937
    %v1939 = vshll.u32 2475754826, %v1933
    %v1940 = vshrl.u32 2131351028, %v1934
    %v1941 = vor.u32 %v1939, %v1940
    %v1942 = vshll.u32 2131351028, %v1933
    %v1943 = vshrl.u32 2102212464, %v1934
    %v1944 = vor.u32 %v1942, %v1943
    %v1945 = vshll.u32 2102212464, %v1933
    %v1946 = vshrl.u32 920167782, %v1934
    %v1947 = vor.u32 %v1945, %v1946
    %v1948 = vshll.u32 920167782, %v1933
    %v1949 = vshrl.u32 1326507024, %v1934
    %v1950 = vor.u32 %v1948, %v1949
    %vm1951 = vcmp.lt.s32.totalorder %v1932, 1
    %vm1952 = vcmp.lt.s32.totalorder %v1932, 2
    %vm1953 = vcmp.lt.s32.totalorder %v1932, 3
    %vm1954 = vcmp.lt.s32.totalorder %v1932, 4
    %v1955 = vsel %vm1951, %v1935, %v1938
    %v1956 = vsel %vm1954, %v1944, 2102212464
    %v1957 = vsel %vm1953, %v1941, %v1956
    %v1958 = vsel %vm1952, %v1955, %v1957
    %v1959 = vsel %vm1951, %v1938, %v1941
    %v1960 = vsel %vm1954, %v1947, 920167782
    %v1961 = vsel %vm1953, %v1944, %v1960
    %v1962 = vsel %vm1952, %v1959, %v1961
    %v1963 = vsel %vm1951, %v1941, %v1944
    %v1964 = vsel %vm1954, %v1950, 1326507024
    %v1965 = vsel %vm1953, %v1947, %v1964
    %v1966 = vsel %vm1952, %v1963, %v1965
    %v1967 = vshll.u32 %v1927, 8
    %v1968 = vmul.u32.u64.compose %v1967, %v1966
    %v1969 = vextract.low.u32 %v1968
    %v1970 = vextract.high.u32 %v1968
    %v1971 = vmul.u32.u64.compose %v1967, %v1962
    %v1972 = vextract.low.u32 %v1971
    %v1973 = vextract.high.u32 %v1971
    %v1974 = vmul.u32 %v1967, %v1958
    %v1975 = vadd.s32 %v1970, %v1972
    %vm1976 = vc.u32 %v1970, %v1972
    %v1977 = vadd.s32 %v1973, 1
    %v1978 = vsel %vm1976, %v1977, %v1973
    %v1979 = vadd.s32 %v1974, %v1978
    %v1980 = vadd.s32 %v1979, 536870912
    %v1981 = vshrl.u32 %v1980, 30
    %v1982 = vshll.u32 %v1981, 30
    %v1983 = vsub.s32 %v1979, %v1982
    %vm1984 = vcmp.lt.s32.totalorder %v1983, 0
    %v1985 = vsub.s32 0, %v1983
    %v1986 = vsel %vm1984, %v1985, %v1983
    %v1987 = vclz %v1986
    %v1988 = vsub.s32 %v1987, 2
    %vm1989 = vcmp.gt.s32.totalorder 0, %v1988
    %v1990 = vsel %vm1989, 0, %v1988
    %v1991 = vsub.s32 32, %v1990
    %v1992 = vshll.u32 %v1983, %v1990
    %v1993 = vshrl.u32 %v1975, %v1991
    %v1994 = vor.u32 %v1992, %v1993
    %v1995 = vsub.s32 4294967266, %v1990
    %v1996 = vadd.s32 %v1995, 127
    %v1997 = vshll.u32 %v1996, 23
    %v1998 = vor.u32 4788187, %v1997
    %v1999 = vand.u32 2147483647, %v1998
    %v2001 = vcvt.s32.f32 %v1994
    %v2002 = vmul.f32 %v2001, %v1999
    %v2003 = vxor.u32 %v2002, 2147483648
    %v2004 = vsel %vm1921, %v2003, %v2002
    %v2005 = vsub.s32 4, %v1981
    %v2006 = vsel %vm1921, %v2005, %v1981
    %v2007 = vsel %vm1920, %v633, %v2004
    %v2008 = vsel %vm1920, 0, %v2006
    %v2009 = vcosq.f32.pop %v2007
    %v2010 = vsinq.f32.pop %v2007
    %vm2011 = vweird.f32 %v633
    %v2012 = vadd.s32 %v2008, 3
    %v2013 = vand.u32 %v2012, 3
    %vm2014 = vcmp.lt.s32.totalorder %v2013, 2
    %vm2015 = vcmp.eq.s32.totalorder %v2013, 0
    %v2016 = vxor.u32 %v2010, 2147483648
    %v2017 = vsel %vm2015, %v2009, %v2016
    %vm2018 = vcmp.eq.s32.totalorder %v2013, 2
    %v2019 = vxor.u32 %v2009, 2147483648
    %v2020 = vsel %vm2018, %v2019, %v2010
    %v2021 = vsel %vm2014, %v2017, %v2020
    %v2022 = vsel %vm2011, nan, %v2021
    %v2023 = vand.u32 2147483647, %v634
    %vm2024 = vcmp.le.f32.partialorder %v2023, 0.7853982
    %vm2025 = vcmp.lt.s32.totalorder %v634, 0
    %v2026 = vand.u32 %v634, 2139095040
    %v2027 = vshrl.u32 %v2026, 23
    %v2028 = vsub.s32 %v2027, 127
    %v2029 = vand.u32 2147483647, %v634
    %v2030 = vand.u32 %v2029, 8388607
    %v2031 = vor.u32 %v2030, 8388608
    %v2032 = vsub.s32 0, %v2031
    %v2033 = vadd.s32 %v2028, 1
    %vm2034 = vcmp.gt.s32.totalorder %v2033, 0
    %v2035 = vsel %vm2034, %v2033, 0
    %v2036 = vshrl.u32 %v2035, 5
    %v2037 = vand.u32 %v2035, 31
    %v2038 = vsub.s32 32, %v2037
    %v2039 = vshrl.u32 683565275, %v2038
    %v2040 = vshll.u32 683565275, %v2037
    %v2041 = vshrl.u32 2475754826, %v2038
    %v2042 = vor.u32 %v2040, %v2041
    %v2043 = vshll.u32 2475754826, %v2037
    %v2044 = vshrl.u32 2131351028, %v2038
    %v2045 = vor.u32 %v2043, %v2044
    %v2046 = vshll.u32 2131351028, %v2037
    %v2047 = vshrl.u32 2102212464, %v2038
    %v2048 = vor.u32 %v2046, %v2047
    %v2049 = vshll.u32 2102212464, %v2037
    %v2050 = vshrl.u32 920167782, %v2038
    %v2051 = vor.u32 %v2049, %v2050
    %v2052 = vshll.u32 920167782, %v2037
    %v2053 = vshrl.u32 1326507024, %v2038
    %v2054 = vor.u32 %v2052, %v2053
    %vm2055 = vcmp.lt.s32.totalorder %v2036, 1
    %vm2056 = vcmp.lt.s32.totalorder %v2036, 2
    %vm2057 = vcmp.lt.s32.totalorder %v2036, 3
    %vm2058 = vcmp.lt.s32.totalorder %v2036, 4
    %v2059 = vsel %vm2055, %v2039, %v2042
    %v2060 = vsel %vm2058, %v2048, 2102212464
    %v2061 = vsel %vm2057, %v2045, %v2060
    %v2062 = vsel %vm2056, %v2059, %v2061
    %v2063 = vsel %vm2055, %v2042, %v2045
    %v2064 = vsel %vm2058, %v2051, 920167782
    %v2065 = vsel %vm2057, %v2048, %v2064
    %v2066 = vsel %vm2056, %v2063, %v2065
    %v2067 = vsel %vm2055, %v2045, %v2048
    %v2068 = vsel %vm2058, %v2054, 1326507024
    %v2069 = vsel %vm2057, %v2051, %v2068
    %v2070 = vsel %vm2056, %v2067, %v2069
    %v2071 = vshll.u32 %v2031, 8
    %v2072 = vmul.u32.u64.compose %v2071, %v2070
    %v2073 = vextract.low.u32 %v2072
    %v2074 = vextract.high.u32 %v2072
    %v2075 = vmul.u32.u64.compose %v2071, %v2066
    %v2076 = vextract.low.u32 %v2075
    %v2077 = vextract.high.u32 %v2075
    %v2078 = vmul.u32 %v2071, %v2062
    %v2079 = vadd.s32 %v2074, %v2076
    %vm2080 = vc.u32 %v2074, %v2076
    %v2081 = vadd.s32 %v2077, 1
    %v2082 = vsel %vm2080, %v2081, %v2077
    %v2083 = vadd.s32 %v2078, %v2082
    %v2084 = vadd.s32 %v2083, 536870912
    %v2085 = vshrl.u32 %v2084, 30
    %v2086 = vshll.u32 %v2085, 30
    %v2087 = vsub.s32 %v2083, %v2086
    %vm2088 = vcmp.lt.s32.totalorder %v2087, 0
    %v2089 = vsub.s32 0, %v2087
    %v2090 = vsel %vm2088, %v2089, %v2087
    %v2091 = vclz %v2090
    %v2092 = vsub.s32 %v2091, 2
    %vm2093 = vcmp.gt.s32.totalorder 0, %v2092
    %v2094 = vsel %vm2093, 0, %v2092
    %v2095 = vsub.s32 32, %v2094
    %v2096 = vshll.u32 %v2087, %v2094
    %v2097 = vshrl.u32 %v2079, %v2095
    %v2098 = vor.u32 %v2096, %v2097
    %v2099 = vsub.s32 4294967266, %v2094
    %v2100 = vadd.s32 %v2099, 127
    %v2101 = vshll.u32 %v2100, 23
    %v2102 = vor.u32 4788187, %v2101
    %v2103 = vand.u32 2147483647, %v2102
    %v2105 = vcvt.s32.f32 %v2098
    %v2106 = vmul.f32 %v2105, %v2103
    %v2107 = vxor.u32 %v2106, 2147483648
    %v2108 = vsel %vm2025, %v2107, %v2106
    %v2109 = vsub.s32 4, %v2085
    %v2110 = vsel %vm2025, %v2109, %v2085
    %v2111 = vsel %vm2024, %v634, %v2108
    %v2112 = vsel %vm2024, 0, %v2110
    %v2113 = vcosq.f32.pop %v2111
    %v2114 = vsinq.f32.pop %v2111
    %vm2115 = vweird.f32 %v634
    %v2116 = vadd.s32 %v2112, 3
    %v2117 = vand.u32 %v2116, 3
    %vm2118 = vcmp.lt.s32.totalorder %v2117, 2
    %vm2119 = vcmp.eq.s32.totalorder %v2117, 0
    %v2120 = vxor.u32 %v2114, 2147483648
    %v2121 = vsel %vm2119, %v2113, %v2120
    %vm2122 = vcmp.eq.s32.totalorder %v2117, 2
    %v2123 = vxor.u32 %v2113, 2147483648
    %v2124 = vsel %vm2122, %v2123, %v2114
    %v2125 = vsel %vm2118, %v2121, %v2124
    %v2126 = vsel %vm2115, nan, %v2125
    %v2127 = vand.u32 2147483647, %v635
    %vm2128 = vcmp.le.f32.partialorder %v2127, 0.7853982
    %vm2129 = vcmp.lt.s32.totalorder %v635, 0
    %v2130 = vand.u32 %v635, 2139095040
    %v2131 = vshrl.u32 %v2130, 23
    %v2132 = vsub.s32 %v2131, 127
    %v2133 = vand.u32 2147483647, %v635
    %v2134 = vand.u32 %v2133, 8388607
    %v2135 = vor.u32 %v2134, 8388608
    %v2136 = vsub.s32 0, %v2135
    %v2137 = vadd.s32 %v2132, 1
    %vm2138 = vcmp.gt.s32.totalorder %v2137, 0
    %v2139 = vsel %vm2138, %v2137, 0
    %v2140 = vshrl.u32 %v2139, 5
    %v2141 = vand.u32 %v2139, 31
    %v2142 = vsub.s32 32, %v2141
    %v2143 = vshrl.u32 683565275, %v2142
    %v2144 = vshll.u32 683565275, %v2141
    %v2145 = vshrl.u32 2475754826, %v2142
    %v2146 = vor.u32 %v2144, %v2145
    %v2147 = vshll.u32 2475754826, %v2141
    %v2148 = vshrl.u32 2131351028, %v2142
    %v2149 = vor.u32 %v2147, %v2148
    %v2150 = vshll.u32 2131351028, %v2141
    %v2151 = vshrl.u32 2102212464, %v2142
    %v2152 = vor.u32 %v2150, %v2151
    %v2153 = vshll.u32 2102212464, %v2141
    %v2154 = vshrl.u32 920167782, %v2142
    %v2155 = vor.u32 %v2153, %v2154
    %v2156 = vshll.u32 920167782, %v2141
    %v2157 = vshrl.u32 1326507024, %v2142
    %v2158 = vor.u32 %v2156, %v2157
    %vm2159 = vcmp.lt.s32.totalorder %v2140, 1
    %vm2160 = vcmp.lt.s32.totalorder %v2140, 2
    %vm2161 = vcmp.lt.s32.totalorder %v2140, 3
    %vm2162 = vcmp.lt.s32.totalorder %v2140, 4
    %v2163 = vsel %vm2159, %v2143, %v2146
    %v2164 = vsel %vm2162, %v2152, 2102212464
    %v2165 = vsel %vm2161, %v2149, %v2164
    %v2166 = vsel %vm2160, %v2163, %v2165
    %v2167 = vsel %vm2159, %v2146, %v2149
    %v2168 = vsel %vm2162, %v2155, 920167782
    %v2169 = vsel %vm2161, %v2152, %v2168
    %v2170 = vsel %vm2160, %v2167, %v2169
    %v2171 = vsel %vm2159, %v2149, %v2152
    %v2172 = vsel %vm2162, %v2158, 1326507024
    %v2173 = vsel %vm2161, %v2155, %v2172
    %v2174 = vsel %vm2160, %v2171, %v2173
    %v2175 = vshll.u32 %v2135, 8
    %v2176 = vmul.u32.u64.compose %v2175, %v2174
    %v2177 = vextract.low.u32 %v2176
    %v2178 = vextract.high.u32 %v2176
    %v2179 = vmul.u32.u64.compose %v2175, %v2170
    %v2180 = vextract.low.u32 %v2179
    %v2181 = vextract.high.u32 %v2179
    %v2182 = vmul.u32 %v2175, %v2166
    %v2183 = vadd.s32 %v2178, %v2180
    %vm2184 = vc.u32 %v2178, %v2180
    %v2185 = vadd.s32 %v2181, 1
    %v2186 = vsel %vm2184, %v2185, %v2181
    %v2187 = vadd.s32 %v2182, %v2186
    %v2188 = vadd.s32 %v2187, 536870912
    %v2189 = vshrl.u32 %v2188, 30
    %v2190 = vshll.u32 %v2189, 30
    %v2191 = vsub.s32 %v2187, %v2190
    %vm2192 = vcmp.lt.s32.totalorder %v2191, 0
    %v2193 = vsub.s32 0, %v2191
    %v2194 = vsel %vm2192, %v2193, %v2191
    %v2195 = vclz %v2194
    %v2196 = vsub.s32 %v2195, 2
    %vm2197 = vcmp.gt.s32.totalorder 0, %v2196
    %v2198 = vsel %vm2197, 0, %v2196
    %v2199 = vsub.s32 32, %v2198
    %v2200 = vshll.u32 %v2191, %v2198
    %v2201 = vshrl.u32 %v2183, %v2199
    %v2202 = vor.u32 %v2200, %v2201
    %v2203 = vsub.s32 4294967266, %v2198
    %v2204 = vadd.s32 %v2203, 127
    %v2205 = vshll.u32 %v2204, 23
    %v2206 = vor.u32 4788187, %v2205
    %v2207 = vand.u32 2147483647, %v2206
    %v2209 = vcvt.s32.f32 %v2202
    %v2210 = vmul.f32 %v2209, %v2207
    %v2211 = vxor.u32 %v2210, 2147483648
    %v2212 = vsel %vm2129, %v2211, %v2210
    %v2213 = vsub.s32 4, %v2189
    %v2214 = vsel %vm2129, %v2213, %v2189
    %v2215 = vsel %vm2128, %v635, %v2212
    %v2216 = vsel %vm2128, 0, %v2214
    %v2217 = vcosq.f32.pop %v2215
    %v2218 = vsinq.f32.pop %v2215
    %vm2219 = vweird.f32 %v635
    %v2220 = vadd.s32 %v2216, 3
    %v2221 = vand.u32 %v2220, 3
    %vm2222 = vcmp.lt.s32.totalorder %v2221, 2
    %vm2223 = vcmp.eq.s32.totalorder %v2221, 0
    %v2224 = vxor.u32 %v2218, 2147483648
    %v2225 = vsel %vm2223, %v2217, %v2224
    %vm2226 = vcmp.eq.s32.totalorder %v2221, 2
    %v2227 = vxor.u32 %v2217, 2147483648
    %v2228 = vsel %vm2226, %v2227, %v2218
    %v2229 = vsel %vm2222, %v2225, %v2228
    %v2230 = vsel %vm2219, nan, %v2229
    %v2231 = vand.u32 2147483647, %v636
    %vm2232 = vcmp.le.f32.partialorder %v2231, 0.7853982
    %vm2233 = vcmp.lt.s32.totalorder %v636, 0
    %v2234 = vand.u32 %v636, 2139095040
    %v2235 = vshrl.u32 %v2234, 23
    %v2236 = vsub.s32 %v2235, 127
    %v2237 = vand.u32 2147483647, %v636
    %v2238 = vand.u32 %v2237, 8388607
    %v2239 = vor.u32 %v2238, 8388608
    %v2240 = vsub.s32 0, %v2239
    %v2241 = vadd.s32 %v2236, 1
    %vm2242 = vcmp.gt.s32.totalorder %v2241, 0
    %v2243 = vsel %vm2242, %v2241, 0
    %v2244 = vshrl.u32 %v2243, 5
    %v2245 = vand.u32 %v2243, 31
    %v2246 = vsub.s32 32, %v2245
    %v2247 = vshrl.u32 683565275, %v2246
    %v2248 = vshll.u32 683565275, %v2245
    %v2249 = vshrl.u32 2475754826, %v2246
    %v2250 = vor.u32 %v2248, %v2249
    %v2251 = vshll.u32 2475754826, %v2245
    %v2252 = vshrl.u32 2131351028, %v2246
    %v2253 = vor.u32 %v2251, %v2252
    %v2254 = vshll.u32 2131351028, %v2245
    %v2255 = vshrl.u32 2102212464, %v2246
    %v2256 = vor.u32 %v2254, %v2255
    %v2257 = vshll.u32 2102212464, %v2245
    %v2258 = vshrl.u32 920167782, %v2246
    %v2259 = vor.u32 %v2257, %v2258
    %v2260 = vshll.u32 920167782, %v2245
    %v2261 = vshrl.u32 1326507024, %v2246
    %v2262 = vor.u32 %v2260, %v2261
    %vm2263 = vcmp.lt.s32.totalorder %v2244, 1
    %vm2264 = vcmp.lt.s32.totalorder %v2244, 2
    %vm2265 = vcmp.lt.s32.totalorder %v2244, 3
    %vm2266 = vcmp.lt.s32.totalorder %v2244, 4
    %v2267 = vsel %vm2263, %v2247, %v2250
    %v2268 = vsel %vm2266, %v2256, 2102212464
    %v2269 = vsel %vm2265, %v2253, %v2268
    %v2270 = vsel %vm2264, %v2267, %v2269
    %v2271 = vsel %vm2263, %v2250, %v2253
    %v2272 = vsel %vm2266, %v2259, 920167782
    %v2273 = vsel %vm2265, %v2256, %v2272
    %v2274 = vsel %vm2264, %v2271, %v2273
    %v2275 = vsel %vm2263, %v2253, %v2256
    %v2276 = vsel %vm2266, %v2262, 1326507024
    %v2277 = vsel %vm2265, %v2259, %v2276
    %v2278 = vsel %vm2264, %v2275, %v2277
    %v2279 = vshll.u32 %v2239, 8
    %v2280 = vmul.u32.u64.compose %v2279, %v2278
    %v2281 = vextract.low.u32 %v2280
    %v2282 = vextract.high.u32 %v2280
    %v2283 = vmul.u32.u64.compose %v2279, %v2274
    %v2284 = vextract.low.u32 %v2283
    %v2285 = vextract.high.u32 %v2283
    %v2286 = vmul.u32 %v2279, %v2270
    %v2287 = vadd.s32 %v2282, %v2284
    %vm2288 = vc.u32 %v2282, %v2284
    %v2289 = vadd.s32 %v2285, 1
    %v2290 = vsel %vm2288, %v2289, %v2285
    %v2291 = vadd.s32 %v2286, %v2290
    %v2292 = vadd.s32 %v2291, 536870912
    %v2293 = vshrl.u32 %v2292, 30
    %v2294 = vshll.u32 %v2293, 30
    %v2295 = vsub.s32 %v2291, %v2294
    %vm2296 = vcmp.lt.s32.totalorder %v2295, 0
    %v2297 = vsub.s32 0, %v2295
    %v2298 = vsel %vm2296, %v2297, %v2295
    %v2299 = vclz %v2298
    %v2300 = vsub.s32 %v2299, 2
    %vm2301 = vcmp.gt.s32.totalorder 0, %v2300
    %v2302 = vsel %vm2301, 0, %v2300
    %v2303 = vsub.s32 32, %v2302
    %v2304 = vshll.u32 %v2295, %v2302
    %v2305 = vshrl.u32 %v2287, %v2303
    %v2306 = vor.u32 %v2304, %v2305
    %v2307 = vsub.s32 4294967266, %v2302
    %v2308 = vadd.s32 %v2307, 127
    %v2309 = vshll.u32 %v2308, 23
    %v2310 = vor.u32 4788187, %v2309
    %v2311 = vand.u32 2147483647, %v2310
    %v2313 = vcvt.s32.f32 %v2306
    %v2314 = vmul.f32 %v2313, %v2311
    %v2315 = vxor.u32 %v2314, 2147483648
    %v2316 = vsel %vm2233, %v2315, %v2314
    %v2317 = vsub.s32 4, %v2293
    %v2318 = vsel %vm2233, %v2317, %v2293
    %v2319 = vsel %vm2232, %v636, %v2316
    %v2320 = vsel %vm2232, 0, %v2318
    %v2321 = vcosq.f32.pop %v2319
    %v2322 = vsinq.f32.pop %v2319
    %vm2323 = vweird.f32 %v636
    %v2324 = vadd.s32 %v2320, 3
    %v2325 = vand.u32 %v2324, 3
    %vm2326 = vcmp.lt.s32.totalorder %v2325, 2
    %vm2327 = vcmp.eq.s32.totalorder %v2325, 0
    %v2328 = vxor.u32 %v2322, 2147483648
    %v2329 = vsel %vm2327, %v2321, %v2328
    %vm2330 = vcmp.eq.s32.totalorder %v2325, 2
    %v2331 = vxor.u32 %v2321, 2147483648
    %v2332 = vsel %vm2330, %v2331, %v2322
    %v2333 = vsel %vm2326, %v2329, %v2332
    %v2334 = vsel %vm2323, nan, %v2333
    %v2335 = vand.u32 2147483647, %v637
    %vm2336 = vcmp.le.f32.partialorder %v2335, 0.7853982
    %vm2337 = vcmp.lt.s32.totalorder %v637, 0
    %v2338 = vand.u32 %v637, 2139095040
    %v2339 = vshrl.u32 %v2338, 23
    %v2340 = vsub.s32 %v2339, 127
    %v2341 = vand.u32 2147483647, %v637
    %v2342 = vand.u32 %v2341, 8388607
    %v2343 = vor.u32 %v2342, 8388608
    %v2344 = vsub.s32 0, %v2343
    %v2345 = vadd.s32 %v2340, 1
    %vm2346 = vcmp.gt.s32.totalorder %v2345, 0
    %v2347 = vsel %vm2346, %v2345, 0
    %v2348 = vshrl.u32 %v2347, 5
    %v2349 = vand.u32 %v2347, 31
    %v2350 = vsub.s32 32, %v2349
    %v2351 = vshrl.u32 683565275, %v2350
    %v2352 = vshll.u32 683565275, %v2349
    %v2353 = vshrl.u32 2475754826, %v2350
    %v2354 = vor.u32 %v2352, %v2353
    %v2355 = vshll.u32 2475754826, %v2349
    %v2356 = vshrl.u32 2131351028, %v2350
    %v2357 = vor.u32 %v2355, %v2356
    %v2358 = vshll.u32 2131351028, %v2349
    %v2359 = vshrl.u32 2102212464, %v2350
    %v2360 = vor.u32 %v2358, %v2359
    %v2361 = vshll.u32 2102212464, %v2349
    %v2362 = vshrl.u32 920167782, %v2350
    %v2363 = vor.u32 %v2361, %v2362
    %v2364 = vshll.u32 920167782, %v2349
    %v2365 = vshrl.u32 1326507024, %v2350
    %v2366 = vor.u32 %v2364, %v2365
    %vm2367 = vcmp.lt.s32.totalorder %v2348, 1
    %vm2368 = vcmp.lt.s32.totalorder %v2348, 2
    %vm2369 = vcmp.lt.s32.totalorder %v2348, 3
    %vm2370 = vcmp.lt.s32.totalorder %v2348, 4
    %v2371 = vsel %vm2367, %v2351, %v2354
    %v2372 = vsel %vm2370, %v2360, 2102212464
    %v2373 = vsel %vm2369, %v2357, %v2372
    %v2374 = vsel %vm2368, %v2371, %v2373
    %v2375 = vsel %vm2367, %v2354, %v2357
    %v2376 = vsel %vm2370, %v2363, 920167782
    %v2377 = vsel %vm2369, %v2360, %v2376
    %v2378 = vsel %vm2368, %v2375, %v2377
    %v2379 = vsel %vm2367, %v2357, %v2360
    %v2380 = vsel %vm2370, %v2366, 1326507024
    %v2381 = vsel %vm2369, %v2363, %v2380
    %v2382 = vsel %vm2368, %v2379, %v2381
    %v2383 = vshll.u32 %v2343, 8
    %v2384 = vmul.u32.u64.compose %v2383, %v2382
    %v2385 = vextract.low.u32 %v2384
    %v2386 = vextract.high.u32 %v2384
    %v2387 = vmul.u32.u64.compose %v2383, %v2378
    %v2388 = vextract.low.u32 %v2387
    %v2389 = vextract.high.u32 %v2387
    %v2390 = vmul.u32 %v2383, %v2374
    %v2391 = vadd.s32 %v2386, %v2388
    %vm2392 = vc.u32 %v2386, %v2388
    %v2393 = vadd.s32 %v2389, 1
    %v2394 = vsel %vm2392, %v2393, %v2389
    %v2395 = vadd.s32 %v2390, %v2394
    %v2396 = vadd.s32 %v2395, 536870912
    %v2397 = vshrl.u32 %v2396, 30
    %v2398 = vshll.u32 %v2397, 30
    %v2399 = vsub.s32 %v2395, %v2398
    %vm2400 = vcmp.lt.s32.totalorder %v2399, 0
    %v2401 = vsub.s32 0, %v2399
    %v2402 = vsel %vm2400, %v2401, %v2399
    %v2403 = vclz %v2402
    %v2404 = vsub.s32 %v2403, 2
    %vm2405 = vcmp.gt.s32.totalorder 0, %v2404
    %v2406 = vsel %vm2405, 0, %v2404
    %v2407 = vsub.s32 32, %v2406
    %v2408 = vshll.u32 %v2399, %v2406
    %v2409 = vshrl.u32 %v2391, %v2407
    %v2410 = vor.u32 %v2408, %v2409
    %v2411 = vsub.s32 4294967266, %v2406
    %v2412 = vadd.s32 %v2411, 127
    %v2413 = vshll.u32 %v2412, 23
    %v2414 = vor.u32 4788187, %v2413
    %v2415 = vand.u32 2147483647, %v2414
    %v2417 = vcvt.s32.f32 %v2410
    %v2418 = vmul.f32 %v2417, %v2415
    %v2419 = vxor.u32 %v2418, 2147483648
    %v2420 = vsel %vm2337, %v2419, %v2418
    %v2421 = vsub.s32 4, %v2397
    %v2422 = vsel %vm2337, %v2421, %v2397
    %v2423 = vsel %vm2336, %v637, %v2420
    %v2424 = vsel %vm2336, 0, %v2422
    %v2425 = vcosq.f32.pop %v2423
    %v2426 = vsinq.f32.pop %v2423
    %vm2427 = vweird.f32 %v637
    %v2428 = vadd.s32 %v2424, 3
    %v2429 = vand.u32 %v2428, 3
    %vm2430 = vcmp.lt.s32.totalorder %v2429, 2
    %vm2431 = vcmp.eq.s32.totalorder %v2429, 0
    %v2432 = vxor.u32 %v2426, 2147483648
    %v2433 = vsel %vm2431, %v2425, %v2432
    %vm2434 = vcmp.eq.s32.totalorder %v2429, 2
    %v2435 = vxor.u32 %v2425, 2147483648
    %v2436 = vsel %vm2434, %v2435, %v2426
    %v2437 = vsel %vm2430, %v2433, %v2436
    %v2438 = vsel %vm2427, nan, %v2437
    %v2439 = vand.u32 2147483647, %v638
    %vm2440 = vcmp.le.f32.partialorder %v2439, 0.7853982
    %vm2441 = vcmp.lt.s32.totalorder %v638, 0
    %v2442 = vand.u32 %v638, 2139095040
    %v2443 = vshrl.u32 %v2442, 23
    %v2444 = vsub.s32 %v2443, 127
    %v2445 = vand.u32 2147483647, %v638
    %v2446 = vand.u32 %v2445, 8388607
    %v2447 = vor.u32 %v2446, 8388608
    %v2448 = vsub.s32 0, %v2447
    %v2449 = vadd.s32 %v2444, 1
    %vm2450 = vcmp.gt.s32.totalorder %v2449, 0
    %v2451 = vsel %vm2450, %v2449, 0
    %v2452 = vshrl.u32 %v2451, 5
    %v2453 = vand.u32 %v2451, 31
    %v2454 = vsub.s32 32, %v2453
    %v2455 = vshrl.u32 683565275, %v2454
    %v2456 = vshll.u32 683565275, %v2453
    %v2457 = vshrl.u32 2475754826, %v2454
    %v2458 = vor.u32 %v2456, %v2457
    %v2459 = vshll.u32 2475754826, %v2453
    %v2460 = vshrl.u32 2131351028, %v2454
    %v2461 = vor.u32 %v2459, %v2460
    %v2462 = vshll.u32 2131351028, %v2453
    %v2463 = vshrl.u32 2102212464, %v2454
    %v2464 = vor.u32 %v2462, %v2463
    %v2465 = vshll.u32 2102212464, %v2453
    %v2466 = vshrl.u32 920167782, %v2454
    %v2467 = vor.u32 %v2465, %v2466
    %v2468 = vshll.u32 920167782, %v2453
    %v2469 = vshrl.u32 1326507024, %v2454
    %v2470 = vor.u32 %v2468, %v2469
    %vm2471 = vcmp.lt.s32.totalorder %v2452, 1
    %vm2472 = vcmp.lt.s32.totalorder %v2452, 2
    %vm2473 = vcmp.lt.s32.totalorder %v2452, 3
    %vm2474 = vcmp.lt.s32.totalorder %v2452, 4
    %v2475 = vsel %vm2471, %v2455, %v2458
    %v2476 = vsel %vm2474, %v2464, 2102212464
    %v2477 = vsel %vm2473, %v2461, %v2476
    %v2478 = vsel %vm2472, %v2475, %v2477
    %v2479 = vsel %vm2471, %v2458, %v2461
    %v2480 = vsel %vm2474, %v2467, 920167782
    %v2481 = vsel %vm2473, %v2464, %v2480
    %v2482 = vsel %vm2472, %v2479, %v2481
    %v2483 = vsel %vm2471, %v2461, %v2464
    %v2484 = vsel %vm2474, %v2470, 1326507024
    %v2485 = vsel %vm2473, %v2467, %v2484
    %v2486 = vsel %vm2472, %v2483, %v2485
    %v2487 = vshll.u32 %v2447, 8
    %v2488 = vmul.u32.u64.compose %v2487, %v2486
    %v2489 = vextract.low.u32 %v2488
    %v2490 = vextract.high.u32 %v2488
    %v2491 = vmul.u32.u64.compose %v2487, %v2482
    %v2492 = vextract.low.u32 %v2491
    %v2493 = vextract.high.u32 %v2491
    %v2494 = vmul.u32 %v2487, %v2478
    %v2495 = vadd.s32 %v2490, %v2492
    %vm2496 = vc.u32 %v2490, %v2492
    %v2497 = vadd.s32 %v2493, 1
    %v2498 = vsel %vm2496, %v2497, %v2493
    %v2499 = vadd.s32 %v2494, %v2498
    %v2500 = vadd.s32 %v2499, 536870912
    %v2501 = vshrl.u32 %v2500, 30
    %v2502 = vshll.u32 %v2501, 30
    %v2503 = vsub.s32 %v2499, %v2502
    %vm2504 = vcmp.lt.s32.totalorder %v2503, 0
    %v2505 = vsub.s32 0, %v2503
    %v2506 = vsel %vm2504, %v2505, %v2503
    %v2507 = vclz %v2506
    %v2508 = vsub.s32 %v2507, 2
    %vm2509 = vcmp.gt.s32.totalorder 0, %v2508
    %v2510 = vsel %vm2509, 0, %v2508
    %v2511 = vsub.s32 32, %v2510
    %v2512 = vshll.u32 %v2503, %v2510
    %v2513 = vshrl.u32 %v2495, %v2511
    %v2514 = vor.u32 %v2512, %v2513
    %v2515 = vsub.s32 4294967266, %v2510
    %v2516 = vadd.s32 %v2515, 127
    %v2517 = vshll.u32 %v2516, 23
    %v2518 = vor.u32 4788187, %v2517
    %v2519 = vand.u32 2147483647, %v2518
    %v2521 = vcvt.s32.f32 %v2514
    %v2522 = vmul.f32 %v2521, %v2519
    %v2523 = vxor.u32 %v2522, 2147483648
    %v2524 = vsel %vm2441, %v2523, %v2522
    %v2525 = vsub.s32 4, %v2501
    %v2526 = vsel %vm2441, %v2525, %v2501
    %v2527 = vsel %vm2440, %v638, %v2524
    %v2528 = vsel %vm2440, 0, %v2526
    %v2529 = vcosq.f32.pop %v2527
    %v2530 = vsinq.f32.pop %v2527
    %vm2531 = vweird.f32 %v638
    %v2532 = vadd.s32 %v2528, 3
    %v2533 = vand.u32 %v2532, 3
    %vm2534 = vcmp.lt.s32.totalorder %v2533, 2
    %vm2535 = vcmp.eq.s32.totalorder %v2533, 0
    %v2536 = vxor.u32 %v2530, 2147483648
    %v2537 = vsel %vm2535, %v2529, %v2536
    %vm2538 = vcmp.eq.s32.totalorder %v2533, 2
    %v2539 = vxor.u32 %v2529, 2147483648
    %v2540 = vsel %vm2538, %v2539, %v2530
    %v2541 = vsel %vm2534, %v2537, %v2540
    %v2542 = vsel %vm2531, nan, %v2541
    %v2543 = vand.u32 2147483647, %v639
    %vm2544 = vcmp.le.f32.partialorder %v2543, 0.7853982
    %vm2545 = vcmp.lt.s32.totalorder %v639, 0
    %v2546 = vand.u32 %v639, 2139095040
    %v2547 = vshrl.u32 %v2546, 23
    %v2548 = vsub.s32 %v2547, 127
    %v2549 = vand.u32 2147483647, %v639
    %v2550 = vand.u32 %v2549, 8388607
    %v2551 = vor.u32 %v2550, 8388608
    %v2552 = vsub.s32 0, %v2551
    %v2553 = vadd.s32 %v2548, 1
    %vm2554 = vcmp.gt.s32.totalorder %v2553, 0
    %v2555 = vsel %vm2554, %v2553, 0
    %v2556 = vshrl.u32 %v2555, 5
    %v2557 = vand.u32 %v2555, 31
    %v2558 = vsub.s32 32, %v2557
    %v2559 = vshrl.u32 683565275, %v2558
    %v2560 = vshll.u32 683565275, %v2557
    %v2561 = vshrl.u32 2475754826, %v2558
    %v2562 = vor.u32 %v2560, %v2561
    %v2563 = vshll.u32 2475754826, %v2557
    %v2564 = vshrl.u32 2131351028, %v2558
    %v2565 = vor.u32 %v2563, %v2564
    %v2566 = vshll.u32 2131351028, %v2557
    %v2567 = vshrl.u32 2102212464, %v2558
    %v2568 = vor.u32 %v2566, %v2567
    %v2569 = vshll.u32 2102212464, %v2557
    %v2570 = vshrl.u32 920167782, %v2558
    %v2571 = vor.u32 %v2569, %v2570
    %v2572 = vshll.u32 920167782, %v2557
    %v2573 = vshrl.u32 1326507024, %v2558
    %v2574 = vor.u32 %v2572, %v2573
    %vm2575 = vcmp.lt.s32.totalorder %v2556, 1
    %vm2576 = vcmp.lt.s32.totalorder %v2556, 2
    %vm2577 = vcmp.lt.s32.totalorder %v2556, 3
    %vm2578 = vcmp.lt.s32.totalorder %v2556, 4
    %v2579 = vsel %vm2575, %v2559, %v2562
    %v2580 = vsel %vm2578, %v2568, 2102212464
    %v2581 = vsel %vm2577, %v2565, %v2580
    %v2582 = vsel %vm2576, %v2579, %v2581
    %v2583 = vsel %vm2575, %v2562, %v2565
    %v2584 = vsel %vm2578, %v2571, 920167782
    %v2585 = vsel %vm2577, %v2568, %v2584
    %v2586 = vsel %vm2576, %v2583, %v2585
    %v2587 = vsel %vm2575, %v2565, %v2568
    %v2588 = vsel %vm2578, %v2574, 1326507024
    %v2589 = vsel %vm2577, %v2571, %v2588
    %v2590 = vsel %vm2576, %v2587, %v2589
    %v2591 = vshll.u32 %v2551, 8
    %v2592 = vmul.u32.u64.compose %v2591, %v2590
    %v2593 = vextract.low.u32 %v2592
    %v2594 = vextract.high.u32 %v2592
    %v2595 = vmul.u32.u64.compose %v2591, %v2586
    %v2596 = vextract.low.u32 %v2595
    %v2597 = vextract.high.u32 %v2595
    %v2598 = vmul.u32 %v2591, %v2582
    %v2599 = vadd.s32 %v2594, %v2596
    %vm2600 = vc.u32 %v2594, %v2596
    %v2601 = vadd.s32 %v2597, 1
    %v2602 = vsel %vm2600, %v2601, %v2597
    %v2603 = vadd.s32 %v2598, %v2602
    %v2604 = vadd.s32 %v2603, 536870912
    %v2605 = vshrl.u32 %v2604, 30
    %v2606 = vshll.u32 %v2605, 30
    %v2607 = vsub.s32 %v2603, %v2606
    %vm2608 = vcmp.lt.s32.totalorder %v2607, 0
    %v2609 = vsub.s32 0, %v2607
    %v2610 = vsel %vm2608, %v2609, %v2607
    %v2611 = vclz %v2610
    %v2612 = vsub.s32 %v2611, 2
    %vm2613 = vcmp.gt.s32.totalorder 0, %v2612
    %v2614 = vsel %vm2613, 0, %v2612
    %v2615 = vsub.s32 32, %v2614
    %v2616 = vshll.u32 %v2607, %v2614
    %v2617 = vshrl.u32 %v2599, %v2615
    %v2618 = vor.u32 %v2616, %v2617
    %v2619 = vsub.s32 4294967266, %v2614
    %v2620 = vadd.s32 %v2619, 127
    %v2621 = vshll.u32 %v2620, 23
    %v2622 = vor.u32 4788187, %v2621
    %v2623 = vand.u32 2147483647, %v2622
    %v2625 = vcvt.s32.f32 %v2618
    %v2626 = vmul.f32 %v2625, %v2623
    %v2627 = vxor.u32 %v2626, 2147483648
    %v2628 = vsel %vm2545, %v2627, %v2626
    %v2629 = vsub.s32 4, %v2605
    %v2630 = vsel %vm2545, %v2629, %v2605
    %v2631 = vsel %vm2544, %v639, %v2628
    %v2632 = vsel %vm2544, 0, %v2630
    %v2633 = vcosq.f32.pop %v2631
    %v2634 = vsinq.f32.pop %v2631
    %vm2635 = vweird.f32 %v639
    %v2636 = vadd.s32 %v2632, 3
    %v2637 = vand.u32 %v2636, 3
    %vm2638 = vcmp.lt.s32.totalorder %v2637, 2
    %vm2639 = vcmp.eq.s32.totalorder %v2637, 0
    %v2640 = vxor.u32 %v2634, 2147483648
    %v2641 = vsel %vm2639, %v2633, %v2640
    %vm2642 = vcmp.eq.s32.totalorder %v2637, 2
    %v2643 = vxor.u32 %v2633, 2147483648
    %v2644 = vsel %vm2642, %v2643, %v2634
    %v2645 = vsel %vm2638, %v2641, %v2644
    %v2646 = vsel %vm2635, nan, %v2645
    %v2647 = vand.u32 2147483647, %v640
    %vm2648 = vcmp.le.f32.partialorder %v2647, 0.7853982
    %vm2649 = vcmp.lt.s32.totalorder %v640, 0
    %v2650 = vand.u32 %v640, 2139095040
    %v2651 = vshrl.u32 %v2650, 23
    %v2652 = vsub.s32 %v2651, 127
    %v2653 = vand.u32 2147483647, %v640
    %v2654 = vand.u32 %v2653, 8388607
    %v2655 = vor.u32 %v2654, 8388608
    %v2656 = vsub.s32 0, %v2655
    %v2657 = vadd.s32 %v2652, 1
    %vm2658 = vcmp.gt.s32.totalorder %v2657, 0
    %v2659 = vsel %vm2658, %v2657, 0
    %v2660 = vshrl.u32 %v2659, 5
    %v2661 = vand.u32 %v2659, 31
    %v2662 = vsub.s32 32, %v2661
    %v2663 = vshrl.u32 683565275, %v2662
    %v2664 = vshll.u32 683565275, %v2661
    %v2665 = vshrl.u32 2475754826, %v2662
    %v2666 = vor.u32 %v2664, %v2665
    %v2667 = vshll.u32 2475754826, %v2661
    %v2668 = vshrl.u32 2131351028, %v2662
    %v2669 = vor.u32 %v2667, %v2668
    %v2670 = vshll.u32 2131351028, %v2661
    %v2671 = vshrl.u32 2102212464, %v2662
    %v2672 = vor.u32 %v2670, %v2671
    %v2673 = vshll.u32 2102212464, %v2661
    %v2674 = vshrl.u32 920167782, %v2662
    %v2675 = vor.u32 %v2673, %v2674
    %v2676 = vshll.u32 920167782, %v2661
    %v2677 = vshrl.u32 1326507024, %v2662
    %v2678 = vor.u32 %v2676, %v2677
    %vm2679 = vcmp.lt.s32.totalorder %v2660, 1
    %vm2680 = vcmp.lt.s32.totalorder %v2660, 2
    %vm2681 = vcmp.lt.s32.totalorder %v2660, 3
    %vm2682 = vcmp.lt.s32.totalorder %v2660, 4
    %v2683 = vsel %vm2679, %v2663, %v2666
    %v2684 = vsel %vm2682, %v2672, 2102212464
    %v2685 = vsel %vm2681, %v2669, %v2684
    %v2686 = vsel %vm2680, %v2683, %v2685
    %v2687 = vsel %vm2679, %v2666, %v2669
    %v2688 = vsel %vm2682, %v2675, 920167782
    %v2689 = vsel %vm2681, %v2672, %v2688
    %v2690 = vsel %vm2680, %v2687, %v2689
    %v2691 = vsel %vm2679, %v2669, %v2672
    %v2692 = vsel %vm2682, %v2678, 1326507024
    %v2693 = vsel %vm2681, %v2675, %v2692
    %v2694 = vsel %vm2680, %v2691, %v2693
    %v2695 = vshll.u32 %v2655, 8
    %v2696 = vmul.u32.u64.compose %v2695, %v2694
    %v2697 = vextract.low.u32 %v2696
    %v2698 = vextract.high.u32 %v2696
    %v2699 = vmul.u32.u64.compose %v2695, %v2690
    %v2700 = vextract.low.u32 %v2699
    %v2701 = vextract.high.u32 %v2699
    %v2702 = vmul.u32 %v2695, %v2686
    %v2703 = vadd.s32 %v2698, %v2700
    %vm2704 = vc.u32 %v2698, %v2700
    %v2705 = vadd.s32 %v2701, 1
    %v2706 = vsel %vm2704, %v2705, %v2701
    %v2707 = vadd.s32 %v2702, %v2706
    %v2708 = vadd.s32 %v2707, 536870912
    %v2709 = vshrl.u32 %v2708, 30
    %v2710 = vshll.u32 %v2709, 30
    %v2711 = vsub.s32 %v2707, %v2710
    %vm2712 = vcmp.lt.s32.totalorder %v2711, 0
    %v2713 = vsub.s32 0, %v2711
    %v2714 = vsel %vm2712, %v2713, %v2711
    %v2715 = vclz %v2714
    %v2716 = vsub.s32 %v2715, 2
    %vm2717 = vcmp.gt.s32.totalorder 0, %v2716
    %v2718 = vsel %vm2717, 0, %v2716
    %v2719 = vsub.s32 32, %v2718
    %v2720 = vshll.u32 %v2711, %v2718
    %v2721 = vshrl.u32 %v2703, %v2719
    %v2722 = vor.u32 %v2720, %v2721
    %v2723 = vsub.s32 4294967266, %v2718
    %v2724 = vadd.s32 %v2723, 127
    %v2725 = vshll.u32 %v2724, 23
    %v2726 = vor.u32 4788187, %v2725
    %v2727 = vand.u32 2147483647, %v2726
    %v2729 = vcvt.s32.f32 %v2722
    %v2730 = vmul.f32 %v2729, %v2727
    %v2731 = vxor.u32 %v2730, 2147483648
    %v2732 = vsel %vm2649, %v2731, %v2730
    %v2733 = vsub.s32 4, %v2709
    %v2734 = vsel %vm2649, %v2733, %v2709
    %v2735 = vsel %vm2648, %v640, %v2732
    %v2736 = vsel %vm2648, 0, %v2734
    %v2737 = vcosq.f32.pop %v2735
    %v2738 = vsinq.f32.pop %v2735
    %vm2739 = vweird.f32 %v640
    %v2740 = vadd.s32 %v2736, 3
    %v2741 = vand.u32 %v2740, 3
    %vm2742 = vcmp.lt.s32.totalorder %v2741, 2
    %vm2743 = vcmp.eq.s32.totalorder %v2741, 0
    %v2744 = vxor.u32 %v2738, 2147483648
    %v2745 = vsel %vm2743, %v2737, %v2744
    %vm2746 = vcmp.eq.s32.totalorder %v2741, 2
    %v2747 = vxor.u32 %v2737, 2147483648
    %v2748 = vsel %vm2746, %v2747, %v2738
    %v2749 = vsel %vm2742, %v2745, %v2748
    %v2750 = vsel %vm2739, nan, %v2749
    %v2751 = vand.u32 2147483647, %v641
    %vm2752 = vcmp.le.f32.partialorder %v2751, 0.7853982
    %vm2753 = vcmp.lt.s32.totalorder %v641, 0
    %v2754 = vand.u32 %v641, 2139095040
    %v2755 = vshrl.u32 %v2754, 23
    %v2756 = vsub.s32 %v2755, 127
    %v2757 = vand.u32 2147483647, %v641
    %v2758 = vand.u32 %v2757, 8388607
    %v2759 = vor.u32 %v2758, 8388608
    %v2760 = vsub.s32 0, %v2759
    %v2761 = vadd.s32 %v2756, 1
    %vm2762 = vcmp.gt.s32.totalorder %v2761, 0
    %v2763 = vsel %vm2762, %v2761, 0
    %v2764 = vshrl.u32 %v2763, 5
    %v2765 = vand.u32 %v2763, 31
    %v2766 = vsub.s32 32, %v2765
    %v2767 = vshrl.u32 683565275, %v2766
    %v2768 = vshll.u32 683565275, %v2765
    %v2769 = vshrl.u32 2475754826, %v2766
    %v2770 = vor.u32 %v2768, %v2769
    %v2771 = vshll.u32 2475754826, %v2765
    %v2772 = vshrl.u32 2131351028, %v2766
    %v2773 = vor.u32 %v2771, %v2772
    %v2774 = vshll.u32 2131351028, %v2765
    %v2775 = vshrl.u32 2102212464, %v2766
    %v2776 = vor.u32 %v2774, %v2775
    %v2777 = vshll.u32 2102212464, %v2765
    %v2778 = vshrl.u32 920167782, %v2766
    %v2779 = vor.u32 %v2777, %v2778
    %v2780 = vshll.u32 920167782, %v2765
    %v2781 = vshrl.u32 1326507024, %v2766
    %v2782 = vor.u32 %v2780, %v2781
    %vm2783 = vcmp.lt.s32.totalorder %v2764, 1
    %vm2784 = vcmp.lt.s32.totalorder %v2764, 2
    %vm2785 = vcmp.lt.s32.totalorder %v2764, 3
    %vm2786 = vcmp.lt.s32.totalorder %v2764, 4
    %v2787 = vsel %vm2783, %v2767, %v2770
    %v2788 = vsel %vm2786, %v2776, 2102212464
    %v2789 = vsel %vm2785, %v2773, %v2788
    %v2790 = vsel %vm2784, %v2787, %v2789
    %v2791 = vsel %vm2783, %v2770, %v2773
    %v2792 = vsel %vm2786, %v2779, 920167782
    %v2793 = vsel %vm2785, %v2776, %v2792
    %v2794 = vsel %vm2784, %v2791, %v2793
    %v2795 = vsel %vm2783, %v2773, %v2776
    %v2796 = vsel %vm2786, %v2782, 1326507024
    %v2797 = vsel %vm2785, %v2779, %v2796
    %v2798 = vsel %vm2784, %v2795, %v2797
    %v2799 = vshll.u32 %v2759, 8
    %v2800 = vmul.u32.u64.compose %v2799, %v2798
    %v2801 = vextract.low.u32 %v2800
    %v2802 = vextract.high.u32 %v2800
    %v2803 = vmul.u32.u64.compose %v2799, %v2794
    %v2804 = vextract.low.u32 %v2803
    %v2805 = vextract.high.u32 %v2803
    %v2806 = vmul.u32 %v2799, %v2790
    %v2807 = vadd.s32 %v2802, %v2804
    %vm2808 = vc.u32 %v2802, %v2804
    %v2809 = vadd.s32 %v2805, 1
    %v2810 = vsel %vm2808, %v2809, %v2805
    %v2811 = vadd.s32 %v2806, %v2810
    %v2812 = vadd.s32 %v2811, 536870912
    %v2813 = vshrl.u32 %v2812, 30
    %v2814 = vshll.u32 %v2813, 30
    %v2815 = vsub.s32 %v2811, %v2814
    %vm2816 = vcmp.lt.s32.totalorder %v2815, 0
    %v2817 = vsub.s32 0, %v2815
    %v2818 = vsel %vm2816, %v2817, %v2815
    %v2819 = vclz %v2818
    %v2820 = vsub.s32 %v2819, 2
    %vm2821 = vcmp.gt.s32.totalorder 0, %v2820
    %v2822 = vsel %vm2821, 0, %v2820
    %v2823 = vsub.s32 32, %v2822
    %v2824 = vshll.u32 %v2815, %v2822
    %v2825 = vshrl.u32 %v2807, %v2823
    %v2826 = vor.u32 %v2824, %v2825
    %v2827 = vsub.s32 4294967266, %v2822
    %v2828 = vadd.s32 %v2827, 127
    %v2829 = vshll.u32 %v2828, 23
    %v2830 = vor.u32 4788187, %v2829
    %v2831 = vand.u32 2147483647, %v2830
    %v2833 = vcvt.s32.f32 %v2826
    %v2834 = vmul.f32 %v2833, %v2831
    %v2835 = vxor.u32 %v2834, 2147483648
    %v2836 = vsel %vm2753, %v2835, %v2834
    %v2837 = vsub.s32 4, %v2813
    %v2838 = vsel %vm2753, %v2837, %v2813
    %v2839 = vsel %vm2752, %v641, %v2836
    %v2840 = vsel %vm2752, 0, %v2838
    %v2841 = vcosq.f32.pop %v2839
    %v2842 = vsinq.f32.pop %v2839
    %vm2843 = vweird.f32 %v641
    %v2844 = vadd.s32 %v2840, 3
    %v2845 = vand.u32 %v2844, 3
    %vm2846 = vcmp.lt.s32.totalorder %v2845, 2
    %vm2847 = vcmp.eq.s32.totalorder %v2845, 0
    %v2848 = vxor.u32 %v2842, 2147483648
    %v2849 = vsel %vm2847, %v2841, %v2848
    %vm2850 = vcmp.eq.s32.totalorder %v2845, 2
    %v2851 = vxor.u32 %v2841, 2147483648
    %v2852 = vsel %vm2850, %v2851, %v2842
    %v2853 = vsel %vm2846, %v2849, %v2852
    %v2854 = vsel %vm2843, nan, %v2853
    %v2855 = vand.u32 2147483647, %v642
    %vm2856 = vcmp.le.f32.partialorder %v2855, 0.7853982
    %vm2857 = vcmp.lt.s32.totalorder %v642, 0
    %v2858 = vand.u32 %v642, 2139095040
    %v2859 = vshrl.u32 %v2858, 23
    %v2860 = vsub.s32 %v2859, 127
    %v2861 = vand.u32 2147483647, %v642
    %v2862 = vand.u32 %v2861, 8388607
    %v2863 = vor.u32 %v2862, 8388608
    %v2864 = vsub.s32 0, %v2863
    %v2865 = vadd.s32 %v2860, 1
    %vm2866 = vcmp.gt.s32.totalorder %v2865, 0
    %v2867 = vsel %vm2866, %v2865, 0
    %v2868 = vshrl.u32 %v2867, 5
    %v2869 = vand.u32 %v2867, 31
    %v2870 = vsub.s32 32, %v2869
    %v2871 = vshrl.u32 683565275, %v2870
    %v2872 = vshll.u32 683565275, %v2869
    %v2873 = vshrl.u32 2475754826, %v2870
    %v2874 = vor.u32 %v2872, %v2873
    %v2875 = vshll.u32 2475754826, %v2869
    %v2876 = vshrl.u32 2131351028, %v2870
    %v2877 = vor.u32 %v2875, %v2876
    %v2878 = vshll.u32 2131351028, %v2869
    %v2879 = vshrl.u32 2102212464, %v2870
    %v2880 = vor.u32 %v2878, %v2879
    %v2881 = vshll.u32 2102212464, %v2869
    %v2882 = vshrl.u32 920167782, %v2870
    %v2883 = vor.u32 %v2881, %v2882
    %v2884 = vshll.u32 920167782, %v2869
    %v2885 = vshrl.u32 1326507024, %v2870
    %v2886 = vor.u32 %v2884, %v2885
    %vm2887 = vcmp.lt.s32.totalorder %v2868, 1
    %vm2888 = vcmp.lt.s32.totalorder %v2868, 2
    %vm2889 = vcmp.lt.s32.totalorder %v2868, 3
    %vm2890 = vcmp.lt.s32.totalorder %v2868, 4
    %v2891 = vsel %vm2887, %v2871, %v2874
    %v2892 = vsel %vm2890, %v2880, 2102212464
    %v2893 = vsel %vm2889, %v2877, %v2892
    %v2894 = vsel %vm2888, %v2891, %v2893
    %v2895 = vsel %vm2887, %v2874, %v2877
    %v2896 = vsel %vm2890, %v2883, 920167782
    %v2897 = vsel %vm2889, %v2880, %v2896
    %v2898 = vsel %vm2888, %v2895, %v2897
    %v2899 = vsel %vm2887, %v2877, %v2880
    %v2900 = vsel %vm2890, %v2886, 1326507024
    %v2901 = vsel %vm2889, %v2883, %v2900
    %v2902 = vsel %vm2888, %v2899, %v2901
    %v2903 = vshll.u32 %v2863, 8
    %v2904 = vmul.u32.u64.compose %v2903, %v2902
    %v2905 = vextract.low.u32 %v2904
    %v2906 = vextract.high.u32 %v2904
    %v2907 = vmul.u32.u64.compose %v2903, %v2898
    %v2908 = vextract.low.u32 %v2907
    %v2909 = vextract.high.u32 %v2907
    %v2910 = vmul.u32 %v2903, %v2894
    %v2911 = vadd.s32 %v2906, %v2908
    %vm2912 = vc.u32 %v2906, %v2908
    %v2913 = vadd.s32 %v2909, 1
    %v2914 = vsel %vm2912, %v2913, %v2909
    %v2915 = vadd.s32 %v2910, %v2914
    %v2916 = vadd.s32 %v2915, 536870912
    %v2917 = vshrl.u32 %v2916, 30
    %v2918 = vshll.u32 %v2917, 30
    %v2919 = vsub.s32 %v2915, %v2918
    %vm2920 = vcmp.lt.s32.totalorder %v2919, 0
    %v2921 = vsub.s32 0, %v2919
    %v2922 = vsel %vm2920, %v2921, %v2919
    %v2923 = vclz %v2922
    %v2924 = vsub.s32 %v2923, 2
    %vm2925 = vcmp.gt.s32.totalorder 0, %v2924
    %v2926 = vsel %vm2925, 0, %v2924
    %v2927 = vsub.s32 32, %v2926
    %v2928 = vshll.u32 %v2919, %v2926
    %v2929 = vshrl.u32 %v2911, %v2927
    %v2930 = vor.u32 %v2928, %v2929
    %v2931 = vsub.s32 4294967266, %v2926
    %v2932 = vadd.s32 %v2931, 127
    %v2933 = vshll.u32 %v2932, 23
    %v2934 = vor.u32 4788187, %v2933
    %v2935 = vand.u32 2147483647, %v2934
    %v2937 = vcvt.s32.f32 %v2930
    %v2938 = vmul.f32 %v2937, %v2935
    %v2939 = vxor.u32 %v2938, 2147483648
    %v2940 = vsel %vm2857, %v2939, %v2938
    %v2941 = vsub.s32 4, %v2917
    %v2942 = vsel %vm2857, %v2941, %v2917
    %v2943 = vsel %vm2856, %v642, %v2940
    %v2944 = vsel %vm2856, 0, %v2942
    %v2945 = vcosq.f32.pop %v2943
    %v2946 = vsinq.f32.pop %v2943
    %vm2947 = vweird.f32 %v642
    %v2948 = vadd.s32 %v2944, 3
    %v2949 = vand.u32 %v2948, 3
    %vm2950 = vcmp.lt.s32.totalorder %v2949, 2
    %vm2951 = vcmp.eq.s32.totalorder %v2949, 0
    %v2952 = vxor.u32 %v2946, 2147483648
    %v2953 = vsel %vm2951, %v2945, %v2952
    %vm2954 = vcmp.eq.s32.totalorder %v2949, 2
    %v2955 = vxor.u32 %v2945, 2147483648
    %v2956 = vsel %vm2954, %v2955, %v2946
    %v2957 = vsel %vm2950, %v2953, %v2956
    %v2958 = vsel %vm2947, nan, %v2957
    %v2959 = vand.u32 2147483647, %v643
    %vm2960 = vcmp.le.f32.partialorder %v2959, 0.7853982
    %vm2961 = vcmp.lt.s32.totalorder %v643, 0
    %v2962 = vand.u32 %v643, 2139095040
    %v2963 = vshrl.u32 %v2962, 23
    %v2964 = vsub.s32 %v2963, 127
    %v2965 = vand.u32 2147483647, %v643
    %v2966 = vand.u32 %v2965, 8388607
    %v2967 = vor.u32 %v2966, 8388608
    %v2968 = vsub.s32 0, %v2967
    %v2969 = vadd.s32 %v2964, 1
    %vm2970 = vcmp.gt.s32.totalorder %v2969, 0
    %v2971 = vsel %vm2970, %v2969, 0
    %v2972 = vshrl.u32 %v2971, 5
    %v2973 = vand.u32 %v2971, 31
    %v2974 = vsub.s32 32, %v2973
    %v2975 = vshrl.u32 683565275, %v2974
    %v2976 = vshll.u32 683565275, %v2973
    %v2977 = vshrl.u32 2475754826, %v2974
    %v2978 = vor.u32 %v2976, %v2977
    %v2979 = vshll.u32 2475754826, %v2973
    %v2980 = vshrl.u32 2131351028, %v2974
    %v2981 = vor.u32 %v2979, %v2980
    %v2982 = vshll.u32 2131351028, %v2973
    %v2983 = vshrl.u32 2102212464, %v2974
    %v2984 = vor.u32 %v2982, %v2983
    %v2985 = vshll.u32 2102212464, %v2973
    %v2986 = vshrl.u32 920167782, %v2974
    %v2987 = vor.u32 %v2985, %v2986
    %v2988 = vshll.u32 920167782, %v2973
    %v2989 = vshrl.u32 1326507024, %v2974
    %v2990 = vor.u32 %v2988, %v2989
    %vm2991 = vcmp.lt.s32.totalorder %v2972, 1
    %vm2992 = vcmp.lt.s32.totalorder %v2972, 2
    %vm2993 = vcmp.lt.s32.totalorder %v2972, 3
    %vm2994 = vcmp.lt.s32.totalorder %v2972, 4
    %v2995 = vsel %vm2991, %v2975, %v2978
    %v2996 = vsel %vm2994, %v2984, 2102212464
    %v2997 = vsel %vm2993, %v2981, %v2996
    %v2998 = vsel %vm2992, %v2995, %v2997
    %v2999 = vsel %vm2991, %v2978, %v2981
    %v3000 = vsel %vm2994, %v2987, 920167782
    %v3001 = vsel %vm2993, %v2984, %v3000
    %v3002 = vsel %vm2992, %v2999, %v3001
    %v3003 = vsel %vm2991, %v2981, %v2984
    %v3004 = vsel %vm2994, %v2990, 1326507024
    %v3005 = vsel %vm2993, %v2987, %v3004
    %v3006 = vsel %vm2992, %v3003, %v3005
    %v3007 = vshll.u32 %v2967, 8
    %v3008 = vmul.u32.u64.compose %v3007, %v3006
    %v3009 = vextract.low.u32 %v3008
    %v3010 = vextract.high.u32 %v3008
    %v3011 = vmul.u32.u64.compose %v3007, %v3002
    %v3012 = vextract.low.u32 %v3011
    %v3013 = vextract.high.u32 %v3011
    %v3014 = vmul.u32 %v3007, %v2998
    %v3015 = vadd.s32 %v3010, %v3012
    %vm3016 = vc.u32 %v3010, %v3012
    %v3017 = vadd.s32 %v3013, 1
    %v3018 = vsel %vm3016, %v3017, %v3013
    %v3019 = vadd.s32 %v3014, %v3018
    %v3020 = vadd.s32 %v3019, 536870912
    %v3021 = vshrl.u32 %v3020, 30
    %v3022 = vshll.u32 %v3021, 30
    %v3023 = vsub.s32 %v3019, %v3022
    %vm3024 = vcmp.lt.s32.totalorder %v3023, 0
    %v3025 = vsub.s32 0, %v3023
    %v3026 = vsel %vm3024, %v3025, %v3023
    %v3027 = vclz %v3026
    %v3028 = vsub.s32 %v3027, 2
    %vm3029 = vcmp.gt.s32.totalorder 0, %v3028
    %v3030 = vsel %vm3029, 0, %v3028
    %v3031 = vsub.s32 32, %v3030
    %v3032 = vshll.u32 %v3023, %v3030
    %v3033 = vshrl.u32 %v3015, %v3031
    %v3034 = vor.u32 %v3032, %v3033
    %v3035 = vsub.s32 4294967266, %v3030
    %v3036 = vadd.s32 %v3035, 127
    %v3037 = vshll.u32 %v3036, 23
    %v3038 = vor.u32 4788187, %v3037
    %v3039 = vand.u32 2147483647, %v3038
    %v3041 = vcvt.s32.f32 %v3034
    %v3042 = vmul.f32 %v3041, %v3039
    %v3043 = vxor.u32 %v3042, 2147483648
    %v3044 = vsel %vm2961, %v3043, %v3042
    %v3045 = vsub.s32 4, %v3021
    %v3046 = vsel %vm2961, %v3045, %v3021
    %v3047 = vsel %vm2960, %v643, %v3044
    %v3048 = vsel %vm2960, 0, %v3046
    %v3049 = vcosq.f32.pop %v3047
    %v3050 = vsinq.f32.pop %v3047
    %vm3051 = vweird.f32 %v643
    %v3052 = vadd.s32 %v3048, 3
    %v3053 = vand.u32 %v3052, 3
    %vm3054 = vcmp.lt.s32.totalorder %v3053, 2
    %vm3055 = vcmp.eq.s32.totalorder %v3053, 0
    %v3056 = vxor.u32 %v3050, 2147483648
    %v3057 = vsel %vm3055, %v3049, %v3056
    %vm3058 = vcmp.eq.s32.totalorder %v3053, 2
    %v3059 = vxor.u32 %v3049, 2147483648
    %v3060 = vsel %vm3058, %v3059, %v3050
    %v3061 = vsel %vm3054, %v3057, %v3060
    %v3062 = vsel %vm3051, nan, %v3061
    %v3063 = vand.u32 2147483647, %v644
    %vm3064 = vcmp.le.f32.partialorder %v3063, 0.7853982
    %vm3065 = vcmp.lt.s32.totalorder %v644, 0
    %v3066 = vand.u32 %v644, 2139095040
    %v3067 = vshrl.u32 %v3066, 23
    %v3068 = vsub.s32 %v3067, 127
    %v3069 = vand.u32 2147483647, %v644
    %v3070 = vand.u32 %v3069, 8388607
    %v3071 = vor.u32 %v3070, 8388608
    %v3072 = vsub.s32 0, %v3071
    %v3073 = vadd.s32 %v3068, 1
    %vm3074 = vcmp.gt.s32.totalorder %v3073, 0
    %v3075 = vsel %vm3074, %v3073, 0
    %v3076 = vshrl.u32 %v3075, 5
    %v3077 = vand.u32 %v3075, 31
    %v3078 = vsub.s32 32, %v3077
    %v3079 = vshrl.u32 683565275, %v3078
    %v3080 = vshll.u32 683565275, %v3077
    %v3081 = vshrl.u32 2475754826, %v3078
    %v3082 = vor.u32 %v3080, %v3081
    %v3083 = vshll.u32 2475754826, %v3077
    %v3084 = vshrl.u32 2131351028, %v3078
    %v3085 = vor.u32 %v3083, %v3084
    %v3086 = vshll.u32 2131351028, %v3077
    %v3087 = vshrl.u32 2102212464, %v3078
    %v3088 = vor.u32 %v3086, %v3087
    %v3089 = vshll.u32 2102212464, %v3077
    %v3090 = vshrl.u32 920167782, %v3078
    %v3091 = vor.u32 %v3089, %v3090
    %v3092 = vshll.u32 920167782, %v3077
    %v3093 = vshrl.u32 1326507024, %v3078
    %v3094 = vor.u32 %v3092, %v3093
    %vm3095 = vcmp.lt.s32.totalorder %v3076, 1
    %vm3096 = vcmp.lt.s32.totalorder %v3076, 2
    %vm3097 = vcmp.lt.s32.totalorder %v3076, 3
    %vm3098 = vcmp.lt.s32.totalorder %v3076, 4
    %v3099 = vsel %vm3095, %v3079, %v3082
    %v3100 = vsel %vm3098, %v3088, 2102212464
    %v3101 = vsel %vm3097, %v3085, %v3100
    %v3102 = vsel %vm3096, %v3099, %v3101
    %v3103 = vsel %vm3095, %v3082, %v3085
    %v3104 = vsel %vm3098, %v3091, 920167782
    %v3105 = vsel %vm3097, %v3088, %v3104
    %v3106 = vsel %vm3096, %v3103, %v3105
    %v3107 = vsel %vm3095, %v3085, %v3088
    %v3108 = vsel %vm3098, %v3094, 1326507024
    %v3109 = vsel %vm3097, %v3091, %v3108
    %v3110 = vsel %vm3096, %v3107, %v3109
    %v3111 = vshll.u32 %v3071, 8
    %v3112 = vmul.u32.u64.compose %v3111, %v3110
    %v3113 = vextract.low.u32 %v3112
    %v3114 = vextract.high.u32 %v3112
    %v3115 = vmul.u32.u64.compose %v3111, %v3106
    %v3116 = vextract.low.u32 %v3115
    %v3117 = vextract.high.u32 %v3115
    %v3118 = vmul.u32 %v3111, %v3102
    %v3119 = vadd.s32 %v3114, %v3116
    %vm3120 = vc.u32 %v3114, %v3116
    %v3121 = vadd.s32 %v3117, 1
    %v3122 = vsel %vm3120, %v3121, %v3117
    %v3123 = vadd.s32 %v3118, %v3122
    %v3124 = vadd.s32 %v3123, 536870912
    %v3125 = vshrl.u32 %v3124, 30
    %v3126 = vshll.u32 %v3125, 30
    %v3127 = vsub.s32 %v3123, %v3126
    %vm3128 = vcmp.lt.s32.totalorder %v3127, 0
    %v3129 = vsub.s32 0, %v3127
    %v3130 = vsel %vm3128, %v3129, %v3127
    %v3131 = vclz %v3130
    %v3132 = vsub.s32 %v3131, 2
    %vm3133 = vcmp.gt.s32.totalorder 0, %v3132
    %v3134 = vsel %vm3133, 0, %v3132
    %v3135 = vsub.s32 32, %v3134
    %v3136 = vshll.u32 %v3127, %v3134
    %v3137 = vshrl.u32 %v3119, %v3135
    %v3138 = vor.u32 %v3136, %v3137
    %v3139 = vsub.s32 4294967266, %v3134
    %v3140 = vadd.s32 %v3139, 127
    %v3141 = vshll.u32 %v3140, 23
    %v3142 = vor.u32 4788187, %v3141
    %v3143 = vand.u32 2147483647, %v3142
    %v3145 = vcvt.s32.f32 %v3138
    %v3146 = vmul.f32 %v3145, %v3143
    %v3147 = vxor.u32 %v3146, 2147483648
    %v3148 = vsel %vm3065, %v3147, %v3146
    %v3149 = vsub.s32 4, %v3125
    %v3150 = vsel %vm3065, %v3149, %v3125
    %v3151 = vsel %vm3064, %v644, %v3148
    %v3152 = vsel %vm3064, 0, %v3150
    %v3153 = vcosq.f32.pop %v3151
    %v3154 = vsinq.f32.pop %v3151
    %vm3155 = vweird.f32 %v644
    %v3156 = vadd.s32 %v3152, 3
    %v3157 = vand.u32 %v3156, 3
    %vm3158 = vcmp.lt.s32.totalorder %v3157, 2
    %vm3159 = vcmp.eq.s32.totalorder %v3157, 0
    %v3160 = vxor.u32 %v3154, 2147483648
    %v3161 = vsel %vm3159, %v3153, %v3160
    %vm3162 = vcmp.eq.s32.totalorder %v3157, 2
    %v3163 = vxor.u32 %v3153, 2147483648
    %v3164 = vsel %vm3162, %v3163, %v3154
    %v3165 = vsel %vm3158, %v3161, %v3164
    %v3166 = vsel %vm3155, nan, %v3165
    %v3167 = vand.u32 2147483647, %v645
    %vm3168 = vcmp.le.f32.partialorder %v3167, 0.7853982
    %vm3169 = vcmp.lt.s32.totalorder %v645, 0
    %v3170 = vand.u32 %v645, 2139095040
    %v3171 = vshrl.u32 %v3170, 23
    %v3172 = vsub.s32 %v3171, 127
    %v3173 = vand.u32 2147483647, %v645
    %v3174 = vand.u32 %v3173, 8388607
    %v3175 = vor.u32 %v3174, 8388608
    %v3176 = vsub.s32 0, %v3175
    %v3177 = vadd.s32 %v3172, 1
    %vm3178 = vcmp.gt.s32.totalorder %v3177, 0
    %v3179 = vsel %vm3178, %v3177, 0
    %v3180 = vshrl.u32 %v3179, 5
    %v3181 = vand.u32 %v3179, 31
    %v3182 = vsub.s32 32, %v3181
    %v3183 = vshrl.u32 683565275, %v3182
    %v3184 = vshll.u32 683565275, %v3181
    %v3185 = vshrl.u32 2475754826, %v3182
    %v3186 = vor.u32 %v3184, %v3185
    %v3187 = vshll.u32 2475754826, %v3181
    %v3188 = vshrl.u32 2131351028, %v3182
    %v3189 = vor.u32 %v3187, %v3188
    %v3190 = vshll.u32 2131351028, %v3181
    %v3191 = vshrl.u32 2102212464, %v3182
    %v3192 = vor.u32 %v3190, %v3191
    %v3193 = vshll.u32 2102212464, %v3181
    %v3194 = vshrl.u32 920167782, %v3182
    %v3195 = vor.u32 %v3193, %v3194
    %v3196 = vshll.u32 920167782, %v3181
    %v3197 = vshrl.u32 1326507024, %v3182
    %v3198 = vor.u32 %v3196, %v3197
    %vm3199 = vcmp.lt.s32.totalorder %v3180, 1
    %vm3200 = vcmp.lt.s32.totalorder %v3180, 2
    %vm3201 = vcmp.lt.s32.totalorder %v3180, 3
    %vm3202 = vcmp.lt.s32.totalorder %v3180, 4
    %v3203 = vsel %vm3199, %v3183, %v3186
    %v3204 = vsel %vm3202, %v3192, 2102212464
    %v3205 = vsel %vm3201, %v3189, %v3204
    %v3206 = vsel %vm3200, %v3203, %v3205
    %v3207 = vsel %vm3199, %v3186, %v3189
    %v3208 = vsel %vm3202, %v3195, 920167782
    %v3209 = vsel %vm3201, %v3192, %v3208
    %v3210 = vsel %vm3200, %v3207, %v3209
    %v3211 = vsel %vm3199, %v3189, %v3192
    %v3212 = vsel %vm3202, %v3198, 1326507024
    %v3213 = vsel %vm3201, %v3195, %v3212
    %v3214 = vsel %vm3200, %v3211, %v3213
    %v3215 = vshll.u32 %v3175, 8
    %v3216 = vmul.u32.u64.compose %v3215, %v3214
    %v3217 = vextract.low.u32 %v3216
    %v3218 = vextract.high.u32 %v3216
    %v3219 = vmul.u32.u64.compose %v3215, %v3210
    %v3220 = vextract.low.u32 %v3219
    %v3221 = vextract.high.u32 %v3219
    %v3222 = vmul.u32 %v3215, %v3206
    %v3223 = vadd.s32 %v3218, %v3220
    %vm3224 = vc.u32 %v3218, %v3220
    %v3225 = vadd.s32 %v3221, 1
    %v3226 = vsel %vm3224, %v3225, %v3221
    %v3227 = vadd.s32 %v3222, %v3226
    %v3228 = vadd.s32 %v3227, 536870912
    %v3229 = vshrl.u32 %v3228, 30
    %v3230 = vshll.u32 %v3229, 30
    %v3231 = vsub.s32 %v3227, %v3230
    %vm3232 = vcmp.lt.s32.totalorder %v3231, 0
    %v3233 = vsub.s32 0, %v3231
    %v3234 = vsel %vm3232, %v3233, %v3231
    %v3235 = vclz %v3234
    %v3236 = vsub.s32 %v3235, 2
    %vm3237 = vcmp.gt.s32.totalorder 0, %v3236
    %v3238 = vsel %vm3237, 0, %v3236
    %v3239 = vsub.s32 32, %v3238
    %v3240 = vshll.u32 %v3231, %v3238
    %v3241 = vshrl.u32 %v3223, %v3239
    %v3242 = vor.u32 %v3240, %v3241
    %v3243 = vsub.s32 4294967266, %v3238
    %v3244 = vadd.s32 %v3243, 127
    %v3245 = vshll.u32 %v3244, 23
    %v3246 = vor.u32 4788187, %v3245
    %v3247 = vand.u32 2147483647, %v3246
    %v3249 = vcvt.s32.f32 %v3242
    %v3250 = vmul.f32 %v3249, %v3247
    %v3251 = vxor.u32 %v3250, 2147483648
    %v3252 = vsel %vm3169, %v3251, %v3250
    %v3253 = vsub.s32 4, %v3229
    %v3254 = vsel %vm3169, %v3253, %v3229
    %v3255 = vsel %vm3168, %v645, %v3252
    %v3256 = vsel %vm3168, 0, %v3254
    %v3257 = vcosq.f32.pop %v3255
    %v3258 = vsinq.f32.pop %v3255
    %vm3259 = vweird.f32 %v645
    %v3260 = vadd.s32 %v3256, 3
    %v3261 = vand.u32 %v3260, 3
    %vm3262 = vcmp.lt.s32.totalorder %v3261, 2
    %vm3263 = vcmp.eq.s32.totalorder %v3261, 0
    %v3264 = vxor.u32 %v3258, 2147483648
    %v3265 = vsel %vm3263, %v3257, %v3264
    %vm3266 = vcmp.eq.s32.totalorder %v3261, 2
    %v3267 = vxor.u32 %v3257, 2147483648
    %v3268 = vsel %vm3266, %v3267, %v3258
    %v3269 = vsel %vm3262, %v3265, %v3268
    %v3270 = vsel %vm3259, nan, %v3269
    %v3271 = vand.u32 2147483647, %v646
    %vm3272 = vcmp.le.f32.partialorder %v3271, 0.7853982
    %vm3273 = vcmp.lt.s32.totalorder %v646, 0
    %v3274 = vand.u32 %v646, 2139095040
    %v3275 = vshrl.u32 %v3274, 23
    %v3276 = vsub.s32 %v3275, 127
    %v3277 = vand.u32 2147483647, %v646
    %v3278 = vand.u32 %v3277, 8388607
    %v3279 = vor.u32 %v3278, 8388608
    %v3280 = vsub.s32 0, %v3279
    %v3281 = vadd.s32 %v3276, 1
    %vm3282 = vcmp.gt.s32.totalorder %v3281, 0
    %v3283 = vsel %vm3282, %v3281, 0
    %v3284 = vshrl.u32 %v3283, 5
    %v3285 = vand.u32 %v3283, 31
    %v3286 = vsub.s32 32, %v3285
    %v3287 = vshrl.u32 683565275, %v3286
    %v3288 = vshll.u32 683565275, %v3285
    %v3289 = vshrl.u32 2475754826, %v3286
    %v3290 = vor.u32 %v3288, %v3289
    %v3291 = vshll.u32 2475754826, %v3285
    %v3292 = vshrl.u32 2131351028, %v3286
    %v3293 = vor.u32 %v3291, %v3292
    %v3294 = vshll.u32 2131351028, %v3285
    %v3295 = vshrl.u32 2102212464, %v3286
    %v3296 = vor.u32 %v3294, %v3295
    %v3297 = vshll.u32 2102212464, %v3285
    %v3298 = vshrl.u32 920167782, %v3286
    %v3299 = vor.u32 %v3297, %v3298
    %v3300 = vshll.u32 920167782, %v3285
    %v3301 = vshrl.u32 1326507024, %v3286
    %v3302 = vor.u32 %v3300, %v3301
    %vm3303 = vcmp.lt.s32.totalorder %v3284, 1
    %vm3304 = vcmp.lt.s32.totalorder %v3284, 2
    %vm3305 = vcmp.lt.s32.totalorder %v3284, 3
    %vm3306 = vcmp.lt.s32.totalorder %v3284, 4
    %v3307 = vsel %vm3303, %v3287, %v3290
    %v3308 = vsel %vm3306, %v3296, 2102212464
    %v3309 = vsel %vm3305, %v3293, %v3308
    %v3310 = vsel %vm3304, %v3307, %v3309
    %v3311 = vsel %vm3303, %v3290, %v3293
    %v3312 = vsel %vm3306, %v3299, 920167782
    %v3313 = vsel %vm3305, %v3296, %v3312
    %v3314 = vsel %vm3304, %v3311, %v3313
    %v3315 = vsel %vm3303, %v3293, %v3296
    %v3316 = vsel %vm3306, %v3302, 1326507024
    %v3317 = vsel %vm3305, %v3299, %v3316
    %v3318 = vsel %vm3304, %v3315, %v3317
    %v3319 = vshll.u32 %v3279, 8
    %v3320 = vmul.u32.u64.compose %v3319, %v3318
    %v3321 = vextract.low.u32 %v3320
    %v3322 = vextract.high.u32 %v3320
    %v3323 = vmul.u32.u64.compose %v3319, %v3314
    %v3324 = vextract.low.u32 %v3323
    %v3325 = vextract.high.u32 %v3323
    %v3326 = vmul.u32 %v3319, %v3310
    %v3327 = vadd.s32 %v3322, %v3324
    %vm3328 = vc.u32 %v3322, %v3324
    %v3329 = vadd.s32 %v3325, 1
    %v3330 = vsel %vm3328, %v3329, %v3325
    %v3331 = vadd.s32 %v3326, %v3330
    %v3332 = vadd.s32 %v3331, 536870912
    %v3333 = vshrl.u32 %v3332, 30
    %v3334 = vshll.u32 %v3333, 30
    %v3335 = vsub.s32 %v3331, %v3334
    %vm3336 = vcmp.lt.s32.totalorder %v3335, 0
    %v3337 = vsub.s32 0, %v3335
    %v3338 = vsel %vm3336, %v3337, %v3335
    %v3339 = vclz %v3338
    %v3340 = vsub.s32 %v3339, 2
    %vm3341 = vcmp.gt.s32.totalorder 0, %v3340
    %v3342 = vsel %vm3341, 0, %v3340
    %v3343 = vsub.s32 32, %v3342
    %v3344 = vshll.u32 %v3335, %v3342
    %v3345 = vshrl.u32 %v3327, %v3343
    %v3346 = vor.u32 %v3344, %v3345
    %v3347 = vsub.s32 4294967266, %v3342
    %v3348 = vadd.s32 %v3347, 127
    %v3349 = vshll.u32 %v3348, 23
    %v3350 = vor.u32 4788187, %v3349
    %v3351 = vand.u32 2147483647, %v3350
    %v3353 = vcvt.s32.f32 %v3346
    %v3354 = vmul.f32 %v3353, %v3351
    %v3355 = vxor.u32 %v3354, 2147483648
    %v3356 = vsel %vm3273, %v3355, %v3354
    %v3357 = vsub.s32 4, %v3333
    %v3358 = vsel %vm3273, %v3357, %v3333
    %v3359 = vsel %vm3272, %v646, %v3356
    %v3360 = vsel %vm3272, 0, %v3358
    %v3361 = vcosq.f32.pop %v3359
    %v3362 = vsinq.f32.pop %v3359
    %vm3363 = vweird.f32 %v646
    %v3364 = vadd.s32 %v3360, 3
    %v3365 = vand.u32 %v3364, 3
    %vm3366 = vcmp.lt.s32.totalorder %v3365, 2
    %vm3367 = vcmp.eq.s32.totalorder %v3365, 0
    %v3368 = vxor.u32 %v3362, 2147483648
    %v3369 = vsel %vm3367, %v3361, %v3368
    %vm3370 = vcmp.eq.s32.totalorder %v3365, 2
    %v3371 = vxor.u32 %v3361, 2147483648
    %v3372 = vsel %vm3370, %v3371, %v3362
    %v3373 = vsel %vm3366, %v3369, %v3372
    %v3374 = vsel %vm3363, nan, %v3373
    %v3375 = vand.u32 2147483647, %v647
    %vm3376 = vcmp.le.f32.partialorder %v3375, 0.7853982
    %vm3377 = vcmp.lt.s32.totalorder %v647, 0
    %v3378 = vand.u32 %v647, 2139095040
    %v3379 = vshrl.u32 %v3378, 23
    %v3380 = vsub.s32 %v3379, 127
    %v3381 = vand.u32 2147483647, %v647
    %v3382 = vand.u32 %v3381, 8388607
    %v3383 = vor.u32 %v3382, 8388608
    %v3384 = vsub.s32 0, %v3383
    %v3385 = vadd.s32 %v3380, 1
    %vm3386 = vcmp.gt.s32.totalorder %v3385, 0
    %v3387 = vsel %vm3386, %v3385, 0
    %v3388 = vshrl.u32 %v3387, 5
    %v3389 = vand.u32 %v3387, 31
    %v3390 = vsub.s32 32, %v3389
    %v3391 = vshrl.u32 683565275, %v3390
    %v3392 = vshll.u32 683565275, %v3389
    %v3393 = vshrl.u32 2475754826, %v3390
    %v3394 = vor.u32 %v3392, %v3393
    %v3395 = vshll.u32 2475754826, %v3389
    %v3396 = vshrl.u32 2131351028, %v3390
    %v3397 = vor.u32 %v3395, %v3396
    %v3398 = vshll.u32 2131351028, %v3389
    %v3399 = vshrl.u32 2102212464, %v3390
    %v3400 = vor.u32 %v3398, %v3399
    %v3401 = vshll.u32 2102212464, %v3389
    %v3402 = vshrl.u32 920167782, %v3390
    %v3403 = vor.u32 %v3401, %v3402
    %v3404 = vshll.u32 920167782, %v3389
    %v3405 = vshrl.u32 1326507024, %v3390
    %v3406 = vor.u32 %v3404, %v3405
    %vm3407 = vcmp.lt.s32.totalorder %v3388, 1
    %vm3408 = vcmp.lt.s32.totalorder %v3388, 2
    %vm3409 = vcmp.lt.s32.totalorder %v3388, 3
    %vm3410 = vcmp.lt.s32.totalorder %v3388, 4
    %v3411 = vsel %vm3407, %v3391, %v3394
    %v3412 = vsel %vm3410, %v3400, 2102212464
    %v3413 = vsel %vm3409, %v3397, %v3412
    %v3414 = vsel %vm3408, %v3411, %v3413
    %v3415 = vsel %vm3407, %v3394, %v3397
    %v3416 = vsel %vm3410, %v3403, 920167782
    %v3417 = vsel %vm3409, %v3400, %v3416
    %v3418 = vsel %vm3408, %v3415, %v3417
    %v3419 = vsel %vm3407, %v3397, %v3400
    %v3420 = vsel %vm3410, %v3406, 1326507024
    %v3421 = vsel %vm3409, %v3403, %v3420
    %v3422 = vsel %vm3408, %v3419, %v3421
    %v3423 = vshll.u32 %v3383, 8
    %v3424 = vmul.u32.u64.compose %v3423, %v3422
    %v3425 = vextract.low.u32 %v3424
    %v3426 = vextract.high.u32 %v3424
    %v3427 = vmul.u32.u64.compose %v3423, %v3418
    %v3428 = vextract.low.u32 %v3427
    %v3429 = vextract.high.u32 %v3427
    %v3430 = vmul.u32 %v3423, %v3414
    %v3431 = vadd.s32 %v3426, %v3428
    %vm3432 = vc.u32 %v3426, %v3428
    %v3433 = vadd.s32 %v3429, 1
    %v3434 = vsel %vm3432, %v3433, %v3429
    %v3435 = vadd.s32 %v3430, %v3434
    %v3436 = vadd.s32 %v3435, 536870912
    %v3437 = vshrl.u32 %v3436, 30
    %v3438 = vshll.u32 %v3437, 30
    %v3439 = vsub.s32 %v3435, %v3438
    %vm3440 = vcmp.lt.s32.totalorder %v3439, 0
    %v3441 = vsub.s32 0, %v3439
    %v3442 = vsel %vm3440, %v3441, %v3439
    %v3443 = vclz %v3442
    %v3444 = vsub.s32 %v3443, 2
    %vm3445 = vcmp.gt.s32.totalorder 0, %v3444
    %v3446 = vsel %vm3445, 0, %v3444
    %v3447 = vsub.s32 32, %v3446
    %v3448 = vshll.u32 %v3439, %v3446
    %v3449 = vshrl.u32 %v3431, %v3447
    %v3450 = vor.u32 %v3448, %v3449
    %v3451 = vsub.s32 4294967266, %v3446
    %v3452 = vadd.s32 %v3451, 127
    %v3453 = vshll.u32 %v3452, 23
    %v3454 = vor.u32 4788187, %v3453
    %v3455 = vand.u32 2147483647, %v3454
    %v3457 = vcvt.s32.f32 %v3450
    %v3458 = vmul.f32 %v3457, %v3455
    %v3459 = vxor.u32 %v3458, 2147483648
    %v3460 = vsel %vm3377, %v3459, %v3458
    %v3461 = vsub.s32 4, %v3437
    %v3462 = vsel %vm3377, %v3461, %v3437
    %v3463 = vsel %vm3376, %v647, %v3460
    %v3464 = vsel %vm3376, 0, %v3462
    %v3465 = vcosq.f32.pop %v3463
    %v3466 = vsinq.f32.pop %v3463
    %vm3467 = vweird.f32 %v647
    %v3468 = vadd.s32 %v3464, 3
    %v3469 = vand.u32 %v3468, 3
    %vm3470 = vcmp.lt.s32.totalorder %v3469, 2
    %vm3471 = vcmp.eq.s32.totalorder %v3469, 0
    %v3472 = vxor.u32 %v3466, 2147483648
    %v3473 = vsel %vm3471, %v3465, %v3472
    %vm3474 = vcmp.eq.s32.totalorder %v3469, 2
    %v3475 = vxor.u32 %v3465, 2147483648
    %v3476 = vsel %vm3474, %v3475, %v3466
    %v3477 = vsel %vm3470, %v3473, %v3476
    %v3478 = vsel %vm3467, nan, %v3477
    %v3479 = vand.u32 2147483647, %v648
    %vm3480 = vcmp.le.f32.partialorder %v3479, 0.7853982
    %vm3481 = vcmp.lt.s32.totalorder %v648, 0
    %v3482 = vand.u32 %v648, 2139095040
    %v3483 = vshrl.u32 %v3482, 23
    %v3484 = vsub.s32 %v3483, 127
    %v3485 = vand.u32 2147483647, %v648
    %v3486 = vand.u32 %v3485, 8388607
    %v3487 = vor.u32 %v3486, 8388608
    %v3488 = vsub.s32 0, %v3487
    %v3489 = vadd.s32 %v3484, 1
    %vm3490 = vcmp.gt.s32.totalorder %v3489, 0
    %v3491 = vsel %vm3490, %v3489, 0
    %v3492 = vshrl.u32 %v3491, 5
    %v3493 = vand.u32 %v3491, 31
    %v3494 = vsub.s32 32, %v3493
    %v3495 = vshrl.u32 683565275, %v3494
    %v3496 = vshll.u32 683565275, %v3493
    %v3497 = vshrl.u32 2475754826, %v3494
    %v3498 = vor.u32 %v3496, %v3497
    %v3499 = vshll.u32 2475754826, %v3493
    %v3500 = vshrl.u32 2131351028, %v3494
    %v3501 = vor.u32 %v3499, %v3500
    %v3502 = vshll.u32 2131351028, %v3493
    %v3503 = vshrl.u32 2102212464, %v3494
    %v3504 = vor.u32 %v3502, %v3503
    %v3505 = vshll.u32 2102212464, %v3493
    %v3506 = vshrl.u32 920167782, %v3494
    %v3507 = vor.u32 %v3505, %v3506
    %v3508 = vshll.u32 920167782, %v3493
    %v3509 = vshrl.u32 1326507024, %v3494
    %v3510 = vor.u32 %v3508, %v3509
    %vm3511 = vcmp.lt.s32.totalorder %v3492, 1
    %vm3512 = vcmp.lt.s32.totalorder %v3492, 2
    %vm3513 = vcmp.lt.s32.totalorder %v3492, 3
    %vm3514 = vcmp.lt.s32.totalorder %v3492, 4
    %v3515 = vsel %vm3511, %v3495, %v3498
    %v3516 = vsel %vm3514, %v3504, 2102212464
    %v3517 = vsel %vm3513, %v3501, %v3516
    %v3518 = vsel %vm3512, %v3515, %v3517
    %v3519 = vsel %vm3511, %v3498, %v3501
    %v3520 = vsel %vm3514, %v3507, 920167782
    %v3521 = vsel %vm3513, %v3504, %v3520
    %v3522 = vsel %vm3512, %v3519, %v3521
    %v3523 = vsel %vm3511, %v3501, %v3504
    %v3524 = vsel %vm3514, %v3510, 1326507024
    %v3525 = vsel %vm3513, %v3507, %v3524
    %v3526 = vsel %vm3512, %v3523, %v3525
    %v3527 = vshll.u32 %v3487, 8
    %v3528 = vmul.u32.u64.compose %v3527, %v3526
    %v3529 = vextract.low.u32 %v3528
    %v3530 = vextract.high.u32 %v3528
    %v3531 = vmul.u32.u64.compose %v3527, %v3522
    %v3532 = vextract.low.u32 %v3531
    %v3533 = vextract.high.u32 %v3531
    %v3534 = vmul.u32 %v3527, %v3518
    %v3535 = vadd.s32 %v3530, %v3532
    %vm3536 = vc.u32 %v3530, %v3532
    %v3537 = vadd.s32 %v3533, 1
    %v3538 = vsel %vm3536, %v3537, %v3533
    %v3539 = vadd.s32 %v3534, %v3538
    %v3540 = vadd.s32 %v3539, 536870912
    %v3541 = vshrl.u32 %v3540, 30
    %v3542 = vshll.u32 %v3541, 30
    %v3543 = vsub.s32 %v3539, %v3542
    %vm3544 = vcmp.lt.s32.totalorder %v3543, 0
    %v3545 = vsub.s32 0, %v3543
    %v3546 = vsel %vm3544, %v3545, %v3543
    %v3547 = vclz %v3546
    %v3548 = vsub.s32 %v3547, 2
    %vm3549 = vcmp.gt.s32.totalorder 0, %v3548
    %v3550 = vsel %vm3549, 0, %v3548
    %v3551 = vsub.s32 32, %v3550
    %v3552 = vshll.u32 %v3543, %v3550
    %v3553 = vshrl.u32 %v3535, %v3551
    %v3554 = vor.u32 %v3552, %v3553
    %v3555 = vsub.s32 4294967266, %v3550
    %v3556 = vadd.s32 %v3555, 127
    %v3557 = vshll.u32 %v3556, 23
    %v3558 = vor.u32 4788187, %v3557
    %v3559 = vand.u32 2147483647, %v3558
    %v3561 = vcvt.s32.f32 %v3554
    %v3562 = vmul.f32 %v3561, %v3559
    %v3563 = vxor.u32 %v3562, 2147483648
    %v3564 = vsel %vm3481, %v3563, %v3562
    %v3565 = vsub.s32 4, %v3541
    %v3566 = vsel %vm3481, %v3565, %v3541
    %v3567 = vsel %vm3480, %v648, %v3564
    %v3568 = vsel %vm3480, 0, %v3566
    %v3569 = vcosq.f32.pop %v3567
    %v3570 = vsinq.f32.pop %v3567
    %vm3571 = vweird.f32 %v648
    %v3572 = vadd.s32 %v3568, 3
    %v3573 = vand.u32 %v3572, 3
    %vm3574 = vcmp.lt.s32.totalorder %v3573, 2
    %vm3575 = vcmp.eq.s32.totalorder %v3573, 0
    %v3576 = vxor.u32 %v3570, 2147483648
    %v3577 = vsel %vm3575, %v3569, %v3576
    %vm3578 = vcmp.eq.s32.totalorder %v3573, 2
    %v3579 = vxor.u32 %v3569, 2147483648
    %v3580 = vsel %vm3578, %v3579, %v3570
    %v3581 = vsel %vm3574, %v3577, %v3580
    %v3582 = vsel %vm3571, nan, %v3581
    %v3583 = vand.u32 2147483647, %v649
    %vm3584 = vcmp.le.f32.partialorder %v3583, 0.7853982
    %vm3585 = vcmp.lt.s32.totalorder %v649, 0
    %v3586 = vand.u32 %v649, 2139095040
    %v3587 = vshrl.u32 %v3586, 23
    %v3588 = vsub.s32 %v3587, 127
    %v3589 = vand.u32 2147483647, %v649
    %v3590 = vand.u32 %v3589, 8388607
    %v3591 = vor.u32 %v3590, 8388608
    %v3592 = vsub.s32 0, %v3591
    %v3593 = vadd.s32 %v3588, 1
    %vm3594 = vcmp.gt.s32.totalorder %v3593, 0
    %v3595 = vsel %vm3594, %v3593, 0
    %v3596 = vshrl.u32 %v3595, 5
    %v3597 = vand.u32 %v3595, 31
    %v3598 = vsub.s32 32, %v3597
    %v3599 = vshrl.u32 683565275, %v3598
    %v3600 = vshll.u32 683565275, %v3597
    %v3601 = vshrl.u32 2475754826, %v3598
    %v3602 = vor.u32 %v3600, %v3601
    %v3603 = vshll.u32 2475754826, %v3597
    %v3604 = vshrl.u32 2131351028, %v3598
    %v3605 = vor.u32 %v3603, %v3604
    %v3606 = vshll.u32 2131351028, %v3597
    %v3607 = vshrl.u32 2102212464, %v3598
    %v3608 = vor.u32 %v3606, %v3607
    %v3609 = vshll.u32 2102212464, %v3597
    %v3610 = vshrl.u32 920167782, %v3598
    %v3611 = vor.u32 %v3609, %v3610
    %v3612 = vshll.u32 920167782, %v3597
    %v3613 = vshrl.u32 1326507024, %v3598
    %v3614 = vor.u32 %v3612, %v3613
    %vm3615 = vcmp.lt.s32.totalorder %v3596, 1
    %vm3616 = vcmp.lt.s32.totalorder %v3596, 2
    %vm3617 = vcmp.lt.s32.totalorder %v3596, 3
    %vm3618 = vcmp.lt.s32.totalorder %v3596, 4
    %v3619 = vsel %vm3615, %v3599, %v3602
    %v3620 = vsel %vm3618, %v3608, 2102212464
    %v3621 = vsel %vm3617, %v3605, %v3620
    %v3622 = vsel %vm3616, %v3619, %v3621
    %v3623 = vsel %vm3615, %v3602, %v3605
    %v3624 = vsel %vm3618, %v3611, 920167782
    %v3625 = vsel %vm3617, %v3608, %v3624
    %v3626 = vsel %vm3616, %v3623, %v3625
    %v3627 = vsel %vm3615, %v3605, %v3608
    %v3628 = vsel %vm3618, %v3614, 1326507024
    %v3629 = vsel %vm3617, %v3611, %v3628
    %v3630 = vsel %vm3616, %v3627, %v3629
    %v3631 = vshll.u32 %v3591, 8
    %v3632 = vmul.u32.u64.compose %v3631, %v3630
    %v3633 = vextract.low.u32 %v3632
    %v3634 = vextract.high.u32 %v3632
    %v3635 = vmul.u32.u64.compose %v3631, %v3626
    %v3636 = vextract.low.u32 %v3635
    %v3637 = vextract.high.u32 %v3635
    %v3638 = vmul.u32 %v3631, %v3622
    %v3639 = vadd.s32 %v3634, %v3636
    %vm3640 = vc.u32 %v3634, %v3636
    %v3641 = vadd.s32 %v3637, 1
    %v3642 = vsel %vm3640, %v3641, %v3637
    %v3643 = vadd.s32 %v3638, %v3642
    %v3644 = vadd.s32 %v3643, 536870912
    %v3645 = vshrl.u32 %v3644, 30
    %v3646 = vshll.u32 %v3645, 30
    %v3647 = vsub.s32 %v3643, %v3646
    %vm3648 = vcmp.lt.s32.totalorder %v3647, 0
    %v3649 = vsub.s32 0, %v3647
    %v3650 = vsel %vm3648, %v3649, %v3647
    %v3651 = vclz %v3650
    %v3652 = vsub.s32 %v3651, 2
    %vm3653 = vcmp.gt.s32.totalorder 0, %v3652
    %v3654 = vsel %vm3653, 0, %v3652
    %v3655 = vsub.s32 32, %v3654
    %v3656 = vshll.u32 %v3647, %v3654
    %v3657 = vshrl.u32 %v3639, %v3655
    %v3658 = vor.u32 %v3656, %v3657
    %v3659 = vsub.s32 4294967266, %v3654
    %v3660 = vadd.s32 %v3659, 127
    %v3661 = vshll.u32 %v3660, 23
    %v3662 = vor.u32 4788187, %v3661
    %v3663 = vand.u32 2147483647, %v3662
    %v3665 = vcvt.s32.f32 %v3658
    %v3666 = vmul.f32 %v3665, %v3663
    %v3667 = vxor.u32 %v3666, 2147483648
    %v3668 = vsel %vm3585, %v3667, %v3666
    %v3669 = vsub.s32 4, %v3645
    %v3670 = vsel %vm3585, %v3669, %v3645
    %v3671 = vsel %vm3584, %v649, %v3668
    %v3672 = vsel %vm3584, 0, %v3670
    %v3673 = vcosq.f32.pop %v3671
    %v3674 = vsinq.f32.pop %v3671
    %vm3675 = vweird.f32 %v649
    %v3676 = vadd.s32 %v3672, 3
    %v3677 = vand.u32 %v3676, 3
    %vm3678 = vcmp.lt.s32.totalorder %v3677, 2
    %vm3679 = vcmp.eq.s32.totalorder %v3677, 0
    %v3680 = vxor.u32 %v3674, 2147483648
    %v3681 = vsel %vm3679, %v3673, %v3680
    %vm3682 = vcmp.eq.s32.totalorder %v3677, 2
    %v3683 = vxor.u32 %v3673, 2147483648
    %v3684 = vsel %vm3682, %v3683, %v3674
    %v3685 = vsel %vm3678, %v3681, %v3684
    %v3686 = vsel %vm3675, nan, %v3685
    %v3687 = vand.u32 2147483647, %v650
    %vm3688 = vcmp.le.f32.partialorder %v3687, 0.7853982
    %vm3689 = vcmp.lt.s32.totalorder %v650, 0
    %v3690 = vand.u32 %v650, 2139095040
    %v3691 = vshrl.u32 %v3690, 23
    %v3692 = vsub.s32 %v3691, 127
    %v3693 = vand.u32 2147483647, %v650
    %v3694 = vand.u32 %v3693, 8388607
    %v3695 = vor.u32 %v3694, 8388608
    %v3696 = vsub.s32 0, %v3695
    %v3697 = vadd.s32 %v3692, 1
    %vm3698 = vcmp.gt.s32.totalorder %v3697, 0
    %v3699 = vsel %vm3698, %v3697, 0
    %v3700 = vshrl.u32 %v3699, 5
    %v3701 = vand.u32 %v3699, 31
    %v3702 = vsub.s32 32, %v3701
    %v3703 = vshrl.u32 683565275, %v3702
    %v3704 = vshll.u32 683565275, %v3701
    %v3705 = vshrl.u32 2475754826, %v3702
    %v3706 = vor.u32 %v3704, %v3705
    %v3707 = vshll.u32 2475754826, %v3701
    %v3708 = vshrl.u32 2131351028, %v3702
    %v3709 = vor.u32 %v3707, %v3708
    %v3710 = vshll.u32 2131351028, %v3701
    %v3711 = vshrl.u32 2102212464, %v3702
    %v3712 = vor.u32 %v3710, %v3711
    %v3713 = vshll.u32 2102212464, %v3701
    %v3714 = vshrl.u32 920167782, %v3702
    %v3715 = vor.u32 %v3713, %v3714
    %v3716 = vshll.u32 920167782, %v3701
    %v3717 = vshrl.u32 1326507024, %v3702
    %v3718 = vor.u32 %v3716, %v3717
    %vm3719 = vcmp.lt.s32.totalorder %v3700, 1
    %vm3720 = vcmp.lt.s32.totalorder %v3700, 2
    %vm3721 = vcmp.lt.s32.totalorder %v3700, 3
    %vm3722 = vcmp.lt.s32.totalorder %v3700, 4
    %v3723 = vsel %vm3719, %v3703, %v3706
    %v3724 = vsel %vm3722, %v3712, 2102212464
    %v3725 = vsel %vm3721, %v3709, %v3724
    %v3726 = vsel %vm3720, %v3723, %v3725
    %v3727 = vsel %vm3719, %v3706, %v3709
    %v3728 = vsel %vm3722, %v3715, 920167782
    %v3729 = vsel %vm3721, %v3712, %v3728
    %v3730 = vsel %vm3720, %v3727, %v3729
    %v3731 = vsel %vm3719, %v3709, %v3712
    %v3732 = vsel %vm3722, %v3718, 1326507024
    %v3733 = vsel %vm3721, %v3715, %v3732
    %v3734 = vsel %vm3720, %v3731, %v3733
    %v3735 = vshll.u32 %v3695, 8
    %v3736 = vmul.u32.u64.compose %v3735, %v3734
    %v3737 = vextract.low.u32 %v3736
    %v3738 = vextract.high.u32 %v3736
    %v3739 = vmul.u32.u64.compose %v3735, %v3730
    %v3740 = vextract.low.u32 %v3739
    %v3741 = vextract.high.u32 %v3739
    %v3742 = vmul.u32 %v3735, %v3726
    %v3743 = vadd.s32 %v3738, %v3740
    %vm3744 = vc.u32 %v3738, %v3740
    %v3745 = vadd.s32 %v3741, 1
    %v3746 = vsel %vm3744, %v3745, %v3741
    %v3747 = vadd.s32 %v3742, %v3746
    %v3748 = vadd.s32 %v3747, 536870912
    %v3749 = vshrl.u32 %v3748, 30
    %v3750 = vshll.u32 %v3749, 30
    %v3751 = vsub.s32 %v3747, %v3750
    %vm3752 = vcmp.lt.s32.totalorder %v3751, 0
    %v3753 = vsub.s32 0, %v3751
    %v3754 = vsel %vm3752, %v3753, %v3751
    %v3755 = vclz %v3754
    %v3756 = vsub.s32 %v3755, 2
    %vm3757 = vcmp.gt.s32.totalorder 0, %v3756
    %v3758 = vsel %vm3757, 0, %v3756
    %v3759 = vsub.s32 32, %v3758
    %v3760 = vshll.u32 %v3751, %v3758
    %v3761 = vshrl.u32 %v3743, %v3759
    %v3762 = vor.u32 %v3760, %v3761
    %v3763 = vsub.s32 4294967266, %v3758
    %v3764 = vadd.s32 %v3763, 127
    %v3765 = vshll.u32 %v3764, 23
    %v3766 = vor.u32 4788187, %v3765
    %v3767 = vand.u32 2147483647, %v3766
    %v3769 = vcvt.s32.f32 %v3762
    %v3770 = vmul.f32 %v3769, %v3767
    %v3771 = vxor.u32 %v3770, 2147483648
    %v3772 = vsel %vm3689, %v3771, %v3770
    %v3773 = vsub.s32 4, %v3749
    %v3774 = vsel %vm3689, %v3773, %v3749
    %v3775 = vsel %vm3688, %v650, %v3772
    %v3776 = vsel %vm3688, 0, %v3774
    %v3777 = vcosq.f32.pop %v3775
    %v3778 = vsinq.f32.pop %v3775
    %vm3779 = vweird.f32 %v650
    %v3780 = vadd.s32 %v3776, 3
    %v3781 = vand.u32 %v3780, 3
    %vm3782 = vcmp.lt.s32.totalorder %v3781, 2
    %vm3783 = vcmp.eq.s32.totalorder %v3781, 0
    %v3784 = vxor.u32 %v3778, 2147483648
    %v3785 = vsel %vm3783, %v3777, %v3784
    %vm3786 = vcmp.eq.s32.totalorder %v3781, 2
    %v3787 = vxor.u32 %v3777, 2147483648
    %v3788 = vsel %vm3786, %v3787, %v3778
    %v3789 = vsel %vm3782, %v3785, %v3788
    %v3790 = vsel %vm3779, nan, %v3789
    %v3791 = vand.u32 2147483647, %v651
    %vm3792 = vcmp.le.f32.partialorder %v3791, 0.7853982
    %vm3793 = vcmp.lt.s32.totalorder %v651, 0
    %v3794 = vand.u32 %v651, 2139095040
    %v3795 = vshrl.u32 %v3794, 23
    %v3796 = vsub.s32 %v3795, 127
    %v3797 = vand.u32 2147483647, %v651
    %v3798 = vand.u32 %v3797, 8388607
    %v3799 = vor.u32 %v3798, 8388608
    %v3800 = vsub.s32 0, %v3799
    %v3801 = vadd.s32 %v3796, 1
    %vm3802 = vcmp.gt.s32.totalorder %v3801, 0
    %v3803 = vsel %vm3802, %v3801, 0
    %v3804 = vshrl.u32 %v3803, 5
    %v3805 = vand.u32 %v3803, 31
    %v3806 = vsub.s32 32, %v3805
    %v3807 = vshrl.u32 683565275, %v3806
    %v3808 = vshll.u32 683565275, %v3805
    %v3809 = vshrl.u32 2475754826, %v3806
    %v3810 = vor.u32 %v3808, %v3809
    %v3811 = vshll.u32 2475754826, %v3805
    %v3812 = vshrl.u32 2131351028, %v3806
    %v3813 = vor.u32 %v3811, %v3812
    %v3814 = vshll.u32 2131351028, %v3805
    %v3815 = vshrl.u32 2102212464, %v3806
    %v3816 = vor.u32 %v3814, %v3815
    %v3817 = vshll.u32 2102212464, %v3805
    %v3818 = vshrl.u32 920167782, %v3806
    %v3819 = vor.u32 %v3817, %v3818
    %v3820 = vshll.u32 920167782, %v3805
    %v3821 = vshrl.u32 1326507024, %v3806
    %v3822 = vor.u32 %v3820, %v3821
    %vm3823 = vcmp.lt.s32.totalorder %v3804, 1
    %vm3824 = vcmp.lt.s32.totalorder %v3804, 2
    %vm3825 = vcmp.lt.s32.totalorder %v3804, 3
    %vm3826 = vcmp.lt.s32.totalorder %v3804, 4
    %v3827 = vsel %vm3823, %v3807, %v3810
    %v3828 = vsel %vm3826, %v3816, 2102212464
    %v3829 = vsel %vm3825, %v3813, %v3828
    %v3830 = vsel %vm3824, %v3827, %v3829
    %v3831 = vsel %vm3823, %v3810, %v3813
    %v3832 = vsel %vm3826, %v3819, 920167782
    %v3833 = vsel %vm3825, %v3816, %v3832
    %v3834 = vsel %vm3824, %v3831, %v3833
    %v3835 = vsel %vm3823, %v3813, %v3816
    %v3836 = vsel %vm3826, %v3822, 1326507024
    %v3837 = vsel %vm3825, %v3819, %v3836
    %v3838 = vsel %vm3824, %v3835, %v3837
    %v3839 = vshll.u32 %v3799, 8
    %v3840 = vmul.u32.u64.compose %v3839, %v3838
    %v3841 = vextract.low.u32 %v3840
    %v3842 = vextract.high.u32 %v3840
    %v3843 = vmul.u32.u64.compose %v3839, %v3834
    %v3844 = vextract.low.u32 %v3843
    %v3845 = vextract.high.u32 %v3843
    %v3846 = vmul.u32 %v3839, %v3830
    %v3847 = vadd.s32 %v3842, %v3844
    %vm3848 = vc.u32 %v3842, %v3844
    %v3849 = vadd.s32 %v3845, 1
    %v3850 = vsel %vm3848, %v3849, %v3845
    %v3851 = vadd.s32 %v3846, %v3850
    %v3852 = vadd.s32 %v3851, 536870912
    %v3853 = vshrl.u32 %v3852, 30
    %v3854 = vshll.u32 %v3853, 30
    %v3855 = vsub.s32 %v3851, %v3854
    %vm3856 = vcmp.lt.s32.totalorder %v3855, 0
    %v3857 = vsub.s32 0, %v3855
    %v3858 = vsel %vm3856, %v3857, %v3855
    %v3859 = vclz %v3858
    %v3860 = vsub.s32 %v3859, 2
    %vm3861 = vcmp.gt.s32.totalorder 0, %v3860
    %v3862 = vsel %vm3861, 0, %v3860
    %v3863 = vsub.s32 32, %v3862
    %v3864 = vshll.u32 %v3855, %v3862
    %v3865 = vshrl.u32 %v3847, %v3863
    %v3866 = vor.u32 %v3864, %v3865
    %v3867 = vsub.s32 4294967266, %v3862
    %v3868 = vadd.s32 %v3867, 127
    %v3869 = vshll.u32 %v3868, 23
    %v3870 = vor.u32 4788187, %v3869
    %v3871 = vand.u32 2147483647, %v3870
    %v3873 = vcvt.s32.f32 %v3866
    %v3874 = vmul.f32 %v3873, %v3871
    %v3875 = vxor.u32 %v3874, 2147483648
    %v3876 = vsel %vm3793, %v3875, %v3874
    %v3877 = vsub.s32 4, %v3853
    %v3878 = vsel %vm3793, %v3877, %v3853
    %v3879 = vsel %vm3792, %v651, %v3876
    %v3880 = vsel %vm3792, 0, %v3878
    %v3881 = vcosq.f32.pop %v3879
    %v3882 = vsinq.f32.pop %v3879
    %vm3883 = vweird.f32 %v651
    %v3884 = vadd.s32 %v3880, 3
    %v3885 = vand.u32 %v3884, 3
    %vm3886 = vcmp.lt.s32.totalorder %v3885, 2
    %vm3887 = vcmp.eq.s32.totalorder %v3885, 0
    %v3888 = vxor.u32 %v3882, 2147483648
    %v3889 = vsel %vm3887, %v3881, %v3888
    %vm3890 = vcmp.eq.s32.totalorder %v3885, 2
    %v3891 = vxor.u32 %v3881, 2147483648
    %v3892 = vsel %vm3890, %v3891, %v3882
    %v3893 = vsel %vm3886, %v3889, %v3892
    %v3894 = vsel %vm3883, nan, %v3893
    %v3895 = vand.u32 2147483647, %v652
    %vm3896 = vcmp.le.f32.partialorder %v3895, 0.7853982
    %vm3897 = vcmp.lt.s32.totalorder %v652, 0
    %v3898 = vand.u32 %v652, 2139095040
    %v3899 = vshrl.u32 %v3898, 23
    %v3900 = vsub.s32 %v3899, 127
    %v3901 = vand.u32 2147483647, %v652
    %v3902 = vand.u32 %v3901, 8388607
    %v3903 = vor.u32 %v3902, 8388608
    %v3904 = vsub.s32 0, %v3903
    %v3905 = vadd.s32 %v3900, 1
    %vm3906 = vcmp.gt.s32.totalorder %v3905, 0
    %v3907 = vsel %vm3906, %v3905, 0
    %v3908 = vshrl.u32 %v3907, 5
    %v3909 = vand.u32 %v3907, 31
    %v3910 = vsub.s32 32, %v3909
    %v3911 = vshrl.u32 683565275, %v3910
    %v3912 = vshll.u32 683565275, %v3909
    %v3913 = vshrl.u32 2475754826, %v3910
    %v3914 = vor.u32 %v3912, %v3913
    %v3915 = vshll.u32 2475754826, %v3909
    %v3916 = vshrl.u32 2131351028, %v3910
    %v3917 = vor.u32 %v3915, %v3916
    %v3918 = vshll.u32 2131351028, %v3909
    %v3919 = vshrl.u32 2102212464, %v3910
    %v3920 = vor.u32 %v3918, %v3919
    %v3921 = vshll.u32 2102212464, %v3909
    %v3922 = vshrl.u32 920167782, %v3910
    %v3923 = vor.u32 %v3921, %v3922
    %v3924 = vshll.u32 920167782, %v3909
    %v3925 = vshrl.u32 1326507024, %v3910
    %v3926 = vor.u32 %v3924, %v3925
    %vm3927 = vcmp.lt.s32.totalorder %v3908, 1
    %vm3928 = vcmp.lt.s32.totalorder %v3908, 2
    %vm3929 = vcmp.lt.s32.totalorder %v3908, 3
    %vm3930 = vcmp.lt.s32.totalorder %v3908, 4
    %v3931 = vsel %vm3927, %v3911, %v3914
    %v3932 = vsel %vm3930, %v3920, 2102212464
    %v3933 = vsel %vm3929, %v3917, %v3932
    %v3934 = vsel %vm3928, %v3931, %v3933
    %v3935 = vsel %vm3927, %v3914, %v3917
    %v3936 = vsel %vm3930, %v3923, 920167782
    %v3937 = vsel %vm3929, %v3920, %v3936
    %v3938 = vsel %vm3928, %v3935, %v3937
    %v3939 = vsel %vm3927, %v3917, %v3920
    %v3940 = vsel %vm3930, %v3926, 1326507024
    %v3941 = vsel %vm3929, %v3923, %v3940
    %v3942 = vsel %vm3928, %v3939, %v3941
    %v3943 = vshll.u32 %v3903, 8
    %v3944 = vmul.u32.u64.compose %v3943, %v3942
    %v3945 = vextract.low.u32 %v3944
    %v3946 = vextract.high.u32 %v3944
    %v3947 = vmul.u32.u64.compose %v3943, %v3938
    %v3948 = vextract.low.u32 %v3947
    %v3949 = vextract.high.u32 %v3947
    %v3950 = vmul.u32 %v3943, %v3934
    %v3951 = vadd.s32 %v3946, %v3948
    %vm3952 = vc.u32 %v3946, %v3948
    %v3953 = vadd.s32 %v3949, 1
    %v3954 = vsel %vm3952, %v3953, %v3949
    %v3955 = vadd.s32 %v3950, %v3954
    %v3956 = vadd.s32 %v3955, 536870912
    %v3957 = vshrl.u32 %v3956, 30
    %v3958 = vshll.u32 %v3957, 30
    %v3959 = vsub.s32 %v3955, %v3958
    %vm3960 = vcmp.lt.s32.totalorder %v3959, 0
    %v3961 = vsub.s32 0, %v3959
    %v3962 = vsel %vm3960, %v3961, %v3959
    %v3963 = vclz %v3962
    %v3964 = vsub.s32 %v3963, 2
    %vm3965 = vcmp.gt.s32.totalorder 0, %v3964
    %v3966 = vsel %vm3965, 0, %v3964
    %v3967 = vsub.s32 32, %v3966
    %v3968 = vshll.u32 %v3959, %v3966
    %v3969 = vshrl.u32 %v3951, %v3967
    %v3970 = vor.u32 %v3968, %v3969
    %v3971 = vsub.s32 4294967266, %v3966
    %v3972 = vadd.s32 %v3971, 127
    %v3973 = vshll.u32 %v3972, 23
    %v3974 = vor.u32 4788187, %v3973
    %v3975 = vand.u32 2147483647, %v3974
    %v3977 = vcvt.s32.f32 %v3970
    %v3978 = vmul.f32 %v3977, %v3975
    %v3979 = vxor.u32 %v3978, 2147483648
    %v3980 = vsel %vm3897, %v3979, %v3978
    %v3981 = vsub.s32 4, %v3957
    %v3982 = vsel %vm3897, %v3981, %v3957
    %v3983 = vsel %vm3896, %v652, %v3980
    %v3984 = vsel %vm3896, 0, %v3982
    %v3985 = vcosq.f32.pop %v3983
    %v3986 = vsinq.f32.pop %v3983
    %vm3987 = vweird.f32 %v652
    %v3988 = vadd.s32 %v3984, 3
    %v3989 = vand.u32 %v3988, 3
    %vm3990 = vcmp.lt.s32.totalorder %v3989, 2
    %vm3991 = vcmp.eq.s32.totalorder %v3989, 0
    %v3992 = vxor.u32 %v3986, 2147483648
    %v3993 = vsel %vm3991, %v3985, %v3992
    %vm3994 = vcmp.eq.s32.totalorder %v3989, 2
    %v3995 = vxor.u32 %v3985, 2147483648
    %v3996 = vsel %vm3994, %v3995, %v3986
    %v3997 = vsel %vm3990, %v3993, %v3996
    %v3998 = vsel %vm3987, nan, %v3997
    %v3999 = vand.u32 2147483647, %v653
    %vm4000 = vcmp.le.f32.partialorder %v3999, 0.7853982
    %vm4001 = vcmp.lt.s32.totalorder %v653, 0
    %v4002 = vand.u32 %v653, 2139095040
    %v4003 = vshrl.u32 %v4002, 23
    %v4004 = vsub.s32 %v4003, 127
    %v4005 = vand.u32 2147483647, %v653
    %v4006 = vand.u32 %v4005, 8388607
    %v4007 = vor.u32 %v4006, 8388608
    %v4008 = vsub.s32 0, %v4007
    %v4009 = vadd.s32 %v4004, 1
    %vm4010 = vcmp.gt.s32.totalorder %v4009, 0
    %v4011 = vsel %vm4010, %v4009, 0
    %v4012 = vshrl.u32 %v4011, 5
    %v4013 = vand.u32 %v4011, 31
    %v4014 = vsub.s32 32, %v4013
    %v4015 = vshrl.u32 683565275, %v4014
    %v4016 = vshll.u32 683565275, %v4013
    %v4017 = vshrl.u32 2475754826, %v4014
    %v4018 = vor.u32 %v4016, %v4017
    %v4019 = vshll.u32 2475754826, %v4013
    %v4020 = vshrl.u32 2131351028, %v4014
    %v4021 = vor.u32 %v4019, %v4020
    %v4022 = vshll.u32 2131351028, %v4013
    %v4023 = vshrl.u32 2102212464, %v4014
    %v4024 = vor.u32 %v4022, %v4023
    %v4025 = vshll.u32 2102212464, %v4013
    %v4026 = vshrl.u32 920167782, %v4014
    %v4027 = vor.u32 %v4025, %v4026
    %v4028 = vshll.u32 920167782, %v4013
    %v4029 = vshrl.u32 1326507024, %v4014
    %v4030 = vor.u32 %v4028, %v4029
    %vm4031 = vcmp.lt.s32.totalorder %v4012, 1
    %vm4032 = vcmp.lt.s32.totalorder %v4012, 2
    %vm4033 = vcmp.lt.s32.totalorder %v4012, 3
    %vm4034 = vcmp.lt.s32.totalorder %v4012, 4
    %v4035 = vsel %vm4031, %v4015, %v4018
    %v4036 = vsel %vm4034, %v4024, 2102212464
    %v4037 = vsel %vm4033, %v4021, %v4036
    %v4038 = vsel %vm4032, %v4035, %v4037
    %v4039 = vsel %vm4031, %v4018, %v4021
    %v4040 = vsel %vm4034, %v4027, 920167782
    %v4041 = vsel %vm4033, %v4024, %v4040
    %v4042 = vsel %vm4032, %v4039, %v4041
    %v4043 = vsel %vm4031, %v4021, %v4024
    %v4044 = vsel %vm4034, %v4030, 1326507024
    %v4045 = vsel %vm4033, %v4027, %v4044
    %v4046 = vsel %vm4032, %v4043, %v4045
    %v4047 = vshll.u32 %v4007, 8
    %v4048 = vmul.u32.u64.compose %v4047, %v4046
    %v4049 = vextract.low.u32 %v4048
    %v4050 = vextract.high.u32 %v4048
    %v4051 = vmul.u32.u64.compose %v4047, %v4042
    %v4052 = vextract.low.u32 %v4051
    %v4053 = vextract.high.u32 %v4051
    %v4054 = vmul.u32 %v4047, %v4038
    %v4055 = vadd.s32 %v4050, %v4052
    %vm4056 = vc.u32 %v4050, %v4052
    %v4057 = vadd.s32 %v4053, 1
    %v4058 = vsel %vm4056, %v4057, %v4053
    %v4059 = vadd.s32 %v4054, %v4058
    %v4060 = vadd.s32 %v4059, 536870912
    %v4061 = vshrl.u32 %v4060, 30
    %v4062 = vshll.u32 %v4061, 30
    %v4063 = vsub.s32 %v4059, %v4062
    %vm4064 = vcmp.lt.s32.totalorder %v4063, 0
    %v4065 = vsub.s32 0, %v4063
    %v4066 = vsel %vm4064, %v4065, %v4063
    %v4067 = vclz %v4066
    %v4068 = vsub.s32 %v4067, 2
    %vm4069 = vcmp.gt.s32.totalorder 0, %v4068
    %v4070 = vsel %vm4069, 0, %v4068
    %v4071 = vsub.s32 32, %v4070
    %v4072 = vshll.u32 %v4063, %v4070
    %v4073 = vshrl.u32 %v4055, %v4071
    %v4074 = vor.u32 %v4072, %v4073
    %v4075 = vsub.s32 4294967266, %v4070
    %v4076 = vadd.s32 %v4075, 127
    %v4077 = vshll.u32 %v4076, 23
    %v4078 = vor.u32 4788187, %v4077
    %v4079 = vand.u32 2147483647, %v4078
    %v4081 = vcvt.s32.f32 %v4074
    %v4082 = vmul.f32 %v4081, %v4079
    %v4083 = vxor.u32 %v4082, 2147483648
    %v4084 = vsel %vm4001, %v4083, %v4082
    %v4085 = vsub.s32 4, %v4061
    %v4086 = vsel %vm4001, %v4085, %v4061
    %v4087 = vsel %vm4000, %v653, %v4084
    %v4088 = vsel %vm4000, 0, %v4086
    %v4089 = vcosq.f32.pop %v4087
    %v4090 = vsinq.f32.pop %v4087
    %vm4091 = vweird.f32 %v653
    %v4092 = vadd.s32 %v4088, 3
    %v4093 = vand.u32 %v4092, 3
    %vm4094 = vcmp.lt.s32.totalorder %v4093, 2
    %vm4095 = vcmp.eq.s32.totalorder %v4093, 0
    %v4096 = vxor.u32 %v4090, 2147483648
    %v4097 = vsel %vm4095, %v4089, %v4096
    %vm4098 = vcmp.eq.s32.totalorder %v4093, 2
    %v4099 = vxor.u32 %v4089, 2147483648
    %v4100 = vsel %vm4098, %v4099, %v4090
    %v4101 = vsel %vm4094, %v4097, %v4100
    %v4102 = vsel %vm4091, nan, %v4101
    %v4103 = vand.u32 2147483647, %v654
    %vm4104 = vcmp.le.f32.partialorder %v4103, 0.7853982
    %vm4105 = vcmp.lt.s32.totalorder %v654, 0
    %v4106 = vand.u32 %v654, 2139095040
    %v4107 = vshrl.u32 %v4106, 23
    %v4108 = vsub.s32 %v4107, 127
    %v4109 = vand.u32 2147483647, %v654
    %v4110 = vand.u32 %v4109, 8388607
    %v4111 = vor.u32 %v4110, 8388608
    %v4112 = vsub.s32 0, %v4111
    %v4113 = vadd.s32 %v4108, 1
    %vm4114 = vcmp.gt.s32.totalorder %v4113, 0
    %v4115 = vsel %vm4114, %v4113, 0
    %v4116 = vshrl.u32 %v4115, 5
    %v4117 = vand.u32 %v4115, 31
    %v4118 = vsub.s32 32, %v4117
    %v4119 = vshrl.u32 683565275, %v4118
    %v4120 = vshll.u32 683565275, %v4117
    %v4121 = vshrl.u32 2475754826, %v4118
    %v4122 = vor.u32 %v4120, %v4121
    %v4123 = vshll.u32 2475754826, %v4117
    %v4124 = vshrl.u32 2131351028, %v4118
    %v4125 = vor.u32 %v4123, %v4124
    %v4126 = vshll.u32 2131351028, %v4117
    %v4127 = vshrl.u32 2102212464, %v4118
    %v4128 = vor.u32 %v4126, %v4127
    %v4129 = vshll.u32 2102212464, %v4117
    %v4130 = vshrl.u32 920167782, %v4118
    %v4131 = vor.u32 %v4129, %v4130
    %v4132 = vshll.u32 920167782, %v4117
    %v4133 = vshrl.u32 1326507024, %v4118
    %v4134 = vor.u32 %v4132, %v4133
    %vm4135 = vcmp.lt.s32.totalorder %v4116, 1
    %vm4136 = vcmp.lt.s32.totalorder %v4116, 2
    %vm4137 = vcmp.lt.s32.totalorder %v4116, 3
    %vm4138 = vcmp.lt.s32.totalorder %v4116, 4
    %v4139 = vsel %vm4135, %v4119, %v4122
    %v4140 = vsel %vm4138, %v4128, 2102212464
    %v4141 = vsel %vm4137, %v4125, %v4140
    %v4142 = vsel %vm4136, %v4139, %v4141
    %v4143 = vsel %vm4135, %v4122, %v4125
    %v4144 = vsel %vm4138, %v4131, 920167782
    %v4145 = vsel %vm4137, %v4128, %v4144
    %v4146 = vsel %vm4136, %v4143, %v4145
    %v4147 = vsel %vm4135, %v4125, %v4128
    %v4148 = vsel %vm4138, %v4134, 1326507024
    %v4149 = vsel %vm4137, %v4131, %v4148
    %v4150 = vsel %vm4136, %v4147, %v4149
    %v4151 = vshll.u32 %v4111, 8
    %v4152 = vmul.u32.u64.compose %v4151, %v4150
    %v4153 = vextract.low.u32 %v4152
    %v4154 = vextract.high.u32 %v4152
    %v4155 = vmul.u32.u64.compose %v4151, %v4146
    %v4156 = vextract.low.u32 %v4155
    %v4157 = vextract.high.u32 %v4155
    %v4158 = vmul.u32 %v4151, %v4142
    %v4159 = vadd.s32 %v4154, %v4156
    %vm4160 = vc.u32 %v4154, %v4156
    %v4161 = vadd.s32 %v4157, 1
    %v4162 = vsel %vm4160, %v4161, %v4157
    %v4163 = vadd.s32 %v4158, %v4162
    %v4164 = vadd.s32 %v4163, 536870912
    %v4165 = vshrl.u32 %v4164, 30
    %v4166 = vshll.u32 %v4165, 30
    %v4167 = vsub.s32 %v4163, %v4166
    %vm4168 = vcmp.lt.s32.totalorder %v4167, 0
    %v4169 = vsub.s32 0, %v4167
    %v4170 = vsel %vm4168, %v4169, %v4167
    %v4171 = vclz %v4170
    %v4172 = vsub.s32 %v4171, 2
    %vm4173 = vcmp.gt.s32.totalorder 0, %v4172
    %v4174 = vsel %vm4173, 0, %v4172
    %v4175 = vsub.s32 32, %v4174
    %v4176 = vshll.u32 %v4167, %v4174
    %v4177 = vshrl.u32 %v4159, %v4175
    %v4178 = vor.u32 %v4176, %v4177
    %v4179 = vsub.s32 4294967266, %v4174
    %v4180 = vadd.s32 %v4179, 127
    %v4181 = vshll.u32 %v4180, 23
    %v4182 = vor.u32 4788187, %v4181
    %v4183 = vand.u32 2147483647, %v4182
    %v4185 = vcvt.s32.f32 %v4178
    %v4186 = vmul.f32 %v4185, %v4183
    %v4187 = vxor.u32 %v4186, 2147483648
    %v4188 = vsel %vm4105, %v4187, %v4186
    %v4189 = vsub.s32 4, %v4165
    %v4190 = vsel %vm4105, %v4189, %v4165
    %v4191 = vsel %vm4104, %v654, %v4188
    %v4192 = vsel %vm4104, 0, %v4190
    %v4193 = vcosq.f32.pop %v4191
    %v4194 = vsinq.f32.pop %v4191
    %vm4195 = vweird.f32 %v654
    %v4196 = vadd.s32 %v4192, 3
    %v4197 = vand.u32 %v4196, 3
    %vm4198 = vcmp.lt.s32.totalorder %v4197, 2
    %vm4199 = vcmp.eq.s32.totalorder %v4197, 0
    %v4200 = vxor.u32 %v4194, 2147483648
    %v4201 = vsel %vm4199, %v4193, %v4200
    %vm4202 = vcmp.eq.s32.totalorder %v4197, 2
    %v4203 = vxor.u32 %v4193, 2147483648
    %v4204 = vsel %vm4202, %v4203, %v4194
    %v4205 = vsel %vm4198, %v4201, %v4204
    %v4206 = vsel %vm4195, nan, %v4205
    %v4207 = vand.u32 2147483647, %v655
    %vm4208 = vcmp.le.f32.partialorder %v4207, 0.7853982
    %vm4209 = vcmp.lt.s32.totalorder %v655, 0
    %v4210 = vand.u32 %v655, 2139095040
    %v4211 = vshrl.u32 %v4210, 23
    %v4212 = vsub.s32 %v4211, 127
    %v4213 = vand.u32 2147483647, %v655
    %v4214 = vand.u32 %v4213, 8388607
    %v4215 = vor.u32 %v4214, 8388608
    %v4216 = vsub.s32 0, %v4215
    %v4217 = vadd.s32 %v4212, 1
    %vm4218 = vcmp.gt.s32.totalorder %v4217, 0
    %v4219 = vsel %vm4218, %v4217, 0
    %v4220 = vshrl.u32 %v4219, 5
    %v4221 = vand.u32 %v4219, 31
    %v4222 = vsub.s32 32, %v4221
    %v4223 = vshrl.u32 683565275, %v4222
    %v4224 = vshll.u32 683565275, %v4221
    %v4225 = vshrl.u32 2475754826, %v4222
    %v4226 = vor.u32 %v4224, %v4225
    %v4227 = vshll.u32 2475754826, %v4221
    %v4228 = vshrl.u32 2131351028, %v4222
    %v4229 = vor.u32 %v4227, %v4228
    %v4230 = vshll.u32 2131351028, %v4221
    %v4231 = vshrl.u32 2102212464, %v4222
    %v4232 = vor.u32 %v4230, %v4231
    %v4233 = vshll.u32 2102212464, %v4221
    %v4234 = vshrl.u32 920167782, %v4222
    %v4235 = vor.u32 %v4233, %v4234
    %v4236 = vshll.u32 920167782, %v4221
    %v4237 = vshrl.u32 1326507024, %v4222
    %v4238 = vor.u32 %v4236, %v4237
    %vm4239 = vcmp.lt.s32.totalorder %v4220, 1
    %vm4240 = vcmp.lt.s32.totalorder %v4220, 2
    %vm4241 = vcmp.lt.s32.totalorder %v4220, 3
    %vm4242 = vcmp.lt.s32.totalorder %v4220, 4
    %v4243 = vsel %vm4239, %v4223, %v4226
    %v4244 = vsel %vm4242, %v4232, 2102212464
    %v4245 = vsel %vm4241, %v4229, %v4244
    %v4246 = vsel %vm4240, %v4243, %v4245
    %v4247 = vsel %vm4239, %v4226, %v4229
    %v4248 = vsel %vm4242, %v4235, 920167782
    %v4249 = vsel %vm4241, %v4232, %v4248
    %v4250 = vsel %vm4240, %v4247, %v4249
    %v4251 = vsel %vm4239, %v4229, %v4232
    %v4252 = vsel %vm4242, %v4238, 1326507024
    %v4253 = vsel %vm4241, %v4235, %v4252
    %v4254 = vsel %vm4240, %v4251, %v4253
    %v4255 = vshll.u32 %v4215, 8
    %v4256 = vmul.u32.u64.compose %v4255, %v4254
    %v4257 = vextract.low.u32 %v4256
    %v4258 = vextract.high.u32 %v4256
    %v4259 = vmul.u32.u64.compose %v4255, %v4250
    %v4260 = vextract.low.u32 %v4259
    %v4261 = vextract.high.u32 %v4259
    %v4262 = vmul.u32 %v4255, %v4246
    %v4263 = vadd.s32 %v4258, %v4260
    %vm4264 = vc.u32 %v4258, %v4260
    %v4265 = vadd.s32 %v4261, 1
    %v4266 = vsel %vm4264, %v4265, %v4261
    %v4267 = vadd.s32 %v4262, %v4266
    %v4268 = vadd.s32 %v4267, 536870912
    %v4269 = vshrl.u32 %v4268, 30
    %v4270 = vshll.u32 %v4269, 30
    %v4271 = vsub.s32 %v4267, %v4270
    %vm4272 = vcmp.lt.s32.totalorder %v4271, 0
    %v4273 = vsub.s32 0, %v4271
    %v4274 = vsel %vm4272, %v4273, %v4271
    %v4275 = vclz %v4274
    %v4276 = vsub.s32 %v4275, 2
    %vm4277 = vcmp.gt.s32.totalorder 0, %v4276
    %v4278 = vsel %vm4277, 0, %v4276
    %v4279 = vsub.s32 32, %v4278
    %v4280 = vshll.u32 %v4271, %v4278
    %v4281 = vshrl.u32 %v4263, %v4279
    %v4282 = vor.u32 %v4280, %v4281
    %v4283 = vsub.s32 4294967266, %v4278
    %v4284 = vadd.s32 %v4283, 127
    %v4285 = vshll.u32 %v4284, 23
    %v4286 = vor.u32 4788187, %v4285
    %v4287 = vand.u32 2147483647, %v4286
    %v4289 = vcvt.s32.f32 %v4282
    %v4290 = vmul.f32 %v4289, %v4287
    %v4291 = vxor.u32 %v4290, 2147483648
    %v4292 = vsel %vm4209, %v4291, %v4290
    %v4293 = vsub.s32 4, %v4269
    %v4294 = vsel %vm4209, %v4293, %v4269
    %v4295 = vsel %vm4208, %v655, %v4292
    %v4296 = vsel %vm4208, 0, %v4294
    %v4297 = vcosq.f32.pop %v4295
    %v4298 = vsinq.f32.pop %v4295
    %vm4299 = vweird.f32 %v655
    %v4300 = vadd.s32 %v4296, 3
    %v4301 = vand.u32 %v4300, 3
    %vm4302 = vcmp.lt.s32.totalorder %v4301, 2
    %vm4303 = vcmp.eq.s32.totalorder %v4301, 0
    %v4304 = vxor.u32 %v4298, 2147483648
    %v4305 = vsel %vm4303, %v4297, %v4304
    %vm4306 = vcmp.eq.s32.totalorder %v4301, 2
    %v4307 = vxor.u32 %v4297, 2147483648
    %v4308 = vsel %vm4306, %v4307, %v4298
    %v4309 = vsel %vm4302, %v4305, %v4308
    %v4310 = vsel %vm4299, nan, %v4309
    %v4311 = vand.u32 2147483647, %v656
    %vm4312 = vcmp.le.f32.partialorder %v4311, 0.7853982
    %vm4313 = vcmp.lt.s32.totalorder %v656, 0
    %v4314 = vand.u32 %v656, 2139095040
    %v4315 = vshrl.u32 %v4314, 23
    %v4316 = vsub.s32 %v4315, 127
    %v4317 = vand.u32 2147483647, %v656
    %v4318 = vand.u32 %v4317, 8388607
    %v4319 = vor.u32 %v4318, 8388608
    %v4320 = vsub.s32 0, %v4319
    %v4321 = vadd.s32 %v4316, 1
    %vm4322 = vcmp.gt.s32.totalorder %v4321, 0
    %v4323 = vsel %vm4322, %v4321, 0
    %v4324 = vshrl.u32 %v4323, 5
    %v4325 = vand.u32 %v4323, 31
    %v4326 = vsub.s32 32, %v4325
    %v4327 = vshrl.u32 683565275, %v4326
    %v4328 = vshll.u32 683565275, %v4325
    %v4329 = vshrl.u32 2475754826, %v4326
    %v4330 = vor.u32 %v4328, %v4329
    %v4331 = vshll.u32 2475754826, %v4325
    %v4332 = vshrl.u32 2131351028, %v4326
    %v4333 = vor.u32 %v4331, %v4332
    %v4334 = vshll.u32 2131351028, %v4325
    %v4335 = vshrl.u32 2102212464, %v4326
    %v4336 = vor.u32 %v4334, %v4335
    %v4337 = vshll.u32 2102212464, %v4325
    %v4338 = vshrl.u32 920167782, %v4326
    %v4339 = vor.u32 %v4337, %v4338
    %v4340 = vshll.u32 920167782, %v4325
    %v4341 = vshrl.u32 1326507024, %v4326
    %v4342 = vor.u32 %v4340, %v4341
    %vm4343 = vcmp.lt.s32.totalorder %v4324, 1
    %vm4344 = vcmp.lt.s32.totalorder %v4324, 2
    %vm4345 = vcmp.lt.s32.totalorder %v4324, 3
    %vm4346 = vcmp.lt.s32.totalorder %v4324, 4
    %v4347 = vsel %vm4343, %v4327, %v4330
    %v4348 = vsel %vm4346, %v4336, 2102212464
    %v4349 = vsel %vm4345, %v4333, %v4348
    %v4350 = vsel %vm4344, %v4347, %v4349
    %v4351 = vsel %vm4343, %v4330, %v4333
    %v4352 = vsel %vm4346, %v4339, 920167782
    %v4353 = vsel %vm4345, %v4336, %v4352
    %v4354 = vsel %vm4344, %v4351, %v4353
    %v4355 = vsel %vm4343, %v4333, %v4336
    %v4356 = vsel %vm4346, %v4342, 1326507024
    %v4357 = vsel %vm4345, %v4339, %v4356
    %v4358 = vsel %vm4344, %v4355, %v4357
    %v4359 = vshll.u32 %v4319, 8
    %v4360 = vmul.u32.u64.compose %v4359, %v4358
    %v4361 = vextract.low.u32 %v4360
    %v4362 = vextract.high.u32 %v4360
    %v4363 = vmul.u32.u64.compose %v4359, %v4354
    %v4364 = vextract.low.u32 %v4363
    %v4365 = vextract.high.u32 %v4363
    %v4366 = vmul.u32 %v4359, %v4350
    %v4367 = vadd.s32 %v4362, %v4364
    %vm4368 = vc.u32 %v4362, %v4364
    %v4369 = vadd.s32 %v4365, 1
    %v4370 = vsel %vm4368, %v4369, %v4365
    %v4371 = vadd.s32 %v4366, %v4370
    %v4372 = vadd.s32 %v4371, 536870912
    %v4373 = vshrl.u32 %v4372, 30
    %v4374 = vshll.u32 %v4373, 30
    %v4375 = vsub.s32 %v4371, %v4374
    %vm4376 = vcmp.lt.s32.totalorder %v4375, 0
    %v4377 = vsub.s32 0, %v4375
    %v4378 = vsel %vm4376, %v4377, %v4375
    %v4379 = vclz %v4378
    %v4380 = vsub.s32 %v4379, 2
    %vm4381 = vcmp.gt.s32.totalorder 0, %v4380
    %v4382 = vsel %vm4381, 0, %v4380
    %v4383 = vsub.s32 32, %v4382
    %v4384 = vshll.u32 %v4375, %v4382
    %v4385 = vshrl.u32 %v4367, %v4383
    %v4386 = vor.u32 %v4384, %v4385
    %v4387 = vsub.s32 4294967266, %v4382
    %v4388 = vadd.s32 %v4387, 127
    %v4389 = vshll.u32 %v4388, 23
    %v4390 = vor.u32 4788187, %v4389
    %v4391 = vand.u32 2147483647, %v4390
    %v4393 = vcvt.s32.f32 %v4386
    %v4394 = vmul.f32 %v4393, %v4391
    %v4395 = vxor.u32 %v4394, 2147483648
    %v4396 = vsel %vm4313, %v4395, %v4394
    %v4397 = vsub.s32 4, %v4373
    %v4398 = vsel %vm4313, %v4397, %v4373
    %v4399 = vsel %vm4312, %v656, %v4396
    %v4400 = vsel %vm4312, 0, %v4398
    %v4401 = vcosq.f32.pop %v4399
    %v4402 = vsinq.f32.pop %v4399
    %vm4403 = vweird.f32 %v656
    %v4404 = vadd.s32 %v4400, 3
    %v4405 = vand.u32 %v4404, 3
    %vm4406 = vcmp.lt.s32.totalorder %v4405, 2
    %vm4407 = vcmp.eq.s32.totalorder %v4405, 0
    %v4408 = vxor.u32 %v4402, 2147483648
    %v4409 = vsel %vm4407, %v4401, %v4408
    %vm4410 = vcmp.eq.s32.totalorder %v4405, 2
    %v4411 = vxor.u32 %v4401, 2147483648
    %v4412 = vsel %vm4410, %v4411, %v4402
    %v4413 = vsel %vm4406, %v4409, %v4412
    %v4414 = vsel %vm4403, nan, %v4413
    %v4415 = vand.u32 2147483647, %v657
    %vm4416 = vcmp.le.f32.partialorder %v4415, 0.7853982
    %vm4417 = vcmp.lt.s32.totalorder %v657, 0
    %v4418 = vand.u32 %v657, 2139095040
    %v4419 = vshrl.u32 %v4418, 23
    %v4420 = vsub.s32 %v4419, 127
    %v4421 = vand.u32 2147483647, %v657
    %v4422 = vand.u32 %v4421, 8388607
    %v4423 = vor.u32 %v4422, 8388608
    %v4424 = vsub.s32 0, %v4423
    %v4425 = vadd.s32 %v4420, 1
    %vm4426 = vcmp.gt.s32.totalorder %v4425, 0
    %v4427 = vsel %vm4426, %v4425, 0
    %v4428 = vshrl.u32 %v4427, 5
    %v4429 = vand.u32 %v4427, 31
    %v4430 = vsub.s32 32, %v4429
    %v4431 = vshrl.u32 683565275, %v4430
    %v4432 = vshll.u32 683565275, %v4429
    %v4433 = vshrl.u32 2475754826, %v4430
    %v4434 = vor.u32 %v4432, %v4433
    %v4435 = vshll.u32 2475754826, %v4429
    %v4436 = vshrl.u32 2131351028, %v4430
    %v4437 = vor.u32 %v4435, %v4436
    %v4438 = vshll.u32 2131351028, %v4429
    %v4439 = vshrl.u32 2102212464, %v4430
    %v4440 = vor.u32 %v4438, %v4439
    %v4441 = vshll.u32 2102212464, %v4429
    %v4442 = vshrl.u32 920167782, %v4430
    %v4443 = vor.u32 %v4441, %v4442
    %v4444 = vshll.u32 920167782, %v4429
    %v4445 = vshrl.u32 1326507024, %v4430
    %v4446 = vor.u32 %v4444, %v4445
    %vm4447 = vcmp.lt.s32.totalorder %v4428, 1
    %vm4448 = vcmp.lt.s32.totalorder %v4428, 2
    %vm4449 = vcmp.lt.s32.totalorder %v4428, 3
    %vm4450 = vcmp.lt.s32.totalorder %v4428, 4
    %v4451 = vsel %vm4447, %v4431, %v4434
    %v4452 = vsel %vm4450, %v4440, 2102212464
    %v4453 = vsel %vm4449, %v4437, %v4452
    %v4454 = vsel %vm4448, %v4451, %v4453
    %v4455 = vsel %vm4447, %v4434, %v4437
    %v4456 = vsel %vm4450, %v4443, 920167782
    %v4457 = vsel %vm4449, %v4440, %v4456
    %v4458 = vsel %vm4448, %v4455, %v4457
    %v4459 = vsel %vm4447, %v4437, %v4440
    %v4460 = vsel %vm4450, %v4446, 1326507024
    %v4461 = vsel %vm4449, %v4443, %v4460
    %v4462 = vsel %vm4448, %v4459, %v4461
    %v4463 = vshll.u32 %v4423, 8
    %v4464 = vmul.u32.u64.compose %v4463, %v4462
    %v4465 = vextract.low.u32 %v4464
    %v4466 = vextract.high.u32 %v4464
    %v4467 = vmul.u32.u64.compose %v4463, %v4458
    %v4468 = vextract.low.u32 %v4467
    %v4469 = vextract.high.u32 %v4467
    %v4470 = vmul.u32 %v4463, %v4454
    %v4471 = vadd.s32 %v4466, %v4468
    %vm4472 = vc.u32 %v4466, %v4468
    %v4473 = vadd.s32 %v4469, 1
    %v4474 = vsel %vm4472, %v4473, %v4469
    %v4475 = vadd.s32 %v4470, %v4474
    %v4476 = vadd.s32 %v4475, 536870912
    %v4477 = vshrl.u32 %v4476, 30
    %v4478 = vshll.u32 %v4477, 30
    %v4479 = vsub.s32 %v4475, %v4478
    %vm4480 = vcmp.lt.s32.totalorder %v4479, 0
    %v4481 = vsub.s32 0, %v4479
    %v4482 = vsel %vm4480, %v4481, %v4479
    %v4483 = vclz %v4482
    %v4484 = vsub.s32 %v4483, 2
    %vm4485 = vcmp.gt.s32.totalorder 0, %v4484
    %v4486 = vsel %vm4485, 0, %v4484
    %v4487 = vsub.s32 32, %v4486
    %v4488 = vshll.u32 %v4479, %v4486
    %v4489 = vshrl.u32 %v4471, %v4487
    %v4490 = vor.u32 %v4488, %v4489
    %v4491 = vsub.s32 4294967266, %v4486
    %v4492 = vadd.s32 %v4491, 127
    %v4493 = vshll.u32 %v4492, 23
    %v4494 = vor.u32 4788187, %v4493
    %v4495 = vand.u32 2147483647, %v4494
    %v4497 = vcvt.s32.f32 %v4490
    %v4498 = vmul.f32 %v4497, %v4495
    %v4499 = vxor.u32 %v4498, 2147483648
    %v4500 = vsel %vm4417, %v4499, %v4498
    %v4501 = vsub.s32 4, %v4477
    %v4502 = vsel %vm4417, %v4501, %v4477
    %v4503 = vsel %vm4416, %v657, %v4500
    %v4504 = vsel %vm4416, 0, %v4502
    %v4505 = vcosq.f32.pop %v4503
    %v4506 = vsinq.f32.pop %v4503
    %vm4507 = vweird.f32 %v657
    %v4508 = vadd.s32 %v4504, 3
    %v4509 = vand.u32 %v4508, 3
    %vm4510 = vcmp.lt.s32.totalorder %v4509, 2
    %vm4511 = vcmp.eq.s32.totalorder %v4509, 0
    %v4512 = vxor.u32 %v4506, 2147483648
    %v4513 = vsel %vm4511, %v4505, %v4512
    %vm4514 = vcmp.eq.s32.totalorder %v4509, 2
    %v4515 = vxor.u32 %v4505, 2147483648
    %v4516 = vsel %vm4514, %v4515, %v4506
    %v4517 = vsel %vm4510, %v4513, %v4516
    %v4518 = vsel %vm4507, nan, %v4517
    %v4519 = vand.u32 2147483647, %v658
    %vm4520 = vcmp.le.f32.partialorder %v4519, 0.7853982
    %vm4521 = vcmp.lt.s32.totalorder %v658, 0
    %v4522 = vand.u32 %v658, 2139095040
    %v4523 = vshrl.u32 %v4522, 23
    %v4524 = vsub.s32 %v4523, 127
    %v4525 = vand.u32 2147483647, %v658
    %v4526 = vand.u32 %v4525, 8388607
    %v4527 = vor.u32 %v4526, 8388608
    %v4528 = vsub.s32 0, %v4527
    %v4529 = vadd.s32 %v4524, 1
    %vm4530 = vcmp.gt.s32.totalorder %v4529, 0
    %v4531 = vsel %vm4530, %v4529, 0
    %v4532 = vshrl.u32 %v4531, 5
    %v4533 = vand.u32 %v4531, 31
    %v4534 = vsub.s32 32, %v4533
    %v4535 = vshrl.u32 683565275, %v4534
    %v4536 = vshll.u32 683565275, %v4533
    %v4537 = vshrl.u32 2475754826, %v4534
    %v4538 = vor.u32 %v4536, %v4537
    %v4539 = vshll.u32 2475754826, %v4533
    %v4540 = vshrl.u32 2131351028, %v4534
    %v4541 = vor.u32 %v4539, %v4540
    %v4542 = vshll.u32 2131351028, %v4533
    %v4543 = vshrl.u32 2102212464, %v4534
    %v4544 = vor.u32 %v4542, %v4543
    %v4545 = vshll.u32 2102212464, %v4533
    %v4546 = vshrl.u32 920167782, %v4534
    %v4547 = vor.u32 %v4545, %v4546
    %v4548 = vshll.u32 920167782, %v4533
    %v4549 = vshrl.u32 1326507024, %v4534
    %v4550 = vor.u32 %v4548, %v4549
    %vm4551 = vcmp.lt.s32.totalorder %v4532, 1
    %vm4552 = vcmp.lt.s32.totalorder %v4532, 2
    %vm4553 = vcmp.lt.s32.totalorder %v4532, 3
    %vm4554 = vcmp.lt.s32.totalorder %v4532, 4
    %v4555 = vsel %vm4551, %v4535, %v4538
    %v4556 = vsel %vm4554, %v4544, 2102212464
    %v4557 = vsel %vm4553, %v4541, %v4556
    %v4558 = vsel %vm4552, %v4555, %v4557
    %v4559 = vsel %vm4551, %v4538, %v4541
    %v4560 = vsel %vm4554, %v4547, 920167782
    %v4561 = vsel %vm4553, %v4544, %v4560
    %v4562 = vsel %vm4552, %v4559, %v4561
    %v4563 = vsel %vm4551, %v4541, %v4544
    %v4564 = vsel %vm4554, %v4550, 1326507024
    %v4565 = vsel %vm4553, %v4547, %v4564
    %v4566 = vsel %vm4552, %v4563, %v4565
    %v4567 = vshll.u32 %v4527, 8
    %v4568 = vmul.u32.u64.compose %v4567, %v4566
    %v4569 = vextract.low.u32 %v4568
    %v4570 = vextract.high.u32 %v4568
    %v4571 = vmul.u32.u64.compose %v4567, %v4562
    %v4572 = vextract.low.u32 %v4571
    %v4573 = vextract.high.u32 %v4571
    %v4574 = vmul.u32 %v4567, %v4558
    %v4575 = vadd.s32 %v4570, %v4572
    %vm4576 = vc.u32 %v4570, %v4572
    %v4577 = vadd.s32 %v4573, 1
    %v4578 = vsel %vm4576, %v4577, %v4573
    %v4579 = vadd.s32 %v4574, %v4578
    %v4580 = vadd.s32 %v4579, 536870912
    %v4581 = vshrl.u32 %v4580, 30
    %v4582 = vshll.u32 %v4581, 30
    %v4583 = vsub.s32 %v4579, %v4582
    %vm4584 = vcmp.lt.s32.totalorder %v4583, 0
    %v4585 = vsub.s32 0, %v4583
    %v4586 = vsel %vm4584, %v4585, %v4583
    %v4587 = vclz %v4586
    %v4588 = vsub.s32 %v4587, 2
    %vm4589 = vcmp.gt.s32.totalorder 0, %v4588
    %v4590 = vsel %vm4589, 0, %v4588
    %v4591 = vsub.s32 32, %v4590
    %v4592 = vshll.u32 %v4583, %v4590
    %v4593 = vshrl.u32 %v4575, %v4591
    %v4594 = vor.u32 %v4592, %v4593
    %v4595 = vsub.s32 4294967266, %v4590
    %v4596 = vadd.s32 %v4595, 127
    %v4597 = vshll.u32 %v4596, 23
    %v4598 = vor.u32 4788187, %v4597
    %v4599 = vand.u32 2147483647, %v4598
    %v4601 = vcvt.s32.f32 %v4594
    %v4602 = vmul.f32 %v4601, %v4599
    %v4603 = vxor.u32 %v4602, 2147483648
    %v4604 = vsel %vm4521, %v4603, %v4602
    %v4605 = vsub.s32 4, %v4581
    %v4606 = vsel %vm4521, %v4605, %v4581
    %v4607 = vsel %vm4520, %v658, %v4604
    %v4608 = vsel %vm4520, 0, %v4606
    %v4609 = vcosq.f32.pop %v4607
    %v4610 = vsinq.f32.pop %v4607
    %vm4611 = vweird.f32 %v658
    %v4612 = vadd.s32 %v4608, 3
    %v4613 = vand.u32 %v4612, 3
    %vm4614 = vcmp.lt.s32.totalorder %v4613, 2
    %vm4615 = vcmp.eq.s32.totalorder %v4613, 0
    %v4616 = vxor.u32 %v4610, 2147483648
    %v4617 = vsel %vm4615, %v4609, %v4616
    %vm4618 = vcmp.eq.s32.totalorder %v4613, 2
    %v4619 = vxor.u32 %v4609, 2147483648
    %v4620 = vsel %vm4618, %v4619, %v4610
    %v4621 = vsel %vm4614, %v4617, %v4620
    %v4622 = vsel %vm4611, nan, %v4621
    %v4623 = vand.u32 2147483647, %v659
    %vm4624 = vcmp.le.f32.partialorder %v4623, 0.7853982
    %vm4625 = vcmp.lt.s32.totalorder %v659, 0
    %v4626 = vand.u32 %v659, 2139095040
    %v4627 = vshrl.u32 %v4626, 23
    %v4628 = vsub.s32 %v4627, 127
    %v4629 = vand.u32 2147483647, %v659
    %v4630 = vand.u32 %v4629, 8388607
    %v4631 = vor.u32 %v4630, 8388608
    %v4632 = vsub.s32 0, %v4631
    %v4633 = vadd.s32 %v4628, 1
    %vm4634 = vcmp.gt.s32.totalorder %v4633, 0
    %v4635 = vsel %vm4634, %v4633, 0
    %v4636 = vshrl.u32 %v4635, 5
    %v4637 = vand.u32 %v4635, 31
    %v4638 = vsub.s32 32, %v4637
    %v4639 = vshrl.u32 683565275, %v4638
    %v4640 = vshll.u32 683565275, %v4637
    %v4641 = vshrl.u32 2475754826, %v4638
    %v4642 = vor.u32 %v4640, %v4641
    %v4643 = vshll.u32 2475754826, %v4637
    %v4644 = vshrl.u32 2131351028, %v4638
    %v4645 = vor.u32 %v4643, %v4644
    %v4646 = vshll.u32 2131351028, %v4637
    %v4647 = vshrl.u32 2102212464, %v4638
    %v4648 = vor.u32 %v4646, %v4647
    %v4649 = vshll.u32 2102212464, %v4637
    %v4650 = vshrl.u32 920167782, %v4638
    %v4651 = vor.u32 %v4649, %v4650
    %v4652 = vshll.u32 920167782, %v4637
    %v4653 = vshrl.u32 1326507024, %v4638
    %v4654 = vor.u32 %v4652, %v4653
    %vm4655 = vcmp.lt.s32.totalorder %v4636, 1
    %vm4656 = vcmp.lt.s32.totalorder %v4636, 2
    %vm4657 = vcmp.lt.s32.totalorder %v4636, 3
    %vm4658 = vcmp.lt.s32.totalorder %v4636, 4
    %v4659 = vsel %vm4655, %v4639, %v4642
    %v4660 = vsel %vm4658, %v4648, 2102212464
    %v4661 = vsel %vm4657, %v4645, %v4660
    %v4662 = vsel %vm4656, %v4659, %v4661
    %v4663 = vsel %vm4655, %v4642, %v4645
    %v4664 = vsel %vm4658, %v4651, 920167782
    %v4665 = vsel %vm4657, %v4648, %v4664
    %v4666 = vsel %vm4656, %v4663, %v4665
    %v4667 = vsel %vm4655, %v4645, %v4648
    %v4668 = vsel %vm4658, %v4654, 1326507024
    %v4669 = vsel %vm4657, %v4651, %v4668
    %v4670 = vsel %vm4656, %v4667, %v4669
    %v4671 = vshll.u32 %v4631, 8
    %v4672 = vmul.u32.u64.compose %v4671, %v4670
    %v4673 = vextract.low.u32 %v4672
    %v4674 = vextract.high.u32 %v4672
    %v4675 = vmul.u32.u64.compose %v4671, %v4666
    %v4676 = vextract.low.u32 %v4675
    %v4677 = vextract.high.u32 %v4675
    %v4678 = vmul.u32 %v4671, %v4662
    %v4679 = vadd.s32 %v4674, %v4676
    %vm4680 = vc.u32 %v4674, %v4676
    %v4681 = vadd.s32 %v4677, 1
    %v4682 = vsel %vm4680, %v4681, %v4677
    %v4683 = vadd.s32 %v4678, %v4682
    %v4684 = vadd.s32 %v4683, 536870912
    %v4685 = vshrl.u32 %v4684, 30
    %v4686 = vshll.u32 %v4685, 30
    %v4687 = vsub.s32 %v4683, %v4686
    %vm4688 = vcmp.lt.s32.totalorder %v4687, 0
    %v4689 = vsub.s32 0, %v4687
    %v4690 = vsel %vm4688, %v4689, %v4687
    %v4691 = vclz %v4690
    %v4692 = vsub.s32 %v4691, 2
    %vm4693 = vcmp.gt.s32.totalorder 0, %v4692
    %v4694 = vsel %vm4693, 0, %v4692
    %v4695 = vsub.s32 32, %v4694
    %v4696 = vshll.u32 %v4687, %v4694
    %v4697 = vshrl.u32 %v4679, %v4695
    %v4698 = vor.u32 %v4696, %v4697
    %v4699 = vsub.s32 4294967266, %v4694
    %v4700 = vadd.s32 %v4699, 127
    %v4701 = vshll.u32 %v4700, 23
    %v4702 = vor.u32 4788187, %v4701
    %v4703 = vand.u32 2147483647, %v4702
    %v4705 = vcvt.s32.f32 %v4698
    %v4706 = vmul.f32 %v4705, %v4703
    %v4707 = vxor.u32 %v4706, 2147483648
    %v4708 = vsel %vm4625, %v4707, %v4706
    %v4709 = vsub.s32 4, %v4685
    %v4710 = vsel %vm4625, %v4709, %v4685
    %v4711 = vsel %vm4624, %v659, %v4708
    %v4712 = vsel %vm4624, 0, %v4710
    %v4713 = vcosq.f32.pop %v4711
    %v4714 = vsinq.f32.pop %v4711
    %vm4715 = vweird.f32 %v659
    %v4716 = vadd.s32 %v4712, 3
    %v4717 = vand.u32 %v4716, 3
    %vm4718 = vcmp.lt.s32.totalorder %v4717, 2
    %vm4719 = vcmp.eq.s32.totalorder %v4717, 0
    %v4720 = vxor.u32 %v4714, 2147483648
    %v4721 = vsel %vm4719, %v4713, %v4720
    %vm4722 = vcmp.eq.s32.totalorder %v4717, 2
    %v4723 = vxor.u32 %v4713, 2147483648
    %v4724 = vsel %vm4722, %v4723, %v4714
    %v4725 = vsel %vm4718, %v4721, %v4724
    %v4726 = vsel %vm4715, nan, %v4725
    %v4727 = vand.u32 2147483647, %v660
    %vm4728 = vcmp.le.f32.partialorder %v4727, 0.7853982
    %vm4729 = vcmp.lt.s32.totalorder %v660, 0
    %v4730 = vand.u32 %v660, 2139095040
    %v4731 = vshrl.u32 %v4730, 23
    %v4732 = vsub.s32 %v4731, 127
    %v4733 = vand.u32 2147483647, %v660
    %v4734 = vand.u32 %v4733, 8388607
    %v4735 = vor.u32 %v4734, 8388608
    %v4736 = vsub.s32 0, %v4735
    %v4737 = vadd.s32 %v4732, 1
    %vm4738 = vcmp.gt.s32.totalorder %v4737, 0
    %v4739 = vsel %vm4738, %v4737, 0
    %v4740 = vshrl.u32 %v4739, 5
    %v4741 = vand.u32 %v4739, 31
    %v4742 = vsub.s32 32, %v4741
    %v4743 = vshrl.u32 683565275, %v4742
    %v4744 = vshll.u32 683565275, %v4741
    %v4745 = vshrl.u32 2475754826, %v4742
    %v4746 = vor.u32 %v4744, %v4745
    %v4747 = vshll.u32 2475754826, %v4741
    %v4748 = vshrl.u32 2131351028, %v4742
    %v4749 = vor.u32 %v4747, %v4748
    %v4750 = vshll.u32 2131351028, %v4741
    %v4751 = vshrl.u32 2102212464, %v4742
    %v4752 = vor.u32 %v4750, %v4751
    %v4753 = vshll.u32 2102212464, %v4741
    %v4754 = vshrl.u32 920167782, %v4742
    %v4755 = vor.u32 %v4753, %v4754
    %v4756 = vshll.u32 920167782, %v4741
    %v4757 = vshrl.u32 1326507024, %v4742
    %v4758 = vor.u32 %v4756, %v4757
    %vm4759 = vcmp.lt.s32.totalorder %v4740, 1
    %vm4760 = vcmp.lt.s32.totalorder %v4740, 2
    %vm4761 = vcmp.lt.s32.totalorder %v4740, 3
    %vm4762 = vcmp.lt.s32.totalorder %v4740, 4
    %v4763 = vsel %vm4759, %v4743, %v4746
    %v4764 = vsel %vm4762, %v4752, 2102212464
    %v4765 = vsel %vm4761, %v4749, %v4764
    %v4766 = vsel %vm4760, %v4763, %v4765
    %v4767 = vsel %vm4759, %v4746, %v4749
    %v4768 = vsel %vm4762, %v4755, 920167782
    %v4769 = vsel %vm4761, %v4752, %v4768
    %v4770 = vsel %vm4760, %v4767, %v4769
    %v4771 = vsel %vm4759, %v4749, %v4752
    %v4772 = vsel %vm4762, %v4758, 1326507024
    %v4773 = vsel %vm4761, %v4755, %v4772
    %v4774 = vsel %vm4760, %v4771, %v4773
    %v4775 = vshll.u32 %v4735, 8
    %v4776 = vmul.u32.u64.compose %v4775, %v4774
    %v4777 = vextract.low.u32 %v4776
    %v4778 = vextract.high.u32 %v4776
    %v4779 = vmul.u32.u64.compose %v4775, %v4770
    %v4780 = vextract.low.u32 %v4779
    %v4781 = vextract.high.u32 %v4779
    %v4782 = vmul.u32 %v4775, %v4766
    %v4783 = vadd.s32 %v4778, %v4780
    %vm4784 = vc.u32 %v4778, %v4780
    %v4785 = vadd.s32 %v4781, 1
    %v4786 = vsel %vm4784, %v4785, %v4781
    %v4787 = vadd.s32 %v4782, %v4786
    %v4788 = vadd.s32 %v4787, 536870912
    %v4789 = vshrl.u32 %v4788, 30
    %v4790 = vshll.u32 %v4789, 30
    %v4791 = vsub.s32 %v4787, %v4790
    %vm4792 = vcmp.lt.s32.totalorder %v4791, 0
    %v4793 = vsub.s32 0, %v4791
    %v4794 = vsel %vm4792, %v4793, %v4791
    %v4795 = vclz %v4794
    %v4796 = vsub.s32 %v4795, 2
    %vm4797 = vcmp.gt.s32.totalorder 0, %v4796
    %v4798 = vsel %vm4797, 0, %v4796
    %v4799 = vsub.s32 32, %v4798
    %v4800 = vshll.u32 %v4791, %v4798
    %v4801 = vshrl.u32 %v4783, %v4799
    %v4802 = vor.u32 %v4800, %v4801
    %v4803 = vsub.s32 4294967266, %v4798
    %v4804 = vadd.s32 %v4803, 127
    %v4805 = vshll.u32 %v4804, 23
    %v4806 = vor.u32 4788187, %v4805
    %v4807 = vand.u32 2147483647, %v4806
    %v4809 = vcvt.s32.f32 %v4802
    %v4810 = vmul.f32 %v4809, %v4807
    %v4811 = vxor.u32 %v4810, 2147483648
    %v4812 = vsel %vm4729, %v4811, %v4810
    %v4813 = vsub.s32 4, %v4789
    %v4814 = vsel %vm4729, %v4813, %v4789
    %v4815 = vsel %vm4728, %v660, %v4812
    %v4816 = vsel %vm4728, 0, %v4814
    %v4817 = vcosq.f32.pop %v4815
    %v4818 = vsinq.f32.pop %v4815
    %vm4819 = vweird.f32 %v660
    %v4820 = vadd.s32 %v4816, 3
    %v4821 = vand.u32 %v4820, 3
    %vm4822 = vcmp.lt.s32.totalorder %v4821, 2
    %vm4823 = vcmp.eq.s32.totalorder %v4821, 0
    %v4824 = vxor.u32 %v4818, 2147483648
    %v4825 = vsel %vm4823, %v4817, %v4824
    %vm4826 = vcmp.eq.s32.totalorder %v4821, 2
    %v4827 = vxor.u32 %v4817, 2147483648
    %v4828 = vsel %vm4826, %v4827, %v4818
    %v4829 = vsel %vm4822, %v4825, %v4828
    %v4830 = vsel %vm4819, nan, %v4829
    %v4831 = vand.u32 2147483647, %v661
    %vm4832 = vcmp.le.f32.partialorder %v4831, 0.7853982
    %vm4833 = vcmp.lt.s32.totalorder %v661, 0
    %v4834 = vand.u32 %v661, 2139095040
    %v4835 = vshrl.u32 %v4834, 23
    %v4836 = vsub.s32 %v4835, 127
    %v4837 = vand.u32 2147483647, %v661
    %v4838 = vand.u32 %v4837, 8388607
    %v4839 = vor.u32 %v4838, 8388608
    %v4840 = vsub.s32 0, %v4839
    %v4841 = vadd.s32 %v4836, 1
    %vm4842 = vcmp.gt.s32.totalorder %v4841, 0
    %v4843 = vsel %vm4842, %v4841, 0
    %v4844 = vshrl.u32 %v4843, 5
    %v4845 = vand.u32 %v4843, 31
    %v4846 = vsub.s32 32, %v4845
    %v4847 = vshrl.u32 683565275, %v4846
    %v4848 = vshll.u32 683565275, %v4845
    %v4849 = vshrl.u32 2475754826, %v4846
    %v4850 = vor.u32 %v4848, %v4849
    %v4851 = vshll.u32 2475754826, %v4845
    %v4852 = vshrl.u32 2131351028, %v4846
    %v4853 = vor.u32 %v4851, %v4852
    %v4854 = vshll.u32 2131351028, %v4845
    %v4855 = vshrl.u32 2102212464, %v4846
    %v4856 = vor.u32 %v4854, %v4855
    %v4857 = vshll.u32 2102212464, %v4845
    %v4858 = vshrl.u32 920167782, %v4846
    %v4859 = vor.u32 %v4857, %v4858
    %v4860 = vshll.u32 920167782, %v4845
    %v4861 = vshrl.u32 1326507024, %v4846
    %v4862 = vor.u32 %v4860, %v4861
    %vm4863 = vcmp.lt.s32.totalorder %v4844, 1
    %vm4864 = vcmp.lt.s32.totalorder %v4844, 2
    %vm4865 = vcmp.lt.s32.totalorder %v4844, 3
    %vm4866 = vcmp.lt.s32.totalorder %v4844, 4
    %v4867 = vsel %vm4863, %v4847, %v4850
    %v4868 = vsel %vm4866, %v4856, 2102212464
    %v4869 = vsel %vm4865, %v4853, %v4868
    %v4870 = vsel %vm4864, %v4867, %v4869
    %v4871 = vsel %vm4863, %v4850, %v4853
    %v4872 = vsel %vm4866, %v4859, 920167782
    %v4873 = vsel %vm4865, %v4856, %v4872
    %v4874 = vsel %vm4864, %v4871, %v4873
    %v4875 = vsel %vm4863, %v4853, %v4856
    %v4876 = vsel %vm4866, %v4862, 1326507024
    %v4877 = vsel %vm4865, %v4859, %v4876
    %v4878 = vsel %vm4864, %v4875, %v4877
    %v4879 = vshll.u32 %v4839, 8
    %v4880 = vmul.u32.u64.compose %v4879, %v4878
    %v4881 = vextract.low.u32 %v4880
    %v4882 = vextract.high.u32 %v4880
    %v4883 = vmul.u32.u64.compose %v4879, %v4874
    %v4884 = vextract.low.u32 %v4883
    %v4885 = vextract.high.u32 %v4883
    %v4886 = vmul.u32 %v4879, %v4870
    %v4887 = vadd.s32 %v4882, %v4884
    %vm4888 = vc.u32 %v4882, %v4884
    %v4889 = vadd.s32 %v4885, 1
    %v4890 = vsel %vm4888, %v4889, %v4885
    %v4891 = vadd.s32 %v4886, %v4890
    %v4892 = vadd.s32 %v4891, 536870912
    %v4893 = vshrl.u32 %v4892, 30
    %v4894 = vshll.u32 %v4893, 30
    %v4895 = vsub.s32 %v4891, %v4894
    %vm4896 = vcmp.lt.s32.totalorder %v4895, 0
    %v4897 = vsub.s32 0, %v4895
    %v4898 = vsel %vm4896, %v4897, %v4895
    %v4899 = vclz %v4898
    %v4900 = vsub.s32 %v4899, 2
    %vm4901 = vcmp.gt.s32.totalorder 0, %v4900
    %v4902 = vsel %vm4901, 0, %v4900
    %v4903 = vsub.s32 32, %v4902
    %v4904 = vshll.u32 %v4895, %v4902
    %v4905 = vshrl.u32 %v4887, %v4903
    %v4906 = vor.u32 %v4904, %v4905
    %v4907 = vsub.s32 4294967266, %v4902
    %v4908 = vadd.s32 %v4907, 127
    %v4909 = vshll.u32 %v4908, 23
    %v4910 = vor.u32 4788187, %v4909
    %v4911 = vand.u32 2147483647, %v4910
    %v4913 = vcvt.s32.f32 %v4906
    %v4914 = vmul.f32 %v4913, %v4911
    %v4915 = vxor.u32 %v4914, 2147483648
    %v4916 = vsel %vm4833, %v4915, %v4914
    %v4917 = vsub.s32 4, %v4893
    %v4918 = vsel %vm4833, %v4917, %v4893
    %v4919 = vsel %vm4832, %v661, %v4916
    %v4920 = vsel %vm4832, 0, %v4918
    %v4921 = vcosq.f32.pop %v4919
    %v4922 = vsinq.f32.pop %v4919
    %vm4923 = vweird.f32 %v661
    %v4924 = vadd.s32 %v4920, 3
    %v4925 = vand.u32 %v4924, 3
    %vm4926 = vcmp.lt.s32.totalorder %v4925, 2
    %vm4927 = vcmp.eq.s32.totalorder %v4925, 0
    %v4928 = vxor.u32 %v4922, 2147483648
    %v4929 = vsel %vm4927, %v4921, %v4928
    %vm4930 = vcmp.eq.s32.totalorder %v4925, 2
    %v4931 = vxor.u32 %v4921, 2147483648
    %v4932 = vsel %vm4930, %v4931, %v4922
    %v4933 = vsel %vm4926, %v4929, %v4932
    %v4934 = vsel %vm4923, nan, %v4933
    %v4935 = vand.u32 2147483647, %v662
    %vm4936 = vcmp.le.f32.partialorder %v4935, 0.7853982
    %vm4937 = vcmp.lt.s32.totalorder %v662, 0
    %v4938 = vand.u32 %v662, 2139095040
    %v4939 = vshrl.u32 %v4938, 23
    %v4940 = vsub.s32 %v4939, 127
    %v4941 = vand.u32 2147483647, %v662
    %v4942 = vand.u32 %v4941, 8388607
    %v4943 = vor.u32 %v4942, 8388608
    %v4944 = vsub.s32 0, %v4943
    %v4945 = vadd.s32 %v4940, 1
    %vm4946 = vcmp.gt.s32.totalorder %v4945, 0
    %v4947 = vsel %vm4946, %v4945, 0
    %v4948 = vshrl.u32 %v4947, 5
    %v4949 = vand.u32 %v4947, 31
    %v4950 = vsub.s32 32, %v4949
    %v4951 = vshrl.u32 683565275, %v4950
    %v4952 = vshll.u32 683565275, %v4949
    %v4953 = vshrl.u32 2475754826, %v4950
    %v4954 = vor.u32 %v4952, %v4953
    %v4955 = vshll.u32 2475754826, %v4949
    %v4956 = vshrl.u32 2131351028, %v4950
    %v4957 = vor.u32 %v4955, %v4956
    %v4958 = vshll.u32 2131351028, %v4949
    %v4959 = vshrl.u32 2102212464, %v4950
    %v4960 = vor.u32 %v4958, %v4959
    %v4961 = vshll.u32 2102212464, %v4949
    %v4962 = vshrl.u32 920167782, %v4950
    %v4963 = vor.u32 %v4961, %v4962
    %v4964 = vshll.u32 920167782, %v4949
    %v4965 = vshrl.u32 1326507024, %v4950
    %v4966 = vor.u32 %v4964, %v4965
    %vm4967 = vcmp.lt.s32.totalorder %v4948, 1
    %vm4968 = vcmp.lt.s32.totalorder %v4948, 2
    %vm4969 = vcmp.lt.s32.totalorder %v4948, 3
    %vm4970 = vcmp.lt.s32.totalorder %v4948, 4
    %v4971 = vsel %vm4967, %v4951, %v4954
    %v4972 = vsel %vm4970, %v4960, 2102212464
    %v4973 = vsel %vm4969, %v4957, %v4972
    %v4974 = vsel %vm4968, %v4971, %v4973
    %v4975 = vsel %vm4967, %v4954, %v4957
    %v4976 = vsel %vm4970, %v4963, 920167782
    %v4977 = vsel %vm4969, %v4960, %v4976
    %v4978 = vsel %vm4968, %v4975, %v4977
    %v4979 = vsel %vm4967, %v4957, %v4960
    %v4980 = vsel %vm4970, %v4966, 1326507024
    %v4981 = vsel %vm4969, %v4963, %v4980
    %v4982 = vsel %vm4968, %v4979, %v4981
    %v4983 = vshll.u32 %v4943, 8
    %v4984 = vmul.u32.u64.compose %v4983, %v4982
    %v4985 = vextract.low.u32 %v4984
    %v4986 = vextract.high.u32 %v4984
    %v4987 = vmul.u32.u64.compose %v4983, %v4978
    %v4988 = vextract.low.u32 %v4987
    %v4989 = vextract.high.u32 %v4987
    %v4990 = vmul.u32 %v4983, %v4974
    %v4991 = vadd.s32 %v4986, %v4988
    %vm4992 = vc.u32 %v4986, %v4988
    %v4993 = vadd.s32 %v4989, 1
    %v4994 = vsel %vm4992, %v4993, %v4989
    %v4995 = vadd.s32 %v4990, %v4994
    %v4996 = vadd.s32 %v4995, 536870912
    %v4997 = vshrl.u32 %v4996, 30
    %v4998 = vshll.u32 %v4997, 30
    %v4999 = vsub.s32 %v4995, %v4998
    %vm5000 = vcmp.lt.s32.totalorder %v4999, 0
    %v5001 = vsub.s32 0, %v4999
    %v5002 = vsel %vm5000, %v5001, %v4999
    %v5003 = vclz %v5002
    %v5004 = vsub.s32 %v5003, 2
    %vm5005 = vcmp.gt.s32.totalorder 0, %v5004
    %v5006 = vsel %vm5005, 0, %v5004
    %v5007 = vsub.s32 32, %v5006
    %v5008 = vshll.u32 %v4999, %v5006
    %v5009 = vshrl.u32 %v4991, %v5007
    %v5010 = vor.u32 %v5008, %v5009
    %v5011 = vsub.s32 4294967266, %v5006
    %v5012 = vadd.s32 %v5011, 127
    %v5013 = vshll.u32 %v5012, 23
    %v5014 = vor.u32 4788187, %v5013
    %v5015 = vand.u32 2147483647, %v5014
    %v5017 = vcvt.s32.f32 %v5010
    %v5018 = vmul.f32 %v5017, %v5015
    %v5019 = vxor.u32 %v5018, 2147483648
    %v5020 = vsel %vm4937, %v5019, %v5018
    %v5021 = vsub.s32 4, %v4997
    %v5022 = vsel %vm4937, %v5021, %v4997
    %v5023 = vsel %vm4936, %v662, %v5020
    %v5024 = vsel %vm4936, 0, %v5022
    %v5025 = vcosq.f32.pop %v5023
    %v5026 = vsinq.f32.pop %v5023
    %vm5027 = vweird.f32 %v662
    %v5028 = vadd.s32 %v5024, 3
    %v5029 = vand.u32 %v5028, 3
    %vm5030 = vcmp.lt.s32.totalorder %v5029, 2
    %vm5031 = vcmp.eq.s32.totalorder %v5029, 0
    %v5032 = vxor.u32 %v5026, 2147483648
    %v5033 = vsel %vm5031, %v5025, %v5032
    %vm5034 = vcmp.eq.s32.totalorder %v5029, 2
    %v5035 = vxor.u32 %v5025, 2147483648
    %v5036 = vsel %vm5034, %v5035, %v5026
    %v5037 = vsel %vm5030, %v5033, %v5036
    %v5038 = vsel %vm5027, nan, %v5037
    %v5039 = vand.u32 2147483647, %v663
    %vm5040 = vcmp.le.f32.partialorder %v5039, 0.7853982
    %vm5041 = vcmp.lt.s32.totalorder %v663, 0
    %v5042 = vand.u32 %v663, 2139095040
    %v5043 = vshrl.u32 %v5042, 23
    %v5044 = vsub.s32 %v5043, 127
    %v5045 = vand.u32 2147483647, %v663
    %v5046 = vand.u32 %v5045, 8388607
    %v5047 = vor.u32 %v5046, 8388608
    %v5048 = vsub.s32 0, %v5047
    %v5049 = vadd.s32 %v5044, 1
    %vm5050 = vcmp.gt.s32.totalorder %v5049, 0
    %v5051 = vsel %vm5050, %v5049, 0
    %v5052 = vshrl.u32 %v5051, 5
    %v5053 = vand.u32 %v5051, 31
    %v5054 = vsub.s32 32, %v5053
    %v5055 = vshrl.u32 683565275, %v5054
    %v5056 = vshll.u32 683565275, %v5053
    %v5057 = vshrl.u32 2475754826, %v5054
    %v5058 = vor.u32 %v5056, %v5057
    %v5059 = vshll.u32 2475754826, %v5053
    %v5060 = vshrl.u32 2131351028, %v5054
    %v5061 = vor.u32 %v5059, %v5060
    %v5062 = vshll.u32 2131351028, %v5053
    %v5063 = vshrl.u32 2102212464, %v5054
    %v5064 = vor.u32 %v5062, %v5063
    %v5065 = vshll.u32 2102212464, %v5053
    %v5066 = vshrl.u32 920167782, %v5054
    %v5067 = vor.u32 %v5065, %v5066
    %v5068 = vshll.u32 920167782, %v5053
    %v5069 = vshrl.u32 1326507024, %v5054
    %v5070 = vor.u32 %v5068, %v5069
    %vm5071 = vcmp.lt.s32.totalorder %v5052, 1
    %vm5072 = vcmp.lt.s32.totalorder %v5052, 2
    %vm5073 = vcmp.lt.s32.totalorder %v5052, 3
    %vm5074 = vcmp.lt.s32.totalorder %v5052, 4
    %v5075 = vsel %vm5071, %v5055, %v5058
    %v5076 = vsel %vm5074, %v5064, 2102212464
    %v5077 = vsel %vm5073, %v5061, %v5076
    %v5078 = vsel %vm5072, %v5075, %v5077
    %v5079 = vsel %vm5071, %v5058, %v5061
    %v5080 = vsel %vm5074, %v5067, 920167782
    %v5081 = vsel %vm5073, %v5064, %v5080
    %v5082 = vsel %vm5072, %v5079, %v5081
    %v5083 = vsel %vm5071, %v5061, %v5064
    %v5084 = vsel %vm5074, %v5070, 1326507024
    %v5085 = vsel %vm5073, %v5067, %v5084
    %v5086 = vsel %vm5072, %v5083, %v5085
    %v5087 = vshll.u32 %v5047, 8
    %v5088 = vmul.u32.u64.compose %v5087, %v5086
    %v5089 = vextract.low.u32 %v5088
    %v5090 = vextract.high.u32 %v5088
    %v5091 = vmul.u32.u64.compose %v5087, %v5082
    %v5092 = vextract.low.u32 %v5091
    %v5093 = vextract.high.u32 %v5091
    %v5094 = vmul.u32 %v5087, %v5078
    %v5095 = vadd.s32 %v5090, %v5092
    %vm5096 = vc.u32 %v5090, %v5092
    %v5097 = vadd.s32 %v5093, 1
    %v5098 = vsel %vm5096, %v5097, %v5093
    %v5099 = vadd.s32 %v5094, %v5098
    %v5100 = vadd.s32 %v5099, 536870912
    %v5101 = vshrl.u32 %v5100, 30
    %v5102 = vshll.u32 %v5101, 30
    %v5103 = vsub.s32 %v5099, %v5102
    %vm5104 = vcmp.lt.s32.totalorder %v5103, 0
    %v5105 = vsub.s32 0, %v5103
    %v5106 = vsel %vm5104, %v5105, %v5103
    %v5107 = vclz %v5106
    %v5108 = vsub.s32 %v5107, 2
    %vm5109 = vcmp.gt.s32.totalorder 0, %v5108
    %v5110 = vsel %vm5109, 0, %v5108
    %v5111 = vsub.s32 32, %v5110
    %v5112 = vshll.u32 %v5103, %v5110
    %v5113 = vshrl.u32 %v5095, %v5111
    %v5114 = vor.u32 %v5112, %v5113
    %v5115 = vsub.s32 4294967266, %v5110
    %v5116 = vadd.s32 %v5115, 127
    %v5117 = vshll.u32 %v5116, 23
    %v5118 = vor.u32 4788187, %v5117
    %v5119 = vand.u32 2147483647, %v5118
    %v5121 = vcvt.s32.f32 %v5114
    %v5122 = vmul.f32 %v5121, %v5119
    %v5123 = vxor.u32 %v5122, 2147483648
    %v5124 = vsel %vm5041, %v5123, %v5122
    %v5125 = vsub.s32 4, %v5101
    %v5126 = vsel %vm5041, %v5125, %v5101
    %v5127 = vsel %vm5040, %v663, %v5124
    %v5128 = vsel %vm5040, 0, %v5126
    %v5129 = vcosq.f32.pop %v5127
    %v5130 = vsinq.f32.pop %v5127
    %vm5131 = vweird.f32 %v663
    %v5132 = vadd.s32 %v5128, 3
    %v5133 = vand.u32 %v5132, 3
    %vm5134 = vcmp.lt.s32.totalorder %v5133, 2
    %vm5135 = vcmp.eq.s32.totalorder %v5133, 0
    %v5136 = vxor.u32 %v5130, 2147483648
    %v5137 = vsel %vm5135, %v5129, %v5136
    %vm5138 = vcmp.eq.s32.totalorder %v5133, 2
    %v5139 = vxor.u32 %v5129, 2147483648
    %v5140 = vsel %vm5138, %v5139, %v5130
    %v5141 = vsel %vm5134, %v5137, %v5140
    %v5142 = vsel %vm5131, nan, %v5141
    %v5143 = vand.u32 2147483647, %v664
    %vm5144 = vcmp.le.f32.partialorder %v5143, 0.7853982
    %vm5145 = vcmp.lt.s32.totalorder %v664, 0
    %v5146 = vand.u32 %v664, 2139095040
    %v5147 = vshrl.u32 %v5146, 23
    %v5148 = vsub.s32 %v5147, 127
    %v5149 = vand.u32 2147483647, %v664
    %v5150 = vand.u32 %v5149, 8388607
    %v5151 = vor.u32 %v5150, 8388608
    %v5152 = vsub.s32 0, %v5151
    %v5153 = vadd.s32 %v5148, 1
    %vm5154 = vcmp.gt.s32.totalorder %v5153, 0
    %v5155 = vsel %vm5154, %v5153, 0
    %v5156 = vshrl.u32 %v5155, 5
    %v5157 = vand.u32 %v5155, 31
    %v5158 = vsub.s32 32, %v5157
    %v5159 = vshrl.u32 683565275, %v5158
    %v5160 = vshll.u32 683565275, %v5157
    %v5161 = vshrl.u32 2475754826, %v5158
    %v5162 = vor.u32 %v5160, %v5161
    %v5163 = vshll.u32 2475754826, %v5157
    %v5164 = vshrl.u32 2131351028, %v5158
    %v5165 = vor.u32 %v5163, %v5164
    %v5166 = vshll.u32 2131351028, %v5157
    %v5167 = vshrl.u32 2102212464, %v5158
    %v5168 = vor.u32 %v5166, %v5167
    %v5169 = vshll.u32 2102212464, %v5157
    %v5170 = vshrl.u32 920167782, %v5158
    %v5171 = vor.u32 %v5169, %v5170
    %v5172 = vshll.u32 920167782, %v5157
    %v5173 = vshrl.u32 1326507024, %v5158
    %v5174 = vor.u32 %v5172, %v5173
    %vm5175 = vcmp.lt.s32.totalorder %v5156, 1
    %vm5176 = vcmp.lt.s32.totalorder %v5156, 2
    %vm5177 = vcmp.lt.s32.totalorder %v5156, 3
    %vm5178 = vcmp.lt.s32.totalorder %v5156, 4
    %v5179 = vsel %vm5175, %v5159, %v5162
    %v5180 = vsel %vm5178, %v5168, 2102212464
    %v5181 = vsel %vm5177, %v5165, %v5180
    %v5182 = vsel %vm5176, %v5179, %v5181
    %v5183 = vsel %vm5175, %v5162, %v5165
    %v5184 = vsel %vm5178, %v5171, 920167782
    %v5185 = vsel %vm5177, %v5168, %v5184
    %v5186 = vsel %vm5176, %v5183, %v5185
    %v5187 = vsel %vm5175, %v5165, %v5168
    %v5188 = vsel %vm5178, %v5174, 1326507024
    %v5189 = vsel %vm5177, %v5171, %v5188
    %v5190 = vsel %vm5176, %v5187, %v5189
    %v5191 = vshll.u32 %v5151, 8
    %v5192 = vmul.u32.u64.compose %v5191, %v5190
    %v5193 = vextract.low.u32 %v5192
    %v5194 = vextract.high.u32 %v5192
    %v5195 = vmul.u32.u64.compose %v5191, %v5186
    %v5196 = vextract.low.u32 %v5195
    %v5197 = vextract.high.u32 %v5195
    %v5198 = vmul.u32 %v5191, %v5182
    %v5199 = vadd.s32 %v5194, %v5196
    %vm5200 = vc.u32 %v5194, %v5196
    %v5201 = vadd.s32 %v5197, 1
    %v5202 = vsel %vm5200, %v5201, %v5197
    %v5203 = vadd.s32 %v5198, %v5202
    %v5204 = vadd.s32 %v5203, 536870912
    %v5205 = vshrl.u32 %v5204, 30
    %v5206 = vshll.u32 %v5205, 30
    %v5207 = vsub.s32 %v5203, %v5206
    %vm5208 = vcmp.lt.s32.totalorder %v5207, 0
    %v5209 = vsub.s32 0, %v5207
    %v5210 = vsel %vm5208, %v5209, %v5207
    %v5211 = vclz %v5210
    %v5212 = vsub.s32 %v5211, 2
    %vm5213 = vcmp.gt.s32.totalorder 0, %v5212
    %v5214 = vsel %vm5213, 0, %v5212
    %v5215 = vsub.s32 32, %v5214
    %v5216 = vshll.u32 %v5207, %v5214
    %v5217 = vshrl.u32 %v5199, %v5215
    %v5218 = vor.u32 %v5216, %v5217
    %v5219 = vsub.s32 4294967266, %v5214
    %v5220 = vadd.s32 %v5219, 127
    %v5221 = vshll.u32 %v5220, 23
    %v5222 = vor.u32 4788187, %v5221
    %v5223 = vand.u32 2147483647, %v5222
    %v5225 = vcvt.s32.f32 %v5218
    %v5226 = vmul.f32 %v5225, %v5223
    %v5227 = vxor.u32 %v5226, 2147483648
    %v5228 = vsel %vm5145, %v5227, %v5226
    %v5229 = vsub.s32 4, %v5205
    %v5230 = vsel %vm5145, %v5229, %v5205
    %v5231 = vsel %vm5144, %v664, %v5228
    %v5232 = vsel %vm5144, 0, %v5230
    %v5233 = vcosq.f32.pop %v5231
    %v5234 = vsinq.f32.pop %v5231
    %vm5235 = vweird.f32 %v664
    %v5236 = vadd.s32 %v5232, 3
    %v5237 = vand.u32 %v5236, 3
    %vm5238 = vcmp.lt.s32.totalorder %v5237, 2
    %vm5239 = vcmp.eq.s32.totalorder %v5237, 0
    %v5240 = vxor.u32 %v5234, 2147483648
    %v5241 = vsel %vm5239, %v5233, %v5240
    %vm5242 = vcmp.eq.s32.totalorder %v5237, 2
    %v5243 = vxor.u32 %v5233, 2147483648
    %v5244 = vsel %vm5242, %v5243, %v5234
    %v5245 = vsel %vm5238, %v5241, %v5244
    %v5246 = vsel %vm5235, nan, %v5245
    %v5247 = vand.u32 2147483647, %v665
    %vm5248 = vcmp.le.f32.partialorder %v5247, 0.7853982
    %vm5249 = vcmp.lt.s32.totalorder %v665, 0
    %v5250 = vand.u32 %v665, 2139095040
    %v5251 = vshrl.u32 %v5250, 23
    %v5252 = vsub.s32 %v5251, 127
    %v5253 = vand.u32 2147483647, %v665
    %v5254 = vand.u32 %v5253, 8388607
    %v5255 = vor.u32 %v5254, 8388608
    %v5256 = vsub.s32 0, %v5255
    %v5257 = vadd.s32 %v5252, 1
    %vm5258 = vcmp.gt.s32.totalorder %v5257, 0
    %v5259 = vsel %vm5258, %v5257, 0
    %v5260 = vshrl.u32 %v5259, 5
    %v5261 = vand.u32 %v5259, 31
    %v5262 = vsub.s32 32, %v5261
    %v5263 = vshrl.u32 683565275, %v5262
    %v5264 = vshll.u32 683565275, %v5261
    %v5265 = vshrl.u32 2475754826, %v5262
    %v5266 = vor.u32 %v5264, %v5265
    %v5267 = vshll.u32 2475754826, %v5261
    %v5268 = vshrl.u32 2131351028, %v5262
    %v5269 = vor.u32 %v5267, %v5268
    %v5270 = vshll.u32 2131351028, %v5261
    %v5271 = vshrl.u32 2102212464, %v5262
    %v5272 = vor.u32 %v5270, %v5271
    %v5273 = vshll.u32 2102212464, %v5261
    %v5274 = vshrl.u32 920167782, %v5262
    %v5275 = vor.u32 %v5273, %v5274
    %v5276 = vshll.u32 920167782, %v5261
    %v5277 = vshrl.u32 1326507024, %v5262
    %v5278 = vor.u32 %v5276, %v5277
    %vm5279 = vcmp.lt.s32.totalorder %v5260, 1
    %vm5280 = vcmp.lt.s32.totalorder %v5260, 2
    %vm5281 = vcmp.lt.s32.totalorder %v5260, 3
    %vm5282 = vcmp.lt.s32.totalorder %v5260, 4
    %v5283 = vsel %vm5279, %v5263, %v5266
    %v5284 = vsel %vm5282, %v5272, 2102212464
    %v5285 = vsel %vm5281, %v5269, %v5284
    %v5286 = vsel %vm5280, %v5283, %v5285
    %v5287 = vsel %vm5279, %v5266, %v5269
    %v5288 = vsel %vm5282, %v5275, 920167782
    %v5289 = vsel %vm5281, %v5272, %v5288
    %v5290 = vsel %vm5280, %v5287, %v5289
    %v5291 = vsel %vm5279, %v5269, %v5272
    %v5292 = vsel %vm5282, %v5278, 1326507024
    %v5293 = vsel %vm5281, %v5275, %v5292
    %v5294 = vsel %vm5280, %v5291, %v5293
    %v5295 = vshll.u32 %v5255, 8
    %v5296 = vmul.u32.u64.compose %v5295, %v5294
    %v5297 = vextract.low.u32 %v5296
    %v5298 = vextract.high.u32 %v5296
    %v5299 = vmul.u32.u64.compose %v5295, %v5290
    %v5300 = vextract.low.u32 %v5299
    %v5301 = vextract.high.u32 %v5299
    %v5302 = vmul.u32 %v5295, %v5286
    %v5303 = vadd.s32 %v5298, %v5300
    %vm5304 = vc.u32 %v5298, %v5300
    %v5305 = vadd.s32 %v5301, 1
    %v5306 = vsel %vm5304, %v5305, %v5301
    %v5307 = vadd.s32 %v5302, %v5306
    %v5308 = vadd.s32 %v5307, 536870912
    %v5309 = vshrl.u32 %v5308, 30
    %v5310 = vshll.u32 %v5309, 30
    %v5311 = vsub.s32 %v5307, %v5310
    %vm5312 = vcmp.lt.s32.totalorder %v5311, 0
    %v5313 = vsub.s32 0, %v5311
    %v5314 = vsel %vm5312, %v5313, %v5311
    %v5315 = vclz %v5314
    %v5316 = vsub.s32 %v5315, 2
    %vm5317 = vcmp.gt.s32.totalorder 0, %v5316
    %v5318 = vsel %vm5317, 0, %v5316
    %v5319 = vsub.s32 32, %v5318
    %v5320 = vshll.u32 %v5311, %v5318
    %v5321 = vshrl.u32 %v5303, %v5319
    %v5322 = vor.u32 %v5320, %v5321
    %v5323 = vsub.s32 4294967266, %v5318
    %v5324 = vadd.s32 %v5323, 127
    %v5325 = vshll.u32 %v5324, 23
    %v5326 = vor.u32 4788187, %v5325
    %v5327 = vand.u32 2147483647, %v5326
    %v5329 = vcvt.s32.f32 %v5322
    %v5330 = vmul.f32 %v5329, %v5327
    %v5331 = vxor.u32 %v5330, 2147483648
    %v5332 = vsel %vm5249, %v5331, %v5330
    %v5333 = vsub.s32 4, %v5309
    %v5334 = vsel %vm5249, %v5333, %v5309
    %v5335 = vsel %vm5248, %v665, %v5332
    %v5336 = vsel %vm5248, 0, %v5334
    %v5337 = vcosq.f32.pop %v5335
    %v5338 = vsinq.f32.pop %v5335
    %vm5339 = vweird.f32 %v665
    %v5340 = vadd.s32 %v5336, 3
    %v5341 = vand.u32 %v5340, 3
    %vm5342 = vcmp.lt.s32.totalorder %v5341, 2
    %vm5343 = vcmp.eq.s32.totalorder %v5341, 0
    %v5344 = vxor.u32 %v5338, 2147483648
    %v5345 = vsel %vm5343, %v5337, %v5344
    %vm5346 = vcmp.eq.s32.totalorder %v5341, 2
    %v5347 = vxor.u32 %v5337, 2147483648
    %v5348 = vsel %vm5346, %v5347, %v5338
    %v5349 = vsel %vm5342, %v5345, %v5348
    %v5350 = vsel %vm5339, nan, %v5349
    %v5351 = vand.u32 2147483647, %v666
    %vm5352 = vcmp.le.f32.partialorder %v5351, 0.7853982
    %vm5353 = vcmp.lt.s32.totalorder %v666, 0
    %v5354 = vand.u32 %v666, 2139095040
    %v5355 = vshrl.u32 %v5354, 23
    %v5356 = vsub.s32 %v5355, 127
    %v5357 = vand.u32 2147483647, %v666
    %v5358 = vand.u32 %v5357, 8388607
    %v5359 = vor.u32 %v5358, 8388608
    %v5360 = vsub.s32 0, %v5359
    %v5361 = vadd.s32 %v5356, 1
    %vm5362 = vcmp.gt.s32.totalorder %v5361, 0
    %v5363 = vsel %vm5362, %v5361, 0
    %v5364 = vshrl.u32 %v5363, 5
    %v5365 = vand.u32 %v5363, 31
    %v5366 = vsub.s32 32, %v5365
    %v5367 = vshrl.u32 683565275, %v5366
    %v5368 = vshll.u32 683565275, %v5365
    %v5369 = vshrl.u32 2475754826, %v5366
    %v5370 = vor.u32 %v5368, %v5369
    %v5371 = vshll.u32 2475754826, %v5365
    %v5372 = vshrl.u32 2131351028, %v5366
    %v5373 = vor.u32 %v5371, %v5372
    %v5374 = vshll.u32 2131351028, %v5365
    %v5375 = vshrl.u32 2102212464, %v5366
    %v5376 = vor.u32 %v5374, %v5375
    %v5377 = vshll.u32 2102212464, %v5365
    %v5378 = vshrl.u32 920167782, %v5366
    %v5379 = vor.u32 %v5377, %v5378
    %v5380 = vshll.u32 920167782, %v5365
    %v5381 = vshrl.u32 1326507024, %v5366
    %v5382 = vor.u32 %v5380, %v5381
    %vm5383 = vcmp.lt.s32.totalorder %v5364, 1
    %vm5384 = vcmp.lt.s32.totalorder %v5364, 2
    %vm5385 = vcmp.lt.s32.totalorder %v5364, 3
    %vm5386 = vcmp.lt.s32.totalorder %v5364, 4
    %v5387 = vsel %vm5383, %v5367, %v5370
    %v5388 = vsel %vm5386, %v5376, 2102212464
    %v5389 = vsel %vm5385, %v5373, %v5388
    %v5390 = vsel %vm5384, %v5387, %v5389
    %v5391 = vsel %vm5383, %v5370, %v5373
    %v5392 = vsel %vm5386, %v5379, 920167782
    %v5393 = vsel %vm5385, %v5376, %v5392
    %v5394 = vsel %vm5384, %v5391, %v5393
    %v5395 = vsel %vm5383, %v5373, %v5376
    %v5396 = vsel %vm5386, %v5382, 1326507024
    %v5397 = vsel %vm5385, %v5379, %v5396
    %v5398 = vsel %vm5384, %v5395, %v5397
    %v5399 = vshll.u32 %v5359, 8
    %v5400 = vmul.u32.u64.compose %v5399, %v5398
    %v5401 = vextract.low.u32 %v5400
    %v5402 = vextract.high.u32 %v5400
    %v5403 = vmul.u32.u64.compose %v5399, %v5394
    %v5404 = vextract.low.u32 %v5403
    %v5405 = vextract.high.u32 %v5403
    %v5406 = vmul.u32 %v5399, %v5390
    %v5407 = vadd.s32 %v5402, %v5404
    %vm5408 = vc.u32 %v5402, %v5404
    %v5409 = vadd.s32 %v5405, 1
    %v5410 = vsel %vm5408, %v5409, %v5405
    %v5411 = vadd.s32 %v5406, %v5410
    %v5412 = vadd.s32 %v5411, 536870912
    %v5413 = vshrl.u32 %v5412, 30
    %v5414 = vshll.u32 %v5413, 30
    %v5415 = vsub.s32 %v5411, %v5414
    %vm5416 = vcmp.lt.s32.totalorder %v5415, 0
    %v5417 = vsub.s32 0, %v5415
    %v5418 = vsel %vm5416, %v5417, %v5415
    %v5419 = vclz %v5418
    %v5420 = vsub.s32 %v5419, 2
    %vm5421 = vcmp.gt.s32.totalorder 0, %v5420
    %v5422 = vsel %vm5421, 0, %v5420
    %v5423 = vsub.s32 32, %v5422
    %v5424 = vshll.u32 %v5415, %v5422
    %v5425 = vshrl.u32 %v5407, %v5423
    %v5426 = vor.u32 %v5424, %v5425
    %v5427 = vsub.s32 4294967266, %v5422
    %v5428 = vadd.s32 %v5427, 127
    %v5429 = vshll.u32 %v5428, 23
    %v5430 = vor.u32 4788187, %v5429
    %v5431 = vand.u32 2147483647, %v5430
    %v5433 = vcvt.s32.f32 %v5426
    %v5434 = vmul.f32 %v5433, %v5431
    %v5435 = vxor.u32 %v5434, 2147483648
    %v5436 = vsel %vm5353, %v5435, %v5434
    %v5437 = vsub.s32 4, %v5413
    %v5438 = vsel %vm5353, %v5437, %v5413
    %v5439 = vsel %vm5352, %v666, %v5436
    %v5440 = vsel %vm5352, 0, %v5438
    %v5441 = vcosq.f32.pop %v5439
    %v5442 = vsinq.f32.pop %v5439
    %vm5443 = vweird.f32 %v666
    %v5444 = vadd.s32 %v5440, 3
    %v5445 = vand.u32 %v5444, 3
    %vm5446 = vcmp.lt.s32.totalorder %v5445, 2
    %vm5447 = vcmp.eq.s32.totalorder %v5445, 0
    %v5448 = vxor.u32 %v5442, 2147483648
    %v5449 = vsel %vm5447, %v5441, %v5448
    %vm5450 = vcmp.eq.s32.totalorder %v5445, 2
    %v5451 = vxor.u32 %v5441, 2147483648
    %v5452 = vsel %vm5450, %v5451, %v5442
    %v5453 = vsel %vm5446, %v5449, %v5452
    %v5454 = vsel %vm5443, nan, %v5453
    %v5455 = vand.u32 2147483647, %v667
    %vm5456 = vcmp.le.f32.partialorder %v5455, 0.7853982
    %vm5457 = vcmp.lt.s32.totalorder %v667, 0
    %v5458 = vand.u32 %v667, 2139095040
    %v5459 = vshrl.u32 %v5458, 23
    %v5460 = vsub.s32 %v5459, 127
    %v5461 = vand.u32 2147483647, %v667
    %v5462 = vand.u32 %v5461, 8388607
    %v5463 = vor.u32 %v5462, 8388608
    %v5464 = vsub.s32 0, %v5463
    %v5465 = vadd.s32 %v5460, 1
    %vm5466 = vcmp.gt.s32.totalorder %v5465, 0
    %v5467 = vsel %vm5466, %v5465, 0
    %v5468 = vshrl.u32 %v5467, 5
    %v5469 = vand.u32 %v5467, 31
    %v5470 = vsub.s32 32, %v5469
    %v5471 = vshrl.u32 683565275, %v5470
    %v5472 = vshll.u32 683565275, %v5469
    %v5473 = vshrl.u32 2475754826, %v5470
    %v5474 = vor.u32 %v5472, %v5473
    %v5475 = vshll.u32 2475754826, %v5469
    %v5476 = vshrl.u32 2131351028, %v5470
    %v5477 = vor.u32 %v5475, %v5476
    %v5478 = vshll.u32 2131351028, %v5469
    %v5479 = vshrl.u32 2102212464, %v5470
    %v5480 = vor.u32 %v5478, %v5479
    %v5481 = vshll.u32 2102212464, %v5469
    %v5482 = vshrl.u32 920167782, %v5470
    %v5483 = vor.u32 %v5481, %v5482
    %v5484 = vshll.u32 920167782, %v5469
    %v5485 = vshrl.u32 1326507024, %v5470
    %v5486 = vor.u32 %v5484, %v5485
    %vm5487 = vcmp.lt.s32.totalorder %v5468, 1
    %vm5488 = vcmp.lt.s32.totalorder %v5468, 2
    %vm5489 = vcmp.lt.s32.totalorder %v5468, 3
    %vm5490 = vcmp.lt.s32.totalorder %v5468, 4
    %v5491 = vsel %vm5487, %v5471, %v5474
    %v5492 = vsel %vm5490, %v5480, 2102212464
    %v5493 = vsel %vm5489, %v5477, %v5492
    %v5494 = vsel %vm5488, %v5491, %v5493
    %v5495 = vsel %vm5487, %v5474, %v5477
    %v5496 = vsel %vm5490, %v5483, 920167782
    %v5497 = vsel %vm5489, %v5480, %v5496
    %v5498 = vsel %vm5488, %v5495, %v5497
    %v5499 = vsel %vm5487, %v5477, %v5480
    %v5500 = vsel %vm5490, %v5486, 1326507024
    %v5501 = vsel %vm5489, %v5483, %v5500
    %v5502 = vsel %vm5488, %v5499, %v5501
    %v5503 = vshll.u32 %v5463, 8
    %v5504 = vmul.u32.u64.compose %v5503, %v5502
    %v5505 = vextract.low.u32 %v5504
    %v5506 = vextract.high.u32 %v5504
    %v5507 = vmul.u32.u64.compose %v5503, %v5498
    %v5508 = vextract.low.u32 %v5507
    %v5509 = vextract.high.u32 %v5507
    %v5510 = vmul.u32 %v5503, %v5494
    %v5511 = vadd.s32 %v5506, %v5508
    %vm5512 = vc.u32 %v5506, %v5508
    %v5513 = vadd.s32 %v5509, 1
    %v5514 = vsel %vm5512, %v5513, %v5509
    %v5515 = vadd.s32 %v5510, %v5514
    %v5516 = vadd.s32 %v5515, 536870912
    %v5517 = vshrl.u32 %v5516, 30
    %v5518 = vshll.u32 %v5517, 30
    %v5519 = vsub.s32 %v5515, %v5518
    %vm5520 = vcmp.lt.s32.totalorder %v5519, 0
    %v5521 = vsub.s32 0, %v5519
    %v5522 = vsel %vm5520, %v5521, %v5519
    %v5523 = vclz %v5522
    %v5524 = vsub.s32 %v5523, 2
    %vm5525 = vcmp.gt.s32.totalorder 0, %v5524
    %v5526 = vsel %vm5525, 0, %v5524
    %v5527 = vsub.s32 32, %v5526
    %v5528 = vshll.u32 %v5519, %v5526
    %v5529 = vshrl.u32 %v5511, %v5527
    %v5530 = vor.u32 %v5528, %v5529
    %v5531 = vsub.s32 4294967266, %v5526
    %v5532 = vadd.s32 %v5531, 127
    %v5533 = vshll.u32 %v5532, 23
    %v5534 = vor.u32 4788187, %v5533
    %v5535 = vand.u32 2147483647, %v5534
    %v5537 = vcvt.s32.f32 %v5530
    %v5538 = vmul.f32 %v5537, %v5535
    %v5539 = vxor.u32 %v5538, 2147483648
    %v5540 = vsel %vm5457, %v5539, %v5538
    %v5541 = vsub.s32 4, %v5517
    %v5542 = vsel %vm5457, %v5541, %v5517
    %v5543 = vsel %vm5456, %v667, %v5540
    %v5544 = vsel %vm5456, 0, %v5542
    %v5545 = vcosq.f32.pop %v5543
    %v5546 = vsinq.f32.pop %v5543
    %vm5547 = vweird.f32 %v667
    %v5548 = vadd.s32 %v5544, 3
    %v5549 = vand.u32 %v5548, 3
    %vm5550 = vcmp.lt.s32.totalorder %v5549, 2
    %vm5551 = vcmp.eq.s32.totalorder %v5549, 0
    %v5552 = vxor.u32 %v5546, 2147483648
    %v5553 = vsel %vm5551, %v5545, %v5552
    %vm5554 = vcmp.eq.s32.totalorder %v5549, 2
    %v5555 = vxor.u32 %v5545, 2147483648
    %v5556 = vsel %vm5554, %v5555, %v5546
    %v5557 = vsel %vm5550, %v5553, %v5556
    %v5558 = vsel %vm5547, nan, %v5557
    %v5559 = vand.u32 2147483647, %v668
    %vm5560 = vcmp.le.f32.partialorder %v5559, 0.7853982
    %vm5561 = vcmp.lt.s32.totalorder %v668, 0
    %v5562 = vand.u32 %v668, 2139095040
    %v5563 = vshrl.u32 %v5562, 23
    %v5564 = vsub.s32 %v5563, 127
    %v5565 = vand.u32 2147483647, %v668
    %v5566 = vand.u32 %v5565, 8388607
    %v5567 = vor.u32 %v5566, 8388608
    %v5568 = vsub.s32 0, %v5567
    %v5569 = vadd.s32 %v5564, 1
    %vm5570 = vcmp.gt.s32.totalorder %v5569, 0
    %v5571 = vsel %vm5570, %v5569, 0
    %v5572 = vshrl.u32 %v5571, 5
    %v5573 = vand.u32 %v5571, 31
    %v5574 = vsub.s32 32, %v5573
    %v5575 = vshrl.u32 683565275, %v5574
    %v5576 = vshll.u32 683565275, %v5573
    %v5577 = vshrl.u32 2475754826, %v5574
    %v5578 = vor.u32 %v5576, %v5577
    %v5579 = vshll.u32 2475754826, %v5573
    %v5580 = vshrl.u32 2131351028, %v5574
    %v5581 = vor.u32 %v5579, %v5580
    %v5582 = vshll.u32 2131351028, %v5573
    %v5583 = vshrl.u32 2102212464, %v5574
    %v5584 = vor.u32 %v5582, %v5583
    %v5585 = vshll.u32 2102212464, %v5573
    %v5586 = vshrl.u32 920167782, %v5574
    %v5587 = vor.u32 %v5585, %v5586
    %v5588 = vshll.u32 920167782, %v5573
    %v5589 = vshrl.u32 1326507024, %v5574
    %v5590 = vor.u32 %v5588, %v5589
    %vm5591 = vcmp.lt.s32.totalorder %v5572, 1
    %vm5592 = vcmp.lt.s32.totalorder %v5572, 2
    %vm5593 = vcmp.lt.s32.totalorder %v5572, 3
    %vm5594 = vcmp.lt.s32.totalorder %v5572, 4
    %v5595 = vsel %vm5591, %v5575, %v5578
    %v5596 = vsel %vm5594, %v5584, 2102212464
    %v5597 = vsel %vm5593, %v5581, %v5596
    %v5598 = vsel %vm5592, %v5595, %v5597
    %v5599 = vsel %vm5591, %v5578, %v5581
    %v5600 = vsel %vm5594, %v5587, 920167782
    %v5601 = vsel %vm5593, %v5584, %v5600
    %v5602 = vsel %vm5592, %v5599, %v5601
    %v5603 = vsel %vm5591, %v5581, %v5584
    %v5604 = vsel %vm5594, %v5590, 1326507024
    %v5605 = vsel %vm5593, %v5587, %v5604
    %v5606 = vsel %vm5592, %v5603, %v5605
    %v5607 = vshll.u32 %v5567, 8
    %v5608 = vmul.u32.u64.compose %v5607, %v5606
    %v5609 = vextract.low.u32 %v5608
    %v5610 = vextract.high.u32 %v5608
    %v5611 = vmul.u32.u64.compose %v5607, %v5602
    %v5612 = vextract.low.u32 %v5611
    %v5613 = vextract.high.u32 %v5611
    %v5614 = vmul.u32 %v5607, %v5598
    %v5615 = vadd.s32 %v5610, %v5612
    %vm5616 = vc.u32 %v5610, %v5612
    %v5617 = vadd.s32 %v5613, 1
    %v5618 = vsel %vm5616, %v5617, %v5613
    %v5619 = vadd.s32 %v5614, %v5618
    %v5620 = vadd.s32 %v5619, 536870912
    %v5621 = vshrl.u32 %v5620, 30
    %v5622 = vshll.u32 %v5621, 30
    %v5623 = vsub.s32 %v5619, %v5622
    %vm5624 = vcmp.lt.s32.totalorder %v5623, 0
    %v5625 = vsub.s32 0, %v5623
    %v5626 = vsel %vm5624, %v5625, %v5623
    %v5627 = vclz %v5626
    %v5628 = vsub.s32 %v5627, 2
    %vm5629 = vcmp.gt.s32.totalorder 0, %v5628
    %v5630 = vsel %vm5629, 0, %v5628
    %v5631 = vsub.s32 32, %v5630
    %v5632 = vshll.u32 %v5623, %v5630
    %v5633 = vshrl.u32 %v5615, %v5631
    %v5634 = vor.u32 %v5632, %v5633
    %v5635 = vsub.s32 4294967266, %v5630
    %v5636 = vadd.s32 %v5635, 127
    %v5637 = vshll.u32 %v5636, 23
    %v5638 = vor.u32 4788187, %v5637
    %v5639 = vand.u32 2147483647, %v5638
    %v5641 = vcvt.s32.f32 %v5634
    %v5642 = vmul.f32 %v5641, %v5639
    %v5643 = vxor.u32 %v5642, 2147483648
    %v5644 = vsel %vm5561, %v5643, %v5642
    %v5645 = vsub.s32 4, %v5621
    %v5646 = vsel %vm5561, %v5645, %v5621
    %v5647 = vsel %vm5560, %v668, %v5644
    %v5648 = vsel %vm5560, 0, %v5646
    %v5649 = vcosq.f32.pop %v5647
    %v5650 = vsinq.f32.pop %v5647
    %vm5651 = vweird.f32 %v668
    %v5652 = vadd.s32 %v5648, 3
    %v5653 = vand.u32 %v5652, 3
    %vm5654 = vcmp.lt.s32.totalorder %v5653, 2
    %vm5655 = vcmp.eq.s32.totalorder %v5653, 0
    %v5656 = vxor.u32 %v5650, 2147483648
    %v5657 = vsel %vm5655, %v5649, %v5656
    %vm5658 = vcmp.eq.s32.totalorder %v5653, 2
    %v5659 = vxor.u32 %v5649, 2147483648
    %v5660 = vsel %vm5658, %v5659, %v5650
    %v5661 = vsel %vm5654, %v5657, %v5660
    %v5662 = vsel %vm5651, nan, %v5661
    %v5663 = vand.u32 2147483647, %v669
    %vm5664 = vcmp.le.f32.partialorder %v5663, 0.7853982
    %vm5665 = vcmp.lt.s32.totalorder %v669, 0
    %v5666 = vand.u32 %v669, 2139095040
    %v5667 = vshrl.u32 %v5666, 23
    %v5668 = vsub.s32 %v5667, 127
    %v5669 = vand.u32 2147483647, %v669
    %v5670 = vand.u32 %v5669, 8388607
    %v5671 = vor.u32 %v5670, 8388608
    %v5672 = vsub.s32 0, %v5671
    %v5673 = vadd.s32 %v5668, 1
    %vm5674 = vcmp.gt.s32.totalorder %v5673, 0
    %v5675 = vsel %vm5674, %v5673, 0
    %v5676 = vshrl.u32 %v5675, 5
    %v5677 = vand.u32 %v5675, 31
    %v5678 = vsub.s32 32, %v5677
    %v5679 = vshrl.u32 683565275, %v5678
    %v5680 = vshll.u32 683565275, %v5677
    %v5681 = vshrl.u32 2475754826, %v5678
    %v5682 = vor.u32 %v5680, %v5681
    %v5683 = vshll.u32 2475754826, %v5677
    %v5684 = vshrl.u32 2131351028, %v5678
    %v5685 = vor.u32 %v5683, %v5684
    %v5686 = vshll.u32 2131351028, %v5677
    %v5687 = vshrl.u32 2102212464, %v5678
    %v5688 = vor.u32 %v5686, %v5687
    %v5689 = vshll.u32 2102212464, %v5677
    %v5690 = vshrl.u32 920167782, %v5678
    %v5691 = vor.u32 %v5689, %v5690
    %v5692 = vshll.u32 920167782, %v5677
    %v5693 = vshrl.u32 1326507024, %v5678
    %v5694 = vor.u32 %v5692, %v5693
    %vm5695 = vcmp.lt.s32.totalorder %v5676, 1
    %vm5696 = vcmp.lt.s32.totalorder %v5676, 2
    %vm5697 = vcmp.lt.s32.totalorder %v5676, 3
    %vm5698 = vcmp.lt.s32.totalorder %v5676, 4
    %v5699 = vsel %vm5695, %v5679, %v5682
    %v5700 = vsel %vm5698, %v5688, 2102212464
    %v5701 = vsel %vm5697, %v5685, %v5700
    %v5702 = vsel %vm5696, %v5699, %v5701
    %v5703 = vsel %vm5695, %v5682, %v5685
    %v5704 = vsel %vm5698, %v5691, 920167782
    %v5705 = vsel %vm5697, %v5688, %v5704
    %v5706 = vsel %vm5696, %v5703, %v5705
    %v5707 = vsel %vm5695, %v5685, %v5688
    %v5708 = vsel %vm5698, %v5694, 1326507024
    %v5709 = vsel %vm5697, %v5691, %v5708
    %v5710 = vsel %vm5696, %v5707, %v5709
    %v5711 = vshll.u32 %v5671, 8
    %v5712 = vmul.u32.u64.compose %v5711, %v5710
    %v5713 = vextract.low.u32 %v5712
    %v5714 = vextract.high.u32 %v5712
    %v5715 = vmul.u32.u64.compose %v5711, %v5706
    %v5716 = vextract.low.u32 %v5715
    %v5717 = vextract.high.u32 %v5715
    %v5718 = vmul.u32 %v5711, %v5702
    %v5719 = vadd.s32 %v5714, %v5716
    %vm5720 = vc.u32 %v5714, %v5716
    %v5721 = vadd.s32 %v5717, 1
    %v5722 = vsel %vm5720, %v5721, %v5717
    %v5723 = vadd.s32 %v5718, %v5722
    %v5724 = vadd.s32 %v5723, 536870912
    %v5725 = vshrl.u32 %v5724, 30
    %v5726 = vshll.u32 %v5725, 30
    %v5727 = vsub.s32 %v5723, %v5726
    %vm5728 = vcmp.lt.s32.totalorder %v5727, 0
    %v5729 = vsub.s32 0, %v5727
    %v5730 = vsel %vm5728, %v5729, %v5727
    %v5731 = vclz %v5730
    %v5732 = vsub.s32 %v5731, 2
    %vm5733 = vcmp.gt.s32.totalorder 0, %v5732
    %v5734 = vsel %vm5733, 0, %v5732
    %v5735 = vsub.s32 32, %v5734
    %v5736 = vshll.u32 %v5727, %v5734
    %v5737 = vshrl.u32 %v5719, %v5735
    %v5738 = vor.u32 %v5736, %v5737
    %v5739 = vsub.s32 4294967266, %v5734
    %v5740 = vadd.s32 %v5739, 127
    %v5741 = vshll.u32 %v5740, 23
    %v5742 = vor.u32 4788187, %v5741
    %v5743 = vand.u32 2147483647, %v5742
    %v5745 = vcvt.s32.f32 %v5738
    %v5746 = vmul.f32 %v5745, %v5743
    %v5747 = vxor.u32 %v5746, 2147483648
    %v5748 = vsel %vm5665, %v5747, %v5746
    %v5749 = vsub.s32 4, %v5725
    %v5750 = vsel %vm5665, %v5749, %v5725
    %v5751 = vsel %vm5664, %v669, %v5748
    %v5752 = vsel %vm5664, 0, %v5750
    %v5753 = vcosq.f32.pop %v5751
    %v5754 = vsinq.f32.pop %v5751
    %vm5755 = vweird.f32 %v669
    %v5756 = vadd.s32 %v5752, 3
    %v5757 = vand.u32 %v5756, 3
    %vm5758 = vcmp.lt.s32.totalorder %v5757, 2
    %vm5759 = vcmp.eq.s32.totalorder %v5757, 0
    %v5760 = vxor.u32 %v5754, 2147483648
    %v5761 = vsel %vm5759, %v5753, %v5760
    %vm5762 = vcmp.eq.s32.totalorder %v5757, 2
    %v5763 = vxor.u32 %v5753, 2147483648
    %v5764 = vsel %vm5762, %v5763, %v5754
    %v5765 = vsel %vm5758, %v5761, %v5764
    %v5766 = vsel %vm5755, nan, %v5765
    %v5767 = vand.u32 2147483647, %v670
    %vm5768 = vcmp.le.f32.partialorder %v5767, 0.7853982
    %vm5769 = vcmp.lt.s32.totalorder %v670, 0
    %v5770 = vand.u32 %v670, 2139095040
    %v5771 = vshrl.u32 %v5770, 23
    %v5772 = vsub.s32 %v5771, 127
    %v5773 = vand.u32 2147483647, %v670
    %v5774 = vand.u32 %v5773, 8388607
    %v5775 = vor.u32 %v5774, 8388608
    %v5776 = vsub.s32 0, %v5775
    %v5777 = vadd.s32 %v5772, 1
    %vm5778 = vcmp.gt.s32.totalorder %v5777, 0
    %v5779 = vsel %vm5778, %v5777, 0
    %v5780 = vshrl.u32 %v5779, 5
    %v5781 = vand.u32 %v5779, 31
    %v5782 = vsub.s32 32, %v5781
    %v5783 = vshrl.u32 683565275, %v5782
    %v5784 = vshll.u32 683565275, %v5781
    %v5785 = vshrl.u32 2475754826, %v5782
    %v5786 = vor.u32 %v5784, %v5785
    %v5787 = vshll.u32 2475754826, %v5781
    %v5788 = vshrl.u32 2131351028, %v5782
    %v5789 = vor.u32 %v5787, %v5788
    %v5790 = vshll.u32 2131351028, %v5781
    %v5791 = vshrl.u32 2102212464, %v5782
    %v5792 = vor.u32 %v5790, %v5791
    %v5793 = vshll.u32 2102212464, %v5781
    %v5794 = vshrl.u32 920167782, %v5782
    %v5795 = vor.u32 %v5793, %v5794
    %v5796 = vshll.u32 920167782, %v5781
    %v5797 = vshrl.u32 1326507024, %v5782
    %v5798 = vor.u32 %v5796, %v5797
    %vm5799 = vcmp.lt.s32.totalorder %v5780, 1
    %vm5800 = vcmp.lt.s32.totalorder %v5780, 2
    %vm5801 = vcmp.lt.s32.totalorder %v5780, 3
    %vm5802 = vcmp.lt.s32.totalorder %v5780, 4
    %v5803 = vsel %vm5799, %v5783, %v5786
    %v5804 = vsel %vm5802, %v5792, 2102212464
    %v5805 = vsel %vm5801, %v5789, %v5804
    %v5806 = vsel %vm5800, %v5803, %v5805
    %v5807 = vsel %vm5799, %v5786, %v5789
    %v5808 = vsel %vm5802, %v5795, 920167782
    %v5809 = vsel %vm5801, %v5792, %v5808
    %v5810 = vsel %vm5800, %v5807, %v5809
    %v5811 = vsel %vm5799, %v5789, %v5792
    %v5812 = vsel %vm5802, %v5798, 1326507024
    %v5813 = vsel %vm5801, %v5795, %v5812
    %v5814 = vsel %vm5800, %v5811, %v5813
    %v5815 = vshll.u32 %v5775, 8
    %v5816 = vmul.u32.u64.compose %v5815, %v5814
    %v5817 = vextract.low.u32 %v5816
    %v5818 = vextract.high.u32 %v5816
    %v5819 = vmul.u32.u64.compose %v5815, %v5810
    %v5820 = vextract.low.u32 %v5819
    %v5821 = vextract.high.u32 %v5819
    %v5822 = vmul.u32 %v5815, %v5806
    %v5823 = vadd.s32 %v5818, %v5820
    %vm5824 = vc.u32 %v5818, %v5820
    %v5825 = vadd.s32 %v5821, 1
    %v5826 = vsel %vm5824, %v5825, %v5821
    %v5827 = vadd.s32 %v5822, %v5826
    %v5828 = vadd.s32 %v5827, 536870912
    %v5829 = vshrl.u32 %v5828, 30
    %v5830 = vshll.u32 %v5829, 30
    %v5831 = vsub.s32 %v5827, %v5830
    %vm5832 = vcmp.lt.s32.totalorder %v5831, 0
    %v5833 = vsub.s32 0, %v5831
    %v5834 = vsel %vm5832, %v5833, %v5831
    %v5835 = vclz %v5834
    %v5836 = vsub.s32 %v5835, 2
    %vm5837 = vcmp.gt.s32.totalorder 0, %v5836
    %v5838 = vsel %vm5837, 0, %v5836
    %v5839 = vsub.s32 32, %v5838
    %v5840 = vshll.u32 %v5831, %v5838
    %v5841 = vshrl.u32 %v5823, %v5839
    %v5842 = vor.u32 %v5840, %v5841
    %v5843 = vsub.s32 4294967266, %v5838
    %v5844 = vadd.s32 %v5843, 127
    %v5845 = vshll.u32 %v5844, 23
    %v5846 = vor.u32 4788187, %v5845
    %v5847 = vand.u32 2147483647, %v5846
    %v5849 = vcvt.s32.f32 %v5842
    %v5850 = vmul.f32 %v5849, %v5847
    %v5851 = vxor.u32 %v5850, 2147483648
    %v5852 = vsel %vm5769, %v5851, %v5850
    %v5853 = vsub.s32 4, %v5829
    %v5854 = vsel %vm5769, %v5853, %v5829
    %v5855 = vsel %vm5768, %v670, %v5852
    %v5856 = vsel %vm5768, 0, %v5854
    %v5857 = vcosq.f32.pop %v5855
    %v5858 = vsinq.f32.pop %v5855
    %vm5859 = vweird.f32 %v670
    %v5860 = vadd.s32 %v5856, 3
    %v5861 = vand.u32 %v5860, 3
    %vm5862 = vcmp.lt.s32.totalorder %v5861, 2
    %vm5863 = vcmp.eq.s32.totalorder %v5861, 0
    %v5864 = vxor.u32 %v5858, 2147483648
    %v5865 = vsel %vm5863, %v5857, %v5864
    %vm5866 = vcmp.eq.s32.totalorder %v5861, 2
    %v5867 = vxor.u32 %v5857, 2147483648
    %v5868 = vsel %vm5866, %v5867, %v5858
    %v5869 = vsel %vm5862, %v5865, %v5868
    %v5870 = vsel %vm5859, nan, %v5869
    %vm5871 = vcmask 523264
    %5872 = vst.msk [vmem:[#allocation2] sm:$0xff] %vm5871, %v774
    %5873 = vst.msk [vmem:[#allocation2 + $0x8] sm:$0xff] %vm5871, %v878
    %5874 = vst.msk [vmem:[#allocation2 + $0x10] sm:$0xff] %vm5871, %v982
    %5875 = vst.msk [vmem:[#allocation2 + $0x18] sm:$0xff] %vm5871, %v1086
    %5876 = vst.msk [vmem:[#allocation2 + $0x20] sm:$0xff] %vm5871, %v1190
    %5877 = vst.msk [vmem:[#allocation2 + $0x28] sm:$0xff] %vm5871, %v1294
    %5878 = vst.msk [vmem:[#allocation2 + $0x30] sm:$0xff] %vm5871, %v1398
    %5879 = vst.msk [vmem:[#allocation2 + $0x38] sm:$0xff] %vm5871, %v1502
    %5880 = vst.msk [vmem:[#allocation2 + $0x40] sm:$0xff] %vm5871, %v1606
    %5881 = vst.msk [vmem:[#allocation2 + $0x48] sm:$0xff] %vm5871, %v1710
    %5882 = vst.msk [vmem:[#allocation2 + $0x50] sm:$0xff] %vm5871, %v1814
    %5883 = vst.msk [vmem:[#allocation2 + $0x58] sm:$0xff] %vm5871, %v1918
    %5884 = vst.msk [vmem:[#allocation2 + $0x60] sm:$0xff] %vm5871, %v2022
    %5885 = vst.msk [vmem:[#allocation2 + $0x68] sm:$0xff] %vm5871, %v2126
    %5886 = vst.msk [vmem:[#allocation2 + $0x70] sm:$0xff] %vm5871, %v2230
    %5887 = vst.msk [vmem:[#allocation2 + $0x78] sm:$0xff] %vm5871, %v2334
    %5888 = vst.msk [vmem:[#allocation2 + $0x80] sm:$0xff] %vm5871, %v2438
    %5889 = vst.msk [vmem:[#allocation2 + $0x88] sm:$0xff] %vm5871, %v2542
    %5890 = vst.msk [vmem:[#allocation2 + $0x90] sm:$0xff] %vm5871, %v2646
    %5891 = vst.msk [vmem:[#allocation2 + $0x98] sm:$0xff] %vm5871, %v2750
    %5892 = vst.msk [vmem:[#allocation2 + $0xa0] sm:$0xff] %vm5871, %v2854
    %5893 = vst.msk [vmem:[#allocation2 + $0xa8] sm:$0xff] %vm5871, %v2958
    %5894 = vst.msk [vmem:[#allocation2 + $0xb0] sm:$0xff] %vm5871, %v3062
    %5895 = vst.msk [vmem:[#allocation2 + $0xb8] sm:$0xff] %vm5871, %v3166
    %5896 = vst.msk [vmem:[#allocation2 + $0xc0] sm:$0xff] %vm5871, %v3270
    %5897 = vst.msk [vmem:[#allocation2 + $0xc8] sm:$0xff] %vm5871, %v3374
    %5898 = vst.msk [vmem:[#allocation2 + $0xd0] sm:$0xff] %vm5871, %v3478
    %5899 = vst.msk [vmem:[#allocation2 + $0xd8] sm:$0xff] %vm5871, %v3582
    %5900 = vst.msk [vmem:[#allocation2 + $0xe0] sm:$0xff] %vm5871, %v3686
    %5901 = vst.msk [vmem:[#allocation2 + $0xe8] sm:$0xff] %vm5871, %v3790
    %5902 = vst.msk [vmem:[#allocation2 + $0xf0] sm:$0xff] %vm5871, %v3894
    %5903 = vst.msk [vmem:[#allocation2 + $0xf8] sm:$0xff] %vm5871, %v3998
    %5904 = vst.msk [vmem:[#allocation2 + $0x100] sm:$0xff] %vm5871, %v4102
    %5905 = vst.msk [vmem:[#allocation2 + $0x108] sm:$0xff] %vm5871, %v4206
    %5906 = vst.msk [vmem:[#allocation2 + $0x110] sm:$0xff] %vm5871, %v4310
    %5907 = vst.msk [vmem:[#allocation2 + $0x118] sm:$0xff] %vm5871, %v4414
    %5908 = vst.msk [vmem:[#allocation2 + $0x120] sm:$0xff] %vm5871, %v4518
    %5909 = vst.msk [vmem:[#allocation2 + $0x128] sm:$0xff] %vm5871, %v4622
    %5910 = vst.msk [vmem:[#allocation2 + $0x130] sm:$0xff] %vm5871, %v4726
    %5911 = vst.msk [vmem:[#allocation2 + $0x138] sm:$0xff] %vm5871, %v4830
    %5912 = vst.msk [vmem:[#allocation2 + $0x140] sm:$0xff] %vm5871, %v4934
    %5913 = vst.msk [vmem:[#allocation2 + $0x148] sm:$0xff] %vm5871, %v5038
    %5914 = vst.msk [vmem:[#allocation2 + $0x150] sm:$0xff] %vm5871, %v5142
    %5915 = vst.msk [vmem:[#allocation2 + $0x158] sm:$0xff] %vm5871, %v5246
    %5916 = vst.msk [vmem:[#allocation2 + $0x160] sm:$0xff] %vm5871, %v5350
    %5917 = vst.msk [vmem:[#allocation2 + $0x168] sm:$0xff] %vm5871, %v5454
    %5918 = vst.msk [vmem:[#allocation2 + $0x170] sm:$0xff] %vm5871, %v5558
    %5919 = vst.msk [vmem:[#allocation2 + $0x178] sm:$0xff] %vm5871, %v5662
    %5920 = vst.msk [vmem:[#allocation2 + $0x180] sm:$0xff] %vm5871, %v5766
    %5921 = vst.msk [vmem:[#allocation2 + $0x188] sm:$0xff] %vm5871, %v5870
    %v5922 = vand.u32 2147483647, %v621
    %vm5923 = vcmp.le.f32.partialorder %v5922, 0.7853982
    %vm5924 = vcmp.lt.s32.totalorder %v621, 0
    %v5925 = vand.u32 %v621, 2139095040
    %v5926 = vshrl.u32 %v5925, 23
    %v5927 = vsub.s32 %v5926, 127
    %v5928 = vand.u32 2147483647, %v621
    %v5929 = vand.u32 %v5928, 8388607
    %v5930 = vor.u32 %v5929, 8388608
    %v5931 = vsub.s32 0, %v5930
    %v5932 = vadd.s32 %v5927, 1
    %vm5933 = vcmp.gt.s32.totalorder %v5932, 0
    %v5934 = vsel %vm5933, %v5932, 0
    %v5935 = vshrl.u32 %v5934, 5
    %v5936 = vand.u32 %v5934, 31
    %v5937 = vsub.s32 32, %v5936
    %v5938 = vshrl.u32 683565275, %v5937
    %v5939 = vshll.u32 683565275, %v5936
    %v5940 = vshrl.u32 2475754826, %v5937
    %v5941 = vor.u32 %v5939, %v5940
    %v5942 = vshll.u32 2475754826, %v5936
    %v5943 = vshrl.u32 2131351028, %v5937
    %v5944 = vor.u32 %v5942, %v5943
    %v5945 = vshll.u32 2131351028, %v5936
    %v5946 = vshrl.u32 2102212464, %v5937
    %v5947 = vor.u32 %v5945, %v5946
    %v5948 = vshll.u32 2102212464, %v5936
    %v5949 = vshrl.u32 920167782, %v5937
    %v5950 = vor.u32 %v5948, %v5949
    %v5951 = vshll.u32 920167782, %v5936
    %v5952 = vshrl.u32 1326507024, %v5937
    %v5953 = vor.u32 %v5951, %v5952
    %vm5954 = vcmp.lt.s32.totalorder %v5935, 1
    %vm5955 = vcmp.lt.s32.totalorder %v5935, 2
    %vm5956 = vcmp.lt.s32.totalorder %v5935, 3
    %vm5957 = vcmp.lt.s32.totalorder %v5935, 4
    %v5958 = vsel %vm5954, %v5938, %v5941
    %v5959 = vsel %vm5957, %v5947, 2102212464
    %v5960 = vsel %vm5956, %v5944, %v5959
    %v5961 = vsel %vm5955, %v5958, %v5960
    %v5962 = vsel %vm5954, %v5941, %v5944
    %v5963 = vsel %vm5957, %v5950, 920167782
    %v5964 = vsel %vm5956, %v5947, %v5963
    %v5965 = vsel %vm5955, %v5962, %v5964
    %v5966 = vsel %vm5954, %v5944, %v5947
    %v5967 = vsel %vm5957, %v5953, 1326507024
    %v5968 = vsel %vm5956, %v5950, %v5967
    %v5969 = vsel %vm5955, %v5966, %v5968
    %v5970 = vshll.u32 %v5930, 8
    %v5971 = vmul.u32.u64.compose %v5970, %v5969
    %v5972 = vextract.low.u32 %v5971
    %v5973 = vextract.high.u32 %v5971
    %v5974 = vmul.u32.u64.compose %v5970, %v5965
    %v5975 = vextract.low.u32 %v5974
    %v5976 = vextract.high.u32 %v5974
    %v5977 = vmul.u32 %v5970, %v5961
    %v5978 = vadd.s32 %v5973, %v5975
    %vm5979 = vc.u32 %v5973, %v5975
    %v5980 = vadd.s32 %v5976, 1
    %v5981 = vsel %vm5979, %v5980, %v5976
    %v5982 = vadd.s32 %v5977, %v5981
    %v5983 = vadd.s32 %v5982, 536870912
    %v5984 = vshrl.u32 %v5983, 30
    %v5985 = vshll.u32 %v5984, 30
    %v5986 = vsub.s32 %v5982, %v5985
    %vm5987 = vcmp.lt.s32.totalorder %v5986, 0
    %v5988 = vsub.s32 0, %v5986
    %v5989 = vsel %vm5987, %v5988, %v5986
    %v5990 = vclz %v5989
    %v5991 = vsub.s32 %v5990, 2
    %vm5992 = vcmp.gt.s32.totalorder 0, %v5991
    %v5993 = vsel %vm5992, 0, %v5991
    %v5994 = vsub.s32 32, %v5993
    %v5995 = vshll.u32 %v5986, %v5993
    %v5996 = vshrl.u32 %v5978, %v5994
    %v5997 = vor.u32 %v5995, %v5996
    %v5998 = vsub.s32 4294967266, %v5993
    %v5999 = vadd.s32 %v5998, 127
    %v6000 = vshll.u32 %v5999, 23
    %v6001 = vor.u32 4788187, %v6000
    %v6002 = vand.u32 2147483647, %v6001
    %v6004 = vcvt.s32.f32 %v5997
    %v6005 = vmul.f32 %v6004, %v6002
    %v6006 = vxor.u32 %v6005, 2147483648
    %v6007 = vsel %vm5924, %v6006, %v6005
    %v6008 = vsub.s32 4, %v5984
    %v6009 = vsel %vm5924, %v6008, %v5984
    %v6010 = vsel %vm5923, %v621, %v6007
    %v6011 = vsel %vm5923, 0, %v6009
    %v6012 = vcosq.f32.pop %v6010
    %v6013 = vsinq.f32.pop %v6010
    %vm6014 = vweird.f32 %v621
    %v6015 = vand.u32 %v6011, 3
    %vm6016 = vcmp.lt.s32.totalorder %v6015, 2
    %vm6017 = vcmp.eq.s32.totalorder %v6015, 0
    %v6018 = vxor.u32 %v6013, 2147483648
    %v6019 = vsel %vm6017, %v6012, %v6018
    %vm6020 = vcmp.eq.s32.totalorder %v6015, 2
    %v6021 = vxor.u32 %v6012, 2147483648
    %v6022 = vsel %vm6020, %v6021, %v6013
    %v6023 = vsel %vm6016, %v6019, %v6022
    %v6024 = vsel %vm6014, nan, %v6023
    %v6025 = vand.u32 2147483647, %v622
    %vm6026 = vcmp.le.f32.partialorder %v6025, 0.7853982
    %vm6027 = vcmp.lt.s32.totalorder %v622, 0
    %v6028 = vand.u32 %v622, 2139095040
    %v6029 = vshrl.u32 %v6028, 23
    %v6030 = vsub.s32 %v6029, 127
    %v6031 = vand.u32 2147483647, %v622
    %v6032 = vand.u32 %v6031, 8388607
    %v6033 = vor.u32 %v6032, 8388608
    %v6034 = vsub.s32 0, %v6033
    %v6035 = vadd.s32 %v6030, 1
    %vm6036 = vcmp.gt.s32.totalorder %v6035, 0
    %v6037 = vsel %vm6036, %v6035, 0
    %v6038 = vshrl.u32 %v6037, 5
    %v6039 = vand.u32 %v6037, 31
    %v6040 = vsub.s32 32, %v6039
    %v6041 = vshrl.u32 683565275, %v6040
    %v6042 = vshll.u32 683565275, %v6039
    %v6043 = vshrl.u32 2475754826, %v6040
    %v6044 = vor.u32 %v6042, %v6043
    %v6045 = vshll.u32 2475754826, %v6039
    %v6046 = vshrl.u32 2131351028, %v6040
    %v6047 = vor.u32 %v6045, %v6046
    %v6048 = vshll.u32 2131351028, %v6039
    %v6049 = vshrl.u32 2102212464, %v6040
    %v6050 = vor.u32 %v6048, %v6049
    %v6051 = vshll.u32 2102212464, %v6039
    %v6052 = vshrl.u32 920167782, %v6040
    %v6053 = vor.u32 %v6051, %v6052
    %v6054 = vshll.u32 920167782, %v6039
    %v6055 = vshrl.u32 1326507024, %v6040
    %v6056 = vor.u32 %v6054, %v6055
    %vm6057 = vcmp.lt.s32.totalorder %v6038, 1
    %vm6058 = vcmp.lt.s32.totalorder %v6038, 2
    %vm6059 = vcmp.lt.s32.totalorder %v6038, 3
    %vm6060 = vcmp.lt.s32.totalorder %v6038, 4
    %v6061 = vsel %vm6057, %v6041, %v6044
    %v6062 = vsel %vm6060, %v6050, 2102212464
    %v6063 = vsel %vm6059, %v6047, %v6062
    %v6064 = vsel %vm6058, %v6061, %v6063
    %v6065 = vsel %vm6057, %v6044, %v6047
    %v6066 = vsel %vm6060, %v6053, 920167782
    %v6067 = vsel %vm6059, %v6050, %v6066
    %v6068 = vsel %vm6058, %v6065, %v6067
    %v6069 = vsel %vm6057, %v6047, %v6050
    %v6070 = vsel %vm6060, %v6056, 1326507024
    %v6071 = vsel %vm6059, %v6053, %v6070
    %v6072 = vsel %vm6058, %v6069, %v6071
    %v6073 = vshll.u32 %v6033, 8
    %v6074 = vmul.u32.u64.compose %v6073, %v6072
    %v6075 = vextract.low.u32 %v6074
    %v6076 = vextract.high.u32 %v6074
    %v6077 = vmul.u32.u64.compose %v6073, %v6068
    %v6078 = vextract.low.u32 %v6077
    %v6079 = vextract.high.u32 %v6077
    %v6080 = vmul.u32 %v6073, %v6064
    %v6081 = vadd.s32 %v6076, %v6078
    %vm6082 = vc.u32 %v6076, %v6078
    %v6083 = vadd.s32 %v6079, 1
    %v6084 = vsel %vm6082, %v6083, %v6079
    %v6085 = vadd.s32 %v6080, %v6084
    %v6086 = vadd.s32 %v6085, 536870912
    %v6087 = vshrl.u32 %v6086, 30
    %v6088 = vshll.u32 %v6087, 30
    %v6089 = vsub.s32 %v6085, %v6088
    %vm6090 = vcmp.lt.s32.totalorder %v6089, 0
    %v6091 = vsub.s32 0, %v6089
    %v6092 = vsel %vm6090, %v6091, %v6089
    %v6093 = vclz %v6092
    %v6094 = vsub.s32 %v6093, 2
    %vm6095 = vcmp.gt.s32.totalorder 0, %v6094
    %v6096 = vsel %vm6095, 0, %v6094
    %v6097 = vsub.s32 32, %v6096
    %v6098 = vshll.u32 %v6089, %v6096
    %v6099 = vshrl.u32 %v6081, %v6097
    %v6100 = vor.u32 %v6098, %v6099
    %v6101 = vsub.s32 4294967266, %v6096
    %v6102 = vadd.s32 %v6101, 127
    %v6103 = vshll.u32 %v6102, 23
    %v6104 = vor.u32 4788187, %v6103
    %v6105 = vand.u32 2147483647, %v6104
    %v6107 = vcvt.s32.f32 %v6100
    %v6108 = vmul.f32 %v6107, %v6105
    %v6109 = vxor.u32 %v6108, 2147483648
    %v6110 = vsel %vm6027, %v6109, %v6108
    %v6111 = vsub.s32 4, %v6087
    %v6112 = vsel %vm6027, %v6111, %v6087
    %v6113 = vsel %vm6026, %v622, %v6110
    %v6114 = vsel %vm6026, 0, %v6112
    %v6115 = vcosq.f32.pop %v6113
    %v6116 = vsinq.f32.pop %v6113
    %vm6117 = vweird.f32 %v622
    %v6118 = vand.u32 %v6114, 3
    %vm6119 = vcmp.lt.s32.totalorder %v6118, 2
    %vm6120 = vcmp.eq.s32.totalorder %v6118, 0
    %v6121 = vxor.u32 %v6116, 2147483648
    %v6122 = vsel %vm6120, %v6115, %v6121
    %vm6123 = vcmp.eq.s32.totalorder %v6118, 2
    %v6124 = vxor.u32 %v6115, 2147483648
    %v6125 = vsel %vm6123, %v6124, %v6116
    %v6126 = vsel %vm6119, %v6122, %v6125
    %v6127 = vsel %vm6117, nan, %v6126
    %v6128 = vand.u32 2147483647, %v623
    %vm6129 = vcmp.le.f32.partialorder %v6128, 0.7853982
    %vm6130 = vcmp.lt.s32.totalorder %v623, 0
    %v6131 = vand.u32 %v623, 2139095040
    %v6132 = vshrl.u32 %v6131, 23
    %v6133 = vsub.s32 %v6132, 127
    %v6134 = vand.u32 2147483647, %v623
    %v6135 = vand.u32 %v6134, 8388607
    %v6136 = vor.u32 %v6135, 8388608
    %v6137 = vsub.s32 0, %v6136
    %v6138 = vadd.s32 %v6133, 1
    %vm6139 = vcmp.gt.s32.totalorder %v6138, 0
    %v6140 = vsel %vm6139, %v6138, 0
    %v6141 = vshrl.u32 %v6140, 5
    %v6142 = vand.u32 %v6140, 31
    %v6143 = vsub.s32 32, %v6142
    %v6144 = vshrl.u32 683565275, %v6143
    %v6145 = vshll.u32 683565275, %v6142
    %v6146 = vshrl.u32 2475754826, %v6143
    %v6147 = vor.u32 %v6145, %v6146
    %v6148 = vshll.u32 2475754826, %v6142
    %v6149 = vshrl.u32 2131351028, %v6143
    %v6150 = vor.u32 %v6148, %v6149
    %v6151 = vshll.u32 2131351028, %v6142
    %v6152 = vshrl.u32 2102212464, %v6143
    %v6153 = vor.u32 %v6151, %v6152
    %v6154 = vshll.u32 2102212464, %v6142
    %v6155 = vshrl.u32 920167782, %v6143
    %v6156 = vor.u32 %v6154, %v6155
    %v6157 = vshll.u32 920167782, %v6142
    %v6158 = vshrl.u32 1326507024, %v6143
    %v6159 = vor.u32 %v6157, %v6158
    %vm6160 = vcmp.lt.s32.totalorder %v6141, 1
    %vm6161 = vcmp.lt.s32.totalorder %v6141, 2
    %vm6162 = vcmp.lt.s32.totalorder %v6141, 3
    %vm6163 = vcmp.lt.s32.totalorder %v6141, 4
    %v6164 = vsel %vm6160, %v6144, %v6147
    %v6165 = vsel %vm6163, %v6153, 2102212464
    %v6166 = vsel %vm6162, %v6150, %v6165
    %v6167 = vsel %vm6161, %v6164, %v6166
    %v6168 = vsel %vm6160, %v6147, %v6150
    %v6169 = vsel %vm6163, %v6156, 920167782
    %v6170 = vsel %vm6162, %v6153, %v6169
    %v6171 = vsel %vm6161, %v6168, %v6170
    %v6172 = vsel %vm6160, %v6150, %v6153
    %v6173 = vsel %vm6163, %v6159, 1326507024
    %v6174 = vsel %vm6162, %v6156, %v6173
    %v6175 = vsel %vm6161, %v6172, %v6174
    %v6176 = vshll.u32 %v6136, 8
    %v6177 = vmul.u32.u64.compose %v6176, %v6175
    %v6178 = vextract.low.u32 %v6177
    %v6179 = vextract.high.u32 %v6177
    %v6180 = vmul.u32.u64.compose %v6176, %v6171
    %v6181 = vextract.low.u32 %v6180
    %v6182 = vextract.high.u32 %v6180
    %v6183 = vmul.u32 %v6176, %v6167
    %v6184 = vadd.s32 %v6179, %v6181
    %vm6185 = vc.u32 %v6179, %v6181
    %v6186 = vadd.s32 %v6182, 1
    %v6187 = vsel %vm6185, %v6186, %v6182
    %v6188 = vadd.s32 %v6183, %v6187
    %v6189 = vadd.s32 %v6188, 536870912
    %v6190 = vshrl.u32 %v6189, 30
    %v6191 = vshll.u32 %v6190, 30
    %v6192 = vsub.s32 %v6188, %v6191
    %vm6193 = vcmp.lt.s32.totalorder %v6192, 0
    %v6194 = vsub.s32 0, %v6192
    %v6195 = vsel %vm6193, %v6194, %v6192
    %v6196 = vclz %v6195
    %v6197 = vsub.s32 %v6196, 2
    %vm6198 = vcmp.gt.s32.totalorder 0, %v6197
    %v6199 = vsel %vm6198, 0, %v6197
    %v6200 = vsub.s32 32, %v6199
    %v6201 = vshll.u32 %v6192, %v6199
    %v6202 = vshrl.u32 %v6184, %v6200
    %v6203 = vor.u32 %v6201, %v6202
    %v6204 = vsub.s32 4294967266, %v6199
    %v6205 = vadd.s32 %v6204, 127
    %v6206 = vshll.u32 %v6205, 23
    %v6207 = vor.u32 4788187, %v6206
    %v6208 = vand.u32 2147483647, %v6207
    %v6210 = vcvt.s32.f32 %v6203
    %v6211 = vmul.f32 %v6210, %v6208
    %v6212 = vxor.u32 %v6211, 2147483648
    %v6213 = vsel %vm6130, %v6212, %v6211
    %v6214 = vsub.s32 4, %v6190
    %v6215 = vsel %vm6130, %v6214, %v6190
    %v6216 = vsel %vm6129, %v623, %v6213
    %v6217 = vsel %vm6129, 0, %v6215
    %v6218 = vcosq.f32.pop %v6216
    %v6219 = vsinq.f32.pop %v6216
    %vm6220 = vweird.f32 %v623
    %v6221 = vand.u32 %v6217, 3
    %vm6222 = vcmp.lt.s32.totalorder %v6221, 2
    %vm6223 = vcmp.eq.s32.totalorder %v6221, 0
    %v6224 = vxor.u32 %v6219, 2147483648
    %v6225 = vsel %vm6223, %v6218, %v6224
    %vm6226 = vcmp.eq.s32.totalorder %v6221, 2
    %v6227 = vxor.u32 %v6218, 2147483648
    %v6228 = vsel %vm6226, %v6227, %v6219
    %v6229 = vsel %vm6222, %v6225, %v6228
    %v6230 = vsel %vm6220, nan, %v6229
    %v6231 = vand.u32 2147483647, %v624
    %vm6232 = vcmp.le.f32.partialorder %v6231, 0.7853982
    %vm6233 = vcmp.lt.s32.totalorder %v624, 0
    %v6234 = vand.u32 %v624, 2139095040
    %v6235 = vshrl.u32 %v6234, 23
    %v6236 = vsub.s32 %v6235, 127
    %v6237 = vand.u32 2147483647, %v624
    %v6238 = vand.u32 %v6237, 8388607
    %v6239 = vor.u32 %v6238, 8388608
    %v6240 = vsub.s32 0, %v6239
    %v6241 = vadd.s32 %v6236, 1
    %vm6242 = vcmp.gt.s32.totalorder %v6241, 0
    %v6243 = vsel %vm6242, %v6241, 0
    %v6244 = vshrl.u32 %v6243, 5
    %v6245 = vand.u32 %v6243, 31
    %v6246 = vsub.s32 32, %v6245
    %v6247 = vshrl.u32 683565275, %v6246
    %v6248 = vshll.u32 683565275, %v6245
    %v6249 = vshrl.u32 2475754826, %v6246
    %v6250 = vor.u32 %v6248, %v6249
    %v6251 = vshll.u32 2475754826, %v6245
    %v6252 = vshrl.u32 2131351028, %v6246
    %v6253 = vor.u32 %v6251, %v6252
    %v6254 = vshll.u32 2131351028, %v6245
    %v6255 = vshrl.u32 2102212464, %v6246
    %v6256 = vor.u32 %v6254, %v6255
    %v6257 = vshll.u32 2102212464, %v6245
    %v6258 = vshrl.u32 920167782, %v6246
    %v6259 = vor.u32 %v6257, %v6258
    %v6260 = vshll.u32 920167782, %v6245
    %v6261 = vshrl.u32 1326507024, %v6246
    %v6262 = vor.u32 %v6260, %v6261
    %vm6263 = vcmp.lt.s32.totalorder %v6244, 1
    %vm6264 = vcmp.lt.s32.totalorder %v6244, 2
    %vm6265 = vcmp.lt.s32.totalorder %v6244, 3
    %vm6266 = vcmp.lt.s32.totalorder %v6244, 4
    %v6267 = vsel %vm6263, %v6247, %v6250
    %v6268 = vsel %vm6266, %v6256, 2102212464
    %v6269 = vsel %vm6265, %v6253, %v6268
    %v6270 = vsel %vm6264, %v6267, %v6269
    %v6271 = vsel %vm6263, %v6250, %v6253
    %v6272 = vsel %vm6266, %v6259, 920167782
    %v6273 = vsel %vm6265, %v6256, %v6272
    %v6274 = vsel %vm6264, %v6271, %v6273
    %v6275 = vsel %vm6263, %v6253, %v6256
    %v6276 = vsel %vm6266, %v6262, 1326507024
    %v6277 = vsel %vm6265, %v6259, %v6276
    %v6278 = vsel %vm6264, %v6275, %v6277
    %v6279 = vshll.u32 %v6239, 8
    %v6280 = vmul.u32.u64.compose %v6279, %v6278
    %v6281 = vextract.low.u32 %v6280
    %v6282 = vextract.high.u32 %v6280
    %v6283 = vmul.u32.u64.compose %v6279, %v6274
    %v6284 = vextract.low.u32 %v6283
    %v6285 = vextract.high.u32 %v6283
    %v6286 = vmul.u32 %v6279, %v6270
    %v6287 = vadd.s32 %v6282, %v6284
    %vm6288 = vc.u32 %v6282, %v6284
    %v6289 = vadd.s32 %v6285, 1
    %v6290 = vsel %vm6288, %v6289, %v6285
    %v6291 = vadd.s32 %v6286, %v6290
    %v6292 = vadd.s32 %v6291, 536870912
    %v6293 = vshrl.u32 %v6292, 30
    %v6294 = vshll.u32 %v6293, 30
    %v6295 = vsub.s32 %v6291, %v6294
    %vm6296 = vcmp.lt.s32.totalorder %v6295, 0
    %v6297 = vsub.s32 0, %v6295
    %v6298 = vsel %vm6296, %v6297, %v6295
    %v6299 = vclz %v6298
    %v6300 = vsub.s32 %v6299, 2
    %vm6301 = vcmp.gt.s32.totalorder 0, %v6300
    %v6302 = vsel %vm6301, 0, %v6300
    %v6303 = vsub.s32 32, %v6302
    %v6304 = vshll.u32 %v6295, %v6302
    %v6305 = vshrl.u32 %v6287, %v6303
    %v6306 = vor.u32 %v6304, %v6305
    %v6307 = vsub.s32 4294967266, %v6302
    %v6308 = vadd.s32 %v6307, 127
    %v6309 = vshll.u32 %v6308, 23
    %v6310 = vor.u32 4788187, %v6309
    %v6311 = vand.u32 2147483647, %v6310
    %v6313 = vcvt.s32.f32 %v6306
    %v6314 = vmul.f32 %v6313, %v6311
    %v6315 = vxor.u32 %v6314, 2147483648
    %v6316 = vsel %vm6233, %v6315, %v6314
    %v6317 = vsub.s32 4, %v6293
    %v6318 = vsel %vm6233, %v6317, %v6293
    %v6319 = vsel %vm6232, %v624, %v6316
    %v6320 = vsel %vm6232, 0, %v6318
    %v6321 = vcosq.f32.pop %v6319
    %v6322 = vsinq.f32.pop %v6319
    %vm6323 = vweird.f32 %v624
    %v6324 = vand.u32 %v6320, 3
    %vm6325 = vcmp.lt.s32.totalorder %v6324, 2
    %vm6326 = vcmp.eq.s32.totalorder %v6324, 0
    %v6327 = vxor.u32 %v6322, 2147483648
    %v6328 = vsel %vm6326, %v6321, %v6327
    %vm6329 = vcmp.eq.s32.totalorder %v6324, 2
    %v6330 = vxor.u32 %v6321, 2147483648
    %v6331 = vsel %vm6329, %v6330, %v6322
    %v6332 = vsel %vm6325, %v6328, %v6331
    %v6333 = vsel %vm6323, nan, %v6332
    %v6334 = vand.u32 2147483647, %v625
    %vm6335 = vcmp.le.f32.partialorder %v6334, 0.7853982
    %vm6336 = vcmp.lt.s32.totalorder %v625, 0
    %v6337 = vand.u32 %v625, 2139095040
    %v6338 = vshrl.u32 %v6337, 23
    %v6339 = vsub.s32 %v6338, 127
    %v6340 = vand.u32 2147483647, %v625
    %v6341 = vand.u32 %v6340, 8388607
    %v6342 = vor.u32 %v6341, 8388608
    %v6343 = vsub.s32 0, %v6342
    %v6344 = vadd.s32 %v6339, 1
    %vm6345 = vcmp.gt.s32.totalorder %v6344, 0
    %v6346 = vsel %vm6345, %v6344, 0
    %v6347 = vshrl.u32 %v6346, 5
    %v6348 = vand.u32 %v6346, 31
    %v6349 = vsub.s32 32, %v6348
    %v6350 = vshrl.u32 683565275, %v6349
    %v6351 = vshll.u32 683565275, %v6348
    %v6352 = vshrl.u32 2475754826, %v6349
    %v6353 = vor.u32 %v6351, %v6352
    %v6354 = vshll.u32 2475754826, %v6348
    %v6355 = vshrl.u32 2131351028, %v6349
    %v6356 = vor.u32 %v6354, %v6355
    %v6357 = vshll.u32 2131351028, %v6348
    %v6358 = vshrl.u32 2102212464, %v6349
    %v6359 = vor.u32 %v6357, %v6358
    %v6360 = vshll.u32 2102212464, %v6348
    %v6361 = vshrl.u32 920167782, %v6349
    %v6362 = vor.u32 %v6360, %v6361
    %v6363 = vshll.u32 920167782, %v6348
    %v6364 = vshrl.u32 1326507024, %v6349
    %v6365 = vor.u32 %v6363, %v6364
    %vm6366 = vcmp.lt.s32.totalorder %v6347, 1
    %vm6367 = vcmp.lt.s32.totalorder %v6347, 2
    %vm6368 = vcmp.lt.s32.totalorder %v6347, 3
    %vm6369 = vcmp.lt.s32.totalorder %v6347, 4
    %v6370 = vsel %vm6366, %v6350, %v6353
    %v6371 = vsel %vm6369, %v6359, 2102212464
    %v6372 = vsel %vm6368, %v6356, %v6371
    %v6373 = vsel %vm6367, %v6370, %v6372
    %v6374 = vsel %vm6366, %v6353, %v6356
    %v6375 = vsel %vm6369, %v6362, 920167782
    %v6376 = vsel %vm6368, %v6359, %v6375
    %v6377 = vsel %vm6367, %v6374, %v6376
    %v6378 = vsel %vm6366, %v6356, %v6359
    %v6379 = vsel %vm6369, %v6365, 1326507024
    %v6380 = vsel %vm6368, %v6362, %v6379
    %v6381 = vsel %vm6367, %v6378, %v6380
    %v6382 = vshll.u32 %v6342, 8
    %v6383 = vmul.u32.u64.compose %v6382, %v6381
    %v6384 = vextract.low.u32 %v6383
    %v6385 = vextract.high.u32 %v6383
    %v6386 = vmul.u32.u64.compose %v6382, %v6377
    %v6387 = vextract.low.u32 %v6386
    %v6388 = vextract.high.u32 %v6386
    %v6389 = vmul.u32 %v6382, %v6373
    %v6390 = vadd.s32 %v6385, %v6387
    %vm6391 = vc.u32 %v6385, %v6387
    %v6392 = vadd.s32 %v6388, 1
    %v6393 = vsel %vm6391, %v6392, %v6388
    %v6394 = vadd.s32 %v6389, %v6393
    %v6395 = vadd.s32 %v6394, 536870912
    %v6396 = vshrl.u32 %v6395, 30
    %v6397 = vshll.u32 %v6396, 30
    %v6398 = vsub.s32 %v6394, %v6397
    %vm6399 = vcmp.lt.s32.totalorder %v6398, 0
    %v6400 = vsub.s32 0, %v6398
    %v6401 = vsel %vm6399, %v6400, %v6398
    %v6402 = vclz %v6401
    %v6403 = vsub.s32 %v6402, 2
    %vm6404 = vcmp.gt.s32.totalorder 0, %v6403
    %v6405 = vsel %vm6404, 0, %v6403
    %v6406 = vsub.s32 32, %v6405
    %v6407 = vshll.u32 %v6398, %v6405
    %v6408 = vshrl.u32 %v6390, %v6406
    %v6409 = vor.u32 %v6407, %v6408
    %v6410 = vsub.s32 4294967266, %v6405
    %v6411 = vadd.s32 %v6410, 127
    %v6412 = vshll.u32 %v6411, 23
    %v6413 = vor.u32 4788187, %v6412
    %v6414 = vand.u32 2147483647, %v6413
    %v6416 = vcvt.s32.f32 %v6409
    %v6417 = vmul.f32 %v6416, %v6414
    %v6418 = vxor.u32 %v6417, 2147483648
    %v6419 = vsel %vm6336, %v6418, %v6417
    %v6420 = vsub.s32 4, %v6396
    %v6421 = vsel %vm6336, %v6420, %v6396
    %v6422 = vsel %vm6335, %v625, %v6419
    %v6423 = vsel %vm6335, 0, %v6421
    %v6424 = vcosq.f32.pop %v6422
    %v6425 = vsinq.f32.pop %v6422
    %vm6426 = vweird.f32 %v625
    %v6427 = vand.u32 %v6423, 3
    %vm6428 = vcmp.lt.s32.totalorder %v6427, 2
    %vm6429 = vcmp.eq.s32.totalorder %v6427, 0
    %v6430 = vxor.u32 %v6425, 2147483648
    %v6431 = vsel %vm6429, %v6424, %v6430
    %vm6432 = vcmp.eq.s32.totalorder %v6427, 2
    %v6433 = vxor.u32 %v6424, 2147483648
    %v6434 = vsel %vm6432, %v6433, %v6425
    %v6435 = vsel %vm6428, %v6431, %v6434
    %v6436 = vsel %vm6426, nan, %v6435
    %v6437 = vand.u32 2147483647, %v626
    %vm6438 = vcmp.le.f32.partialorder %v6437, 0.7853982
    %vm6439 = vcmp.lt.s32.totalorder %v626, 0
    %v6440 = vand.u32 %v626, 2139095040
    %v6441 = vshrl.u32 %v6440, 23
    %v6442 = vsub.s32 %v6441, 127
    %v6443 = vand.u32 2147483647, %v626
    %v6444 = vand.u32 %v6443, 8388607
    %v6445 = vor.u32 %v6444, 8388608
    %v6446 = vsub.s32 0, %v6445
    %v6447 = vadd.s32 %v6442, 1
    %vm6448 = vcmp.gt.s32.totalorder %v6447, 0
    %v6449 = vsel %vm6448, %v6447, 0
    %v6450 = vshrl.u32 %v6449, 5
    %v6451 = vand.u32 %v6449, 31
    %v6452 = vsub.s32 32, %v6451
    %v6453 = vshrl.u32 683565275, %v6452
    %v6454 = vshll.u32 683565275, %v6451
    %v6455 = vshrl.u32 2475754826, %v6452
    %v6456 = vor.u32 %v6454, %v6455
    %v6457 = vshll.u32 2475754826, %v6451
    %v6458 = vshrl.u32 2131351028, %v6452
    %v6459 = vor.u32 %v6457, %v6458
    %v6460 = vshll.u32 2131351028, %v6451
    %v6461 = vshrl.u32 2102212464, %v6452
    %v6462 = vor.u32 %v6460, %v6461
    %v6463 = vshll.u32 2102212464, %v6451
    %v6464 = vshrl.u32 920167782, %v6452
    %v6465 = vor.u32 %v6463, %v6464
    %v6466 = vshll.u32 920167782, %v6451
    %v6467 = vshrl.u32 1326507024, %v6452
    %v6468 = vor.u32 %v6466, %v6467
    %vm6469 = vcmp.lt.s32.totalorder %v6450, 1
    %vm6470 = vcmp.lt.s32.totalorder %v6450, 2
    %vm6471 = vcmp.lt.s32.totalorder %v6450, 3
    %vm6472 = vcmp.lt.s32.totalorder %v6450, 4
    %v6473 = vsel %vm6469, %v6453, %v6456
    %v6474 = vsel %vm6472, %v6462, 2102212464
    %v6475 = vsel %vm6471, %v6459, %v6474
    %v6476 = vsel %vm6470, %v6473, %v6475
    %v6477 = vsel %vm6469, %v6456, %v6459
    %v6478 = vsel %vm6472, %v6465, 920167782
    %v6479 = vsel %vm6471, %v6462, %v6478
    %v6480 = vsel %vm6470, %v6477, %v6479
    %v6481 = vsel %vm6469, %v6459, %v6462
    %v6482 = vsel %vm6472, %v6468, 1326507024
    %v6483 = vsel %vm6471, %v6465, %v6482
    %v6484 = vsel %vm6470, %v6481, %v6483
    %v6485 = vshll.u32 %v6445, 8
    %v6486 = vmul.u32.u64.compose %v6485, %v6484
    %v6487 = vextract.low.u32 %v6486
    %v6488 = vextract.high.u32 %v6486
    %v6489 = vmul.u32.u64.compose %v6485, %v6480
    %v6490 = vextract.low.u32 %v6489
    %v6491 = vextract.high.u32 %v6489
    %v6492 = vmul.u32 %v6485, %v6476
    %v6493 = vadd.s32 %v6488, %v6490
    %vm6494 = vc.u32 %v6488, %v6490
    %v6495 = vadd.s32 %v6491, 1
    %v6496 = vsel %vm6494, %v6495, %v6491
    %v6497 = vadd.s32 %v6492, %v6496
    %v6498 = vadd.s32 %v6497, 536870912
    %v6499 = vshrl.u32 %v6498, 30
    %v6500 = vshll.u32 %v6499, 30
    %v6501 = vsub.s32 %v6497, %v6500
    %vm6502 = vcmp.lt.s32.totalorder %v6501, 0
    %v6503 = vsub.s32 0, %v6501
    %v6504 = vsel %vm6502, %v6503, %v6501
    %v6505 = vclz %v6504
    %v6506 = vsub.s32 %v6505, 2
    %vm6507 = vcmp.gt.s32.totalorder 0, %v6506
    %v6508 = vsel %vm6507, 0, %v6506
    %v6509 = vsub.s32 32, %v6508
    %v6510 = vshll.u32 %v6501, %v6508
    %v6511 = vshrl.u32 %v6493, %v6509
    %v6512 = vor.u32 %v6510, %v6511
    %v6513 = vsub.s32 4294967266, %v6508
    %v6514 = vadd.s32 %v6513, 127
    %v6515 = vshll.u32 %v6514, 23
    %v6516 = vor.u32 4788187, %v6515
    %v6517 = vand.u32 2147483647, %v6516
    %v6519 = vcvt.s32.f32 %v6512
    %v6520 = vmul.f32 %v6519, %v6517
    %v6521 = vxor.u32 %v6520, 2147483648
    %v6522 = vsel %vm6439, %v6521, %v6520
    %v6523 = vsub.s32 4, %v6499
    %v6524 = vsel %vm6439, %v6523, %v6499
    %v6525 = vsel %vm6438, %v626, %v6522
    %v6526 = vsel %vm6438, 0, %v6524
    %v6527 = vcosq.f32.pop %v6525
    %v6528 = vsinq.f32.pop %v6525
    %vm6529 = vweird.f32 %v626
    %v6530 = vand.u32 %v6526, 3
    %vm6531 = vcmp.lt.s32.totalorder %v6530, 2
    %vm6532 = vcmp.eq.s32.totalorder %v6530, 0
    %v6533 = vxor.u32 %v6528, 2147483648
    %v6534 = vsel %vm6532, %v6527, %v6533
    %vm6535 = vcmp.eq.s32.totalorder %v6530, 2
    %v6536 = vxor.u32 %v6527, 2147483648
    %v6537 = vsel %vm6535, %v6536, %v6528
    %v6538 = vsel %vm6531, %v6534, %v6537
    %v6539 = vsel %vm6529, nan, %v6538
    %v6540 = vand.u32 2147483647, %v627
    %vm6541 = vcmp.le.f32.partialorder %v6540, 0.7853982
    %vm6542 = vcmp.lt.s32.totalorder %v627, 0
    %v6543 = vand.u32 %v627, 2139095040
    %v6544 = vshrl.u32 %v6543, 23
    %v6545 = vsub.s32 %v6544, 127
    %v6546 = vand.u32 2147483647, %v627
    %v6547 = vand.u32 %v6546, 8388607
    %v6548 = vor.u32 %v6547, 8388608
    %v6549 = vsub.s32 0, %v6548
    %v6550 = vadd.s32 %v6545, 1
    %vm6551 = vcmp.gt.s32.totalorder %v6550, 0
    %v6552 = vsel %vm6551, %v6550, 0
    %v6553 = vshrl.u32 %v6552, 5
    %v6554 = vand.u32 %v6552, 31
    %v6555 = vsub.s32 32, %v6554
    %v6556 = vshrl.u32 683565275, %v6555
    %v6557 = vshll.u32 683565275, %v6554
    %v6558 = vshrl.u32 2475754826, %v6555
    %v6559 = vor.u32 %v6557, %v6558
    %v6560 = vshll.u32 2475754826, %v6554
    %v6561 = vshrl.u32 2131351028, %v6555
    %v6562 = vor.u32 %v6560, %v6561
    %v6563 = vshll.u32 2131351028, %v6554
    %v6564 = vshrl.u32 2102212464, %v6555
    %v6565 = vor.u32 %v6563, %v6564
    %v6566 = vshll.u32 2102212464, %v6554
    %v6567 = vshrl.u32 920167782, %v6555
    %v6568 = vor.u32 %v6566, %v6567
    %v6569 = vshll.u32 920167782, %v6554
    %v6570 = vshrl.u32 1326507024, %v6555
    %v6571 = vor.u32 %v6569, %v6570
    %vm6572 = vcmp.lt.s32.totalorder %v6553, 1
    %vm6573 = vcmp.lt.s32.totalorder %v6553, 2
    %vm6574 = vcmp.lt.s32.totalorder %v6553, 3
    %vm6575 = vcmp.lt.s32.totalorder %v6553, 4
    %v6576 = vsel %vm6572, %v6556, %v6559
    %v6577 = vsel %vm6575, %v6565, 2102212464
    %v6578 = vsel %vm6574, %v6562, %v6577
    %v6579 = vsel %vm6573, %v6576, %v6578
    %v6580 = vsel %vm6572, %v6559, %v6562
    %v6581 = vsel %vm6575, %v6568, 920167782
    %v6582 = vsel %vm6574, %v6565, %v6581
    %v6583 = vsel %vm6573, %v6580, %v6582
    %v6584 = vsel %vm6572, %v6562, %v6565
    %v6585 = vsel %vm6575, %v6571, 1326507024
    %v6586 = vsel %vm6574, %v6568, %v6585
    %v6587 = vsel %vm6573, %v6584, %v6586
    %v6588 = vshll.u32 %v6548, 8
    %v6589 = vmul.u32.u64.compose %v6588, %v6587
    %v6590 = vextract.low.u32 %v6589
    %v6591 = vextract.high.u32 %v6589
    %v6592 = vmul.u32.u64.compose %v6588, %v6583
    %v6593 = vextract.low.u32 %v6592
    %v6594 = vextract.high.u32 %v6592
    %v6595 = vmul.u32 %v6588, %v6579
    %v6596 = vadd.s32 %v6591, %v6593
    %vm6597 = vc.u32 %v6591, %v6593
    %v6598 = vadd.s32 %v6594, 1
    %v6599 = vsel %vm6597, %v6598, %v6594
    %v6600 = vadd.s32 %v6595, %v6599
    %v6601 = vadd.s32 %v6600, 536870912
    %v6602 = vshrl.u32 %v6601, 30
    %v6603 = vshll.u32 %v6602, 30
    %v6604 = vsub.s32 %v6600, %v6603
    %vm6605 = vcmp.lt.s32.totalorder %v6604, 0
    %v6606 = vsub.s32 0, %v6604
    %v6607 = vsel %vm6605, %v6606, %v6604
    %v6608 = vclz %v6607
    %v6609 = vsub.s32 %v6608, 2
    %vm6610 = vcmp.gt.s32.totalorder 0, %v6609
    %v6611 = vsel %vm6610, 0, %v6609
    %v6612 = vsub.s32 32, %v6611
    %v6613 = vshll.u32 %v6604, %v6611
    %v6614 = vshrl.u32 %v6596, %v6612
    %v6615 = vor.u32 %v6613, %v6614
    %v6616 = vsub.s32 4294967266, %v6611
    %v6617 = vadd.s32 %v6616, 127
    %v6618 = vshll.u32 %v6617, 23
    %v6619 = vor.u32 4788187, %v6618
    %v6620 = vand.u32 2147483647, %v6619
    %v6622 = vcvt.s32.f32 %v6615
    %v6623 = vmul.f32 %v6622, %v6620
    %v6624 = vxor.u32 %v6623, 2147483648
    %v6625 = vsel %vm6542, %v6624, %v6623
    %v6626 = vsub.s32 4, %v6602
    %v6627 = vsel %vm6542, %v6626, %v6602
    %v6628 = vsel %vm6541, %v627, %v6625
    %v6629 = vsel %vm6541, 0, %v6627
    %v6630 = vcosq.f32.pop %v6628
    %v6631 = vsinq.f32.pop %v6628
    %vm6632 = vweird.f32 %v627
    %v6633 = vand.u32 %v6629, 3
    %vm6634 = vcmp.lt.s32.totalorder %v6633, 2
    %vm6635 = vcmp.eq.s32.totalorder %v6633, 0
    %v6636 = vxor.u32 %v6631, 2147483648
    %v6637 = vsel %vm6635, %v6630, %v6636
    %vm6638 = vcmp.eq.s32.totalorder %v6633, 2
    %v6639 = vxor.u32 %v6630, 2147483648
    %v6640 = vsel %vm6638, %v6639, %v6631
    %v6641 = vsel %vm6634, %v6637, %v6640
    %v6642 = vsel %vm6632, nan, %v6641
    %v6643 = vand.u32 2147483647, %v628
    %vm6644 = vcmp.le.f32.partialorder %v6643, 0.7853982
    %vm6645 = vcmp.lt.s32.totalorder %v628, 0
    %v6646 = vand.u32 %v628, 2139095040
    %v6647 = vshrl.u32 %v6646, 23
    %v6648 = vsub.s32 %v6647, 127
    %v6649 = vand.u32 2147483647, %v628
    %v6650 = vand.u32 %v6649, 8388607
    %v6651 = vor.u32 %v6650, 8388608
    %v6652 = vsub.s32 0, %v6651
    %v6653 = vadd.s32 %v6648, 1
    %vm6654 = vcmp.gt.s32.totalorder %v6653, 0
    %v6655 = vsel %vm6654, %v6653, 0
    %v6656 = vshrl.u32 %v6655, 5
    %v6657 = vand.u32 %v6655, 31
    %v6658 = vsub.s32 32, %v6657
    %v6659 = vshrl.u32 683565275, %v6658
    %v6660 = vshll.u32 683565275, %v6657
    %v6661 = vshrl.u32 2475754826, %v6658
    %v6662 = vor.u32 %v6660, %v6661
    %v6663 = vshll.u32 2475754826, %v6657
    %v6664 = vshrl.u32 2131351028, %v6658
    %v6665 = vor.u32 %v6663, %v6664
    %v6666 = vshll.u32 2131351028, %v6657
    %v6667 = vshrl.u32 2102212464, %v6658
    %v6668 = vor.u32 %v6666, %v6667
    %v6669 = vshll.u32 2102212464, %v6657
    %v6670 = vshrl.u32 920167782, %v6658
    %v6671 = vor.u32 %v6669, %v6670
    %v6672 = vshll.u32 920167782, %v6657
    %v6673 = vshrl.u32 1326507024, %v6658
    %v6674 = vor.u32 %v6672, %v6673
    %vm6675 = vcmp.lt.s32.totalorder %v6656, 1
    %vm6676 = vcmp.lt.s32.totalorder %v6656, 2
    %vm6677 = vcmp.lt.s32.totalorder %v6656, 3
    %vm6678 = vcmp.lt.s32.totalorder %v6656, 4
    %v6679 = vsel %vm6675, %v6659, %v6662
    %v6680 = vsel %vm6678, %v6668, 2102212464
    %v6681 = vsel %vm6677, %v6665, %v6680
    %v6682 = vsel %vm6676, %v6679, %v6681
    %v6683 = vsel %vm6675, %v6662, %v6665
    %v6684 = vsel %vm6678, %v6671, 920167782
    %v6685 = vsel %vm6677, %v6668, %v6684
    %v6686 = vsel %vm6676, %v6683, %v6685
    %v6687 = vsel %vm6675, %v6665, %v6668
    %v6688 = vsel %vm6678, %v6674, 1326507024
    %v6689 = vsel %vm6677, %v6671, %v6688
    %v6690 = vsel %vm6676, %v6687, %v6689
    %v6691 = vshll.u32 %v6651, 8
    %v6692 = vmul.u32.u64.compose %v6691, %v6690
    %v6693 = vextract.low.u32 %v6692
    %v6694 = vextract.high.u32 %v6692
    %v6695 = vmul.u32.u64.compose %v6691, %v6686
    %v6696 = vextract.low.u32 %v6695
    %v6697 = vextract.high.u32 %v6695
    %v6698 = vmul.u32 %v6691, %v6682
    %v6699 = vadd.s32 %v6694, %v6696
    %vm6700 = vc.u32 %v6694, %v6696
    %v6701 = vadd.s32 %v6697, 1
    %v6702 = vsel %vm6700, %v6701, %v6697
    %v6703 = vadd.s32 %v6698, %v6702
    %v6704 = vadd.s32 %v6703, 536870912
    %v6705 = vshrl.u32 %v6704, 30
    %v6706 = vshll.u32 %v6705, 30
    %v6707 = vsub.s32 %v6703, %v6706
    %vm6708 = vcmp.lt.s32.totalorder %v6707, 0
    %v6709 = vsub.s32 0, %v6707
    %v6710 = vsel %vm6708, %v6709, %v6707
    %v6711 = vclz %v6710
    %v6712 = vsub.s32 %v6711, 2
    %vm6713 = vcmp.gt.s32.totalorder 0, %v6712
    %v6714 = vsel %vm6713, 0, %v6712
    %v6715 = vsub.s32 32, %v6714
    %v6716 = vshll.u32 %v6707, %v6714
    %v6717 = vshrl.u32 %v6699, %v6715
    %v6718 = vor.u32 %v6716, %v6717
    %v6719 = vsub.s32 4294967266, %v6714
    %v6720 = vadd.s32 %v6719, 127
    %v6721 = vshll.u32 %v6720, 23
    %v6722 = vor.u32 4788187, %v6721
    %v6723 = vand.u32 2147483647, %v6722
    %v6725 = vcvt.s32.f32 %v6718
    %v6726 = vmul.f32 %v6725, %v6723
    %v6727 = vxor.u32 %v6726, 2147483648
    %v6728 = vsel %vm6645, %v6727, %v6726
    %v6729 = vsub.s32 4, %v6705
    %v6730 = vsel %vm6645, %v6729, %v6705
    %v6731 = vsel %vm6644, %v628, %v6728
    %v6732 = vsel %vm6644, 0, %v6730
    %v6733 = vcosq.f32.pop %v6731
    %v6734 = vsinq.f32.pop %v6731
    %vm6735 = vweird.f32 %v628
    %v6736 = vand.u32 %v6732, 3
    %vm6737 = vcmp.lt.s32.totalorder %v6736, 2
    %vm6738 = vcmp.eq.s32.totalorder %v6736, 0
    %v6739 = vxor.u32 %v6734, 2147483648
    %v6740 = vsel %vm6738, %v6733, %v6739
    %vm6741 = vcmp.eq.s32.totalorder %v6736, 2
    %v6742 = vxor.u32 %v6733, 2147483648
    %v6743 = vsel %vm6741, %v6742, %v6734
    %v6744 = vsel %vm6737, %v6740, %v6743
    %v6745 = vsel %vm6735, nan, %v6744
    %v6746 = vand.u32 2147483647, %v629
    %vm6747 = vcmp.le.f32.partialorder %v6746, 0.7853982
    %vm6748 = vcmp.lt.s32.totalorder %v629, 0
    %v6749 = vand.u32 %v629, 2139095040
    %v6750 = vshrl.u32 %v6749, 23
    %v6751 = vsub.s32 %v6750, 127
    %v6752 = vand.u32 2147483647, %v629
    %v6753 = vand.u32 %v6752, 8388607
    %v6754 = vor.u32 %v6753, 8388608
    %v6755 = vsub.s32 0, %v6754
    %v6756 = vadd.s32 %v6751, 1
    %vm6757 = vcmp.gt.s32.totalorder %v6756, 0
    %v6758 = vsel %vm6757, %v6756, 0
    %v6759 = vshrl.u32 %v6758, 5
    %v6760 = vand.u32 %v6758, 31
    %v6761 = vsub.s32 32, %v6760
    %v6762 = vshrl.u32 683565275, %v6761
    %v6763 = vshll.u32 683565275, %v6760
    %v6764 = vshrl.u32 2475754826, %v6761
    %v6765 = vor.u32 %v6763, %v6764
    %v6766 = vshll.u32 2475754826, %v6760
    %v6767 = vshrl.u32 2131351028, %v6761
    %v6768 = vor.u32 %v6766, %v6767
    %v6769 = vshll.u32 2131351028, %v6760
    %v6770 = vshrl.u32 2102212464, %v6761
    %v6771 = vor.u32 %v6769, %v6770
    %v6772 = vshll.u32 2102212464, %v6760
    %v6773 = vshrl.u32 920167782, %v6761
    %v6774 = vor.u32 %v6772, %v6773
    %v6775 = vshll.u32 920167782, %v6760
    %v6776 = vshrl.u32 1326507024, %v6761
    %v6777 = vor.u32 %v6775, %v6776
    %vm6778 = vcmp.lt.s32.totalorder %v6759, 1
    %vm6779 = vcmp.lt.s32.totalorder %v6759, 2
    %vm6780 = vcmp.lt.s32.totalorder %v6759, 3
    %vm6781 = vcmp.lt.s32.totalorder %v6759, 4
    %v6782 = vsel %vm6778, %v6762, %v6765
    %v6783 = vsel %vm6781, %v6771, 2102212464
    %v6784 = vsel %vm6780, %v6768, %v6783
    %v6785 = vsel %vm6779, %v6782, %v6784
    %v6786 = vsel %vm6778, %v6765, %v6768
    %v6787 = vsel %vm6781, %v6774, 920167782
    %v6788 = vsel %vm6780, %v6771, %v6787
    %v6789 = vsel %vm6779, %v6786, %v6788
    %v6790 = vsel %vm6778, %v6768, %v6771
    %v6791 = vsel %vm6781, %v6777, 1326507024
    %v6792 = vsel %vm6780, %v6774, %v6791
    %v6793 = vsel %vm6779, %v6790, %v6792
    %v6794 = vshll.u32 %v6754, 8
    %v6795 = vmul.u32.u64.compose %v6794, %v6793
    %v6796 = vextract.low.u32 %v6795
    %v6797 = vextract.high.u32 %v6795
    %v6798 = vmul.u32.u64.compose %v6794, %v6789
    %v6799 = vextract.low.u32 %v6798
    %v6800 = vextract.high.u32 %v6798
    %v6801 = vmul.u32 %v6794, %v6785
    %v6802 = vadd.s32 %v6797, %v6799
    %vm6803 = vc.u32 %v6797, %v6799
    %v6804 = vadd.s32 %v6800, 1
    %v6805 = vsel %vm6803, %v6804, %v6800
    %v6806 = vadd.s32 %v6801, %v6805
    %v6807 = vadd.s32 %v6806, 536870912
    %v6808 = vshrl.u32 %v6807, 30
    %v6809 = vshll.u32 %v6808, 30
    %v6810 = vsub.s32 %v6806, %v6809
    %vm6811 = vcmp.lt.s32.totalorder %v6810, 0
    %v6812 = vsub.s32 0, %v6810
    %v6813 = vsel %vm6811, %v6812, %v6810
    %v6814 = vclz %v6813
    %v6815 = vsub.s32 %v6814, 2
    %vm6816 = vcmp.gt.s32.totalorder 0, %v6815
    %v6817 = vsel %vm6816, 0, %v6815
    %v6818 = vsub.s32 32, %v6817
    %v6819 = vshll.u32 %v6810, %v6817
    %v6820 = vshrl.u32 %v6802, %v6818
    %v6821 = vor.u32 %v6819, %v6820
    %v6822 = vsub.s32 4294967266, %v6817
    %v6823 = vadd.s32 %v6822, 127
    %v6824 = vshll.u32 %v6823, 23
    %v6825 = vor.u32 4788187, %v6824
    %v6826 = vand.u32 2147483647, %v6825
    %v6828 = vcvt.s32.f32 %v6821
    %v6829 = vmul.f32 %v6828, %v6826
    %v6830 = vxor.u32 %v6829, 2147483648
    %v6831 = vsel %vm6748, %v6830, %v6829
    %v6832 = vsub.s32 4, %v6808
    %v6833 = vsel %vm6748, %v6832, %v6808
    %v6834 = vsel %vm6747, %v629, %v6831
    %v6835 = vsel %vm6747, 0, %v6833
    %v6836 = vcosq.f32.pop %v6834
    %v6837 = vsinq.f32.pop %v6834
    %vm6838 = vweird.f32 %v629
    %v6839 = vand.u32 %v6835, 3
    %vm6840 = vcmp.lt.s32.totalorder %v6839, 2
    %vm6841 = vcmp.eq.s32.totalorder %v6839, 0
    %v6842 = vxor.u32 %v6837, 2147483648
    %v6843 = vsel %vm6841, %v6836, %v6842
    %vm6844 = vcmp.eq.s32.totalorder %v6839, 2
    %v6845 = vxor.u32 %v6836, 2147483648
    %v6846 = vsel %vm6844, %v6845, %v6837
    %v6847 = vsel %vm6840, %v6843, %v6846
    %v6848 = vsel %vm6838, nan, %v6847
    %v6849 = vand.u32 2147483647, %v630
    %vm6850 = vcmp.le.f32.partialorder %v6849, 0.7853982
    %vm6851 = vcmp.lt.s32.totalorder %v630, 0
    %v6852 = vand.u32 %v630, 2139095040
    %v6853 = vshrl.u32 %v6852, 23
    %v6854 = vsub.s32 %v6853, 127
    %v6855 = vand.u32 2147483647, %v630
    %v6856 = vand.u32 %v6855, 8388607
    %v6857 = vor.u32 %v6856, 8388608
    %v6858 = vsub.s32 0, %v6857
    %v6859 = vadd.s32 %v6854, 1
    %vm6860 = vcmp.gt.s32.totalorder %v6859, 0
    %v6861 = vsel %vm6860, %v6859, 0
    %v6862 = vshrl.u32 %v6861, 5
    %v6863 = vand.u32 %v6861, 31
    %v6864 = vsub.s32 32, %v6863
    %v6865 = vshrl.u32 683565275, %v6864
    %v6866 = vshll.u32 683565275, %v6863
    %v6867 = vshrl.u32 2475754826, %v6864
    %v6868 = vor.u32 %v6866, %v6867
    %v6869 = vshll.u32 2475754826, %v6863
    %v6870 = vshrl.u32 2131351028, %v6864
    %v6871 = vor.u32 %v6869, %v6870
    %v6872 = vshll.u32 2131351028, %v6863
    %v6873 = vshrl.u32 2102212464, %v6864
    %v6874 = vor.u32 %v6872, %v6873
    %v6875 = vshll.u32 2102212464, %v6863
    %v6876 = vshrl.u32 920167782, %v6864
    %v6877 = vor.u32 %v6875, %v6876
    %v6878 = vshll.u32 920167782, %v6863
    %v6879 = vshrl.u32 1326507024, %v6864
    %v6880 = vor.u32 %v6878, %v6879
    %vm6881 = vcmp.lt.s32.totalorder %v6862, 1
    %vm6882 = vcmp.lt.s32.totalorder %v6862, 2
    %vm6883 = vcmp.lt.s32.totalorder %v6862, 3
    %vm6884 = vcmp.lt.s32.totalorder %v6862, 4
    %v6885 = vsel %vm6881, %v6865, %v6868
    %v6886 = vsel %vm6884, %v6874, 2102212464
    %v6887 = vsel %vm6883, %v6871, %v6886
    %v6888 = vsel %vm6882, %v6885, %v6887
    %v6889 = vsel %vm6881, %v6868, %v6871
    %v6890 = vsel %vm6884, %v6877, 920167782
    %v6891 = vsel %vm6883, %v6874, %v6890
    %v6892 = vsel %vm6882, %v6889, %v6891
    %v6893 = vsel %vm6881, %v6871, %v6874
    %v6894 = vsel %vm6884, %v6880, 1326507024
    %v6895 = vsel %vm6883, %v6877, %v6894
    %v6896 = vsel %vm6882, %v6893, %v6895
    %v6897 = vshll.u32 %v6857, 8
    %v6898 = vmul.u32.u64.compose %v6897, %v6896
    %v6899 = vextract.low.u32 %v6898
    %v6900 = vextract.high.u32 %v6898
    %v6901 = vmul.u32.u64.compose %v6897, %v6892
    %v6902 = vextract.low.u32 %v6901
    %v6903 = vextract.high.u32 %v6901
    %v6904 = vmul.u32 %v6897, %v6888
    %v6905 = vadd.s32 %v6900, %v6902
    %vm6906 = vc.u32 %v6900, %v6902
    %v6907 = vadd.s32 %v6903, 1
    %v6908 = vsel %vm6906, %v6907, %v6903
    %v6909 = vadd.s32 %v6904, %v6908
    %v6910 = vadd.s32 %v6909, 536870912
    %v6911 = vshrl.u32 %v6910, 30
    %v6912 = vshll.u32 %v6911, 30
    %v6913 = vsub.s32 %v6909, %v6912
    %vm6914 = vcmp.lt.s32.totalorder %v6913, 0
    %v6915 = vsub.s32 0, %v6913
    %v6916 = vsel %vm6914, %v6915, %v6913
    %v6917 = vclz %v6916
    %v6918 = vsub.s32 %v6917, 2
    %vm6919 = vcmp.gt.s32.totalorder 0, %v6918
    %v6920 = vsel %vm6919, 0, %v6918
    %v6921 = vsub.s32 32, %v6920
    %v6922 = vshll.u32 %v6913, %v6920
    %v6923 = vshrl.u32 %v6905, %v6921
    %v6924 = vor.u32 %v6922, %v6923
    %v6925 = vsub.s32 4294967266, %v6920
    %v6926 = vadd.s32 %v6925, 127
    %v6927 = vshll.u32 %v6926, 23
    %v6928 = vor.u32 4788187, %v6927
    %v6929 = vand.u32 2147483647, %v6928
    %v6931 = vcvt.s32.f32 %v6924
    %v6932 = vmul.f32 %v6931, %v6929
    %v6933 = vxor.u32 %v6932, 2147483648
    %v6934 = vsel %vm6851, %v6933, %v6932
    %v6935 = vsub.s32 4, %v6911
    %v6936 = vsel %vm6851, %v6935, %v6911
    %v6937 = vsel %vm6850, %v630, %v6934
    %v6938 = vsel %vm6850, 0, %v6936
    %v6939 = vcosq.f32.pop %v6937
    %v6940 = vsinq.f32.pop %v6937
    %vm6941 = vweird.f32 %v630
    %v6942 = vand.u32 %v6938, 3
    %vm6943 = vcmp.lt.s32.totalorder %v6942, 2
    %vm6944 = vcmp.eq.s32.totalorder %v6942, 0
    %v6945 = vxor.u32 %v6940, 2147483648
    %v6946 = vsel %vm6944, %v6939, %v6945
    %vm6947 = vcmp.eq.s32.totalorder %v6942, 2
    %v6948 = vxor.u32 %v6939, 2147483648
    %v6949 = vsel %vm6947, %v6948, %v6940
    %v6950 = vsel %vm6943, %v6946, %v6949
    %v6951 = vsel %vm6941, nan, %v6950
    %v6952 = vand.u32 2147483647, %v631
    %vm6953 = vcmp.le.f32.partialorder %v6952, 0.7853982
    %vm6954 = vcmp.lt.s32.totalorder %v631, 0
    %v6955 = vand.u32 %v631, 2139095040
    %v6956 = vshrl.u32 %v6955, 23
    %v6957 = vsub.s32 %v6956, 127
    %v6958 = vand.u32 2147483647, %v631
    %v6959 = vand.u32 %v6958, 8388607
    %v6960 = vor.u32 %v6959, 8388608
    %v6961 = vsub.s32 0, %v6960
    %v6962 = vadd.s32 %v6957, 1
    %vm6963 = vcmp.gt.s32.totalorder %v6962, 0
    %v6964 = vsel %vm6963, %v6962, 0
    %v6965 = vshrl.u32 %v6964, 5
    %v6966 = vand.u32 %v6964, 31
    %v6967 = vsub.s32 32, %v6966
    %v6968 = vshrl.u32 683565275, %v6967
    %v6969 = vshll.u32 683565275, %v6966
    %v6970 = vshrl.u32 2475754826, %v6967
    %v6971 = vor.u32 %v6969, %v6970
    %v6972 = vshll.u32 2475754826, %v6966
    %v6973 = vshrl.u32 2131351028, %v6967
    %v6974 = vor.u32 %v6972, %v6973
    %v6975 = vshll.u32 2131351028, %v6966
    %v6976 = vshrl.u32 2102212464, %v6967
    %v6977 = vor.u32 %v6975, %v6976
    %v6978 = vshll.u32 2102212464, %v6966
    %v6979 = vshrl.u32 920167782, %v6967
    %v6980 = vor.u32 %v6978, %v6979
    %v6981 = vshll.u32 920167782, %v6966
    %v6982 = vshrl.u32 1326507024, %v6967
    %v6983 = vor.u32 %v6981, %v6982
    %vm6984 = vcmp.lt.s32.totalorder %v6965, 1
    %vm6985 = vcmp.lt.s32.totalorder %v6965, 2
    %vm6986 = vcmp.lt.s32.totalorder %v6965, 3
    %vm6987 = vcmp.lt.s32.totalorder %v6965, 4
    %v6988 = vsel %vm6984, %v6968, %v6971
    %v6989 = vsel %vm6987, %v6977, 2102212464
    %v6990 = vsel %vm6986, %v6974, %v6989
    %v6991 = vsel %vm6985, %v6988, %v6990
    %v6992 = vsel %vm6984, %v6971, %v6974
    %v6993 = vsel %vm6987, %v6980, 920167782
    %v6994 = vsel %vm6986, %v6977, %v6993
    %v6995 = vsel %vm6985, %v6992, %v6994
    %v6996 = vsel %vm6984, %v6974, %v6977
    %v6997 = vsel %vm6987, %v6983, 1326507024
    %v6998 = vsel %vm6986, %v6980, %v6997
    %v6999 = vsel %vm6985, %v6996, %v6998
    %v7000 = vshll.u32 %v6960, 8
    %v7001 = vmul.u32.u64.compose %v7000, %v6999
    %v7002 = vextract.low.u32 %v7001
    %v7003 = vextract.high.u32 %v7001
    %v7004 = vmul.u32.u64.compose %v7000, %v6995
    %v7005 = vextract.low.u32 %v7004
    %v7006 = vextract.high.u32 %v7004
    %v7007 = vmul.u32 %v7000, %v6991
    %v7008 = vadd.s32 %v7003, %v7005
    %vm7009 = vc.u32 %v7003, %v7005
    %v7010 = vadd.s32 %v7006, 1
    %v7011 = vsel %vm7009, %v7010, %v7006
    %v7012 = vadd.s32 %v7007, %v7011
    %v7013 = vadd.s32 %v7012, 536870912
    %v7014 = vshrl.u32 %v7013, 30
    %v7015 = vshll.u32 %v7014, 30
    %v7016 = vsub.s32 %v7012, %v7015
    %vm7017 = vcmp.lt.s32.totalorder %v7016, 0
    %v7018 = vsub.s32 0, %v7016
    %v7019 = vsel %vm7017, %v7018, %v7016
    %v7020 = vclz %v7019
    %v7021 = vsub.s32 %v7020, 2
    %vm7022 = vcmp.gt.s32.totalorder 0, %v7021
    %v7023 = vsel %vm7022, 0, %v7021
    %v7024 = vsub.s32 32, %v7023
    %v7025 = vshll.u32 %v7016, %v7023
    %v7026 = vshrl.u32 %v7008, %v7024
    %v7027 = vor.u32 %v7025, %v7026
    %v7028 = vsub.s32 4294967266, %v7023
    %v7029 = vadd.s32 %v7028, 127
    %v7030 = vshll.u32 %v7029, 23
    %v7031 = vor.u32 4788187, %v7030
    %v7032 = vand.u32 2147483647, %v7031
    %v7034 = vcvt.s32.f32 %v7027
    %v7035 = vmul.f32 %v7034, %v7032
    %v7036 = vxor.u32 %v7035, 2147483648
    %v7037 = vsel %vm6954, %v7036, %v7035
    %v7038 = vsub.s32 4, %v7014
    %v7039 = vsel %vm6954, %v7038, %v7014
    %v7040 = vsel %vm6953, %v631, %v7037
    %v7041 = vsel %vm6953, 0, %v7039
    %v7042 = vcosq.f32.pop %v7040
    %v7043 = vsinq.f32.pop %v7040
    %vm7044 = vweird.f32 %v631
    %v7045 = vand.u32 %v7041, 3
    %vm7046 = vcmp.lt.s32.totalorder %v7045, 2
    %vm7047 = vcmp.eq.s32.totalorder %v7045, 0
    %v7048 = vxor.u32 %v7043, 2147483648
    %v7049 = vsel %vm7047, %v7042, %v7048
    %vm7050 = vcmp.eq.s32.totalorder %v7045, 2
    %v7051 = vxor.u32 %v7042, 2147483648
    %v7052 = vsel %vm7050, %v7051, %v7043
    %v7053 = vsel %vm7046, %v7049, %v7052
    %v7054 = vsel %vm7044, nan, %v7053
    %v7055 = vand.u32 2147483647, %v632
    %vm7056 = vcmp.le.f32.partialorder %v7055, 0.7853982
    %vm7057 = vcmp.lt.s32.totalorder %v632, 0
    %v7058 = vand.u32 %v632, 2139095040
    %v7059 = vshrl.u32 %v7058, 23
    %v7060 = vsub.s32 %v7059, 127
    %v7061 = vand.u32 2147483647, %v632
    %v7062 = vand.u32 %v7061, 8388607
    %v7063 = vor.u32 %v7062, 8388608
    %v7064 = vsub.s32 0, %v7063
    %v7065 = vadd.s32 %v7060, 1
    %vm7066 = vcmp.gt.s32.totalorder %v7065, 0
    %v7067 = vsel %vm7066, %v7065, 0
    %v7068 = vshrl.u32 %v7067, 5
    %v7069 = vand.u32 %v7067, 31
    %v7070 = vsub.s32 32, %v7069
    %v7071 = vshrl.u32 683565275, %v7070
    %v7072 = vshll.u32 683565275, %v7069
    %v7073 = vshrl.u32 2475754826, %v7070
    %v7074 = vor.u32 %v7072, %v7073
    %v7075 = vshll.u32 2475754826, %v7069
    %v7076 = vshrl.u32 2131351028, %v7070
    %v7077 = vor.u32 %v7075, %v7076
    %v7078 = vshll.u32 2131351028, %v7069
    %v7079 = vshrl.u32 2102212464, %v7070
    %v7080 = vor.u32 %v7078, %v7079
    %v7081 = vshll.u32 2102212464, %v7069
    %v7082 = vshrl.u32 920167782, %v7070
    %v7083 = vor.u32 %v7081, %v7082
    %v7084 = vshll.u32 920167782, %v7069
    %v7085 = vshrl.u32 1326507024, %v7070
    %v7086 = vor.u32 %v7084, %v7085
    %vm7087 = vcmp.lt.s32.totalorder %v7068, 1
    %vm7088 = vcmp.lt.s32.totalorder %v7068, 2
    %vm7089 = vcmp.lt.s32.totalorder %v7068, 3
    %vm7090 = vcmp.lt.s32.totalorder %v7068, 4
    %v7091 = vsel %vm7087, %v7071, %v7074
    %v7092 = vsel %vm7090, %v7080, 2102212464
    %v7093 = vsel %vm7089, %v7077, %v7092
    %v7094 = vsel %vm7088, %v7091, %v7093
    %v7095 = vsel %vm7087, %v7074, %v7077
    %v7096 = vsel %vm7090, %v7083, 920167782
    %v7097 = vsel %vm7089, %v7080, %v7096
    %v7098 = vsel %vm7088, %v7095, %v7097
    %v7099 = vsel %vm7087, %v7077, %v7080
    %v7100 = vsel %vm7090, %v7086, 1326507024
    %v7101 = vsel %vm7089, %v7083, %v7100
    %v7102 = vsel %vm7088, %v7099, %v7101
    %v7103 = vshll.u32 %v7063, 8
    %v7104 = vmul.u32.u64.compose %v7103, %v7102
    %v7105 = vextract.low.u32 %v7104
    %v7106 = vextract.high.u32 %v7104
    %v7107 = vmul.u32.u64.compose %v7103, %v7098
    %v7108 = vextract.low.u32 %v7107
    %v7109 = vextract.high.u32 %v7107
    %v7110 = vmul.u32 %v7103, %v7094
    %v7111 = vadd.s32 %v7106, %v7108
    %vm7112 = vc.u32 %v7106, %v7108
    %v7113 = vadd.s32 %v7109, 1
    %v7114 = vsel %vm7112, %v7113, %v7109
    %v7115 = vadd.s32 %v7110, %v7114
    %v7116 = vadd.s32 %v7115, 536870912
    %v7117 = vshrl.u32 %v7116, 30
    %v7118 = vshll.u32 %v7117, 30
    %v7119 = vsub.s32 %v7115, %v7118
    %vm7120 = vcmp.lt.s32.totalorder %v7119, 0
    %v7121 = vsub.s32 0, %v7119
    %v7122 = vsel %vm7120, %v7121, %v7119
    %v7123 = vclz %v7122
    %v7124 = vsub.s32 %v7123, 2
    %vm7125 = vcmp.gt.s32.totalorder 0, %v7124
    %v7126 = vsel %vm7125, 0, %v7124
    %v7127 = vsub.s32 32, %v7126
    %v7128 = vshll.u32 %v7119, %v7126
    %v7129 = vshrl.u32 %v7111, %v7127
    %v7130 = vor.u32 %v7128, %v7129
    %v7131 = vsub.s32 4294967266, %v7126
    %v7132 = vadd.s32 %v7131, 127
    %v7133 = vshll.u32 %v7132, 23
    %v7134 = vor.u32 4788187, %v7133
    %v7135 = vand.u32 2147483647, %v7134
    %v7137 = vcvt.s32.f32 %v7130
    %v7138 = vmul.f32 %v7137, %v7135
    %v7139 = vxor.u32 %v7138, 2147483648
    %v7140 = vsel %vm7057, %v7139, %v7138
    %v7141 = vsub.s32 4, %v7117
    %v7142 = vsel %vm7057, %v7141, %v7117
    %v7143 = vsel %vm7056, %v632, %v7140
    %v7144 = vsel %vm7056, 0, %v7142
    %v7145 = vcosq.f32.pop %v7143
    %v7146 = vsinq.f32.pop %v7143
    %vm7147 = vweird.f32 %v632
    %v7148 = vand.u32 %v7144, 3
    %vm7149 = vcmp.lt.s32.totalorder %v7148, 2
    %vm7150 = vcmp.eq.s32.totalorder %v7148, 0
    %v7151 = vxor.u32 %v7146, 2147483648
    %v7152 = vsel %vm7150, %v7145, %v7151
    %vm7153 = vcmp.eq.s32.totalorder %v7148, 2
    %v7154 = vxor.u32 %v7145, 2147483648
    %v7155 = vsel %vm7153, %v7154, %v7146
    %v7156 = vsel %vm7149, %v7152, %v7155
    %v7157 = vsel %vm7147, nan, %v7156
    %v7158 = vand.u32 2147483647, %v633
    %vm7159 = vcmp.le.f32.partialorder %v7158, 0.7853982
    %vm7160 = vcmp.lt.s32.totalorder %v633, 0
    %v7161 = vand.u32 %v633, 2139095040
    %v7162 = vshrl.u32 %v7161, 23
    %v7163 = vsub.s32 %v7162, 127
    %v7164 = vand.u32 2147483647, %v633
    %v7165 = vand.u32 %v7164, 8388607
    %v7166 = vor.u32 %v7165, 8388608
    %v7167 = vsub.s32 0, %v7166
    %v7168 = vadd.s32 %v7163, 1
    %vm7169 = vcmp.gt.s32.totalorder %v7168, 0
    %v7170 = vsel %vm7169, %v7168, 0
    %v7171 = vshrl.u32 %v7170, 5
    %v7172 = vand.u32 %v7170, 31
    %v7173 = vsub.s32 32, %v7172
    %v7174 = vshrl.u32 683565275, %v7173
    %v7175 = vshll.u32 683565275, %v7172
    %v7176 = vshrl.u32 2475754826, %v7173
    %v7177 = vor.u32 %v7175, %v7176
    %v7178 = vshll.u32 2475754826, %v7172
    %v7179 = vshrl.u32 2131351028, %v7173
    %v7180 = vor.u32 %v7178, %v7179
    %v7181 = vshll.u32 2131351028, %v7172
    %v7182 = vshrl.u32 2102212464, %v7173
    %v7183 = vor.u32 %v7181, %v7182
    %v7184 = vshll.u32 2102212464, %v7172
    %v7185 = vshrl.u32 920167782, %v7173
    %v7186 = vor.u32 %v7184, %v7185
    %v7187 = vshll.u32 920167782, %v7172
    %v7188 = vshrl.u32 1326507024, %v7173
    %v7189 = vor.u32 %v7187, %v7188
    %vm7190 = vcmp.lt.s32.totalorder %v7171, 1
    %vm7191 = vcmp.lt.s32.totalorder %v7171, 2
    %vm7192 = vcmp.lt.s32.totalorder %v7171, 3
    %vm7193 = vcmp.lt.s32.totalorder %v7171, 4
    %v7194 = vsel %vm7190, %v7174, %v7177
    %v7195 = vsel %vm7193, %v7183, 2102212464
    %v7196 = vsel %vm7192, %v7180, %v7195
    %v7197 = vsel %vm7191, %v7194, %v7196
    %v7198 = vsel %vm7190, %v7177, %v7180
    %v7199 = vsel %vm7193, %v7186, 920167782
    %v7200 = vsel %vm7192, %v7183, %v7199
    %v7201 = vsel %vm7191, %v7198, %v7200
    %v7202 = vsel %vm7190, %v7180, %v7183
    %v7203 = vsel %vm7193, %v7189, 1326507024
    %v7204 = vsel %vm7192, %v7186, %v7203
    %v7205 = vsel %vm7191, %v7202, %v7204
    %v7206 = vshll.u32 %v7166, 8
    %v7207 = vmul.u32.u64.compose %v7206, %v7205
    %v7208 = vextract.low.u32 %v7207
    %v7209 = vextract.high.u32 %v7207
    %v7210 = vmul.u32.u64.compose %v7206, %v7201
    %v7211 = vextract.low.u32 %v7210
    %v7212 = vextract.high.u32 %v7210
    %v7213 = vmul.u32 %v7206, %v7197
    %v7214 = vadd.s32 %v7209, %v7211
    %vm7215 = vc.u32 %v7209, %v7211
    %v7216 = vadd.s32 %v7212, 1
    %v7217 = vsel %vm7215, %v7216, %v7212
    %v7218 = vadd.s32 %v7213, %v7217
    %v7219 = vadd.s32 %v7218, 536870912
    %v7220 = vshrl.u32 %v7219, 30
    %v7221 = vshll.u32 %v7220, 30
    %v7222 = vsub.s32 %v7218, %v7221
    %vm7223 = vcmp.lt.s32.totalorder %v7222, 0
    %v7224 = vsub.s32 0, %v7222
    %v7225 = vsel %vm7223, %v7224, %v7222
    %v7226 = vclz %v7225
    %v7227 = vsub.s32 %v7226, 2
    %vm7228 = vcmp.gt.s32.totalorder 0, %v7227
    %v7229 = vsel %vm7228, 0, %v7227
    %v7230 = vsub.s32 32, %v7229
    %v7231 = vshll.u32 %v7222, %v7229
    %v7232 = vshrl.u32 %v7214, %v7230
    %v7233 = vor.u32 %v7231, %v7232
    %v7234 = vsub.s32 4294967266, %v7229
    %v7235 = vadd.s32 %v7234, 127
    %v7236 = vshll.u32 %v7235, 23
    %v7237 = vor.u32 4788187, %v7236
    %v7238 = vand.u32 2147483647, %v7237
    %v7240 = vcvt.s32.f32 %v7233
    %v7241 = vmul.f32 %v7240, %v7238
    %v7242 = vxor.u32 %v7241, 2147483648
    %v7243 = vsel %vm7160, %v7242, %v7241
    %v7244 = vsub.s32 4, %v7220
    %v7245 = vsel %vm7160, %v7244, %v7220
    %v7246 = vsel %vm7159, %v633, %v7243
    %v7247 = vsel %vm7159, 0, %v7245
    %v7248 = vcosq.f32.pop %v7246
    %v7249 = vsinq.f32.pop %v7246
    %vm7250 = vweird.f32 %v633
    %v7251 = vand.u32 %v7247, 3
    %vm7252 = vcmp.lt.s32.totalorder %v7251, 2
    %vm7253 = vcmp.eq.s32.totalorder %v7251, 0
    %v7254 = vxor.u32 %v7249, 2147483648
    %v7255 = vsel %vm7253, %v7248, %v7254
    %vm7256 = vcmp.eq.s32.totalorder %v7251, 2
    %v7257 = vxor.u32 %v7248, 2147483648
    %v7258 = vsel %vm7256, %v7257, %v7249
    %v7259 = vsel %vm7252, %v7255, %v7258
    %v7260 = vsel %vm7250, nan, %v7259
    %v7261 = vand.u32 2147483647, %v634
    %vm7262 = vcmp.le.f32.partialorder %v7261, 0.7853982
    %vm7263 = vcmp.lt.s32.totalorder %v634, 0
    %v7264 = vand.u32 %v634, 2139095040
    %v7265 = vshrl.u32 %v7264, 23
    %v7266 = vsub.s32 %v7265, 127
    %v7267 = vand.u32 2147483647, %v634
    %v7268 = vand.u32 %v7267, 8388607
    %v7269 = vor.u32 %v7268, 8388608
    %v7270 = vsub.s32 0, %v7269
    %v7271 = vadd.s32 %v7266, 1
    %vm7272 = vcmp.gt.s32.totalorder %v7271, 0
    %v7273 = vsel %vm7272, %v7271, 0
    %v7274 = vshrl.u32 %v7273, 5
    %v7275 = vand.u32 %v7273, 31
    %v7276 = vsub.s32 32, %v7275
    %v7277 = vshrl.u32 683565275, %v7276
    %v7278 = vshll.u32 683565275, %v7275
    %v7279 = vshrl.u32 2475754826, %v7276
    %v7280 = vor.u32 %v7278, %v7279
    %v7281 = vshll.u32 2475754826, %v7275
    %v7282 = vshrl.u32 2131351028, %v7276
    %v7283 = vor.u32 %v7281, %v7282
    %v7284 = vshll.u32 2131351028, %v7275
    %v7285 = vshrl.u32 2102212464, %v7276
    %v7286 = vor.u32 %v7284, %v7285
    %v7287 = vshll.u32 2102212464, %v7275
    %v7288 = vshrl.u32 920167782, %v7276
    %v7289 = vor.u32 %v7287, %v7288
    %v7290 = vshll.u32 920167782, %v7275
    %v7291 = vshrl.u32 1326507024, %v7276
    %v7292 = vor.u32 %v7290, %v7291
    %vm7293 = vcmp.lt.s32.totalorder %v7274, 1
    %vm7294 = vcmp.lt.s32.totalorder %v7274, 2
    %vm7295 = vcmp.lt.s32.totalorder %v7274, 3
    %vm7296 = vcmp.lt.s32.totalorder %v7274, 4
    %v7297 = vsel %vm7293, %v7277, %v7280
    %v7298 = vsel %vm7296, %v7286, 2102212464
    %v7299 = vsel %vm7295, %v7283, %v7298
    %v7300 = vsel %vm7294, %v7297, %v7299
    %v7301 = vsel %vm7293, %v7280, %v7283
    %v7302 = vsel %vm7296, %v7289, 920167782
    %v7303 = vsel %vm7295, %v7286, %v7302
    %v7304 = vsel %vm7294, %v7301, %v7303
    %v7305 = vsel %vm7293, %v7283, %v7286
    %v7306 = vsel %vm7296, %v7292, 1326507024
    %v7307 = vsel %vm7295, %v7289, %v7306
    %v7308 = vsel %vm7294, %v7305, %v7307
    %v7309 = vshll.u32 %v7269, 8
    %v7310 = vmul.u32.u64.compose %v7309, %v7308
    %v7311 = vextract.low.u32 %v7310
    %v7312 = vextract.high.u32 %v7310
    %v7313 = vmul.u32.u64.compose %v7309, %v7304
    %v7314 = vextract.low.u32 %v7313
    %v7315 = vextract.high.u32 %v7313
    %v7316 = vmul.u32 %v7309, %v7300
    %v7317 = vadd.s32 %v7312, %v7314
    %vm7318 = vc.u32 %v7312, %v7314
    %v7319 = vadd.s32 %v7315, 1
    %v7320 = vsel %vm7318, %v7319, %v7315
    %v7321 = vadd.s32 %v7316, %v7320
    %v7322 = vadd.s32 %v7321, 536870912
    %v7323 = vshrl.u32 %v7322, 30
    %v7324 = vshll.u32 %v7323, 30
    %v7325 = vsub.s32 %v7321, %v7324
    %vm7326 = vcmp.lt.s32.totalorder %v7325, 0
    %v7327 = vsub.s32 0, %v7325
    %v7328 = vsel %vm7326, %v7327, %v7325
    %v7329 = vclz %v7328
    %v7330 = vsub.s32 %v7329, 2
    %vm7331 = vcmp.gt.s32.totalorder 0, %v7330
    %v7332 = vsel %vm7331, 0, %v7330
    %v7333 = vsub.s32 32, %v7332
    %v7334 = vshll.u32 %v7325, %v7332
    %v7335 = vshrl.u32 %v7317, %v7333
    %v7336 = vor.u32 %v7334, %v7335
    %v7337 = vsub.s32 4294967266, %v7332
    %v7338 = vadd.s32 %v7337, 127
    %v7339 = vshll.u32 %v7338, 23
    %v7340 = vor.u32 4788187, %v7339
    %v7341 = vand.u32 2147483647, %v7340
    %v7343 = vcvt.s32.f32 %v7336
    %v7344 = vmul.f32 %v7343, %v7341
    %v7345 = vxor.u32 %v7344, 2147483648
    %v7346 = vsel %vm7263, %v7345, %v7344
    %v7347 = vsub.s32 4, %v7323
    %v7348 = vsel %vm7263, %v7347, %v7323
    %v7349 = vsel %vm7262, %v634, %v7346
    %v7350 = vsel %vm7262, 0, %v7348
    %v7351 = vcosq.f32.pop %v7349
    %v7352 = vsinq.f32.pop %v7349
    %vm7353 = vweird.f32 %v634
    %v7354 = vand.u32 %v7350, 3
    %vm7355 = vcmp.lt.s32.totalorder %v7354, 2
    %vm7356 = vcmp.eq.s32.totalorder %v7354, 0
    %v7357 = vxor.u32 %v7352, 2147483648
    %v7358 = vsel %vm7356, %v7351, %v7357
    %vm7359 = vcmp.eq.s32.totalorder %v7354, 2
    %v7360 = vxor.u32 %v7351, 2147483648
    %v7361 = vsel %vm7359, %v7360, %v7352
    %v7362 = vsel %vm7355, %v7358, %v7361
    %v7363 = vsel %vm7353, nan, %v7362
    %v7364 = vand.u32 2147483647, %v635
    %vm7365 = vcmp.le.f32.partialorder %v7364, 0.7853982
    %vm7366 = vcmp.lt.s32.totalorder %v635, 0
    %v7367 = vand.u32 %v635, 2139095040
    %v7368 = vshrl.u32 %v7367, 23
    %v7369 = vsub.s32 %v7368, 127
    %v7370 = vand.u32 2147483647, %v635
    %v7371 = vand.u32 %v7370, 8388607
    %v7372 = vor.u32 %v7371, 8388608
    %v7373 = vsub.s32 0, %v7372
    %v7374 = vadd.s32 %v7369, 1
    %vm7375 = vcmp.gt.s32.totalorder %v7374, 0
    %v7376 = vsel %vm7375, %v7374, 0
    %v7377 = vshrl.u32 %v7376, 5
    %v7378 = vand.u32 %v7376, 31
    %v7379 = vsub.s32 32, %v7378
    %v7380 = vshrl.u32 683565275, %v7379
    %v7381 = vshll.u32 683565275, %v7378
    %v7382 = vshrl.u32 2475754826, %v7379
    %v7383 = vor.u32 %v7381, %v7382
    %v7384 = vshll.u32 2475754826, %v7378
    %v7385 = vshrl.u32 2131351028, %v7379
    %v7386 = vor.u32 %v7384, %v7385
    %v7387 = vshll.u32 2131351028, %v7378
    %v7388 = vshrl.u32 2102212464, %v7379
    %v7389 = vor.u32 %v7387, %v7388
    %v7390 = vshll.u32 2102212464, %v7378
    %v7391 = vshrl.u32 920167782, %v7379
    %v7392 = vor.u32 %v7390, %v7391
    %v7393 = vshll.u32 920167782, %v7378
    %v7394 = vshrl.u32 1326507024, %v7379
    %v7395 = vor.u32 %v7393, %v7394
    %vm7396 = vcmp.lt.s32.totalorder %v7377, 1
    %vm7397 = vcmp.lt.s32.totalorder %v7377, 2
    %vm7398 = vcmp.lt.s32.totalorder %v7377, 3
    %vm7399 = vcmp.lt.s32.totalorder %v7377, 4
    %v7400 = vsel %vm7396, %v7380, %v7383
    %v7401 = vsel %vm7399, %v7389, 2102212464
    %v7402 = vsel %vm7398, %v7386, %v7401
    %v7403 = vsel %vm7397, %v7400, %v7402
    %v7404 = vsel %vm7396, %v7383, %v7386
    %v7405 = vsel %vm7399, %v7392, 920167782
    %v7406 = vsel %vm7398, %v7389, %v7405
    %v7407 = vsel %vm7397, %v7404, %v7406
    %v7408 = vsel %vm7396, %v7386, %v7389
    %v7409 = vsel %vm7399, %v7395, 1326507024
    %v7410 = vsel %vm7398, %v7392, %v7409
    %v7411 = vsel %vm7397, %v7408, %v7410
    %v7412 = vshll.u32 %v7372, 8
    %v7413 = vmul.u32.u64.compose %v7412, %v7411
    %v7414 = vextract.low.u32 %v7413
    %v7415 = vextract.high.u32 %v7413
    %v7416 = vmul.u32.u64.compose %v7412, %v7407
    %v7417 = vextract.low.u32 %v7416
    %v7418 = vextract.high.u32 %v7416
    %v7419 = vmul.u32 %v7412, %v7403
    %v7420 = vadd.s32 %v7415, %v7417
    %vm7421 = vc.u32 %v7415, %v7417
    %v7422 = vadd.s32 %v7418, 1
    %v7423 = vsel %vm7421, %v7422, %v7418
    %v7424 = vadd.s32 %v7419, %v7423
    %v7425 = vadd.s32 %v7424, 536870912
    %v7426 = vshrl.u32 %v7425, 30
    %v7427 = vshll.u32 %v7426, 30
    %v7428 = vsub.s32 %v7424, %v7427
    %vm7429 = vcmp.lt.s32.totalorder %v7428, 0
    %v7430 = vsub.s32 0, %v7428
    %v7431 = vsel %vm7429, %v7430, %v7428
    %v7432 = vclz %v7431
    %v7433 = vsub.s32 %v7432, 2
    %vm7434 = vcmp.gt.s32.totalorder 0, %v7433
    %v7435 = vsel %vm7434, 0, %v7433
    %v7436 = vsub.s32 32, %v7435
    %v7437 = vshll.u32 %v7428, %v7435
    %v7438 = vshrl.u32 %v7420, %v7436
    %v7439 = vor.u32 %v7437, %v7438
    %v7440 = vsub.s32 4294967266, %v7435
    %v7441 = vadd.s32 %v7440, 127
    %v7442 = vshll.u32 %v7441, 23
    %v7443 = vor.u32 4788187, %v7442
    %v7444 = vand.u32 2147483647, %v7443
    %v7446 = vcvt.s32.f32 %v7439
    %v7447 = vmul.f32 %v7446, %v7444
    %v7448 = vxor.u32 %v7447, 2147483648
    %v7449 = vsel %vm7366, %v7448, %v7447
    %v7450 = vsub.s32 4, %v7426
    %v7451 = vsel %vm7366, %v7450, %v7426
    %v7452 = vsel %vm7365, %v635, %v7449
    %v7453 = vsel %vm7365, 0, %v7451
    %v7454 = vcosq.f32.pop %v7452
    %v7455 = vsinq.f32.pop %v7452
    %vm7456 = vweird.f32 %v635
    %v7457 = vand.u32 %v7453, 3
    %vm7458 = vcmp.lt.s32.totalorder %v7457, 2
    %vm7459 = vcmp.eq.s32.totalorder %v7457, 0
    %v7460 = vxor.u32 %v7455, 2147483648
    %v7461 = vsel %vm7459, %v7454, %v7460
    %vm7462 = vcmp.eq.s32.totalorder %v7457, 2
    %v7463 = vxor.u32 %v7454, 2147483648
    %v7464 = vsel %vm7462, %v7463, %v7455
    %v7465 = vsel %vm7458, %v7461, %v7464
    %v7466 = vsel %vm7456, nan, %v7465
    %v7467 = vand.u32 2147483647, %v636
    %vm7468 = vcmp.le.f32.partialorder %v7467, 0.7853982
    %vm7469 = vcmp.lt.s32.totalorder %v636, 0
    %v7470 = vand.u32 %v636, 2139095040
    %v7471 = vshrl.u32 %v7470, 23
    %v7472 = vsub.s32 %v7471, 127
    %v7473 = vand.u32 2147483647, %v636
    %v7474 = vand.u32 %v7473, 8388607
    %v7475 = vor.u32 %v7474, 8388608
    %v7476 = vsub.s32 0, %v7475
    %v7477 = vadd.s32 %v7472, 1
    %vm7478 = vcmp.gt.s32.totalorder %v7477, 0
    %v7479 = vsel %vm7478, %v7477, 0
    %v7480 = vshrl.u32 %v7479, 5
    %v7481 = vand.u32 %v7479, 31
    %v7482 = vsub.s32 32, %v7481
    %v7483 = vshrl.u32 683565275, %v7482
    %v7484 = vshll.u32 683565275, %v7481
    %v7485 = vshrl.u32 2475754826, %v7482
    %v7486 = vor.u32 %v7484, %v7485
    %v7487 = vshll.u32 2475754826, %v7481
    %v7488 = vshrl.u32 2131351028, %v7482
    %v7489 = vor.u32 %v7487, %v7488
    %v7490 = vshll.u32 2131351028, %v7481
    %v7491 = vshrl.u32 2102212464, %v7482
    %v7492 = vor.u32 %v7490, %v7491
    %v7493 = vshll.u32 2102212464, %v7481
    %v7494 = vshrl.u32 920167782, %v7482
    %v7495 = vor.u32 %v7493, %v7494
    %v7496 = vshll.u32 920167782, %v7481
    %v7497 = vshrl.u32 1326507024, %v7482
    %v7498 = vor.u32 %v7496, %v7497
    %vm7499 = vcmp.lt.s32.totalorder %v7480, 1
    %vm7500 = vcmp.lt.s32.totalorder %v7480, 2
    %vm7501 = vcmp.lt.s32.totalorder %v7480, 3
    %vm7502 = vcmp.lt.s32.totalorder %v7480, 4
    %v7503 = vsel %vm7499, %v7483, %v7486
    %v7504 = vsel %vm7502, %v7492, 2102212464
    %v7505 = vsel %vm7501, %v7489, %v7504
    %v7506 = vsel %vm7500, %v7503, %v7505
    %v7507 = vsel %vm7499, %v7486, %v7489
    %v7508 = vsel %vm7502, %v7495, 920167782
    %v7509 = vsel %vm7501, %v7492, %v7508
    %v7510 = vsel %vm7500, %v7507, %v7509
    %v7511 = vsel %vm7499, %v7489, %v7492
    %v7512 = vsel %vm7502, %v7498, 1326507024
    %v7513 = vsel %vm7501, %v7495, %v7512
    %v7514 = vsel %vm7500, %v7511, %v7513
    %v7515 = vshll.u32 %v7475, 8
    %v7516 = vmul.u32.u64.compose %v7515, %v7514
    %v7517 = vextract.low.u32 %v7516
    %v7518 = vextract.high.u32 %v7516
    %v7519 = vmul.u32.u64.compose %v7515, %v7510
    %v7520 = vextract.low.u32 %v7519
    %v7521 = vextract.high.u32 %v7519
    %v7522 = vmul.u32 %v7515, %v7506
    %v7523 = vadd.s32 %v7518, %v7520
    %vm7524 = vc.u32 %v7518, %v7520
    %v7525 = vadd.s32 %v7521, 1
    %v7526 = vsel %vm7524, %v7525, %v7521
    %v7527 = vadd.s32 %v7522, %v7526
    %v7528 = vadd.s32 %v7527, 536870912
    %v7529 = vshrl.u32 %v7528, 30
    %v7530 = vshll.u32 %v7529, 30
    %v7531 = vsub.s32 %v7527, %v7530
    %vm7532 = vcmp.lt.s32.totalorder %v7531, 0
    %v7533 = vsub.s32 0, %v7531
    %v7534 = vsel %vm7532, %v7533, %v7531
    %v7535 = vclz %v7534
    %v7536 = vsub.s32 %v7535, 2
    %vm7537 = vcmp.gt.s32.totalorder 0, %v7536
    %v7538 = vsel %vm7537, 0, %v7536
    %v7539 = vsub.s32 32, %v7538
    %v7540 = vshll.u32 %v7531, %v7538
    %v7541 = vshrl.u32 %v7523, %v7539
    %v7542 = vor.u32 %v7540, %v7541
    %v7543 = vsub.s32 4294967266, %v7538
    %v7544 = vadd.s32 %v7543, 127
    %v7545 = vshll.u32 %v7544, 23
    %v7546 = vor.u32 4788187, %v7545
    %v7547 = vand.u32 2147483647, %v7546
    %v7549 = vcvt.s32.f32 %v7542
    %v7550 = vmul.f32 %v7549, %v7547
    %v7551 = vxor.u32 %v7550, 2147483648
    %v7552 = vsel %vm7469, %v7551, %v7550
    %v7553 = vsub.s32 4, %v7529
    %v7554 = vsel %vm7469, %v7553, %v7529
    %v7555 = vsel %vm7468, %v636, %v7552
    %v7556 = vsel %vm7468, 0, %v7554
    %v7557 = vcosq.f32.pop %v7555
    %v7558 = vsinq.f32.pop %v7555
    %vm7559 = vweird.f32 %v636
    %v7560 = vand.u32 %v7556, 3
    %vm7561 = vcmp.lt.s32.totalorder %v7560, 2
    %vm7562 = vcmp.eq.s32.totalorder %v7560, 0
    %v7563 = vxor.u32 %v7558, 2147483648
    %v7564 = vsel %vm7562, %v7557, %v7563
    %vm7565 = vcmp.eq.s32.totalorder %v7560, 2
    %v7566 = vxor.u32 %v7557, 2147483648
    %v7567 = vsel %vm7565, %v7566, %v7558
    %v7568 = vsel %vm7561, %v7564, %v7567
    %v7569 = vsel %vm7559, nan, %v7568
    %v7570 = vand.u32 2147483647, %v637
    %vm7571 = vcmp.le.f32.partialorder %v7570, 0.7853982
    %vm7572 = vcmp.lt.s32.totalorder %v637, 0
    %v7573 = vand.u32 %v637, 2139095040
    %v7574 = vshrl.u32 %v7573, 23
    %v7575 = vsub.s32 %v7574, 127
    %v7576 = vand.u32 2147483647, %v637
    %v7577 = vand.u32 %v7576, 8388607
    %v7578 = vor.u32 %v7577, 8388608
    %v7579 = vsub.s32 0, %v7578
    %v7580 = vadd.s32 %v7575, 1
    %vm7581 = vcmp.gt.s32.totalorder %v7580, 0
    %v7582 = vsel %vm7581, %v7580, 0
    %v7583 = vshrl.u32 %v7582, 5
    %v7584 = vand.u32 %v7582, 31
    %v7585 = vsub.s32 32, %v7584
    %v7586 = vshrl.u32 683565275, %v7585
    %v7587 = vshll.u32 683565275, %v7584
    %v7588 = vshrl.u32 2475754826, %v7585
    %v7589 = vor.u32 %v7587, %v7588
    %v7590 = vshll.u32 2475754826, %v7584
    %v7591 = vshrl.u32 2131351028, %v7585
    %v7592 = vor.u32 %v7590, %v7591
    %v7593 = vshll.u32 2131351028, %v7584
    %v7594 = vshrl.u32 2102212464, %v7585
    %v7595 = vor.u32 %v7593, %v7594
    %v7596 = vshll.u32 2102212464, %v7584
    %v7597 = vshrl.u32 920167782, %v7585
    %v7598 = vor.u32 %v7596, %v7597
    %v7599 = vshll.u32 920167782, %v7584
    %v7600 = vshrl.u32 1326507024, %v7585
    %v7601 = vor.u32 %v7599, %v7600
    %vm7602 = vcmp.lt.s32.totalorder %v7583, 1
    %vm7603 = vcmp.lt.s32.totalorder %v7583, 2
    %vm7604 = vcmp.lt.s32.totalorder %v7583, 3
    %vm7605 = vcmp.lt.s32.totalorder %v7583, 4
    %v7606 = vsel %vm7602, %v7586, %v7589
    %v7607 = vsel %vm7605, %v7595, 2102212464
    %v7608 = vsel %vm7604, %v7592, %v7607
    %v7609 = vsel %vm7603, %v7606, %v7608
    %v7610 = vsel %vm7602, %v7589, %v7592
    %v7611 = vsel %vm7605, %v7598, 920167782
    %v7612 = vsel %vm7604, %v7595, %v7611
    %v7613 = vsel %vm7603, %v7610, %v7612
    %v7614 = vsel %vm7602, %v7592, %v7595
    %v7615 = vsel %vm7605, %v7601, 1326507024
    %v7616 = vsel %vm7604, %v7598, %v7615
    %v7617 = vsel %vm7603, %v7614, %v7616
    %v7618 = vshll.u32 %v7578, 8
    %v7619 = vmul.u32.u64.compose %v7618, %v7617
    %v7620 = vextract.low.u32 %v7619
    %v7621 = vextract.high.u32 %v7619
    %v7622 = vmul.u32.u64.compose %v7618, %v7613
    %v7623 = vextract.low.u32 %v7622
    %v7624 = vextract.high.u32 %v7622
    %v7625 = vmul.u32 %v7618, %v7609
    %v7626 = vadd.s32 %v7621, %v7623
    %vm7627 = vc.u32 %v7621, %v7623
    %v7628 = vadd.s32 %v7624, 1
    %v7629 = vsel %vm7627, %v7628, %v7624
    %v7630 = vadd.s32 %v7625, %v7629
    %v7631 = vadd.s32 %v7630, 536870912
    %v7632 = vshrl.u32 %v7631, 30
    %v7633 = vshll.u32 %v7632, 30
    %v7634 = vsub.s32 %v7630, %v7633
    %vm7635 = vcmp.lt.s32.totalorder %v7634, 0
    %v7636 = vsub.s32 0, %v7634
    %v7637 = vsel %vm7635, %v7636, %v7634
    %v7638 = vclz %v7637
    %v7639 = vsub.s32 %v7638, 2
    %vm7640 = vcmp.gt.s32.totalorder 0, %v7639
    %v7641 = vsel %vm7640, 0, %v7639
    %v7642 = vsub.s32 32, %v7641
    %v7643 = vshll.u32 %v7634, %v7641
    %v7644 = vshrl.u32 %v7626, %v7642
    %v7645 = vor.u32 %v7643, %v7644
    %v7646 = vsub.s32 4294967266, %v7641
    %v7647 = vadd.s32 %v7646, 127
    %v7648 = vshll.u32 %v7647, 23
    %v7649 = vor.u32 4788187, %v7648
    %v7650 = vand.u32 2147483647, %v7649
    %v7652 = vcvt.s32.f32 %v7645
    %v7653 = vmul.f32 %v7652, %v7650
    %v7654 = vxor.u32 %v7653, 2147483648
    %v7655 = vsel %vm7572, %v7654, %v7653
    %v7656 = vsub.s32 4, %v7632
    %v7657 = vsel %vm7572, %v7656, %v7632
    %v7658 = vsel %vm7571, %v637, %v7655
    %v7659 = vsel %vm7571, 0, %v7657
    %v7660 = vcosq.f32.pop %v7658
    %v7661 = vsinq.f32.pop %v7658
    %vm7662 = vweird.f32 %v637
    %v7663 = vand.u32 %v7659, 3
    %vm7664 = vcmp.lt.s32.totalorder %v7663, 2
    %vm7665 = vcmp.eq.s32.totalorder %v7663, 0
    %v7666 = vxor.u32 %v7661, 2147483648
    %v7667 = vsel %vm7665, %v7660, %v7666
    %vm7668 = vcmp.eq.s32.totalorder %v7663, 2
    %v7669 = vxor.u32 %v7660, 2147483648
    %v7670 = vsel %vm7668, %v7669, %v7661
    %v7671 = vsel %vm7664, %v7667, %v7670
    %v7672 = vsel %vm7662, nan, %v7671
    %v7673 = vand.u32 2147483647, %v638
    %vm7674 = vcmp.le.f32.partialorder %v7673, 0.7853982
    %vm7675 = vcmp.lt.s32.totalorder %v638, 0
    %v7676 = vand.u32 %v638, 2139095040
    %v7677 = vshrl.u32 %v7676, 23
    %v7678 = vsub.s32 %v7677, 127
    %v7679 = vand.u32 2147483647, %v638
    %v7680 = vand.u32 %v7679, 8388607
    %v7681 = vor.u32 %v7680, 8388608
    %v7682 = vsub.s32 0, %v7681
    %v7683 = vadd.s32 %v7678, 1
    %vm7684 = vcmp.gt.s32.totalorder %v7683, 0
    %v7685 = vsel %vm7684, %v7683, 0
    %v7686 = vshrl.u32 %v7685, 5
    %v7687 = vand.u32 %v7685, 31
    %v7688 = vsub.s32 32, %v7687
    %v7689 = vshrl.u32 683565275, %v7688
    %v7690 = vshll.u32 683565275, %v7687
    %v7691 = vshrl.u32 2475754826, %v7688
    %v7692 = vor.u32 %v7690, %v7691
    %v7693 = vshll.u32 2475754826, %v7687
    %v7694 = vshrl.u32 2131351028, %v7688
    %v7695 = vor.u32 %v7693, %v7694
    %v7696 = vshll.u32 2131351028, %v7687
    %v7697 = vshrl.u32 2102212464, %v7688
    %v7698 = vor.u32 %v7696, %v7697
    %v7699 = vshll.u32 2102212464, %v7687
    %v7700 = vshrl.u32 920167782, %v7688
    %v7701 = vor.u32 %v7699, %v7700
    %v7702 = vshll.u32 920167782, %v7687
    %v7703 = vshrl.u32 1326507024, %v7688
    %v7704 = vor.u32 %v7702, %v7703
    %vm7705 = vcmp.lt.s32.totalorder %v7686, 1
    %vm7706 = vcmp.lt.s32.totalorder %v7686, 2
    %vm7707 = vcmp.lt.s32.totalorder %v7686, 3
    %vm7708 = vcmp.lt.s32.totalorder %v7686, 4
    %v7709 = vsel %vm7705, %v7689, %v7692
    %v7710 = vsel %vm7708, %v7698, 2102212464
    %v7711 = vsel %vm7707, %v7695, %v7710
    %v7712 = vsel %vm7706, %v7709, %v7711
    %v7713 = vsel %vm7705, %v7692, %v7695
    %v7714 = vsel %vm7708, %v7701, 920167782
    %v7715 = vsel %vm7707, %v7698, %v7714
    %v7716 = vsel %vm7706, %v7713, %v7715
    %v7717 = vsel %vm7705, %v7695, %v7698
    %v7718 = vsel %vm7708, %v7704, 1326507024
    %v7719 = vsel %vm7707, %v7701, %v7718
    %v7720 = vsel %vm7706, %v7717, %v7719
    %v7721 = vshll.u32 %v7681, 8
    %v7722 = vmul.u32.u64.compose %v7721, %v7720
    %v7723 = vextract.low.u32 %v7722
    %v7724 = vextract.high.u32 %v7722
    %v7725 = vmul.u32.u64.compose %v7721, %v7716
    %v7726 = vextract.low.u32 %v7725
    %v7727 = vextract.high.u32 %v7725
    %v7728 = vmul.u32 %v7721, %v7712
    %v7729 = vadd.s32 %v7724, %v7726
    %vm7730 = vc.u32 %v7724, %v7726
    %v7731 = vadd.s32 %v7727, 1
    %v7732 = vsel %vm7730, %v7731, %v7727
    %v7733 = vadd.s32 %v7728, %v7732
    %v7734 = vadd.s32 %v7733, 536870912
    %v7735 = vshrl.u32 %v7734, 30
    %v7736 = vshll.u32 %v7735, 30
    %v7737 = vsub.s32 %v7733, %v7736
    %vm7738 = vcmp.lt.s32.totalorder %v7737, 0
    %v7739 = vsub.s32 0, %v7737
    %v7740 = vsel %vm7738, %v7739, %v7737
    %v7741 = vclz %v7740
    %v7742 = vsub.s32 %v7741, 2
    %vm7743 = vcmp.gt.s32.totalorder 0, %v7742
    %v7744 = vsel %vm7743, 0, %v7742
    %v7745 = vsub.s32 32, %v7744
    %v7746 = vshll.u32 %v7737, %v7744
    %v7747 = vshrl.u32 %v7729, %v7745
    %v7748 = vor.u32 %v7746, %v7747
    %v7749 = vsub.s32 4294967266, %v7744
    %v7750 = vadd.s32 %v7749, 127
    %v7751 = vshll.u32 %v7750, 23
    %v7752 = vor.u32 4788187, %v7751
    %v7753 = vand.u32 2147483647, %v7752
    %v7755 = vcvt.s32.f32 %v7748
    %v7756 = vmul.f32 %v7755, %v7753
    %v7757 = vxor.u32 %v7756, 2147483648
    %v7758 = vsel %vm7675, %v7757, %v7756
    %v7759 = vsub.s32 4, %v7735
    %v7760 = vsel %vm7675, %v7759, %v7735
    %v7761 = vsel %vm7674, %v638, %v7758
    %v7762 = vsel %vm7674, 0, %v7760
    %v7763 = vcosq.f32.pop %v7761
    %v7764 = vsinq.f32.pop %v7761
    %vm7765 = vweird.f32 %v638
    %v7766 = vand.u32 %v7762, 3
    %vm7767 = vcmp.lt.s32.totalorder %v7766, 2
    %vm7768 = vcmp.eq.s32.totalorder %v7766, 0
    %v7769 = vxor.u32 %v7764, 2147483648
    %v7770 = vsel %vm7768, %v7763, %v7769
    %vm7771 = vcmp.eq.s32.totalorder %v7766, 2
    %v7772 = vxor.u32 %v7763, 2147483648
    %v7773 = vsel %vm7771, %v7772, %v7764
    %v7774 = vsel %vm7767, %v7770, %v7773
    %v7775 = vsel %vm7765, nan, %v7774
    %v7776 = vand.u32 2147483647, %v639
    %vm7777 = vcmp.le.f32.partialorder %v7776, 0.7853982
    %vm7778 = vcmp.lt.s32.totalorder %v639, 0
    %v7779 = vand.u32 %v639, 2139095040
    %v7780 = vshrl.u32 %v7779, 23
    %v7781 = vsub.s32 %v7780, 127
    %v7782 = vand.u32 2147483647, %v639
    %v7783 = vand.u32 %v7782, 8388607
    %v7784 = vor.u32 %v7783, 8388608
    %v7785 = vsub.s32 0, %v7784
    %v7786 = vadd.s32 %v7781, 1
    %vm7787 = vcmp.gt.s32.totalorder %v7786, 0
    %v7788 = vsel %vm7787, %v7786, 0
    %v7789 = vshrl.u32 %v7788, 5
    %v7790 = vand.u32 %v7788, 31
    %v7791 = vsub.s32 32, %v7790
    %v7792 = vshrl.u32 683565275, %v7791
    %v7793 = vshll.u32 683565275, %v7790
    %v7794 = vshrl.u32 2475754826, %v7791
    %v7795 = vor.u32 %v7793, %v7794
    %v7796 = vshll.u32 2475754826, %v7790
    %v7797 = vshrl.u32 2131351028, %v7791
    %v7798 = vor.u32 %v7796, %v7797
    %v7799 = vshll.u32 2131351028, %v7790
    %v7800 = vshrl.u32 2102212464, %v7791
    %v7801 = vor.u32 %v7799, %v7800
    %v7802 = vshll.u32 2102212464, %v7790
    %v7803 = vshrl.u32 920167782, %v7791
    %v7804 = vor.u32 %v7802, %v7803
    %v7805 = vshll.u32 920167782, %v7790
    %v7806 = vshrl.u32 1326507024, %v7791
    %v7807 = vor.u32 %v7805, %v7806
    %vm7808 = vcmp.lt.s32.totalorder %v7789, 1
    %vm7809 = vcmp.lt.s32.totalorder %v7789, 2
    %vm7810 = vcmp.lt.s32.totalorder %v7789, 3
    %vm7811 = vcmp.lt.s32.totalorder %v7789, 4
    %v7812 = vsel %vm7808, %v7792, %v7795
    %v7813 = vsel %vm7811, %v7801, 2102212464
    %v7814 = vsel %vm7810, %v7798, %v7813
    %v7815 = vsel %vm7809, %v7812, %v7814
    %v7816 = vsel %vm7808, %v7795, %v7798
    %v7817 = vsel %vm7811, %v7804, 920167782
    %v7818 = vsel %vm7810, %v7801, %v7817
    %v7819 = vsel %vm7809, %v7816, %v7818
    %v7820 = vsel %vm7808, %v7798, %v7801
    %v7821 = vsel %vm7811, %v7807, 1326507024
    %v7822 = vsel %vm7810, %v7804, %v7821
    %v7823 = vsel %vm7809, %v7820, %v7822
    %v7824 = vshll.u32 %v7784, 8
    %v7825 = vmul.u32.u64.compose %v7824, %v7823
    %v7826 = vextract.low.u32 %v7825
    %v7827 = vextract.high.u32 %v7825
    %v7828 = vmul.u32.u64.compose %v7824, %v7819
    %v7829 = vextract.low.u32 %v7828
    %v7830 = vextract.high.u32 %v7828
    %v7831 = vmul.u32 %v7824, %v7815
    %v7832 = vadd.s32 %v7827, %v7829
    %vm7833 = vc.u32 %v7827, %v7829
    %v7834 = vadd.s32 %v7830, 1
    %v7835 = vsel %vm7833, %v7834, %v7830
    %v7836 = vadd.s32 %v7831, %v7835
    %v7837 = vadd.s32 %v7836, 536870912
    %v7838 = vshrl.u32 %v7837, 30
    %v7839 = vshll.u32 %v7838, 30
    %v7840 = vsub.s32 %v7836, %v7839
    %vm7841 = vcmp.lt.s32.totalorder %v7840, 0
    %v7842 = vsub.s32 0, %v7840
    %v7843 = vsel %vm7841, %v7842, %v7840
    %v7844 = vclz %v7843
    %v7845 = vsub.s32 %v7844, 2
    %vm7846 = vcmp.gt.s32.totalorder 0, %v7845
    %v7847 = vsel %vm7846, 0, %v7845
    %v7848 = vsub.s32 32, %v7847
    %v7849 = vshll.u32 %v7840, %v7847
    %v7850 = vshrl.u32 %v7832, %v7848
    %v7851 = vor.u32 %v7849, %v7850
    %v7852 = vsub.s32 4294967266, %v7847
    %v7853 = vadd.s32 %v7852, 127
    %v7854 = vshll.u32 %v7853, 23
    %v7855 = vor.u32 4788187, %v7854
    %v7856 = vand.u32 2147483647, %v7855
    %v7858 = vcvt.s32.f32 %v7851
    %v7859 = vmul.f32 %v7858, %v7856
    %v7860 = vxor.u32 %v7859, 2147483648
    %v7861 = vsel %vm7778, %v7860, %v7859
    %v7862 = vsub.s32 4, %v7838
    %v7863 = vsel %vm7778, %v7862, %v7838
    %v7864 = vsel %vm7777, %v639, %v7861
    %v7865 = vsel %vm7777, 0, %v7863
    %v7866 = vcosq.f32.pop %v7864
    %v7867 = vsinq.f32.pop %v7864
    %vm7868 = vweird.f32 %v639
    %v7869 = vand.u32 %v7865, 3
    %vm7870 = vcmp.lt.s32.totalorder %v7869, 2
    %vm7871 = vcmp.eq.s32.totalorder %v7869, 0
    %v7872 = vxor.u32 %v7867, 2147483648
    %v7873 = vsel %vm7871, %v7866, %v7872
    %vm7874 = vcmp.eq.s32.totalorder %v7869, 2
    %v7875 = vxor.u32 %v7866, 2147483648
    %v7876 = vsel %vm7874, %v7875, %v7867
    %v7877 = vsel %vm7870, %v7873, %v7876
    %v7878 = vsel %vm7868, nan, %v7877
    %v7879 = vand.u32 2147483647, %v640
    %vm7880 = vcmp.le.f32.partialorder %v7879, 0.7853982
    %vm7881 = vcmp.lt.s32.totalorder %v640, 0
    %v7882 = vand.u32 %v640, 2139095040
    %v7883 = vshrl.u32 %v7882, 23
    %v7884 = vsub.s32 %v7883, 127
    %v7885 = vand.u32 2147483647, %v640
    %v7886 = vand.u32 %v7885, 8388607
    %v7887 = vor.u32 %v7886, 8388608
    %v7888 = vsub.s32 0, %v7887
    %v7889 = vadd.s32 %v7884, 1
    %vm7890 = vcmp.gt.s32.totalorder %v7889, 0
    %v7891 = vsel %vm7890, %v7889, 0
    %v7892 = vshrl.u32 %v7891, 5
    %v7893 = vand.u32 %v7891, 31
    %v7894 = vsub.s32 32, %v7893
    %v7895 = vshrl.u32 683565275, %v7894
    %v7896 = vshll.u32 683565275, %v7893
    %v7897 = vshrl.u32 2475754826, %v7894
    %v7898 = vor.u32 %v7896, %v7897
    %v7899 = vshll.u32 2475754826, %v7893
    %v7900 = vshrl.u32 2131351028, %v7894
    %v7901 = vor.u32 %v7899, %v7900
    %v7902 = vshll.u32 2131351028, %v7893
    %v7903 = vshrl.u32 2102212464, %v7894
    %v7904 = vor.u32 %v7902, %v7903
    %v7905 = vshll.u32 2102212464, %v7893
    %v7906 = vshrl.u32 920167782, %v7894
    %v7907 = vor.u32 %v7905, %v7906
    %v7908 = vshll.u32 920167782, %v7893
    %v7909 = vshrl.u32 1326507024, %v7894
    %v7910 = vor.u32 %v7908, %v7909
    %vm7911 = vcmp.lt.s32.totalorder %v7892, 1
    %vm7912 = vcmp.lt.s32.totalorder %v7892, 2
    %vm7913 = vcmp.lt.s32.totalorder %v7892, 3
    %vm7914 = vcmp.lt.s32.totalorder %v7892, 4
    %v7915 = vsel %vm7911, %v7895, %v7898
    %v7916 = vsel %vm7914, %v7904, 2102212464
    %v7917 = vsel %vm7913, %v7901, %v7916
    %v7918 = vsel %vm7912, %v7915, %v7917
    %v7919 = vsel %vm7911, %v7898, %v7901
    %v7920 = vsel %vm7914, %v7907, 920167782
    %v7921 = vsel %vm7913, %v7904, %v7920
    %v7922 = vsel %vm7912, %v7919, %v7921
    %v7923 = vsel %vm7911, %v7901, %v7904
    %v7924 = vsel %vm7914, %v7910, 1326507024
    %v7925 = vsel %vm7913, %v7907, %v7924
    %v7926 = vsel %vm7912, %v7923, %v7925
    %v7927 = vshll.u32 %v7887, 8
    %v7928 = vmul.u32.u64.compose %v7927, %v7926
    %v7929 = vextract.low.u32 %v7928
    %v7930 = vextract.high.u32 %v7928
    %v7931 = vmul.u32.u64.compose %v7927, %v7922
    %v7932 = vextract.low.u32 %v7931
    %v7933 = vextract.high.u32 %v7931
    %v7934 = vmul.u32 %v7927, %v7918
    %v7935 = vadd.s32 %v7930, %v7932
    %vm7936 = vc.u32 %v7930, %v7932
    %v7937 = vadd.s32 %v7933, 1
    %v7938 = vsel %vm7936, %v7937, %v7933
    %v7939 = vadd.s32 %v7934, %v7938
    %v7940 = vadd.s32 %v7939, 536870912
    %v7941 = vshrl.u32 %v7940, 30
    %v7942 = vshll.u32 %v7941, 30
    %v7943 = vsub.s32 %v7939, %v7942
    %vm7944 = vcmp.lt.s32.totalorder %v7943, 0
    %v7945 = vsub.s32 0, %v7943
    %v7946 = vsel %vm7944, %v7945, %v7943
    %v7947 = vclz %v7946
    %v7948 = vsub.s32 %v7947, 2
    %vm7949 = vcmp.gt.s32.totalorder 0, %v7948
    %v7950 = vsel %vm7949, 0, %v7948
    %v7951 = vsub.s32 32, %v7950
    %v7952 = vshll.u32 %v7943, %v7950
    %v7953 = vshrl.u32 %v7935, %v7951
    %v7954 = vor.u32 %v7952, %v7953
    %v7955 = vsub.s32 4294967266, %v7950
    %v7956 = vadd.s32 %v7955, 127
    %v7957 = vshll.u32 %v7956, 23
    %v7958 = vor.u32 4788187, %v7957
    %v7959 = vand.u32 2147483647, %v7958
    %v7961 = vcvt.s32.f32 %v7954
    %v7962 = vmul.f32 %v7961, %v7959
    %v7963 = vxor.u32 %v7962, 2147483648
    %v7964 = vsel %vm7881, %v7963, %v7962
    %v7965 = vsub.s32 4, %v7941
    %v7966 = vsel %vm7881, %v7965, %v7941
    %v7967 = vsel %vm7880, %v640, %v7964
    %v7968 = vsel %vm7880, 0, %v7966
    %v7969 = vcosq.f32.pop %v7967
    %v7970 = vsinq.f32.pop %v7967
    %vm7971 = vweird.f32 %v640
    %v7972 = vand.u32 %v7968, 3
    %vm7973 = vcmp.lt.s32.totalorder %v7972, 2
    %vm7974 = vcmp.eq.s32.totalorder %v7972, 0
    %v7975 = vxor.u32 %v7970, 2147483648
    %v7976 = vsel %vm7974, %v7969, %v7975
    %vm7977 = vcmp.eq.s32.totalorder %v7972, 2
    %v7978 = vxor.u32 %v7969, 2147483648
    %v7979 = vsel %vm7977, %v7978, %v7970
    %v7980 = vsel %vm7973, %v7976, %v7979
    %v7981 = vsel %vm7971, nan, %v7980
    %v7982 = vand.u32 2147483647, %v641
    %vm7983 = vcmp.le.f32.partialorder %v7982, 0.7853982
    %vm7984 = vcmp.lt.s32.totalorder %v641, 0
    %v7985 = vand.u32 %v641, 2139095040
    %v7986 = vshrl.u32 %v7985, 23
    %v7987 = vsub.s32 %v7986, 127
    %v7988 = vand.u32 2147483647, %v641
    %v7989 = vand.u32 %v7988, 8388607
    %v7990 = vor.u32 %v7989, 8388608
    %v7991 = vsub.s32 0, %v7990
    %v7992 = vadd.s32 %v7987, 1
    %vm7993 = vcmp.gt.s32.totalorder %v7992, 0
    %v7994 = vsel %vm7993, %v7992, 0
    %v7995 = vshrl.u32 %v7994, 5
    %v7996 = vand.u32 %v7994, 31
    %v7997 = vsub.s32 32, %v7996
    %v7998 = vshrl.u32 683565275, %v7997
    %v7999 = vshll.u32 683565275, %v7996
    %v8000 = vshrl.u32 2475754826, %v7997
    %v8001 = vor.u32 %v7999, %v8000
    %v8002 = vshll.u32 2475754826, %v7996
    %v8003 = vshrl.u32 2131351028, %v7997
    %v8004 = vor.u32 %v8002, %v8003
    %v8005 = vshll.u32 2131351028, %v7996
    %v8006 = vshrl.u32 2102212464, %v7997
    %v8007 = vor.u32 %v8005, %v8006
    %v8008 = vshll.u32 2102212464, %v7996
    %v8009 = vshrl.u32 920167782, %v7997
    %v8010 = vor.u32 %v8008, %v8009
    %v8011 = vshll.u32 920167782, %v7996
    %v8012 = vshrl.u32 1326507024, %v7997
    %v8013 = vor.u32 %v8011, %v8012
    %vm8014 = vcmp.lt.s32.totalorder %v7995, 1
    %vm8015 = vcmp.lt.s32.totalorder %v7995, 2
    %vm8016 = vcmp.lt.s32.totalorder %v7995, 3
    %vm8017 = vcmp.lt.s32.totalorder %v7995, 4
    %v8018 = vsel %vm8014, %v7998, %v8001
    %v8019 = vsel %vm8017, %v8007, 2102212464
    %v8020 = vsel %vm8016, %v8004, %v8019
    %v8021 = vsel %vm8015, %v8018, %v8020
    %v8022 = vsel %vm8014, %v8001, %v8004
    %v8023 = vsel %vm8017, %v8010, 920167782
    %v8024 = vsel %vm8016, %v8007, %v8023
    %v8025 = vsel %vm8015, %v8022, %v8024
    %v8026 = vsel %vm8014, %v8004, %v8007
    %v8027 = vsel %vm8017, %v8013, 1326507024
    %v8028 = vsel %vm8016, %v8010, %v8027
    %v8029 = vsel %vm8015, %v8026, %v8028
    %v8030 = vshll.u32 %v7990, 8
    %v8031 = vmul.u32.u64.compose %v8030, %v8029
    %v8032 = vextract.low.u32 %v8031
    %v8033 = vextract.high.u32 %v8031
    %v8034 = vmul.u32.u64.compose %v8030, %v8025
    %v8035 = vextract.low.u32 %v8034
    %v8036 = vextract.high.u32 %v8034
    %v8037 = vmul.u32 %v8030, %v8021
    %v8038 = vadd.s32 %v8033, %v8035
    %vm8039 = vc.u32 %v8033, %v8035
    %v8040 = vadd.s32 %v8036, 1
    %v8041 = vsel %vm8039, %v8040, %v8036
    %v8042 = vadd.s32 %v8037, %v8041
    %v8043 = vadd.s32 %v8042, 536870912
    %v8044 = vshrl.u32 %v8043, 30
    %v8045 = vshll.u32 %v8044, 30
    %v8046 = vsub.s32 %v8042, %v8045
    %vm8047 = vcmp.lt.s32.totalorder %v8046, 0
    %v8048 = vsub.s32 0, %v8046
    %v8049 = vsel %vm8047, %v8048, %v8046
    %v8050 = vclz %v8049
    %v8051 = vsub.s32 %v8050, 2
    %vm8052 = vcmp.gt.s32.totalorder 0, %v8051
    %v8053 = vsel %vm8052, 0, %v8051
    %v8054 = vsub.s32 32, %v8053
    %v8055 = vshll.u32 %v8046, %v8053
    %v8056 = vshrl.u32 %v8038, %v8054
    %v8057 = vor.u32 %v8055, %v8056
    %v8058 = vsub.s32 4294967266, %v8053
    %v8059 = vadd.s32 %v8058, 127
    %v8060 = vshll.u32 %v8059, 23
    %v8061 = vor.u32 4788187, %v8060
    %v8062 = vand.u32 2147483647, %v8061
    %v8064 = vcvt.s32.f32 %v8057
    %v8065 = vmul.f32 %v8064, %v8062
    %v8066 = vxor.u32 %v8065, 2147483648
    %v8067 = vsel %vm7984, %v8066, %v8065
    %v8068 = vsub.s32 4, %v8044
    %v8069 = vsel %vm7984, %v8068, %v8044
    %v8070 = vsel %vm7983, %v641, %v8067
    %v8071 = vsel %vm7983, 0, %v8069
    %v8072 = vcosq.f32.pop %v8070
    %v8073 = vsinq.f32.pop %v8070
    %vm8074 = vweird.f32 %v641
    %v8075 = vand.u32 %v8071, 3
    %vm8076 = vcmp.lt.s32.totalorder %v8075, 2
    %vm8077 = vcmp.eq.s32.totalorder %v8075, 0
    %v8078 = vxor.u32 %v8073, 2147483648
    %v8079 = vsel %vm8077, %v8072, %v8078
    %vm8080 = vcmp.eq.s32.totalorder %v8075, 2
    %v8081 = vxor.u32 %v8072, 2147483648
    %v8082 = vsel %vm8080, %v8081, %v8073
    %v8083 = vsel %vm8076, %v8079, %v8082
    %v8084 = vsel %vm8074, nan, %v8083
    %v8085 = vand.u32 2147483647, %v642
    %vm8086 = vcmp.le.f32.partialorder %v8085, 0.7853982
    %vm8087 = vcmp.lt.s32.totalorder %v642, 0
    %v8088 = vand.u32 %v642, 2139095040
    %v8089 = vshrl.u32 %v8088, 23
    %v8090 = vsub.s32 %v8089, 127
    %v8091 = vand.u32 2147483647, %v642
    %v8092 = vand.u32 %v8091, 8388607
    %v8093 = vor.u32 %v8092, 8388608
    %v8094 = vsub.s32 0, %v8093
    %v8095 = vadd.s32 %v8090, 1
    %vm8096 = vcmp.gt.s32.totalorder %v8095, 0
    %v8097 = vsel %vm8096, %v8095, 0
    %v8098 = vshrl.u32 %v8097, 5
    %v8099 = vand.u32 %v8097, 31
    %v8100 = vsub.s32 32, %v8099
    %v8101 = vshrl.u32 683565275, %v8100
    %v8102 = vshll.u32 683565275, %v8099
    %v8103 = vshrl.u32 2475754826, %v8100
    %v8104 = vor.u32 %v8102, %v8103
    %v8105 = vshll.u32 2475754826, %v8099
    %v8106 = vshrl.u32 2131351028, %v8100
    %v8107 = vor.u32 %v8105, %v8106
    %v8108 = vshll.u32 2131351028, %v8099
    %v8109 = vshrl.u32 2102212464, %v8100
    %v8110 = vor.u32 %v8108, %v8109
    %v8111 = vshll.u32 2102212464, %v8099
    %v8112 = vshrl.u32 920167782, %v8100
    %v8113 = vor.u32 %v8111, %v8112
    %v8114 = vshll.u32 920167782, %v8099
    %v8115 = vshrl.u32 1326507024, %v8100
    %v8116 = vor.u32 %v8114, %v8115
    %vm8117 = vcmp.lt.s32.totalorder %v8098, 1
    %vm8118 = vcmp.lt.s32.totalorder %v8098, 2
    %vm8119 = vcmp.lt.s32.totalorder %v8098, 3
    %vm8120 = vcmp.lt.s32.totalorder %v8098, 4
    %v8121 = vsel %vm8117, %v8101, %v8104
    %v8122 = vsel %vm8120, %v8110, 2102212464
    %v8123 = vsel %vm8119, %v8107, %v8122
    %v8124 = vsel %vm8118, %v8121, %v8123
    %v8125 = vsel %vm8117, %v8104, %v8107
    %v8126 = vsel %vm8120, %v8113, 920167782
    %v8127 = vsel %vm8119, %v8110, %v8126
    %v8128 = vsel %vm8118, %v8125, %v8127
    %v8129 = vsel %vm8117, %v8107, %v8110
    %v8130 = vsel %vm8120, %v8116, 1326507024
    %v8131 = vsel %vm8119, %v8113, %v8130
    %v8132 = vsel %vm8118, %v8129, %v8131
    %v8133 = vshll.u32 %v8093, 8
    %v8134 = vmul.u32.u64.compose %v8133, %v8132
    %v8135 = vextract.low.u32 %v8134
    %v8136 = vextract.high.u32 %v8134
    %v8137 = vmul.u32.u64.compose %v8133, %v8128
    %v8138 = vextract.low.u32 %v8137
    %v8139 = vextract.high.u32 %v8137
    %v8140 = vmul.u32 %v8133, %v8124
    %v8141 = vadd.s32 %v8136, %v8138
    %vm8142 = vc.u32 %v8136, %v8138
    %v8143 = vadd.s32 %v8139, 1
    %v8144 = vsel %vm8142, %v8143, %v8139
    %v8145 = vadd.s32 %v8140, %v8144
    %v8146 = vadd.s32 %v8145, 536870912
    %v8147 = vshrl.u32 %v8146, 30
    %v8148 = vshll.u32 %v8147, 30
    %v8149 = vsub.s32 %v8145, %v8148
    %vm8150 = vcmp.lt.s32.totalorder %v8149, 0
    %v8151 = vsub.s32 0, %v8149
    %v8152 = vsel %vm8150, %v8151, %v8149
    %v8153 = vclz %v8152
    %v8154 = vsub.s32 %v8153, 2
    %vm8155 = vcmp.gt.s32.totalorder 0, %v8154
    %v8156 = vsel %vm8155, 0, %v8154
    %v8157 = vsub.s32 32, %v8156
    %v8158 = vshll.u32 %v8149, %v8156
    %v8159 = vshrl.u32 %v8141, %v8157
    %v8160 = vor.u32 %v8158, %v8159
    %v8161 = vsub.s32 4294967266, %v8156
    %v8162 = vadd.s32 %v8161, 127
    %v8163 = vshll.u32 %v8162, 23
    %v8164 = vor.u32 4788187, %v8163
    %v8165 = vand.u32 2147483647, %v8164
    %v8167 = vcvt.s32.f32 %v8160
    %v8168 = vmul.f32 %v8167, %v8165
    %v8169 = vxor.u32 %v8168, 2147483648
    %v8170 = vsel %vm8087, %v8169, %v8168
    %v8171 = vsub.s32 4, %v8147
    %v8172 = vsel %vm8087, %v8171, %v8147
    %v8173 = vsel %vm8086, %v642, %v8170
    %v8174 = vsel %vm8086, 0, %v8172
    %v8175 = vcosq.f32.pop %v8173
    %v8176 = vsinq.f32.pop %v8173
    %vm8177 = vweird.f32 %v642
    %v8178 = vand.u32 %v8174, 3
    %vm8179 = vcmp.lt.s32.totalorder %v8178, 2
    %vm8180 = vcmp.eq.s32.totalorder %v8178, 0
    %v8181 = vxor.u32 %v8176, 2147483648
    %v8182 = vsel %vm8180, %v8175, %v8181
    %vm8183 = vcmp.eq.s32.totalorder %v8178, 2
    %v8184 = vxor.u32 %v8175, 2147483648
    %v8185 = vsel %vm8183, %v8184, %v8176
    %v8186 = vsel %vm8179, %v8182, %v8185
    %v8187 = vsel %vm8177, nan, %v8186
    %v8188 = vand.u32 2147483647, %v643
    %vm8189 = vcmp.le.f32.partialorder %v8188, 0.7853982
    %vm8190 = vcmp.lt.s32.totalorder %v643, 0
    %v8191 = vand.u32 %v643, 2139095040
    %v8192 = vshrl.u32 %v8191, 23
    %v8193 = vsub.s32 %v8192, 127
    %v8194 = vand.u32 2147483647, %v643
    %v8195 = vand.u32 %v8194, 8388607
    %v8196 = vor.u32 %v8195, 8388608
    %v8197 = vsub.s32 0, %v8196
    %v8198 = vadd.s32 %v8193, 1
    %vm8199 = vcmp.gt.s32.totalorder %v8198, 0
    %v8200 = vsel %vm8199, %v8198, 0
    %v8201 = vshrl.u32 %v8200, 5
    %v8202 = vand.u32 %v8200, 31
    %v8203 = vsub.s32 32, %v8202
    %v8204 = vshrl.u32 683565275, %v8203
    %v8205 = vshll.u32 683565275, %v8202
    %v8206 = vshrl.u32 2475754826, %v8203
    %v8207 = vor.u32 %v8205, %v8206
    %v8208 = vshll.u32 2475754826, %v8202
    %v8209 = vshrl.u32 2131351028, %v8203
    %v8210 = vor.u32 %v8208, %v8209
    %v8211 = vshll.u32 2131351028, %v8202
    %v8212 = vshrl.u32 2102212464, %v8203
    %v8213 = vor.u32 %v8211, %v8212
    %v8214 = vshll.u32 2102212464, %v8202
    %v8215 = vshrl.u32 920167782, %v8203
    %v8216 = vor.u32 %v8214, %v8215
    %v8217 = vshll.u32 920167782, %v8202
    %v8218 = vshrl.u32 1326507024, %v8203
    %v8219 = vor.u32 %v8217, %v8218
    %vm8220 = vcmp.lt.s32.totalorder %v8201, 1
    %vm8221 = vcmp.lt.s32.totalorder %v8201, 2
    %vm8222 = vcmp.lt.s32.totalorder %v8201, 3
    %vm8223 = vcmp.lt.s32.totalorder %v8201, 4
    %v8224 = vsel %vm8220, %v8204, %v8207
    %v8225 = vsel %vm8223, %v8213, 2102212464
    %v8226 = vsel %vm8222, %v8210, %v8225
    %v8227 = vsel %vm8221, %v8224, %v8226
    %v8228 = vsel %vm8220, %v8207, %v8210
    %v8229 = vsel %vm8223, %v8216, 920167782
    %v8230 = vsel %vm8222, %v8213, %v8229
    %v8231 = vsel %vm8221, %v8228, %v8230
    %v8232 = vsel %vm8220, %v8210, %v8213
    %v8233 = vsel %vm8223, %v8219, 1326507024
    %v8234 = vsel %vm8222, %v8216, %v8233
    %v8235 = vsel %vm8221, %v8232, %v8234
    %v8236 = vshll.u32 %v8196, 8
    %v8237 = vmul.u32.u64.compose %v8236, %v8235
    %v8238 = vextract.low.u32 %v8237
    %v8239 = vextract.high.u32 %v8237
    %v8240 = vmul.u32.u64.compose %v8236, %v8231
    %v8241 = vextract.low.u32 %v8240
    %v8242 = vextract.high.u32 %v8240
    %v8243 = vmul.u32 %v8236, %v8227
    %v8244 = vadd.s32 %v8239, %v8241
    %vm8245 = vc.u32 %v8239, %v8241
    %v8246 = vadd.s32 %v8242, 1
    %v8247 = vsel %vm8245, %v8246, %v8242
    %v8248 = vadd.s32 %v8243, %v8247
    %v8249 = vadd.s32 %v8248, 536870912
    %v8250 = vshrl.u32 %v8249, 30
    %v8251 = vshll.u32 %v8250, 30
    %v8252 = vsub.s32 %v8248, %v8251
    %vm8253 = vcmp.lt.s32.totalorder %v8252, 0
    %v8254 = vsub.s32 0, %v8252
    %v8255 = vsel %vm8253, %v8254, %v8252
    %v8256 = vclz %v8255
    %v8257 = vsub.s32 %v8256, 2
    %vm8258 = vcmp.gt.s32.totalorder 0, %v8257
    %v8259 = vsel %vm8258, 0, %v8257
    %v8260 = vsub.s32 32, %v8259
    %v8261 = vshll.u32 %v8252, %v8259
    %v8262 = vshrl.u32 %v8244, %v8260
    %v8263 = vor.u32 %v8261, %v8262
    %v8264 = vsub.s32 4294967266, %v8259
    %v8265 = vadd.s32 %v8264, 127
    %v8266 = vshll.u32 %v8265, 23
    %v8267 = vor.u32 4788187, %v8266
    %v8268 = vand.u32 2147483647, %v8267
    %v8270 = vcvt.s32.f32 %v8263
    %v8271 = vmul.f32 %v8270, %v8268
    %v8272 = vxor.u32 %v8271, 2147483648
    %v8273 = vsel %vm8190, %v8272, %v8271
    %v8274 = vsub.s32 4, %v8250
    %v8275 = vsel %vm8190, %v8274, %v8250
    %v8276 = vsel %vm8189, %v643, %v8273
    %v8277 = vsel %vm8189, 0, %v8275
    %v8278 = vcosq.f32.pop %v8276
    %v8279 = vsinq.f32.pop %v8276
    %vm8280 = vweird.f32 %v643
    %v8281 = vand.u32 %v8277, 3
    %vm8282 = vcmp.lt.s32.totalorder %v8281, 2
    %vm8283 = vcmp.eq.s32.totalorder %v8281, 0
    %v8284 = vxor.u32 %v8279, 2147483648
    %v8285 = vsel %vm8283, %v8278, %v8284
    %vm8286 = vcmp.eq.s32.totalorder %v8281, 2
    %v8287 = vxor.u32 %v8278, 2147483648
    %v8288 = vsel %vm8286, %v8287, %v8279
    %v8289 = vsel %vm8282, %v8285, %v8288
    %v8290 = vsel %vm8280, nan, %v8289
    %v8291 = vand.u32 2147483647, %v644
    %vm8292 = vcmp.le.f32.partialorder %v8291, 0.7853982
    %vm8293 = vcmp.lt.s32.totalorder %v644, 0
    %v8294 = vand.u32 %v644, 2139095040
    %v8295 = vshrl.u32 %v8294, 23
    %v8296 = vsub.s32 %v8295, 127
    %v8297 = vand.u32 2147483647, %v644
    %v8298 = vand.u32 %v8297, 8388607
    %v8299 = vor.u32 %v8298, 8388608
    %v8300 = vsub.s32 0, %v8299
    %v8301 = vadd.s32 %v8296, 1
    %vm8302 = vcmp.gt.s32.totalorder %v8301, 0
    %v8303 = vsel %vm8302, %v8301, 0
    %v8304 = vshrl.u32 %v8303, 5
    %v8305 = vand.u32 %v8303, 31
    %v8306 = vsub.s32 32, %v8305
    %v8307 = vshrl.u32 683565275, %v8306
    %v8308 = vshll.u32 683565275, %v8305
    %v8309 = vshrl.u32 2475754826, %v8306
    %v8310 = vor.u32 %v8308, %v8309
    %v8311 = vshll.u32 2475754826, %v8305
    %v8312 = vshrl.u32 2131351028, %v8306
    %v8313 = vor.u32 %v8311, %v8312
    %v8314 = vshll.u32 2131351028, %v8305
    %v8315 = vshrl.u32 2102212464, %v8306
    %v8316 = vor.u32 %v8314, %v8315
    %v8317 = vshll.u32 2102212464, %v8305
    %v8318 = vshrl.u32 920167782, %v8306
    %v8319 = vor.u32 %v8317, %v8318
    %v8320 = vshll.u32 920167782, %v8305
    %v8321 = vshrl.u32 1326507024, %v8306
    %v8322 = vor.u32 %v8320, %v8321
    %vm8323 = vcmp.lt.s32.totalorder %v8304, 1
    %vm8324 = vcmp.lt.s32.totalorder %v8304, 2
    %vm8325 = vcmp.lt.s32.totalorder %v8304, 3
    %vm8326 = vcmp.lt.s32.totalorder %v8304, 4
    %v8327 = vsel %vm8323, %v8307, %v8310
    %v8328 = vsel %vm8326, %v8316, 2102212464
    %v8329 = vsel %vm8325, %v8313, %v8328
    %v8330 = vsel %vm8324, %v8327, %v8329
    %v8331 = vsel %vm8323, %v8310, %v8313
    %v8332 = vsel %vm8326, %v8319, 920167782
    %v8333 = vsel %vm8325, %v8316, %v8332
    %v8334 = vsel %vm8324, %v8331, %v8333
    %v8335 = vsel %vm8323, %v8313, %v8316
    %v8336 = vsel %vm8326, %v8322, 1326507024
    %v8337 = vsel %vm8325, %v8319, %v8336
    %v8338 = vsel %vm8324, %v8335, %v8337
    %v8339 = vshll.u32 %v8299, 8
    %v8340 = vmul.u32.u64.compose %v8339, %v8338
    %v8341 = vextract.low.u32 %v8340
    %v8342 = vextract.high.u32 %v8340
    %v8343 = vmul.u32.u64.compose %v8339, %v8334
    %v8344 = vextract.low.u32 %v8343
    %v8345 = vextract.high.u32 %v8343
    %v8346 = vmul.u32 %v8339, %v8330
    %v8347 = vadd.s32 %v8342, %v8344
    %vm8348 = vc.u32 %v8342, %v8344
    %v8349 = vadd.s32 %v8345, 1
    %v8350 = vsel %vm8348, %v8349, %v8345
    %v8351 = vadd.s32 %v8346, %v8350
    %v8352 = vadd.s32 %v8351, 536870912
    %v8353 = vshrl.u32 %v8352, 30
    %v8354 = vshll.u32 %v8353, 30
    %v8355 = vsub.s32 %v8351, %v8354
    %vm8356 = vcmp.lt.s32.totalorder %v8355, 0
    %v8357 = vsub.s32 0, %v8355
    %v8358 = vsel %vm8356, %v8357, %v8355
    %v8359 = vclz %v8358
    %v8360 = vsub.s32 %v8359, 2
    %vm8361 = vcmp.gt.s32.totalorder 0, %v8360
    %v8362 = vsel %vm8361, 0, %v8360
    %v8363 = vsub.s32 32, %v8362
    %v8364 = vshll.u32 %v8355, %v8362
    %v8365 = vshrl.u32 %v8347, %v8363
    %v8366 = vor.u32 %v8364, %v8365
    %v8367 = vsub.s32 4294967266, %v8362
    %v8368 = vadd.s32 %v8367, 127
    %v8369 = vshll.u32 %v8368, 23
    %v8370 = vor.u32 4788187, %v8369
    %v8371 = vand.u32 2147483647, %v8370
    %v8373 = vcvt.s32.f32 %v8366
    %v8374 = vmul.f32 %v8373, %v8371
    %v8375 = vxor.u32 %v8374, 2147483648
    %v8376 = vsel %vm8293, %v8375, %v8374
    %v8377 = vsub.s32 4, %v8353
    %v8378 = vsel %vm8293, %v8377, %v8353
    %v8379 = vsel %vm8292, %v644, %v8376
    %v8380 = vsel %vm8292, 0, %v8378
    %v8381 = vcosq.f32.pop %v8379
    %v8382 = vsinq.f32.pop %v8379
    %vm8383 = vweird.f32 %v644
    %v8384 = vand.u32 %v8380, 3
    %vm8385 = vcmp.lt.s32.totalorder %v8384, 2
    %vm8386 = vcmp.eq.s32.totalorder %v8384, 0
    %v8387 = vxor.u32 %v8382, 2147483648
    %v8388 = vsel %vm8386, %v8381, %v8387
    %vm8389 = vcmp.eq.s32.totalorder %v8384, 2
    %v8390 = vxor.u32 %v8381, 2147483648
    %v8391 = vsel %vm8389, %v8390, %v8382
    %v8392 = vsel %vm8385, %v8388, %v8391
    %v8393 = vsel %vm8383, nan, %v8392
    %v8394 = vand.u32 2147483647, %v645
    %vm8395 = vcmp.le.f32.partialorder %v8394, 0.7853982
    %vm8396 = vcmp.lt.s32.totalorder %v645, 0
    %v8397 = vand.u32 %v645, 2139095040
    %v8398 = vshrl.u32 %v8397, 23
    %v8399 = vsub.s32 %v8398, 127
    %v8400 = vand.u32 2147483647, %v645
    %v8401 = vand.u32 %v8400, 8388607
    %v8402 = vor.u32 %v8401, 8388608
    %v8403 = vsub.s32 0, %v8402
    %v8404 = vadd.s32 %v8399, 1
    %vm8405 = vcmp.gt.s32.totalorder %v8404, 0
    %v8406 = vsel %vm8405, %v8404, 0
    %v8407 = vshrl.u32 %v8406, 5
    %v8408 = vand.u32 %v8406, 31
    %v8409 = vsub.s32 32, %v8408
    %v8410 = vshrl.u32 683565275, %v8409
    %v8411 = vshll.u32 683565275, %v8408
    %v8412 = vshrl.u32 2475754826, %v8409
    %v8413 = vor.u32 %v8411, %v8412
    %v8414 = vshll.u32 2475754826, %v8408
    %v8415 = vshrl.u32 2131351028, %v8409
    %v8416 = vor.u32 %v8414, %v8415
    %v8417 = vshll.u32 2131351028, %v8408
    %v8418 = vshrl.u32 2102212464, %v8409
    %v8419 = vor.u32 %v8417, %v8418
    %v8420 = vshll.u32 2102212464, %v8408
    %v8421 = vshrl.u32 920167782, %v8409
    %v8422 = vor.u32 %v8420, %v8421
    %v8423 = vshll.u32 920167782, %v8408
    %v8424 = vshrl.u32 1326507024, %v8409
    %v8425 = vor.u32 %v8423, %v8424
    %vm8426 = vcmp.lt.s32.totalorder %v8407, 1
    %vm8427 = vcmp.lt.s32.totalorder %v8407, 2
    %vm8428 = vcmp.lt.s32.totalorder %v8407, 3
    %vm8429 = vcmp.lt.s32.totalorder %v8407, 4
    %v8430 = vsel %vm8426, %v8410, %v8413
    %v8431 = vsel %vm8429, %v8419, 2102212464
    %v8432 = vsel %vm8428, %v8416, %v8431
    %v8433 = vsel %vm8427, %v8430, %v8432
    %v8434 = vsel %vm8426, %v8413, %v8416
    %v8435 = vsel %vm8429, %v8422, 920167782
    %v8436 = vsel %vm8428, %v8419, %v8435
    %v8437 = vsel %vm8427, %v8434, %v8436
    %v8438 = vsel %vm8426, %v8416, %v8419
    %v8439 = vsel %vm8429, %v8425, 1326507024
    %v8440 = vsel %vm8428, %v8422, %v8439
    %v8441 = vsel %vm8427, %v8438, %v8440
    %v8442 = vshll.u32 %v8402, 8
    %v8443 = vmul.u32.u64.compose %v8442, %v8441
    %v8444 = vextract.low.u32 %v8443
    %v8445 = vextract.high.u32 %v8443
    %v8446 = vmul.u32.u64.compose %v8442, %v8437
    %v8447 = vextract.low.u32 %v8446
    %v8448 = vextract.high.u32 %v8446
    %v8449 = vmul.u32 %v8442, %v8433
    %v8450 = vadd.s32 %v8445, %v8447
    %vm8451 = vc.u32 %v8445, %v8447
    %v8452 = vadd.s32 %v8448, 1
    %v8453 = vsel %vm8451, %v8452, %v8448
    %v8454 = vadd.s32 %v8449, %v8453
    %v8455 = vadd.s32 %v8454, 536870912
    %v8456 = vshrl.u32 %v8455, 30
    %v8457 = vshll.u32 %v8456, 30
    %v8458 = vsub.s32 %v8454, %v8457
    %vm8459 = vcmp.lt.s32.totalorder %v8458, 0
    %v8460 = vsub.s32 0, %v8458
    %v8461 = vsel %vm8459, %v8460, %v8458
    %v8462 = vclz %v8461
    %v8463 = vsub.s32 %v8462, 2
    %vm8464 = vcmp.gt.s32.totalorder 0, %v8463
    %v8465 = vsel %vm8464, 0, %v8463
    %v8466 = vsub.s32 32, %v8465
    %v8467 = vshll.u32 %v8458, %v8465
    %v8468 = vshrl.u32 %v8450, %v8466
    %v8469 = vor.u32 %v8467, %v8468
    %v8470 = vsub.s32 4294967266, %v8465
    %v8471 = vadd.s32 %v8470, 127
    %v8472 = vshll.u32 %v8471, 23
    %v8473 = vor.u32 4788187, %v8472
    %v8474 = vand.u32 2147483647, %v8473
    %v8476 = vcvt.s32.f32 %v8469
    %v8477 = vmul.f32 %v8476, %v8474
    %v8478 = vxor.u32 %v8477, 2147483648
    %v8479 = vsel %vm8396, %v8478, %v8477
    %v8480 = vsub.s32 4, %v8456
    %v8481 = vsel %vm8396, %v8480, %v8456
    %v8482 = vsel %vm8395, %v645, %v8479
    %v8483 = vsel %vm8395, 0, %v8481
    %v8484 = vcosq.f32.pop %v8482
    %v8485 = vsinq.f32.pop %v8482
    %vm8486 = vweird.f32 %v645
    %v8487 = vand.u32 %v8483, 3
    %vm8488 = vcmp.lt.s32.totalorder %v8487, 2
    %vm8489 = vcmp.eq.s32.totalorder %v8487, 0
    %v8490 = vxor.u32 %v8485, 2147483648
    %v8491 = vsel %vm8489, %v8484, %v8490
    %vm8492 = vcmp.eq.s32.totalorder %v8487, 2
    %v8493 = vxor.u32 %v8484, 2147483648
    %v8494 = vsel %vm8492, %v8493, %v8485
    %v8495 = vsel %vm8488, %v8491, %v8494
    %v8496 = vsel %vm8486, nan, %v8495
    %v8497 = vand.u32 2147483647, %v646
    %vm8498 = vcmp.le.f32.partialorder %v8497, 0.7853982
    %vm8499 = vcmp.lt.s32.totalorder %v646, 0
    %v8500 = vand.u32 %v646, 2139095040
    %v8501 = vshrl.u32 %v8500, 23
    %v8502 = vsub.s32 %v8501, 127
    %v8503 = vand.u32 2147483647, %v646
    %v8504 = vand.u32 %v8503, 8388607
    %v8505 = vor.u32 %v8504, 8388608
    %v8506 = vsub.s32 0, %v8505
    %v8507 = vadd.s32 %v8502, 1
    %vm8508 = vcmp.gt.s32.totalorder %v8507, 0
    %v8509 = vsel %vm8508, %v8507, 0
    %v8510 = vshrl.u32 %v8509, 5
    %v8511 = vand.u32 %v8509, 31
    %v8512 = vsub.s32 32, %v8511
    %v8513 = vshrl.u32 683565275, %v8512
    %v8514 = vshll.u32 683565275, %v8511
    %v8515 = vshrl.u32 2475754826, %v8512
    %v8516 = vor.u32 %v8514, %v8515
    %v8517 = vshll.u32 2475754826, %v8511
    %v8518 = vshrl.u32 2131351028, %v8512
    %v8519 = vor.u32 %v8517, %v8518
    %v8520 = vshll.u32 2131351028, %v8511
    %v8521 = vshrl.u32 2102212464, %v8512
    %v8522 = vor.u32 %v8520, %v8521
    %v8523 = vshll.u32 2102212464, %v8511
    %v8524 = vshrl.u32 920167782, %v8512
    %v8525 = vor.u32 %v8523, %v8524
    %v8526 = vshll.u32 920167782, %v8511
    %v8527 = vshrl.u32 1326507024, %v8512
    %v8528 = vor.u32 %v8526, %v8527
    %vm8529 = vcmp.lt.s32.totalorder %v8510, 1
    %vm8530 = vcmp.lt.s32.totalorder %v8510, 2
    %vm8531 = vcmp.lt.s32.totalorder %v8510, 3
    %vm8532 = vcmp.lt.s32.totalorder %v8510, 4
    %v8533 = vsel %vm8529, %v8513, %v8516
    %v8534 = vsel %vm8532, %v8522, 2102212464
    %v8535 = vsel %vm8531, %v8519, %v8534
    %v8536 = vsel %vm8530, %v8533, %v8535
    %v8537 = vsel %vm8529, %v8516, %v8519
    %v8538 = vsel %vm8532, %v8525, 920167782
    %v8539 = vsel %vm8531, %v8522, %v8538
    %v8540 = vsel %vm8530, %v8537, %v8539
    %v8541 = vsel %vm8529, %v8519, %v8522
    %v8542 = vsel %vm8532, %v8528, 1326507024
    %v8543 = vsel %vm8531, %v8525, %v8542
    %v8544 = vsel %vm8530, %v8541, %v8543
    %v8545 = vshll.u32 %v8505, 8
    %v8546 = vmul.u32.u64.compose %v8545, %v8544
    %v8547 = vextract.low.u32 %v8546
    %v8548 = vextract.high.u32 %v8546
    %v8549 = vmul.u32.u64.compose %v8545, %v8540
    %v8550 = vextract.low.u32 %v8549
    %v8551 = vextract.high.u32 %v8549
    %v8552 = vmul.u32 %v8545, %v8536
    %v8553 = vadd.s32 %v8548, %v8550
    %vm8554 = vc.u32 %v8548, %v8550
    %v8555 = vadd.s32 %v8551, 1
    %v8556 = vsel %vm8554, %v8555, %v8551
    %v8557 = vadd.s32 %v8552, %v8556
    %v8558 = vadd.s32 %v8557, 536870912
    %v8559 = vshrl.u32 %v8558, 30
    %v8560 = vshll.u32 %v8559, 30
    %v8561 = vsub.s32 %v8557, %v8560
    %vm8562 = vcmp.lt.s32.totalorder %v8561, 0
    %v8563 = vsub.s32 0, %v8561
    %v8564 = vsel %vm8562, %v8563, %v8561
    %v8565 = vclz %v8564
    %v8566 = vsub.s32 %v8565, 2
    %vm8567 = vcmp.gt.s32.totalorder 0, %v8566
    %v8568 = vsel %vm8567, 0, %v8566
    %v8569 = vsub.s32 32, %v8568
    %v8570 = vshll.u32 %v8561, %v8568
    %v8571 = vshrl.u32 %v8553, %v8569
    %v8572 = vor.u32 %v8570, %v8571
    %v8573 = vsub.s32 4294967266, %v8568
    %v8574 = vadd.s32 %v8573, 127
    %v8575 = vshll.u32 %v8574, 23
    %v8576 = vor.u32 4788187, %v8575
    %v8577 = vand.u32 2147483647, %v8576
    %v8579 = vcvt.s32.f32 %v8572
    %v8580 = vmul.f32 %v8579, %v8577
    %v8581 = vxor.u32 %v8580, 2147483648
    %v8582 = vsel %vm8499, %v8581, %v8580
    %v8583 = vsub.s32 4, %v8559
    %v8584 = vsel %vm8499, %v8583, %v8559
    %v8585 = vsel %vm8498, %v646, %v8582
    %v8586 = vsel %vm8498, 0, %v8584
    %v8587 = vcosq.f32.pop %v8585
    %v8588 = vsinq.f32.pop %v8585
    %vm8589 = vweird.f32 %v646
    %v8590 = vand.u32 %v8586, 3
    %vm8591 = vcmp.lt.s32.totalorder %v8590, 2
    %vm8592 = vcmp.eq.s32.totalorder %v8590, 0
    %v8593 = vxor.u32 %v8588, 2147483648
    %v8594 = vsel %vm8592, %v8587, %v8593
    %vm8595 = vcmp.eq.s32.totalorder %v8590, 2
    %v8596 = vxor.u32 %v8587, 2147483648
    %v8597 = vsel %vm8595, %v8596, %v8588
    %v8598 = vsel %vm8591, %v8594, %v8597
    %v8599 = vsel %vm8589, nan, %v8598
    %v8600 = vand.u32 2147483647, %v647
    %vm8601 = vcmp.le.f32.partialorder %v8600, 0.7853982
    %vm8602 = vcmp.lt.s32.totalorder %v647, 0
    %v8603 = vand.u32 %v647, 2139095040
    %v8604 = vshrl.u32 %v8603, 23
    %v8605 = vsub.s32 %v8604, 127
    %v8606 = vand.u32 2147483647, %v647
    %v8607 = vand.u32 %v8606, 8388607
    %v8608 = vor.u32 %v8607, 8388608
    %v8609 = vsub.s32 0, %v8608
    %v8610 = vadd.s32 %v8605, 1
    %vm8611 = vcmp.gt.s32.totalorder %v8610, 0
    %v8612 = vsel %vm8611, %v8610, 0
    %v8613 = vshrl.u32 %v8612, 5
    %v8614 = vand.u32 %v8612, 31
    %v8615 = vsub.s32 32, %v8614
    %v8616 = vshrl.u32 683565275, %v8615
    %v8617 = vshll.u32 683565275, %v8614
    %v8618 = vshrl.u32 2475754826, %v8615
    %v8619 = vor.u32 %v8617, %v8618
    %v8620 = vshll.u32 2475754826, %v8614
    %v8621 = vshrl.u32 2131351028, %v8615
    %v8622 = vor.u32 %v8620, %v8621
    %v8623 = vshll.u32 2131351028, %v8614
    %v8624 = vshrl.u32 2102212464, %v8615
    %v8625 = vor.u32 %v8623, %v8624
    %v8626 = vshll.u32 2102212464, %v8614
    %v8627 = vshrl.u32 920167782, %v8615
    %v8628 = vor.u32 %v8626, %v8627
    %v8629 = vshll.u32 920167782, %v8614
    %v8630 = vshrl.u32 1326507024, %v8615
    %v8631 = vor.u32 %v8629, %v8630
    %vm8632 = vcmp.lt.s32.totalorder %v8613, 1
    %vm8633 = vcmp.lt.s32.totalorder %v8613, 2
    %vm8634 = vcmp.lt.s32.totalorder %v8613, 3
    %vm8635 = vcmp.lt.s32.totalorder %v8613, 4
    %v8636 = vsel %vm8632, %v8616, %v8619
    %v8637 = vsel %vm8635, %v8625, 2102212464
    %v8638 = vsel %vm8634, %v8622, %v8637
    %v8639 = vsel %vm8633, %v8636, %v8638
    %v8640 = vsel %vm8632, %v8619, %v8622
    %v8641 = vsel %vm8635, %v8628, 920167782
    %v8642 = vsel %vm8634, %v8625, %v8641
    %v8643 = vsel %vm8633, %v8640, %v8642
    %v8644 = vsel %vm8632, %v8622, %v8625
    %v8645 = vsel %vm8635, %v8631, 1326507024
    %v8646 = vsel %vm8634, %v8628, %v8645
    %v8647 = vsel %vm8633, %v8644, %v8646
    %v8648 = vshll.u32 %v8608, 8
    %v8649 = vmul.u32.u64.compose %v8648, %v8647
    %v8650 = vextract.low.u32 %v8649
    %v8651 = vextract.high.u32 %v8649
    %v8652 = vmul.u32.u64.compose %v8648, %v8643
    %v8653 = vextract.low.u32 %v8652
    %v8654 = vextract.high.u32 %v8652
    %v8655 = vmul.u32 %v8648, %v8639
    %v8656 = vadd.s32 %v8651, %v8653
    %vm8657 = vc.u32 %v8651, %v8653
    %v8658 = vadd.s32 %v8654, 1
    %v8659 = vsel %vm8657, %v8658, %v8654
    %v8660 = vadd.s32 %v8655, %v8659
    %v8661 = vadd.s32 %v8660, 536870912
    %v8662 = vshrl.u32 %v8661, 30
    %v8663 = vshll.u32 %v8662, 30
    %v8664 = vsub.s32 %v8660, %v8663
    %vm8665 = vcmp.lt.s32.totalorder %v8664, 0
    %v8666 = vsub.s32 0, %v8664
    %v8667 = vsel %vm8665, %v8666, %v8664
    %v8668 = vclz %v8667
    %v8669 = vsub.s32 %v8668, 2
    %vm8670 = vcmp.gt.s32.totalorder 0, %v8669
    %v8671 = vsel %vm8670, 0, %v8669
    %v8672 = vsub.s32 32, %v8671
    %v8673 = vshll.u32 %v8664, %v8671
    %v8674 = vshrl.u32 %v8656, %v8672
    %v8675 = vor.u32 %v8673, %v8674
    %v8676 = vsub.s32 4294967266, %v8671
    %v8677 = vadd.s32 %v8676, 127
    %v8678 = vshll.u32 %v8677, 23
    %v8679 = vor.u32 4788187, %v8678
    %v8680 = vand.u32 2147483647, %v8679
    %v8682 = vcvt.s32.f32 %v8675
    %v8683 = vmul.f32 %v8682, %v8680
    %v8684 = vxor.u32 %v8683, 2147483648
    %v8685 = vsel %vm8602, %v8684, %v8683
    %v8686 = vsub.s32 4, %v8662
    %v8687 = vsel %vm8602, %v8686, %v8662
    %v8688 = vsel %vm8601, %v647, %v8685
    %v8689 = vsel %vm8601, 0, %v8687
    %v8690 = vcosq.f32.pop %v8688
    %v8691 = vsinq.f32.pop %v8688
    %vm8692 = vweird.f32 %v647
    %v8693 = vand.u32 %v8689, 3
    %vm8694 = vcmp.lt.s32.totalorder %v8693, 2
    %vm8695 = vcmp.eq.s32.totalorder %v8693, 0
    %v8696 = vxor.u32 %v8691, 2147483648
    %v8697 = vsel %vm8695, %v8690, %v8696
    %vm8698 = vcmp.eq.s32.totalorder %v8693, 2
    %v8699 = vxor.u32 %v8690, 2147483648
    %v8700 = vsel %vm8698, %v8699, %v8691
    %v8701 = vsel %vm8694, %v8697, %v8700
    %v8702 = vsel %vm8692, nan, %v8701
    %v8703 = vand.u32 2147483647, %v648
    %vm8704 = vcmp.le.f32.partialorder %v8703, 0.7853982
    %vm8705 = vcmp.lt.s32.totalorder %v648, 0
    %v8706 = vand.u32 %v648, 2139095040
    %v8707 = vshrl.u32 %v8706, 23
    %v8708 = vsub.s32 %v8707, 127
    %v8709 = vand.u32 2147483647, %v648
    %v8710 = vand.u32 %v8709, 8388607
    %v8711 = vor.u32 %v8710, 8388608
    %v8712 = vsub.s32 0, %v8711
    %v8713 = vadd.s32 %v8708, 1
    %vm8714 = vcmp.gt.s32.totalorder %v8713, 0
    %v8715 = vsel %vm8714, %v8713, 0
    %v8716 = vshrl.u32 %v8715, 5
    %v8717 = vand.u32 %v8715, 31
    %v8718 = vsub.s32 32, %v8717
    %v8719 = vshrl.u32 683565275, %v8718
    %v8720 = vshll.u32 683565275, %v8717
    %v8721 = vshrl.u32 2475754826, %v8718
    %v8722 = vor.u32 %v8720, %v8721
    %v8723 = vshll.u32 2475754826, %v8717
    %v8724 = vshrl.u32 2131351028, %v8718
    %v8725 = vor.u32 %v8723, %v8724
    %v8726 = vshll.u32 2131351028, %v8717
    %v8727 = vshrl.u32 2102212464, %v8718
    %v8728 = vor.u32 %v8726, %v8727
    %v8729 = vshll.u32 2102212464, %v8717
    %v8730 = vshrl.u32 920167782, %v8718
    %v8731 = vor.u32 %v8729, %v8730
    %v8732 = vshll.u32 920167782, %v8717
    %v8733 = vshrl.u32 1326507024, %v8718
    %v8734 = vor.u32 %v8732, %v8733
    %vm8735 = vcmp.lt.s32.totalorder %v8716, 1
    %vm8736 = vcmp.lt.s32.totalorder %v8716, 2
    %vm8737 = vcmp.lt.s32.totalorder %v8716, 3
    %vm8738 = vcmp.lt.s32.totalorder %v8716, 4
    %v8739 = vsel %vm8735, %v8719, %v8722
    %v8740 = vsel %vm8738, %v8728, 2102212464
    %v8741 = vsel %vm8737, %v8725, %v8740
    %v8742 = vsel %vm8736, %v8739, %v8741
    %v8743 = vsel %vm8735, %v8722, %v8725
    %v8744 = vsel %vm8738, %v8731, 920167782
    %v8745 = vsel %vm8737, %v8728, %v8744
    %v8746 = vsel %vm8736, %v8743, %v8745
    %v8747 = vsel %vm8735, %v8725, %v8728
    %v8748 = vsel %vm8738, %v8734, 1326507024
    %v8749 = vsel %vm8737, %v8731, %v8748
    %v8750 = vsel %vm8736, %v8747, %v8749
    %v8751 = vshll.u32 %v8711, 8
    %v8752 = vmul.u32.u64.compose %v8751, %v8750
    %v8753 = vextract.low.u32 %v8752
    %v8754 = vextract.high.u32 %v8752
    %v8755 = vmul.u32.u64.compose %v8751, %v8746
    %v8756 = vextract.low.u32 %v8755
    %v8757 = vextract.high.u32 %v8755
    %v8758 = vmul.u32 %v8751, %v8742
    %v8759 = vadd.s32 %v8754, %v8756
    %vm8760 = vc.u32 %v8754, %v8756
    %v8761 = vadd.s32 %v8757, 1
    %v8762 = vsel %vm8760, %v8761, %v8757
    %v8763 = vadd.s32 %v8758, %v8762
    %v8764 = vadd.s32 %v8763, 536870912
    %v8765 = vshrl.u32 %v8764, 30
    %v8766 = vshll.u32 %v8765, 30
    %v8767 = vsub.s32 %v8763, %v8766
    %vm8768 = vcmp.lt.s32.totalorder %v8767, 0
    %v8769 = vsub.s32 0, %v8767
    %v8770 = vsel %vm8768, %v8769, %v8767
    %v8771 = vclz %v8770
    %v8772 = vsub.s32 %v8771, 2
    %vm8773 = vcmp.gt.s32.totalorder 0, %v8772
    %v8774 = vsel %vm8773, 0, %v8772
    %v8775 = vsub.s32 32, %v8774
    %v8776 = vshll.u32 %v8767, %v8774
    %v8777 = vshrl.u32 %v8759, %v8775
    %v8778 = vor.u32 %v8776, %v8777
    %v8779 = vsub.s32 4294967266, %v8774
    %v8780 = vadd.s32 %v8779, 127
    %v8781 = vshll.u32 %v8780, 23
    %v8782 = vor.u32 4788187, %v8781
    %v8783 = vand.u32 2147483647, %v8782
    %v8785 = vcvt.s32.f32 %v8778
    %v8786 = vmul.f32 %v8785, %v8783
    %v8787 = vxor.u32 %v8786, 2147483648
    %v8788 = vsel %vm8705, %v8787, %v8786
    %v8789 = vsub.s32 4, %v8765
    %v8790 = vsel %vm8705, %v8789, %v8765
    %v8791 = vsel %vm8704, %v648, %v8788
    %v8792 = vsel %vm8704, 0, %v8790
    %v8793 = vcosq.f32.pop %v8791
    %v8794 = vsinq.f32.pop %v8791
    %vm8795 = vweird.f32 %v648
    %v8796 = vand.u32 %v8792, 3
    %vm8797 = vcmp.lt.s32.totalorder %v8796, 2
    %vm8798 = vcmp.eq.s32.totalorder %v8796, 0
    %v8799 = vxor.u32 %v8794, 2147483648
    %v8800 = vsel %vm8798, %v8793, %v8799
    %vm8801 = vcmp.eq.s32.totalorder %v8796, 2
    %v8802 = vxor.u32 %v8793, 2147483648
    %v8803 = vsel %vm8801, %v8802, %v8794
    %v8804 = vsel %vm8797, %v8800, %v8803
    %v8805 = vsel %vm8795, nan, %v8804
    %v8806 = vand.u32 2147483647, %v649
    %vm8807 = vcmp.le.f32.partialorder %v8806, 0.7853982
    %vm8808 = vcmp.lt.s32.totalorder %v649, 0
    %v8809 = vand.u32 %v649, 2139095040
    %v8810 = vshrl.u32 %v8809, 23
    %v8811 = vsub.s32 %v8810, 127
    %v8812 = vand.u32 2147483647, %v649
    %v8813 = vand.u32 %v8812, 8388607
    %v8814 = vor.u32 %v8813, 8388608
    %v8815 = vsub.s32 0, %v8814
    %v8816 = vadd.s32 %v8811, 1
    %vm8817 = vcmp.gt.s32.totalorder %v8816, 0
    %v8818 = vsel %vm8817, %v8816, 0
    %v8819 = vshrl.u32 %v8818, 5
    %v8820 = vand.u32 %v8818, 31
    %v8821 = vsub.s32 32, %v8820
    %v8822 = vshrl.u32 683565275, %v8821
    %v8823 = vshll.u32 683565275, %v8820
    %v8824 = vshrl.u32 2475754826, %v8821
    %v8825 = vor.u32 %v8823, %v8824
    %v8826 = vshll.u32 2475754826, %v8820
    %v8827 = vshrl.u32 2131351028, %v8821
    %v8828 = vor.u32 %v8826, %v8827
    %v8829 = vshll.u32 2131351028, %v8820
    %v8830 = vshrl.u32 2102212464, %v8821
    %v8831 = vor.u32 %v8829, %v8830
    %v8832 = vshll.u32 2102212464, %v8820
    %v8833 = vshrl.u32 920167782, %v8821
    %v8834 = vor.u32 %v8832, %v8833
    %v8835 = vshll.u32 920167782, %v8820
    %v8836 = vshrl.u32 1326507024, %v8821
    %v8837 = vor.u32 %v8835, %v8836
    %vm8838 = vcmp.lt.s32.totalorder %v8819, 1
    %vm8839 = vcmp.lt.s32.totalorder %v8819, 2
    %vm8840 = vcmp.lt.s32.totalorder %v8819, 3
    %vm8841 = vcmp.lt.s32.totalorder %v8819, 4
    %v8842 = vsel %vm8838, %v8822, %v8825
    %v8843 = vsel %vm8841, %v8831, 2102212464
    %v8844 = vsel %vm8840, %v8828, %v8843
    %v8845 = vsel %vm8839, %v8842, %v8844
    %v8846 = vsel %vm8838, %v8825, %v8828
    %v8847 = vsel %vm8841, %v8834, 920167782
    %v8848 = vsel %vm8840, %v8831, %v8847
    %v8849 = vsel %vm8839, %v8846, %v8848
    %v8850 = vsel %vm8838, %v8828, %v8831
    %v8851 = vsel %vm8841, %v8837, 1326507024
    %v8852 = vsel %vm8840, %v8834, %v8851
    %v8853 = vsel %vm8839, %v8850, %v8852
    %v8854 = vshll.u32 %v8814, 8
    %v8855 = vmul.u32.u64.compose %v8854, %v8853
    %v8856 = vextract.low.u32 %v8855
    %v8857 = vextract.high.u32 %v8855
    %v8858 = vmul.u32.u64.compose %v8854, %v8849
    %v8859 = vextract.low.u32 %v8858
    %v8860 = vextract.high.u32 %v8858
    %v8861 = vmul.u32 %v8854, %v8845
    %v8862 = vadd.s32 %v8857, %v8859
    %vm8863 = vc.u32 %v8857, %v8859
    %v8864 = vadd.s32 %v8860, 1
    %v8865 = vsel %vm8863, %v8864, %v8860
    %v8866 = vadd.s32 %v8861, %v8865
    %v8867 = vadd.s32 %v8866, 536870912
    %v8868 = vshrl.u32 %v8867, 30
    %v8869 = vshll.u32 %v8868, 30
    %v8870 = vsub.s32 %v8866, %v8869
    %vm8871 = vcmp.lt.s32.totalorder %v8870, 0
    %v8872 = vsub.s32 0, %v8870
    %v8873 = vsel %vm8871, %v8872, %v8870
    %v8874 = vclz %v8873
    %v8875 = vsub.s32 %v8874, 2
    %vm8876 = vcmp.gt.s32.totalorder 0, %v8875
    %v8877 = vsel %vm8876, 0, %v8875
    %v8878 = vsub.s32 32, %v8877
    %v8879 = vshll.u32 %v8870, %v8877
    %v8880 = vshrl.u32 %v8862, %v8878
    %v8881 = vor.u32 %v8879, %v8880
    %v8882 = vsub.s32 4294967266, %v8877
    %v8883 = vadd.s32 %v8882, 127
    %v8884 = vshll.u32 %v8883, 23
    %v8885 = vor.u32 4788187, %v8884
    %v8886 = vand.u32 2147483647, %v8885
    %v8888 = vcvt.s32.f32 %v8881
    %v8889 = vmul.f32 %v8888, %v8886
    %v8890 = vxor.u32 %v8889, 2147483648
    %v8891 = vsel %vm8808, %v8890, %v8889
    %v8892 = vsub.s32 4, %v8868
    %v8893 = vsel %vm8808, %v8892, %v8868
    %v8894 = vsel %vm8807, %v649, %v8891
    %v8895 = vsel %vm8807, 0, %v8893
    %v8896 = vcosq.f32.pop %v8894
    %v8897 = vsinq.f32.pop %v8894
    %vm8898 = vweird.f32 %v649
    %v8899 = vand.u32 %v8895, 3
    %vm8900 = vcmp.lt.s32.totalorder %v8899, 2
    %vm8901 = vcmp.eq.s32.totalorder %v8899, 0
    %v8902 = vxor.u32 %v8897, 2147483648
    %v8903 = vsel %vm8901, %v8896, %v8902
    %vm8904 = vcmp.eq.s32.totalorder %v8899, 2
    %v8905 = vxor.u32 %v8896, 2147483648
    %v8906 = vsel %vm8904, %v8905, %v8897
    %v8907 = vsel %vm8900, %v8903, %v8906
    %v8908 = vsel %vm8898, nan, %v8907
    %v8909 = vand.u32 2147483647, %v650
    %vm8910 = vcmp.le.f32.partialorder %v8909, 0.7853982
    %vm8911 = vcmp.lt.s32.totalorder %v650, 0
    %v8912 = vand.u32 %v650, 2139095040
    %v8913 = vshrl.u32 %v8912, 23
    %v8914 = vsub.s32 %v8913, 127
    %v8915 = vand.u32 2147483647, %v650
    %v8916 = vand.u32 %v8915, 8388607
    %v8917 = vor.u32 %v8916, 8388608
    %v8918 = vsub.s32 0, %v8917
    %v8919 = vadd.s32 %v8914, 1
    %vm8920 = vcmp.gt.s32.totalorder %v8919, 0
    %v8921 = vsel %vm8920, %v8919, 0
    %v8922 = vshrl.u32 %v8921, 5
    %v8923 = vand.u32 %v8921, 31
    %v8924 = vsub.s32 32, %v8923
    %v8925 = vshrl.u32 683565275, %v8924
    %v8926 = vshll.u32 683565275, %v8923
    %v8927 = vshrl.u32 2475754826, %v8924
    %v8928 = vor.u32 %v8926, %v8927
    %v8929 = vshll.u32 2475754826, %v8923
    %v8930 = vshrl.u32 2131351028, %v8924
    %v8931 = vor.u32 %v8929, %v8930
    %v8932 = vshll.u32 2131351028, %v8923
    %v8933 = vshrl.u32 2102212464, %v8924
    %v8934 = vor.u32 %v8932, %v8933
    %v8935 = vshll.u32 2102212464, %v8923
    %v8936 = vshrl.u32 920167782, %v8924
    %v8937 = vor.u32 %v8935, %v8936
    %v8938 = vshll.u32 920167782, %v8923
    %v8939 = vshrl.u32 1326507024, %v8924
    %v8940 = vor.u32 %v8938, %v8939
    %vm8941 = vcmp.lt.s32.totalorder %v8922, 1
    %vm8942 = vcmp.lt.s32.totalorder %v8922, 2
    %vm8943 = vcmp.lt.s32.totalorder %v8922, 3
    %vm8944 = vcmp.lt.s32.totalorder %v8922, 4
    %v8945 = vsel %vm8941, %v8925, %v8928
    %v8946 = vsel %vm8944, %v8934, 2102212464
    %v8947 = vsel %vm8943, %v8931, %v8946
    %v8948 = vsel %vm8942, %v8945, %v8947
    %v8949 = vsel %vm8941, %v8928, %v8931
    %v8950 = vsel %vm8944, %v8937, 920167782
    %v8951 = vsel %vm8943, %v8934, %v8950
    %v8952 = vsel %vm8942, %v8949, %v8951
    %v8953 = vsel %vm8941, %v8931, %v8934
    %v8954 = vsel %vm8944, %v8940, 1326507024
    %v8955 = vsel %vm8943, %v8937, %v8954
    %v8956 = vsel %vm8942, %v8953, %v8955
    %v8957 = vshll.u32 %v8917, 8
    %v8958 = vmul.u32.u64.compose %v8957, %v8956
    %v8959 = vextract.low.u32 %v8958
    %v8960 = vextract.high.u32 %v8958
    %v8961 = vmul.u32.u64.compose %v8957, %v8952
    %v8962 = vextract.low.u32 %v8961
    %v8963 = vextract.high.u32 %v8961
    %v8964 = vmul.u32 %v8957, %v8948
    %v8965 = vadd.s32 %v8960, %v8962
    %vm8966 = vc.u32 %v8960, %v8962
    %v8967 = vadd.s32 %v8963, 1
    %v8968 = vsel %vm8966, %v8967, %v8963
    %v8969 = vadd.s32 %v8964, %v8968
    %v8970 = vadd.s32 %v8969, 536870912
    %v8971 = vshrl.u32 %v8970, 30
    %v8972 = vshll.u32 %v8971, 30
    %v8973 = vsub.s32 %v8969, %v8972
    %vm8974 = vcmp.lt.s32.totalorder %v8973, 0
    %v8975 = vsub.s32 0, %v8973
    %v8976 = vsel %vm8974, %v8975, %v8973
    %v8977 = vclz %v8976
    %v8978 = vsub.s32 %v8977, 2
    %vm8979 = vcmp.gt.s32.totalorder 0, %v8978
    %v8980 = vsel %vm8979, 0, %v8978
    %v8981 = vsub.s32 32, %v8980
    %v8982 = vshll.u32 %v8973, %v8980
    %v8983 = vshrl.u32 %v8965, %v8981
    %v8984 = vor.u32 %v8982, %v8983
    %v8985 = vsub.s32 4294967266, %v8980
    %v8986 = vadd.s32 %v8985, 127
    %v8987 = vshll.u32 %v8986, 23
    %v8988 = vor.u32 4788187, %v8987
    %v8989 = vand.u32 2147483647, %v8988
    %v8991 = vcvt.s32.f32 %v8984
    %v8992 = vmul.f32 %v8991, %v8989
    %v8993 = vxor.u32 %v8992, 2147483648
    %v8994 = vsel %vm8911, %v8993, %v8992
    %v8995 = vsub.s32 4, %v8971
    %v8996 = vsel %vm8911, %v8995, %v8971
    %v8997 = vsel %vm8910, %v650, %v8994
    %v8998 = vsel %vm8910, 0, %v8996
    %v8999 = vcosq.f32.pop %v8997
    %v9000 = vsinq.f32.pop %v8997
    %vm9001 = vweird.f32 %v650
    %v9002 = vand.u32 %v8998, 3
    %vm9003 = vcmp.lt.s32.totalorder %v9002, 2
    %vm9004 = vcmp.eq.s32.totalorder %v9002, 0
    %v9005 = vxor.u32 %v9000, 2147483648
    %v9006 = vsel %vm9004, %v8999, %v9005
    %vm9007 = vcmp.eq.s32.totalorder %v9002, 2
    %v9008 = vxor.u32 %v8999, 2147483648
    %v9009 = vsel %vm9007, %v9008, %v9000
    %v9010 = vsel %vm9003, %v9006, %v9009
    %v9011 = vsel %vm9001, nan, %v9010
    %v9012 = vand.u32 2147483647, %v651
    %vm9013 = vcmp.le.f32.partialorder %v9012, 0.7853982
    %vm9014 = vcmp.lt.s32.totalorder %v651, 0
    %v9015 = vand.u32 %v651, 2139095040
    %v9016 = vshrl.u32 %v9015, 23
    %v9017 = vsub.s32 %v9016, 127
    %v9018 = vand.u32 2147483647, %v651
    %v9019 = vand.u32 %v9018, 8388607
    %v9020 = vor.u32 %v9019, 8388608
    %v9021 = vsub.s32 0, %v9020
    %v9022 = vadd.s32 %v9017, 1
    %vm9023 = vcmp.gt.s32.totalorder %v9022, 0
    %v9024 = vsel %vm9023, %v9022, 0
    %v9025 = vshrl.u32 %v9024, 5
    %v9026 = vand.u32 %v9024, 31
    %v9027 = vsub.s32 32, %v9026
    %v9028 = vshrl.u32 683565275, %v9027
    %v9029 = vshll.u32 683565275, %v9026
    %v9030 = vshrl.u32 2475754826, %v9027
    %v9031 = vor.u32 %v9029, %v9030
    %v9032 = vshll.u32 2475754826, %v9026
    %v9033 = vshrl.u32 2131351028, %v9027
    %v9034 = vor.u32 %v9032, %v9033
    %v9035 = vshll.u32 2131351028, %v9026
    %v9036 = vshrl.u32 2102212464, %v9027
    %v9037 = vor.u32 %v9035, %v9036
    %v9038 = vshll.u32 2102212464, %v9026
    %v9039 = vshrl.u32 920167782, %v9027
    %v9040 = vor.u32 %v9038, %v9039
    %v9041 = vshll.u32 920167782, %v9026
    %v9042 = vshrl.u32 1326507024, %v9027
    %v9043 = vor.u32 %v9041, %v9042
    %vm9044 = vcmp.lt.s32.totalorder %v9025, 1
    %vm9045 = vcmp.lt.s32.totalorder %v9025, 2
    %vm9046 = vcmp.lt.s32.totalorder %v9025, 3
    %vm9047 = vcmp.lt.s32.totalorder %v9025, 4
    %v9048 = vsel %vm9044, %v9028, %v9031
    %v9049 = vsel %vm9047, %v9037, 2102212464
    %v9050 = vsel %vm9046, %v9034, %v9049
    %v9051 = vsel %vm9045, %v9048, %v9050
    %v9052 = vsel %vm9044, %v9031, %v9034
    %v9053 = vsel %vm9047, %v9040, 920167782
    %v9054 = vsel %vm9046, %v9037, %v9053
    %v9055 = vsel %vm9045, %v9052, %v9054
    %v9056 = vsel %vm9044, %v9034, %v9037
    %v9057 = vsel %vm9047, %v9043, 1326507024
    %v9058 = vsel %vm9046, %v9040, %v9057
    %v9059 = vsel %vm9045, %v9056, %v9058
    %v9060 = vshll.u32 %v9020, 8
    %v9061 = vmul.u32.u64.compose %v9060, %v9059
    %v9062 = vextract.low.u32 %v9061
    %v9063 = vextract.high.u32 %v9061
    %v9064 = vmul.u32.u64.compose %v9060, %v9055
    %v9065 = vextract.low.u32 %v9064
    %v9066 = vextract.high.u32 %v9064
    %v9067 = vmul.u32 %v9060, %v9051
    %v9068 = vadd.s32 %v9063, %v9065
    %vm9069 = vc.u32 %v9063, %v9065
    %v9070 = vadd.s32 %v9066, 1
    %v9071 = vsel %vm9069, %v9070, %v9066
    %v9072 = vadd.s32 %v9067, %v9071
    %v9073 = vadd.s32 %v9072, 536870912
    %v9074 = vshrl.u32 %v9073, 30
    %v9075 = vshll.u32 %v9074, 30
    %v9076 = vsub.s32 %v9072, %v9075
    %vm9077 = vcmp.lt.s32.totalorder %v9076, 0
    %v9078 = vsub.s32 0, %v9076
    %v9079 = vsel %vm9077, %v9078, %v9076
    %v9080 = vclz %v9079
    %v9081 = vsub.s32 %v9080, 2
    %vm9082 = vcmp.gt.s32.totalorder 0, %v9081
    %v9083 = vsel %vm9082, 0, %v9081
    %v9084 = vsub.s32 32, %v9083
    %v9085 = vshll.u32 %v9076, %v9083
    %v9086 = vshrl.u32 %v9068, %v9084
    %v9087 = vor.u32 %v9085, %v9086
    %v9088 = vsub.s32 4294967266, %v9083
    %v9089 = vadd.s32 %v9088, 127
    %v9090 = vshll.u32 %v9089, 23
    %v9091 = vor.u32 4788187, %v9090
    %v9092 = vand.u32 2147483647, %v9091
    %v9094 = vcvt.s32.f32 %v9087
    %v9095 = vmul.f32 %v9094, %v9092
    %v9096 = vxor.u32 %v9095, 2147483648
    %v9097 = vsel %vm9014, %v9096, %v9095
    %v9098 = vsub.s32 4, %v9074
    %v9099 = vsel %vm9014, %v9098, %v9074
    %v9100 = vsel %vm9013, %v651, %v9097
    %v9101 = vsel %vm9013, 0, %v9099
    %v9102 = vcosq.f32.pop %v9100
    %v9103 = vsinq.f32.pop %v9100
    %vm9104 = vweird.f32 %v651
    %v9105 = vand.u32 %v9101, 3
    %vm9106 = vcmp.lt.s32.totalorder %v9105, 2
    %vm9107 = vcmp.eq.s32.totalorder %v9105, 0
    %v9108 = vxor.u32 %v9103, 2147483648
    %v9109 = vsel %vm9107, %v9102, %v9108
    %vm9110 = vcmp.eq.s32.totalorder %v9105, 2
    %v9111 = vxor.u32 %v9102, 2147483648
    %v9112 = vsel %vm9110, %v9111, %v9103
    %v9113 = vsel %vm9106, %v9109, %v9112
    %v9114 = vsel %vm9104, nan, %v9113
    %v9115 = vand.u32 2147483647, %v652
    %vm9116 = vcmp.le.f32.partialorder %v9115, 0.7853982
    %vm9117 = vcmp.lt.s32.totalorder %v652, 0
    %v9118 = vand.u32 %v652, 2139095040
    %v9119 = vshrl.u32 %v9118, 23
    %v9120 = vsub.s32 %v9119, 127
    %v9121 = vand.u32 2147483647, %v652
    %v9122 = vand.u32 %v9121, 8388607
    %v9123 = vor.u32 %v9122, 8388608
    %v9124 = vsub.s32 0, %v9123
    %v9125 = vadd.s32 %v9120, 1
    %vm9126 = vcmp.gt.s32.totalorder %v9125, 0
    %v9127 = vsel %vm9126, %v9125, 0
    %v9128 = vshrl.u32 %v9127, 5
    %v9129 = vand.u32 %v9127, 31
    %v9130 = vsub.s32 32, %v9129
    %v9131 = vshrl.u32 683565275, %v9130
    %v9132 = vshll.u32 683565275, %v9129
    %v9133 = vshrl.u32 2475754826, %v9130
    %v9134 = vor.u32 %v9132, %v9133
    %v9135 = vshll.u32 2475754826, %v9129
    %v9136 = vshrl.u32 2131351028, %v9130
    %v9137 = vor.u32 %v9135, %v9136
    %v9138 = vshll.u32 2131351028, %v9129
    %v9139 = vshrl.u32 2102212464, %v9130
    %v9140 = vor.u32 %v9138, %v9139
    %v9141 = vshll.u32 2102212464, %v9129
    %v9142 = vshrl.u32 920167782, %v9130
    %v9143 = vor.u32 %v9141, %v9142
    %v9144 = vshll.u32 920167782, %v9129
    %v9145 = vshrl.u32 1326507024, %v9130
    %v9146 = vor.u32 %v9144, %v9145
    %vm9147 = vcmp.lt.s32.totalorder %v9128, 1
    %vm9148 = vcmp.lt.s32.totalorder %v9128, 2
    %vm9149 = vcmp.lt.s32.totalorder %v9128, 3
    %vm9150 = vcmp.lt.s32.totalorder %v9128, 4
    %v9151 = vsel %vm9147, %v9131, %v9134
    %v9152 = vsel %vm9150, %v9140, 2102212464
    %v9153 = vsel %vm9149, %v9137, %v9152
    %v9154 = vsel %vm9148, %v9151, %v9153
    %v9155 = vsel %vm9147, %v9134, %v9137
    %v9156 = vsel %vm9150, %v9143, 920167782
    %v9157 = vsel %vm9149, %v9140, %v9156
    %v9158 = vsel %vm9148, %v9155, %v9157
    %v9159 = vsel %vm9147, %v9137, %v9140
    %v9160 = vsel %vm9150, %v9146, 1326507024
    %v9161 = vsel %vm9149, %v9143, %v9160
    %v9162 = vsel %vm9148, %v9159, %v9161
    %v9163 = vshll.u32 %v9123, 8
    %v9164 = vmul.u32.u64.compose %v9163, %v9162
    %v9165 = vextract.low.u32 %v9164
    %v9166 = vextract.high.u32 %v9164
    %v9167 = vmul.u32.u64.compose %v9163, %v9158
    %v9168 = vextract.low.u32 %v9167
    %v9169 = vextract.high.u32 %v9167
    %v9170 = vmul.u32 %v9163, %v9154
    %v9171 = vadd.s32 %v9166, %v9168
    %vm9172 = vc.u32 %v9166, %v9168
    %v9173 = vadd.s32 %v9169, 1
    %v9174 = vsel %vm9172, %v9173, %v9169
    %v9175 = vadd.s32 %v9170, %v9174
    %v9176 = vadd.s32 %v9175, 536870912
    %v9177 = vshrl.u32 %v9176, 30
    %v9178 = vshll.u32 %v9177, 30
    %v9179 = vsub.s32 %v9175, %v9178
    %vm9180 = vcmp.lt.s32.totalorder %v9179, 0
    %v9181 = vsub.s32 0, %v9179
    %v9182 = vsel %vm9180, %v9181, %v9179
    %v9183 = vclz %v9182
    %v9184 = vsub.s32 %v9183, 2
    %vm9185 = vcmp.gt.s32.totalorder 0, %v9184
    %v9186 = vsel %vm9185, 0, %v9184
    %v9187 = vsub.s32 32, %v9186
    %v9188 = vshll.u32 %v9179, %v9186
    %v9189 = vshrl.u32 %v9171, %v9187
    %v9190 = vor.u32 %v9188, %v9189
    %v9191 = vsub.s32 4294967266, %v9186
    %v9192 = vadd.s32 %v9191, 127
    %v9193 = vshll.u32 %v9192, 23
    %v9194 = vor.u32 4788187, %v9193
    %v9195 = vand.u32 2147483647, %v9194
    %v9197 = vcvt.s32.f32 %v9190
    %v9198 = vmul.f32 %v9197, %v9195
    %v9199 = vxor.u32 %v9198, 2147483648
    %v9200 = vsel %vm9117, %v9199, %v9198
    %v9201 = vsub.s32 4, %v9177
    %v9202 = vsel %vm9117, %v9201, %v9177
    %v9203 = vsel %vm9116, %v652, %v9200
    %v9204 = vsel %vm9116, 0, %v9202
    %v9205 = vcosq.f32.pop %v9203
    %v9206 = vsinq.f32.pop %v9203
    %vm9207 = vweird.f32 %v652
    %v9208 = vand.u32 %v9204, 3
    %vm9209 = vcmp.lt.s32.totalorder %v9208, 2
    %vm9210 = vcmp.eq.s32.totalorder %v9208, 0
    %v9211 = vxor.u32 %v9206, 2147483648
    %v9212 = vsel %vm9210, %v9205, %v9211
    %vm9213 = vcmp.eq.s32.totalorder %v9208, 2
    %v9214 = vxor.u32 %v9205, 2147483648
    %v9215 = vsel %vm9213, %v9214, %v9206
    %v9216 = vsel %vm9209, %v9212, %v9215
    %v9217 = vsel %vm9207, nan, %v9216
    %v9218 = vand.u32 2147483647, %v653
    %vm9219 = vcmp.le.f32.partialorder %v9218, 0.7853982
    %vm9220 = vcmp.lt.s32.totalorder %v653, 0
    %v9221 = vand.u32 %v653, 2139095040
    %v9222 = vshrl.u32 %v9221, 23
    %v9223 = vsub.s32 %v9222, 127
    %v9224 = vand.u32 2147483647, %v653
    %v9225 = vand.u32 %v9224, 8388607
    %v9226 = vor.u32 %v9225, 8388608
    %v9227 = vsub.s32 0, %v9226
    %v9228 = vadd.s32 %v9223, 1
    %vm9229 = vcmp.gt.s32.totalorder %v9228, 0
    %v9230 = vsel %vm9229, %v9228, 0
    %v9231 = vshrl.u32 %v9230, 5
    %v9232 = vand.u32 %v9230, 31
    %v9233 = vsub.s32 32, %v9232
    %v9234 = vshrl.u32 683565275, %v9233
    %v9235 = vshll.u32 683565275, %v9232
    %v9236 = vshrl.u32 2475754826, %v9233
    %v9237 = vor.u32 %v9235, %v9236
    %v9238 = vshll.u32 2475754826, %v9232
    %v9239 = vshrl.u32 2131351028, %v9233
    %v9240 = vor.u32 %v9238, %v9239
    %v9241 = vshll.u32 2131351028, %v9232
    %v9242 = vshrl.u32 2102212464, %v9233
    %v9243 = vor.u32 %v9241, %v9242
    %v9244 = vshll.u32 2102212464, %v9232
    %v9245 = vshrl.u32 920167782, %v9233
    %v9246 = vor.u32 %v9244, %v9245
    %v9247 = vshll.u32 920167782, %v9232
    %v9248 = vshrl.u32 1326507024, %v9233
    %v9249 = vor.u32 %v9247, %v9248
    %vm9250 = vcmp.lt.s32.totalorder %v9231, 1
    %vm9251 = vcmp.lt.s32.totalorder %v9231, 2
    %vm9252 = vcmp.lt.s32.totalorder %v9231, 3
    %vm9253 = vcmp.lt.s32.totalorder %v9231, 4
    %v9254 = vsel %vm9250, %v9234, %v9237
    %v9255 = vsel %vm9253, %v9243, 2102212464
    %v9256 = vsel %vm9252, %v9240, %v9255
    %v9257 = vsel %vm9251, %v9254, %v9256
    %v9258 = vsel %vm9250, %v9237, %v9240
    %v9259 = vsel %vm9253, %v9246, 920167782
    %v9260 = vsel %vm9252, %v9243, %v9259
    %v9261 = vsel %vm9251, %v9258, %v9260
    %v9262 = vsel %vm9250, %v9240, %v9243
    %v9263 = vsel %vm9253, %v9249, 1326507024
    %v9264 = vsel %vm9252, %v9246, %v9263
    %v9265 = vsel %vm9251, %v9262, %v9264
    %v9266 = vshll.u32 %v9226, 8
    %v9267 = vmul.u32.u64.compose %v9266, %v9265
    %v9268 = vextract.low.u32 %v9267
    %v9269 = vextract.high.u32 %v9267
    %v9270 = vmul.u32.u64.compose %v9266, %v9261
    %v9271 = vextract.low.u32 %v9270
    %v9272 = vextract.high.u32 %v9270
    %v9273 = vmul.u32 %v9266, %v9257
    %v9274 = vadd.s32 %v9269, %v9271
    %vm9275 = vc.u32 %v9269, %v9271
    %v9276 = vadd.s32 %v9272, 1
    %v9277 = vsel %vm9275, %v9276, %v9272
    %v9278 = vadd.s32 %v9273, %v9277
    %v9279 = vadd.s32 %v9278, 536870912
    %v9280 = vshrl.u32 %v9279, 30
    %v9281 = vshll.u32 %v9280, 30
    %v9282 = vsub.s32 %v9278, %v9281
    %vm9283 = vcmp.lt.s32.totalorder %v9282, 0
    %v9284 = vsub.s32 0, %v9282
    %v9285 = vsel %vm9283, %v9284, %v9282
    %v9286 = vclz %v9285
    %v9287 = vsub.s32 %v9286, 2
    %vm9288 = vcmp.gt.s32.totalorder 0, %v9287
    %v9289 = vsel %vm9288, 0, %v9287
    %v9290 = vsub.s32 32, %v9289
    %v9291 = vshll.u32 %v9282, %v9289
    %v9292 = vshrl.u32 %v9274, %v9290
    %v9293 = vor.u32 %v9291, %v9292
    %v9294 = vsub.s32 4294967266, %v9289
    %v9295 = vadd.s32 %v9294, 127
    %v9296 = vshll.u32 %v9295, 23
    %v9297 = vor.u32 4788187, %v9296
    %v9298 = vand.u32 2147483647, %v9297
    %v9300 = vcvt.s32.f32 %v9293
    %v9301 = vmul.f32 %v9300, %v9298
    %v9302 = vxor.u32 %v9301, 2147483648
    %v9303 = vsel %vm9220, %v9302, %v9301
    %v9304 = vsub.s32 4, %v9280
    %v9305 = vsel %vm9220, %v9304, %v9280
    %v9306 = vsel %vm9219, %v653, %v9303
    %v9307 = vsel %vm9219, 0, %v9305
    %v9308 = vcosq.f32.pop %v9306
    %v9309 = vsinq.f32.pop %v9306
    %vm9310 = vweird.f32 %v653
    %v9311 = vand.u32 %v9307, 3
    %vm9312 = vcmp.lt.s32.totalorder %v9311, 2
    %vm9313 = vcmp.eq.s32.totalorder %v9311, 0
    %v9314 = vxor.u32 %v9309, 2147483648
    %v9315 = vsel %vm9313, %v9308, %v9314
    %vm9316 = vcmp.eq.s32.totalorder %v9311, 2
    %v9317 = vxor.u32 %v9308, 2147483648
    %v9318 = vsel %vm9316, %v9317, %v9309
    %v9319 = vsel %vm9312, %v9315, %v9318
    %v9320 = vsel %vm9310, nan, %v9319
    %v9321 = vand.u32 2147483647, %v654
    %vm9322 = vcmp.le.f32.partialorder %v9321, 0.7853982
    %vm9323 = vcmp.lt.s32.totalorder %v654, 0
    %v9324 = vand.u32 %v654, 2139095040
    %v9325 = vshrl.u32 %v9324, 23
    %v9326 = vsub.s32 %v9325, 127
    %v9327 = vand.u32 2147483647, %v654
    %v9328 = vand.u32 %v9327, 8388607
    %v9329 = vor.u32 %v9328, 8388608
    %v9330 = vsub.s32 0, %v9329
    %v9331 = vadd.s32 %v9326, 1
    %vm9332 = vcmp.gt.s32.totalorder %v9331, 0
    %v9333 = vsel %vm9332, %v9331, 0
    %v9334 = vshrl.u32 %v9333, 5
    %v9335 = vand.u32 %v9333, 31
    %v9336 = vsub.s32 32, %v9335
    %v9337 = vshrl.u32 683565275, %v9336
    %v9338 = vshll.u32 683565275, %v9335
    %v9339 = vshrl.u32 2475754826, %v9336
    %v9340 = vor.u32 %v9338, %v9339
    %v9341 = vshll.u32 2475754826, %v9335
    %v9342 = vshrl.u32 2131351028, %v9336
    %v9343 = vor.u32 %v9341, %v9342
    %v9344 = vshll.u32 2131351028, %v9335
    %v9345 = vshrl.u32 2102212464, %v9336
    %v9346 = vor.u32 %v9344, %v9345
    %v9347 = vshll.u32 2102212464, %v9335
    %v9348 = vshrl.u32 920167782, %v9336
    %v9349 = vor.u32 %v9347, %v9348
    %v9350 = vshll.u32 920167782, %v9335
    %v9351 = vshrl.u32 1326507024, %v9336
    %v9352 = vor.u32 %v9350, %v9351
    %vm9353 = vcmp.lt.s32.totalorder %v9334, 1
    %vm9354 = vcmp.lt.s32.totalorder %v9334, 2
    %vm9355 = vcmp.lt.s32.totalorder %v9334, 3
    %vm9356 = vcmp.lt.s32.totalorder %v9334, 4
    %v9357 = vsel %vm9353, %v9337, %v9340
    %v9358 = vsel %vm9356, %v9346, 2102212464
    %v9359 = vsel %vm9355, %v9343, %v9358
    %v9360 = vsel %vm9354, %v9357, %v9359
    %v9361 = vsel %vm9353, %v9340, %v9343
    %v9362 = vsel %vm9356, %v9349, 920167782
    %v9363 = vsel %vm9355, %v9346, %v9362
    %v9364 = vsel %vm9354, %v9361, %v9363
    %v9365 = vsel %vm9353, %v9343, %v9346
    %v9366 = vsel %vm9356, %v9352, 1326507024
    %v9367 = vsel %vm9355, %v9349, %v9366
    %v9368 = vsel %vm9354, %v9365, %v9367
    %v9369 = vshll.u32 %v9329, 8
    %v9370 = vmul.u32.u64.compose %v9369, %v9368
    %v9371 = vextract.low.u32 %v9370
    %v9372 = vextract.high.u32 %v9370
    %v9373 = vmul.u32.u64.compose %v9369, %v9364
    %v9374 = vextract.low.u32 %v9373
    %v9375 = vextract.high.u32 %v9373
    %v9376 = vmul.u32 %v9369, %v9360
    %v9377 = vadd.s32 %v9372, %v9374
    %vm9378 = vc.u32 %v9372, %v9374
    %v9379 = vadd.s32 %v9375, 1
    %v9380 = vsel %vm9378, %v9379, %v9375
    %v9381 = vadd.s32 %v9376, %v9380
    %v9382 = vadd.s32 %v9381, 536870912
    %v9383 = vshrl.u32 %v9382, 30
    %v9384 = vshll.u32 %v9383, 30
    %v9385 = vsub.s32 %v9381, %v9384
    %vm9386 = vcmp.lt.s32.totalorder %v9385, 0
    %v9387 = vsub.s32 0, %v9385
    %v9388 = vsel %vm9386, %v9387, %v9385
    %v9389 = vclz %v9388
    %v9390 = vsub.s32 %v9389, 2
    %vm9391 = vcmp.gt.s32.totalorder 0, %v9390
    %v9392 = vsel %vm9391, 0, %v9390
    %v9393 = vsub.s32 32, %v9392
    %v9394 = vshll.u32 %v9385, %v9392
    %v9395 = vshrl.u32 %v9377, %v9393
    %v9396 = vor.u32 %v9394, %v9395
    %v9397 = vsub.s32 4294967266, %v9392
    %v9398 = vadd.s32 %v9397, 127
    %v9399 = vshll.u32 %v9398, 23
    %v9400 = vor.u32 4788187, %v9399
    %v9401 = vand.u32 2147483647, %v9400
    %v9403 = vcvt.s32.f32 %v9396
    %v9404 = vmul.f32 %v9403, %v9401
    %v9405 = vxor.u32 %v9404, 2147483648
    %v9406 = vsel %vm9323, %v9405, %v9404
    %v9407 = vsub.s32 4, %v9383
    %v9408 = vsel %vm9323, %v9407, %v9383
    %v9409 = vsel %vm9322, %v654, %v9406
    %v9410 = vsel %vm9322, 0, %v9408
    %v9411 = vcosq.f32.pop %v9409
    %v9412 = vsinq.f32.pop %v9409
    %vm9413 = vweird.f32 %v654
    %v9414 = vand.u32 %v9410, 3
    %vm9415 = vcmp.lt.s32.totalorder %v9414, 2
    %vm9416 = vcmp.eq.s32.totalorder %v9414, 0
    %v9417 = vxor.u32 %v9412, 2147483648
    %v9418 = vsel %vm9416, %v9411, %v9417
    %vm9419 = vcmp.eq.s32.totalorder %v9414, 2
    %v9420 = vxor.u32 %v9411, 2147483648
    %v9421 = vsel %vm9419, %v9420, %v9412
    %v9422 = vsel %vm9415, %v9418, %v9421
    %v9423 = vsel %vm9413, nan, %v9422
    %v9424 = vand.u32 2147483647, %v655
    %vm9425 = vcmp.le.f32.partialorder %v9424, 0.7853982
    %vm9426 = vcmp.lt.s32.totalorder %v655, 0
    %v9427 = vand.u32 %v655, 2139095040
    %v9428 = vshrl.u32 %v9427, 23
    %v9429 = vsub.s32 %v9428, 127
    %v9430 = vand.u32 2147483647, %v655
    %v9431 = vand.u32 %v9430, 8388607
    %v9432 = vor.u32 %v9431, 8388608
    %v9433 = vsub.s32 0, %v9432
    %v9434 = vadd.s32 %v9429, 1
    %vm9435 = vcmp.gt.s32.totalorder %v9434, 0
    %v9436 = vsel %vm9435, %v9434, 0
    %v9437 = vshrl.u32 %v9436, 5
    %v9438 = vand.u32 %v9436, 31
    %v9439 = vsub.s32 32, %v9438
    %v9440 = vshrl.u32 683565275, %v9439
    %v9441 = vshll.u32 683565275, %v9438
    %v9442 = vshrl.u32 2475754826, %v9439
    %v9443 = vor.u32 %v9441, %v9442
    %v9444 = vshll.u32 2475754826, %v9438
    %v9445 = vshrl.u32 2131351028, %v9439
    %v9446 = vor.u32 %v9444, %v9445
    %v9447 = vshll.u32 2131351028, %v9438
    %v9448 = vshrl.u32 2102212464, %v9439
    %v9449 = vor.u32 %v9447, %v9448
    %v9450 = vshll.u32 2102212464, %v9438
    %v9451 = vshrl.u32 920167782, %v9439
    %v9452 = vor.u32 %v9450, %v9451
    %v9453 = vshll.u32 920167782, %v9438
    %v9454 = vshrl.u32 1326507024, %v9439
    %v9455 = vor.u32 %v9453, %v9454
    %vm9456 = vcmp.lt.s32.totalorder %v9437, 1
    %vm9457 = vcmp.lt.s32.totalorder %v9437, 2
    %vm9458 = vcmp.lt.s32.totalorder %v9437, 3
    %vm9459 = vcmp.lt.s32.totalorder %v9437, 4
    %v9460 = vsel %vm9456, %v9440, %v9443
    %v9461 = vsel %vm9459, %v9449, 2102212464
    %v9462 = vsel %vm9458, %v9446, %v9461
    %v9463 = vsel %vm9457, %v9460, %v9462
    %v9464 = vsel %vm9456, %v9443, %v9446
    %v9465 = vsel %vm9459, %v9452, 920167782
    %v9466 = vsel %vm9458, %v9449, %v9465
    %v9467 = vsel %vm9457, %v9464, %v9466
    %v9468 = vsel %vm9456, %v9446, %v9449
    %v9469 = vsel %vm9459, %v9455, 1326507024
    %v9470 = vsel %vm9458, %v9452, %v9469
    %v9471 = vsel %vm9457, %v9468, %v9470
    %v9472 = vshll.u32 %v9432, 8
    %v9473 = vmul.u32.u64.compose %v9472, %v9471
    %v9474 = vextract.low.u32 %v9473
    %v9475 = vextract.high.u32 %v9473
    %v9476 = vmul.u32.u64.compose %v9472, %v9467
    %v9477 = vextract.low.u32 %v9476
    %v9478 = vextract.high.u32 %v9476
    %v9479 = vmul.u32 %v9472, %v9463
    %v9480 = vadd.s32 %v9475, %v9477
    %vm9481 = vc.u32 %v9475, %v9477
    %v9482 = vadd.s32 %v9478, 1
    %v9483 = vsel %vm9481, %v9482, %v9478
    %v9484 = vadd.s32 %v9479, %v9483
    %v9485 = vadd.s32 %v9484, 536870912
    %v9486 = vshrl.u32 %v9485, 30
    %v9487 = vshll.u32 %v9486, 30
    %v9488 = vsub.s32 %v9484, %v9487
    %vm9489 = vcmp.lt.s32.totalorder %v9488, 0
    %v9490 = vsub.s32 0, %v9488
    %v9491 = vsel %vm9489, %v9490, %v9488
    %v9492 = vclz %v9491
    %v9493 = vsub.s32 %v9492, 2
    %vm9494 = vcmp.gt.s32.totalorder 0, %v9493
    %v9495 = vsel %vm9494, 0, %v9493
    %v9496 = vsub.s32 32, %v9495
    %v9497 = vshll.u32 %v9488, %v9495
    %v9498 = vshrl.u32 %v9480, %v9496
    %v9499 = vor.u32 %v9497, %v9498
    %v9500 = vsub.s32 4294967266, %v9495
    %v9501 = vadd.s32 %v9500, 127
    %v9502 = vshll.u32 %v9501, 23
    %v9503 = vor.u32 4788187, %v9502
    %v9504 = vand.u32 2147483647, %v9503
    %v9506 = vcvt.s32.f32 %v9499
    %v9507 = vmul.f32 %v9506, %v9504
    %v9508 = vxor.u32 %v9507, 2147483648
    %v9509 = vsel %vm9426, %v9508, %v9507
    %v9510 = vsub.s32 4, %v9486
    %v9511 = vsel %vm9426, %v9510, %v9486
    %v9512 = vsel %vm9425, %v655, %v9509
    %v9513 = vsel %vm9425, 0, %v9511
    %v9514 = vcosq.f32.pop %v9512
    %v9515 = vsinq.f32.pop %v9512
    %vm9516 = vweird.f32 %v655
    %v9517 = vand.u32 %v9513, 3
    %vm9518 = vcmp.lt.s32.totalorder %v9517, 2
    %vm9519 = vcmp.eq.s32.totalorder %v9517, 0
    %v9520 = vxor.u32 %v9515, 2147483648
    %v9521 = vsel %vm9519, %v9514, %v9520
    %vm9522 = vcmp.eq.s32.totalorder %v9517, 2
    %v9523 = vxor.u32 %v9514, 2147483648
    %v9524 = vsel %vm9522, %v9523, %v9515
    %v9525 = vsel %vm9518, %v9521, %v9524
    %v9526 = vsel %vm9516, nan, %v9525
    %v9527 = vand.u32 2147483647, %v656
    %vm9528 = vcmp.le.f32.partialorder %v9527, 0.7853982
    %vm9529 = vcmp.lt.s32.totalorder %v656, 0
    %v9530 = vand.u32 %v656, 2139095040
    %v9531 = vshrl.u32 %v9530, 23
    %v9532 = vsub.s32 %v9531, 127
    %v9533 = vand.u32 2147483647, %v656
    %v9534 = vand.u32 %v9533, 8388607
    %v9535 = vor.u32 %v9534, 8388608
    %v9536 = vsub.s32 0, %v9535
    %v9537 = vadd.s32 %v9532, 1
    %vm9538 = vcmp.gt.s32.totalorder %v9537, 0
    %v9539 = vsel %vm9538, %v9537, 0
    %v9540 = vshrl.u32 %v9539, 5
    %v9541 = vand.u32 %v9539, 31
    %v9542 = vsub.s32 32, %v9541
    %v9543 = vshrl.u32 683565275, %v9542
    %v9544 = vshll.u32 683565275, %v9541
    %v9545 = vshrl.u32 2475754826, %v9542
    %v9546 = vor.u32 %v9544, %v9545
    %v9547 = vshll.u32 2475754826, %v9541
    %v9548 = vshrl.u32 2131351028, %v9542
    %v9549 = vor.u32 %v9547, %v9548
    %v9550 = vshll.u32 2131351028, %v9541
    %v9551 = vshrl.u32 2102212464, %v9542
    %v9552 = vor.u32 %v9550, %v9551
    %v9553 = vshll.u32 2102212464, %v9541
    %v9554 = vshrl.u32 920167782, %v9542
    %v9555 = vor.u32 %v9553, %v9554
    %v9556 = vshll.u32 920167782, %v9541
    %v9557 = vshrl.u32 1326507024, %v9542
    %v9558 = vor.u32 %v9556, %v9557
    %vm9559 = vcmp.lt.s32.totalorder %v9540, 1
    %vm9560 = vcmp.lt.s32.totalorder %v9540, 2
    %vm9561 = vcmp.lt.s32.totalorder %v9540, 3
    %vm9562 = vcmp.lt.s32.totalorder %v9540, 4
    %v9563 = vsel %vm9559, %v9543, %v9546
    %v9564 = vsel %vm9562, %v9552, 2102212464
    %v9565 = vsel %vm9561, %v9549, %v9564
    %v9566 = vsel %vm9560, %v9563, %v9565
    %v9567 = vsel %vm9559, %v9546, %v9549
    %v9568 = vsel %vm9562, %v9555, 920167782
    %v9569 = vsel %vm9561, %v9552, %v9568
    %v9570 = vsel %vm9560, %v9567, %v9569
    %v9571 = vsel %vm9559, %v9549, %v9552
    %v9572 = vsel %vm9562, %v9558, 1326507024
    %v9573 = vsel %vm9561, %v9555, %v9572
    %v9574 = vsel %vm9560, %v9571, %v9573
    %v9575 = vshll.u32 %v9535, 8
    %v9576 = vmul.u32.u64.compose %v9575, %v9574
    %v9577 = vextract.low.u32 %v9576
    %v9578 = vextract.high.u32 %v9576
    %v9579 = vmul.u32.u64.compose %v9575, %v9570
    %v9580 = vextract.low.u32 %v9579
    %v9581 = vextract.high.u32 %v9579
    %v9582 = vmul.u32 %v9575, %v9566
    %v9583 = vadd.s32 %v9578, %v9580
    %vm9584 = vc.u32 %v9578, %v9580
    %v9585 = vadd.s32 %v9581, 1
    %v9586 = vsel %vm9584, %v9585, %v9581
    %v9587 = vadd.s32 %v9582, %v9586
    %v9588 = vadd.s32 %v9587, 536870912
    %v9589 = vshrl.u32 %v9588, 30
    %v9590 = vshll.u32 %v9589, 30
    %v9591 = vsub.s32 %v9587, %v9590
    %vm9592 = vcmp.lt.s32.totalorder %v9591, 0
    %v9593 = vsub.s32 0, %v9591
    %v9594 = vsel %vm9592, %v9593, %v9591
    %v9595 = vclz %v9594
    %v9596 = vsub.s32 %v9595, 2
    %vm9597 = vcmp.gt.s32.totalorder 0, %v9596
    %v9598 = vsel %vm9597, 0, %v9596
    %v9599 = vsub.s32 32, %v9598
    %v9600 = vshll.u32 %v9591, %v9598
    %v9601 = vshrl.u32 %v9583, %v9599
    %v9602 = vor.u32 %v9600, %v9601
    %v9603 = vsub.s32 4294967266, %v9598
    %v9604 = vadd.s32 %v9603, 127
    %v9605 = vshll.u32 %v9604, 23
    %v9606 = vor.u32 4788187, %v9605
    %v9607 = vand.u32 2147483647, %v9606
    %v9609 = vcvt.s32.f32 %v9602
    %v9610 = vmul.f32 %v9609, %v9607
    %v9611 = vxor.u32 %v9610, 2147483648
    %v9612 = vsel %vm9529, %v9611, %v9610
    %v9613 = vsub.s32 4, %v9589
    %v9614 = vsel %vm9529, %v9613, %v9589
    %v9615 = vsel %vm9528, %v656, %v9612
    %v9616 = vsel %vm9528, 0, %v9614
    %v9617 = vcosq.f32.pop %v9615
    %v9618 = vsinq.f32.pop %v9615
    %vm9619 = vweird.f32 %v656
    %v9620 = vand.u32 %v9616, 3
    %vm9621 = vcmp.lt.s32.totalorder %v9620, 2
    %vm9622 = vcmp.eq.s32.totalorder %v9620, 0
    %v9623 = vxor.u32 %v9618, 2147483648
    %v9624 = vsel %vm9622, %v9617, %v9623
    %vm9625 = vcmp.eq.s32.totalorder %v9620, 2
    %v9626 = vxor.u32 %v9617, 2147483648
    %v9627 = vsel %vm9625, %v9626, %v9618
    %v9628 = vsel %vm9621, %v9624, %v9627
    %v9629 = vsel %vm9619, nan, %v9628
    %v9630 = vand.u32 2147483647, %v657
    %vm9631 = vcmp.le.f32.partialorder %v9630, 0.7853982
    %vm9632 = vcmp.lt.s32.totalorder %v657, 0
    %v9633 = vand.u32 %v657, 2139095040
    %v9634 = vshrl.u32 %v9633, 23
    %v9635 = vsub.s32 %v9634, 127
    %v9636 = vand.u32 2147483647, %v657
    %v9637 = vand.u32 %v9636, 8388607
    %v9638 = vor.u32 %v9637, 8388608
    %v9639 = vsub.s32 0, %v9638
    %v9640 = vadd.s32 %v9635, 1
    %vm9641 = vcmp.gt.s32.totalorder %v9640, 0
    %v9642 = vsel %vm9641, %v9640, 0
    %v9643 = vshrl.u32 %v9642, 5
    %v9644 = vand.u32 %v9642, 31
    %v9645 = vsub.s32 32, %v9644
    %v9646 = vshrl.u32 683565275, %v9645
    %v9647 = vshll.u32 683565275, %v9644
    %v9648 = vshrl.u32 2475754826, %v9645
    %v9649 = vor.u32 %v9647, %v9648
    %v9650 = vshll.u32 2475754826, %v9644
    %v9651 = vshrl.u32 2131351028, %v9645
    %v9652 = vor.u32 %v9650, %v9651
    %v9653 = vshll.u32 2131351028, %v9644
    %v9654 = vshrl.u32 2102212464, %v9645
    %v9655 = vor.u32 %v9653, %v9654
    %v9656 = vshll.u32 2102212464, %v9644
    %v9657 = vshrl.u32 920167782, %v9645
    %v9658 = vor.u32 %v9656, %v9657
    %v9659 = vshll.u32 920167782, %v9644
    %v9660 = vshrl.u32 1326507024, %v9645
    %v9661 = vor.u32 %v9659, %v9660
    %vm9662 = vcmp.lt.s32.totalorder %v9643, 1
    %vm9663 = vcmp.lt.s32.totalorder %v9643, 2
    %vm9664 = vcmp.lt.s32.totalorder %v9643, 3
    %vm9665 = vcmp.lt.s32.totalorder %v9643, 4
    %v9666 = vsel %vm9662, %v9646, %v9649
    %v9667 = vsel %vm9665, %v9655, 2102212464
    %v9668 = vsel %vm9664, %v9652, %v9667
    %v9669 = vsel %vm9663, %v9666, %v9668
    %v9670 = vsel %vm9662, %v9649, %v9652
    %v9671 = vsel %vm9665, %v9658, 920167782
    %v9672 = vsel %vm9664, %v9655, %v9671
    %v9673 = vsel %vm9663, %v9670, %v9672
    %v9674 = vsel %vm9662, %v9652, %v9655
    %v9675 = vsel %vm9665, %v9661, 1326507024
    %v9676 = vsel %vm9664, %v9658, %v9675
    %v9677 = vsel %vm9663, %v9674, %v9676
    %v9678 = vshll.u32 %v9638, 8
    %v9679 = vmul.u32.u64.compose %v9678, %v9677
    %v9680 = vextract.low.u32 %v9679
    %v9681 = vextract.high.u32 %v9679
    %v9682 = vmul.u32.u64.compose %v9678, %v9673
    %v9683 = vextract.low.u32 %v9682
    %v9684 = vextract.high.u32 %v9682
    %v9685 = vmul.u32 %v9678, %v9669
    %v9686 = vadd.s32 %v9681, %v9683
    %vm9687 = vc.u32 %v9681, %v9683
    %v9688 = vadd.s32 %v9684, 1
    %v9689 = vsel %vm9687, %v9688, %v9684
    %v9690 = vadd.s32 %v9685, %v9689
    %v9691 = vadd.s32 %v9690, 536870912
    %v9692 = vshrl.u32 %v9691, 30
    %v9693 = vshll.u32 %v9692, 30
    %v9694 = vsub.s32 %v9690, %v9693
    %vm9695 = vcmp.lt.s32.totalorder %v9694, 0
    %v9696 = vsub.s32 0, %v9694
    %v9697 = vsel %vm9695, %v9696, %v9694
    %v9698 = vclz %v9697
    %v9699 = vsub.s32 %v9698, 2
    %vm9700 = vcmp.gt.s32.totalorder 0, %v9699
    %v9701 = vsel %vm9700, 0, %v9699
    %v9702 = vsub.s32 32, %v9701
    %v9703 = vshll.u32 %v9694, %v9701
    %v9704 = vshrl.u32 %v9686, %v9702
    %v9705 = vor.u32 %v9703, %v9704
    %v9706 = vsub.s32 4294967266, %v9701
    %v9707 = vadd.s32 %v9706, 127
    %v9708 = vshll.u32 %v9707, 23
    %v9709 = vor.u32 4788187, %v9708
    %v9710 = vand.u32 2147483647, %v9709
    %v9712 = vcvt.s32.f32 %v9705
    %v9713 = vmul.f32 %v9712, %v9710
    %v9714 = vxor.u32 %v9713, 2147483648
    %v9715 = vsel %vm9632, %v9714, %v9713
    %v9716 = vsub.s32 4, %v9692
    %v9717 = vsel %vm9632, %v9716, %v9692
    %v9718 = vsel %vm9631, %v657, %v9715
    %v9719 = vsel %vm9631, 0, %v9717
    %v9720 = vcosq.f32.pop %v9718
    %v9721 = vsinq.f32.pop %v9718
    %vm9722 = vweird.f32 %v657
    %v9723 = vand.u32 %v9719, 3
    %vm9724 = vcmp.lt.s32.totalorder %v9723, 2
    %vm9725 = vcmp.eq.s32.totalorder %v9723, 0
    %v9726 = vxor.u32 %v9721, 2147483648
    %v9727 = vsel %vm9725, %v9720, %v9726
    %vm9728 = vcmp.eq.s32.totalorder %v9723, 2
    %v9729 = vxor.u32 %v9720, 2147483648
    %v9730 = vsel %vm9728, %v9729, %v9721
    %v9731 = vsel %vm9724, %v9727, %v9730
    %v9732 = vsel %vm9722, nan, %v9731
    %v9733 = vand.u32 2147483647, %v658
    %vm9734 = vcmp.le.f32.partialorder %v9733, 0.7853982
    %vm9735 = vcmp.lt.s32.totalorder %v658, 0
    %v9736 = vand.u32 %v658, 2139095040
    %v9737 = vshrl.u32 %v9736, 23
    %v9738 = vsub.s32 %v9737, 127
    %v9739 = vand.u32 2147483647, %v658
    %v9740 = vand.u32 %v9739, 8388607
    %v9741 = vor.u32 %v9740, 8388608
    %v9742 = vsub.s32 0, %v9741
    %v9743 = vadd.s32 %v9738, 1
    %vm9744 = vcmp.gt.s32.totalorder %v9743, 0
    %v9745 = vsel %vm9744, %v9743, 0
    %v9746 = vshrl.u32 %v9745, 5
    %v9747 = vand.u32 %v9745, 31
    %v9748 = vsub.s32 32, %v9747
    %v9749 = vshrl.u32 683565275, %v9748
    %v9750 = vshll.u32 683565275, %v9747
    %v9751 = vshrl.u32 2475754826, %v9748
    %v9752 = vor.u32 %v9750, %v9751
    %v9753 = vshll.u32 2475754826, %v9747
    %v9754 = vshrl.u32 2131351028, %v9748
    %v9755 = vor.u32 %v9753, %v9754
    %v9756 = vshll.u32 2131351028, %v9747
    %v9757 = vshrl.u32 2102212464, %v9748
    %v9758 = vor.u32 %v9756, %v9757
    %v9759 = vshll.u32 2102212464, %v9747
    %v9760 = vshrl.u32 920167782, %v9748
    %v9761 = vor.u32 %v9759, %v9760
    %v9762 = vshll.u32 920167782, %v9747
    %v9763 = vshrl.u32 1326507024, %v9748
    %v9764 = vor.u32 %v9762, %v9763
    %vm9765 = vcmp.lt.s32.totalorder %v9746, 1
    %vm9766 = vcmp.lt.s32.totalorder %v9746, 2
    %vm9767 = vcmp.lt.s32.totalorder %v9746, 3
    %vm9768 = vcmp.lt.s32.totalorder %v9746, 4
    %v9769 = vsel %vm9765, %v9749, %v9752
    %v9770 = vsel %vm9768, %v9758, 2102212464
    %v9771 = vsel %vm9767, %v9755, %v9770
    %v9772 = vsel %vm9766, %v9769, %v9771
    %v9773 = vsel %vm9765, %v9752, %v9755
    %v9774 = vsel %vm9768, %v9761, 920167782
    %v9775 = vsel %vm9767, %v9758, %v9774
    %v9776 = vsel %vm9766, %v9773, %v9775
    %v9777 = vsel %vm9765, %v9755, %v9758
    %v9778 = vsel %vm9768, %v9764, 1326507024
    %v9779 = vsel %vm9767, %v9761, %v9778
    %v9780 = vsel %vm9766, %v9777, %v9779
    %v9781 = vshll.u32 %v9741, 8
    %v9782 = vmul.u32.u64.compose %v9781, %v9780
    %v9783 = vextract.low.u32 %v9782
    %v9784 = vextract.high.u32 %v9782
    %v9785 = vmul.u32.u64.compose %v9781, %v9776
    %v9786 = vextract.low.u32 %v9785
    %v9787 = vextract.high.u32 %v9785
    %v9788 = vmul.u32 %v9781, %v9772
    %v9789 = vadd.s32 %v9784, %v9786
    %vm9790 = vc.u32 %v9784, %v9786
    %v9791 = vadd.s32 %v9787, 1
    %v9792 = vsel %vm9790, %v9791, %v9787
    %v9793 = vadd.s32 %v9788, %v9792
    %v9794 = vadd.s32 %v9793, 536870912
    %v9795 = vshrl.u32 %v9794, 30
    %v9796 = vshll.u32 %v9795, 30
    %v9797 = vsub.s32 %v9793, %v9796
    %vm9798 = vcmp.lt.s32.totalorder %v9797, 0
    %v9799 = vsub.s32 0, %v9797
    %v9800 = vsel %vm9798, %v9799, %v9797
    %v9801 = vclz %v9800
    %v9802 = vsub.s32 %v9801, 2
    %vm9803 = vcmp.gt.s32.totalorder 0, %v9802
    %v9804 = vsel %vm9803, 0, %v9802
    %v9805 = vsub.s32 32, %v9804
    %v9806 = vshll.u32 %v9797, %v9804
    %v9807 = vshrl.u32 %v9789, %v9805
    %v9808 = vor.u32 %v9806, %v9807
    %v9809 = vsub.s32 4294967266, %v9804
    %v9810 = vadd.s32 %v9809, 127
    %v9811 = vshll.u32 %v9810, 23
    %v9812 = vor.u32 4788187, %v9811
    %v9813 = vand.u32 2147483647, %v9812
    %v9815 = vcvt.s32.f32 %v9808
    %v9816 = vmul.f32 %v9815, %v9813
    %v9817 = vxor.u32 %v9816, 2147483648
    %v9818 = vsel %vm9735, %v9817, %v9816
    %v9819 = vsub.s32 4, %v9795
    %v9820 = vsel %vm9735, %v9819, %v9795
    %v9821 = vsel %vm9734, %v658, %v9818
    %v9822 = vsel %vm9734, 0, %v9820
    %v9823 = vcosq.f32.pop %v9821
    %v9824 = vsinq.f32.pop %v9821
    %vm9825 = vweird.f32 %v658
    %v9826 = vand.u32 %v9822, 3
    %vm9827 = vcmp.lt.s32.totalorder %v9826, 2
    %vm9828 = vcmp.eq.s32.totalorder %v9826, 0
    %v9829 = vxor.u32 %v9824, 2147483648
    %v9830 = vsel %vm9828, %v9823, %v9829
    %vm9831 = vcmp.eq.s32.totalorder %v9826, 2
    %v9832 = vxor.u32 %v9823, 2147483648
    %v9833 = vsel %vm9831, %v9832, %v9824
    %v9834 = vsel %vm9827, %v9830, %v9833
    %v9835 = vsel %vm9825, nan, %v9834
    %v9836 = vand.u32 2147483647, %v659
    %vm9837 = vcmp.le.f32.partialorder %v9836, 0.7853982
    %vm9838 = vcmp.lt.s32.totalorder %v659, 0
    %v9839 = vand.u32 %v659, 2139095040
    %v9840 = vshrl.u32 %v9839, 23
    %v9841 = vsub.s32 %v9840, 127
    %v9842 = vand.u32 2147483647, %v659
    %v9843 = vand.u32 %v9842, 8388607
    %v9844 = vor.u32 %v9843, 8388608
    %v9845 = vsub.s32 0, %v9844
    %v9846 = vadd.s32 %v9841, 1
    %vm9847 = vcmp.gt.s32.totalorder %v9846, 0
    %v9848 = vsel %vm9847, %v9846, 0
    %v9849 = vshrl.u32 %v9848, 5
    %v9850 = vand.u32 %v9848, 31
    %v9851 = vsub.s32 32, %v9850
    %v9852 = vshrl.u32 683565275, %v9851
    %v9853 = vshll.u32 683565275, %v9850
    %v9854 = vshrl.u32 2475754826, %v9851
    %v9855 = vor.u32 %v9853, %v9854
    %v9856 = vshll.u32 2475754826, %v9850
    %v9857 = vshrl.u32 2131351028, %v9851
    %v9858 = vor.u32 %v9856, %v9857
    %v9859 = vshll.u32 2131351028, %v9850
    %v9860 = vshrl.u32 2102212464, %v9851
    %v9861 = vor.u32 %v9859, %v9860
    %v9862 = vshll.u32 2102212464, %v9850
    %v9863 = vshrl.u32 920167782, %v9851
    %v9864 = vor.u32 %v9862, %v9863
    %v9865 = vshll.u32 920167782, %v9850
    %v9866 = vshrl.u32 1326507024, %v9851
    %v9867 = vor.u32 %v9865, %v9866
    %vm9868 = vcmp.lt.s32.totalorder %v9849, 1
    %vm9869 = vcmp.lt.s32.totalorder %v9849, 2
    %vm9870 = vcmp.lt.s32.totalorder %v9849, 3
    %vm9871 = vcmp.lt.s32.totalorder %v9849, 4
    %v9872 = vsel %vm9868, %v9852, %v9855
    %v9873 = vsel %vm9871, %v9861, 2102212464
    %v9874 = vsel %vm9870, %v9858, %v9873
    %v9875 = vsel %vm9869, %v9872, %v9874
    %v9876 = vsel %vm9868, %v9855, %v9858
    %v9877 = vsel %vm9871, %v9864, 920167782
    %v9878 = vsel %vm9870, %v9861, %v9877
    %v9879 = vsel %vm9869, %v9876, %v9878
    %v9880 = vsel %vm9868, %v9858, %v9861
    %v9881 = vsel %vm9871, %v9867, 1326507024
    %v9882 = vsel %vm9870, %v9864, %v9881
    %v9883 = vsel %vm9869, %v9880, %v9882
    %v9884 = vshll.u32 %v9844, 8
    %v9885 = vmul.u32.u64.compose %v9884, %v9883
    %v9886 = vextract.low.u32 %v9885
    %v9887 = vextract.high.u32 %v9885
    %v9888 = vmul.u32.u64.compose %v9884, %v9879
    %v9889 = vextract.low.u32 %v9888
    %v9890 = vextract.high.u32 %v9888
    %v9891 = vmul.u32 %v9884, %v9875
    %v9892 = vadd.s32 %v9887, %v9889
    %vm9893 = vc.u32 %v9887, %v9889
    %v9894 = vadd.s32 %v9890, 1
    %v9895 = vsel %vm9893, %v9894, %v9890
    %v9896 = vadd.s32 %v9891, %v9895
    %v9897 = vadd.s32 %v9896, 536870912
    %v9898 = vshrl.u32 %v9897, 30
    %v9899 = vshll.u32 %v9898, 30
    %v9900 = vsub.s32 %v9896, %v9899
    %vm9901 = vcmp.lt.s32.totalorder %v9900, 0
    %v9902 = vsub.s32 0, %v9900
    %v9903 = vsel %vm9901, %v9902, %v9900
    %v9904 = vclz %v9903
    %v9905 = vsub.s32 %v9904, 2
    %vm9906 = vcmp.gt.s32.totalorder 0, %v9905
    %v9907 = vsel %vm9906, 0, %v9905
    %v9908 = vsub.s32 32, %v9907
    %v9909 = vshll.u32 %v9900, %v9907
    %v9910 = vshrl.u32 %v9892, %v9908
    %v9911 = vor.u32 %v9909, %v9910
    %v9912 = vsub.s32 4294967266, %v9907
    %v9913 = vadd.s32 %v9912, 127
    %v9914 = vshll.u32 %v9913, 23
    %v9915 = vor.u32 4788187, %v9914
    %v9916 = vand.u32 2147483647, %v9915
    %v9918 = vcvt.s32.f32 %v9911
    %v9919 = vmul.f32 %v9918, %v9916
    %v9920 = vxor.u32 %v9919, 2147483648
    %v9921 = vsel %vm9838, %v9920, %v9919
    %v9922 = vsub.s32 4, %v9898
    %v9923 = vsel %vm9838, %v9922, %v9898
    %v9924 = vsel %vm9837, %v659, %v9921
    %v9925 = vsel %vm9837, 0, %v9923
    %v9926 = vcosq.f32.pop %v9924
    %v9927 = vsinq.f32.pop %v9924
    %vm9928 = vweird.f32 %v659
    %v9929 = vand.u32 %v9925, 3
    %vm9930 = vcmp.lt.s32.totalorder %v9929, 2
    %vm9931 = vcmp.eq.s32.totalorder %v9929, 0
    %v9932 = vxor.u32 %v9927, 2147483648
    %v9933 = vsel %vm9931, %v9926, %v9932
    %vm9934 = vcmp.eq.s32.totalorder %v9929, 2
    %v9935 = vxor.u32 %v9926, 2147483648
    %v9936 = vsel %vm9934, %v9935, %v9927
    %v9937 = vsel %vm9930, %v9933, %v9936
    %v9938 = vsel %vm9928, nan, %v9937
    %v9939 = vand.u32 2147483647, %v660
    %vm9940 = vcmp.le.f32.partialorder %v9939, 0.7853982
    %vm9941 = vcmp.lt.s32.totalorder %v660, 0
    %v9942 = vand.u32 %v660, 2139095040
    %v9943 = vshrl.u32 %v9942, 23
    %v9944 = vsub.s32 %v9943, 127
    %v9945 = vand.u32 2147483647, %v660
    %v9946 = vand.u32 %v9945, 8388607
    %v9947 = vor.u32 %v9946, 8388608
    %v9948 = vsub.s32 0, %v9947
    %v9949 = vadd.s32 %v9944, 1
    %vm9950 = vcmp.gt.s32.totalorder %v9949, 0
    %v9951 = vsel %vm9950, %v9949, 0
    %v9952 = vshrl.u32 %v9951, 5
    %v9953 = vand.u32 %v9951, 31
    %v9954 = vsub.s32 32, %v9953
    %v9955 = vshrl.u32 683565275, %v9954
    %v9956 = vshll.u32 683565275, %v9953
    %v9957 = vshrl.u32 2475754826, %v9954
    %v9958 = vor.u32 %v9956, %v9957
    %v9959 = vshll.u32 2475754826, %v9953
    %v9960 = vshrl.u32 2131351028, %v9954
    %v9961 = vor.u32 %v9959, %v9960
    %v9962 = vshll.u32 2131351028, %v9953
    %v9963 = vshrl.u32 2102212464, %v9954
    %v9964 = vor.u32 %v9962, %v9963
    %v9965 = vshll.u32 2102212464, %v9953
    %v9966 = vshrl.u32 920167782, %v9954
    %v9967 = vor.u32 %v9965, %v9966
    %v9968 = vshll.u32 920167782, %v9953
    %v9969 = vshrl.u32 1326507024, %v9954
    %v9970 = vor.u32 %v9968, %v9969
    %vm9971 = vcmp.lt.s32.totalorder %v9952, 1
    %vm9972 = vcmp.lt.s32.totalorder %v9952, 2
    %vm9973 = vcmp.lt.s32.totalorder %v9952, 3
    %vm9974 = vcmp.lt.s32.totalorder %v9952, 4
    %v9975 = vsel %vm9971, %v9955, %v9958
    %v9976 = vsel %vm9974, %v9964, 2102212464
    %v9977 = vsel %vm9973, %v9961, %v9976
    %v9978 = vsel %vm9972, %v9975, %v9977
    %v9979 = vsel %vm9971, %v9958, %v9961
    %v9980 = vsel %vm9974, %v9967, 920167782
    %v9981 = vsel %vm9973, %v9964, %v9980
    %v9982 = vsel %vm9972, %v9979, %v9981
    %v9983 = vsel %vm9971, %v9961, %v9964
    %v9984 = vsel %vm9974, %v9970, 1326507024
    %v9985 = vsel %vm9973, %v9967, %v9984
    %v9986 = vsel %vm9972, %v9983, %v9985
    %v9987 = vshll.u32 %v9947, 8
    %v9988 = vmul.u32.u64.compose %v9987, %v9986
    %v9989 = vextract.low.u32 %v9988
    %v9990 = vextract.high.u32 %v9988
    %v9991 = vmul.u32.u64.compose %v9987, %v9982
    %v9992 = vextract.low.u32 %v9991
    %v9993 = vextract.high.u32 %v9991
    %v9994 = vmul.u32 %v9987, %v9978
    %v9995 = vadd.s32 %v9990, %v9992
    %vm9996 = vc.u32 %v9990, %v9992
    %v9997 = vadd.s32 %v9993, 1
    %v9998 = vsel %vm9996, %v9997, %v9993
    %v9999 = vadd.s32 %v9994, %v9998
    %v10000 = vadd.s32 %v9999, 536870912
    %v10001 = vshrl.u32 %v10000, 30
    %v10002 = vshll.u32 %v10001, 30
    %v10003 = vsub.s32 %v9999, %v10002
    %vm10004 = vcmp.lt.s32.totalorder %v10003, 0
    %v10005 = vsub.s32 0, %v10003
    %v10006 = vsel %vm10004, %v10005, %v10003
    %v10007 = vclz %v10006
    %v10008 = vsub.s32 %v10007, 2
    %vm10009 = vcmp.gt.s32.totalorder 0, %v10008
    %v10010 = vsel %vm10009, 0, %v10008
    %v10011 = vsub.s32 32, %v10010
    %v10012 = vshll.u32 %v10003, %v10010
    %v10013 = vshrl.u32 %v9995, %v10011
    %v10014 = vor.u32 %v10012, %v10013
    %v10015 = vsub.s32 4294967266, %v10010
    %v10016 = vadd.s32 %v10015, 127
    %v10017 = vshll.u32 %v10016, 23
    %v10018 = vor.u32 4788187, %v10017
    %v10019 = vand.u32 2147483647, %v10018
    %v10021 = vcvt.s32.f32 %v10014
    %v10022 = vmul.f32 %v10021, %v10019
    %v10023 = vxor.u32 %v10022, 2147483648
    %v10024 = vsel %vm9941, %v10023, %v10022
    %v10025 = vsub.s32 4, %v10001
    %v10026 = vsel %vm9941, %v10025, %v10001
    %v10027 = vsel %vm9940, %v660, %v10024
    %v10028 = vsel %vm9940, 0, %v10026
    %v10029 = vcosq.f32.pop %v10027
    %v10030 = vsinq.f32.pop %v10027
    %vm10031 = vweird.f32 %v660
    %v10032 = vand.u32 %v10028, 3
    %vm10033 = vcmp.lt.s32.totalorder %v10032, 2
    %vm10034 = vcmp.eq.s32.totalorder %v10032, 0
    %v10035 = vxor.u32 %v10030, 2147483648
    %v10036 = vsel %vm10034, %v10029, %v10035
    %vm10037 = vcmp.eq.s32.totalorder %v10032, 2
    %v10038 = vxor.u32 %v10029, 2147483648
    %v10039 = vsel %vm10037, %v10038, %v10030
    %v10040 = vsel %vm10033, %v10036, %v10039
    %v10041 = vsel %vm10031, nan, %v10040
    %v10042 = vand.u32 2147483647, %v661
    %vm10043 = vcmp.le.f32.partialorder %v10042, 0.7853982
    %vm10044 = vcmp.lt.s32.totalorder %v661, 0
    %v10045 = vand.u32 %v661, 2139095040
    %v10046 = vshrl.u32 %v10045, 23
    %v10047 = vsub.s32 %v10046, 127
    %v10048 = vand.u32 2147483647, %v661
    %v10049 = vand.u32 %v10048, 8388607
    %v10050 = vor.u32 %v10049, 8388608
    %v10051 = vsub.s32 0, %v10050
    %v10052 = vadd.s32 %v10047, 1
    %vm10053 = vcmp.gt.s32.totalorder %v10052, 0
    %v10054 = vsel %vm10053, %v10052, 0
    %v10055 = vshrl.u32 %v10054, 5
    %v10056 = vand.u32 %v10054, 31
    %v10057 = vsub.s32 32, %v10056
    %v10058 = vshrl.u32 683565275, %v10057
    %v10059 = vshll.u32 683565275, %v10056
    %v10060 = vshrl.u32 2475754826, %v10057
    %v10061 = vor.u32 %v10059, %v10060
    %v10062 = vshll.u32 2475754826, %v10056
    %v10063 = vshrl.u32 2131351028, %v10057
    %v10064 = vor.u32 %v10062, %v10063
    %v10065 = vshll.u32 2131351028, %v10056
    %v10066 = vshrl.u32 2102212464, %v10057
    %v10067 = vor.u32 %v10065, %v10066
    %v10068 = vshll.u32 2102212464, %v10056
    %v10069 = vshrl.u32 920167782, %v10057
    %v10070 = vor.u32 %v10068, %v10069
    %v10071 = vshll.u32 920167782, %v10056
    %v10072 = vshrl.u32 1326507024, %v10057
    %v10073 = vor.u32 %v10071, %v10072
    %vm10074 = vcmp.lt.s32.totalorder %v10055, 1
    %vm10075 = vcmp.lt.s32.totalorder %v10055, 2
    %vm10076 = vcmp.lt.s32.totalorder %v10055, 3
    %vm10077 = vcmp.lt.s32.totalorder %v10055, 4
    %v10078 = vsel %vm10074, %v10058, %v10061
    %v10079 = vsel %vm10077, %v10067, 2102212464
    %v10080 = vsel %vm10076, %v10064, %v10079
    %v10081 = vsel %vm10075, %v10078, %v10080
    %v10082 = vsel %vm10074, %v10061, %v10064
    %v10083 = vsel %vm10077, %v10070, 920167782
    %v10084 = vsel %vm10076, %v10067, %v10083
    %v10085 = vsel %vm10075, %v10082, %v10084
    %v10086 = vsel %vm10074, %v10064, %v10067
    %v10087 = vsel %vm10077, %v10073, 1326507024
    %v10088 = vsel %vm10076, %v10070, %v10087
    %v10089 = vsel %vm10075, %v10086, %v10088
    %v10090 = vshll.u32 %v10050, 8
    %v10091 = vmul.u32.u64.compose %v10090, %v10089
    %v10092 = vextract.low.u32 %v10091
    %v10093 = vextract.high.u32 %v10091
    %v10094 = vmul.u32.u64.compose %v10090, %v10085
    %v10095 = vextract.low.u32 %v10094
    %v10096 = vextract.high.u32 %v10094
    %v10097 = vmul.u32 %v10090, %v10081
    %v10098 = vadd.s32 %v10093, %v10095
    %vm10099 = vc.u32 %v10093, %v10095
    %v10100 = vadd.s32 %v10096, 1
    %v10101 = vsel %vm10099, %v10100, %v10096
    %v10102 = vadd.s32 %v10097, %v10101
    %v10103 = vadd.s32 %v10102, 536870912
    %v10104 = vshrl.u32 %v10103, 30
    %v10105 = vshll.u32 %v10104, 30
    %v10106 = vsub.s32 %v10102, %v10105
    %vm10107 = vcmp.lt.s32.totalorder %v10106, 0
    %v10108 = vsub.s32 0, %v10106
    %v10109 = vsel %vm10107, %v10108, %v10106
    %v10110 = vclz %v10109
    %v10111 = vsub.s32 %v10110, 2
    %vm10112 = vcmp.gt.s32.totalorder 0, %v10111
    %v10113 = vsel %vm10112, 0, %v10111
    %v10114 = vsub.s32 32, %v10113
    %v10115 = vshll.u32 %v10106, %v10113
    %v10116 = vshrl.u32 %v10098, %v10114
    %v10117 = vor.u32 %v10115, %v10116
    %v10118 = vsub.s32 4294967266, %v10113
    %v10119 = vadd.s32 %v10118, 127
    %v10120 = vshll.u32 %v10119, 23
    %v10121 = vor.u32 4788187, %v10120
    %v10122 = vand.u32 2147483647, %v10121
    %v10124 = vcvt.s32.f32 %v10117
    %v10125 = vmul.f32 %v10124, %v10122
    %v10126 = vxor.u32 %v10125, 2147483648
    %v10127 = vsel %vm10044, %v10126, %v10125
    %v10128 = vsub.s32 4, %v10104
    %v10129 = vsel %vm10044, %v10128, %v10104
    %v10130 = vsel %vm10043, %v661, %v10127
    %v10131 = vsel %vm10043, 0, %v10129
    %v10132 = vcosq.f32.pop %v10130
    %v10133 = vsinq.f32.pop %v10130
    %vm10134 = vweird.f32 %v661
    %v10135 = vand.u32 %v10131, 3
    %vm10136 = vcmp.lt.s32.totalorder %v10135, 2
    %vm10137 = vcmp.eq.s32.totalorder %v10135, 0
    %v10138 = vxor.u32 %v10133, 2147483648
    %v10139 = vsel %vm10137, %v10132, %v10138
    %vm10140 = vcmp.eq.s32.totalorder %v10135, 2
    %v10141 = vxor.u32 %v10132, 2147483648
    %v10142 = vsel %vm10140, %v10141, %v10133
    %v10143 = vsel %vm10136, %v10139, %v10142
    %v10144 = vsel %vm10134, nan, %v10143
    %v10145 = vand.u32 2147483647, %v662
    %vm10146 = vcmp.le.f32.partialorder %v10145, 0.7853982
    %vm10147 = vcmp.lt.s32.totalorder %v662, 0
    %v10148 = vand.u32 %v662, 2139095040
    %v10149 = vshrl.u32 %v10148, 23
    %v10150 = vsub.s32 %v10149, 127
    %v10151 = vand.u32 2147483647, %v662
    %v10152 = vand.u32 %v10151, 8388607
    %v10153 = vor.u32 %v10152, 8388608
    %v10154 = vsub.s32 0, %v10153
    %v10155 = vadd.s32 %v10150, 1
    %vm10156 = vcmp.gt.s32.totalorder %v10155, 0
    %v10157 = vsel %vm10156, %v10155, 0
    %v10158 = vshrl.u32 %v10157, 5
    %v10159 = vand.u32 %v10157, 31
    %v10160 = vsub.s32 32, %v10159
    %v10161 = vshrl.u32 683565275, %v10160
    %v10162 = vshll.u32 683565275, %v10159
    %v10163 = vshrl.u32 2475754826, %v10160
    %v10164 = vor.u32 %v10162, %v10163
    %v10165 = vshll.u32 2475754826, %v10159
    %v10166 = vshrl.u32 2131351028, %v10160
    %v10167 = vor.u32 %v10165, %v10166
    %v10168 = vshll.u32 2131351028, %v10159
    %v10169 = vshrl.u32 2102212464, %v10160
    %v10170 = vor.u32 %v10168, %v10169
    %v10171 = vshll.u32 2102212464, %v10159
    %v10172 = vshrl.u32 920167782, %v10160
    %v10173 = vor.u32 %v10171, %v10172
    %v10174 = vshll.u32 920167782, %v10159
    %v10175 = vshrl.u32 1326507024, %v10160
    %v10176 = vor.u32 %v10174, %v10175
    %vm10177 = vcmp.lt.s32.totalorder %v10158, 1
    %vm10178 = vcmp.lt.s32.totalorder %v10158, 2
    %vm10179 = vcmp.lt.s32.totalorder %v10158, 3
    %vm10180 = vcmp.lt.s32.totalorder %v10158, 4
    %v10181 = vsel %vm10177, %v10161, %v10164
    %v10182 = vsel %vm10180, %v10170, 2102212464
    %v10183 = vsel %vm10179, %v10167, %v10182
    %v10184 = vsel %vm10178, %v10181, %v10183
    %v10185 = vsel %vm10177, %v10164, %v10167
    %v10186 = vsel %vm10180, %v10173, 920167782
    %v10187 = vsel %vm10179, %v10170, %v10186
    %v10188 = vsel %vm10178, %v10185, %v10187
    %v10189 = vsel %vm10177, %v10167, %v10170
    %v10190 = vsel %vm10180, %v10176, 1326507024
    %v10191 = vsel %vm10179, %v10173, %v10190
    %v10192 = vsel %vm10178, %v10189, %v10191
    %v10193 = vshll.u32 %v10153, 8
    %v10194 = vmul.u32.u64.compose %v10193, %v10192
    %v10195 = vextract.low.u32 %v10194
    %v10196 = vextract.high.u32 %v10194
    %v10197 = vmul.u32.u64.compose %v10193, %v10188
    %v10198 = vextract.low.u32 %v10197
    %v10199 = vextract.high.u32 %v10197
    %v10200 = vmul.u32 %v10193, %v10184
    %v10201 = vadd.s32 %v10196, %v10198
    %vm10202 = vc.u32 %v10196, %v10198
    %v10203 = vadd.s32 %v10199, 1
    %v10204 = vsel %vm10202, %v10203, %v10199
    %v10205 = vadd.s32 %v10200, %v10204
    %v10206 = vadd.s32 %v10205, 536870912
    %v10207 = vshrl.u32 %v10206, 30
    %v10208 = vshll.u32 %v10207, 30
    %v10209 = vsub.s32 %v10205, %v10208
    %vm10210 = vcmp.lt.s32.totalorder %v10209, 0
    %v10211 = vsub.s32 0, %v10209
    %v10212 = vsel %vm10210, %v10211, %v10209
    %v10213 = vclz %v10212
    %v10214 = vsub.s32 %v10213, 2
    %vm10215 = vcmp.gt.s32.totalorder 0, %v10214
    %v10216 = vsel %vm10215, 0, %v10214
    %v10217 = vsub.s32 32, %v10216
    %v10218 = vshll.u32 %v10209, %v10216
    %v10219 = vshrl.u32 %v10201, %v10217
    %v10220 = vor.u32 %v10218, %v10219
    %v10221 = vsub.s32 4294967266, %v10216
    %v10222 = vadd.s32 %v10221, 127
    %v10223 = vshll.u32 %v10222, 23
    %v10224 = vor.u32 4788187, %v10223
    %v10225 = vand.u32 2147483647, %v10224
    %v10227 = vcvt.s32.f32 %v10220
    %v10228 = vmul.f32 %v10227, %v10225
    %v10229 = vxor.u32 %v10228, 2147483648
    %v10230 = vsel %vm10147, %v10229, %v10228
    %v10231 = vsub.s32 4, %v10207
    %v10232 = vsel %vm10147, %v10231, %v10207
    %v10233 = vsel %vm10146, %v662, %v10230
    %v10234 = vsel %vm10146, 0, %v10232
    %v10235 = vcosq.f32.pop %v10233
    %v10236 = vsinq.f32.pop %v10233
    %vm10237 = vweird.f32 %v662
    %v10238 = vand.u32 %v10234, 3
    %vm10239 = vcmp.lt.s32.totalorder %v10238, 2
    %vm10240 = vcmp.eq.s32.totalorder %v10238, 0
    %v10241 = vxor.u32 %v10236, 2147483648
    %v10242 = vsel %vm10240, %v10235, %v10241
    %vm10243 = vcmp.eq.s32.totalorder %v10238, 2
    %v10244 = vxor.u32 %v10235, 2147483648
    %v10245 = vsel %vm10243, %v10244, %v10236
    %v10246 = vsel %vm10239, %v10242, %v10245
    %v10247 = vsel %vm10237, nan, %v10246
    %v10248 = vand.u32 2147483647, %v663
    %vm10249 = vcmp.le.f32.partialorder %v10248, 0.7853982
    %vm10250 = vcmp.lt.s32.totalorder %v663, 0
    %v10251 = vand.u32 %v663, 2139095040
    %v10252 = vshrl.u32 %v10251, 23
    %v10253 = vsub.s32 %v10252, 127
    %v10254 = vand.u32 2147483647, %v663
    %v10255 = vand.u32 %v10254, 8388607
    %v10256 = vor.u32 %v10255, 8388608
    %v10257 = vsub.s32 0, %v10256
    %v10258 = vadd.s32 %v10253, 1
    %vm10259 = vcmp.gt.s32.totalorder %v10258, 0
    %v10260 = vsel %vm10259, %v10258, 0
    %v10261 = vshrl.u32 %v10260, 5
    %v10262 = vand.u32 %v10260, 31
    %v10263 = vsub.s32 32, %v10262
    %v10264 = vshrl.u32 683565275, %v10263
    %v10265 = vshll.u32 683565275, %v10262
    %v10266 = vshrl.u32 2475754826, %v10263
    %v10267 = vor.u32 %v10265, %v10266
    %v10268 = vshll.u32 2475754826, %v10262
    %v10269 = vshrl.u32 2131351028, %v10263
    %v10270 = vor.u32 %v10268, %v10269
    %v10271 = vshll.u32 2131351028, %v10262
    %v10272 = vshrl.u32 2102212464, %v10263
    %v10273 = vor.u32 %v10271, %v10272
    %v10274 = vshll.u32 2102212464, %v10262
    %v10275 = vshrl.u32 920167782, %v10263
    %v10276 = vor.u32 %v10274, %v10275
    %v10277 = vshll.u32 920167782, %v10262
    %v10278 = vshrl.u32 1326507024, %v10263
    %v10279 = vor.u32 %v10277, %v10278
    %vm10280 = vcmp.lt.s32.totalorder %v10261, 1
    %vm10281 = vcmp.lt.s32.totalorder %v10261, 2
    %vm10282 = vcmp.lt.s32.totalorder %v10261, 3
    %vm10283 = vcmp.lt.s32.totalorder %v10261, 4
    %v10284 = vsel %vm10280, %v10264, %v10267
    %v10285 = vsel %vm10283, %v10273, 2102212464
    %v10286 = vsel %vm10282, %v10270, %v10285
    %v10287 = vsel %vm10281, %v10284, %v10286
    %v10288 = vsel %vm10280, %v10267, %v10270
    %v10289 = vsel %vm10283, %v10276, 920167782
    %v10290 = vsel %vm10282, %v10273, %v10289
    %v10291 = vsel %vm10281, %v10288, %v10290
    %v10292 = vsel %vm10280, %v10270, %v10273
    %v10293 = vsel %vm10283, %v10279, 1326507024
    %v10294 = vsel %vm10282, %v10276, %v10293
    %v10295 = vsel %vm10281, %v10292, %v10294
    %v10296 = vshll.u32 %v10256, 8
    %v10297 = vmul.u32.u64.compose %v10296, %v10295
    %v10298 = vextract.low.u32 %v10297
    %v10299 = vextract.high.u32 %v10297
    %v10300 = vmul.u32.u64.compose %v10296, %v10291
    %v10301 = vextract.low.u32 %v10300
    %v10302 = vextract.high.u32 %v10300
    %v10303 = vmul.u32 %v10296, %v10287
    %v10304 = vadd.s32 %v10299, %v10301
    %vm10305 = vc.u32 %v10299, %v10301
    %v10306 = vadd.s32 %v10302, 1
    %v10307 = vsel %vm10305, %v10306, %v10302
    %v10308 = vadd.s32 %v10303, %v10307
    %v10309 = vadd.s32 %v10308, 536870912
    %v10310 = vshrl.u32 %v10309, 30
    %v10311 = vshll.u32 %v10310, 30
    %v10312 = vsub.s32 %v10308, %v10311
    %vm10313 = vcmp.lt.s32.totalorder %v10312, 0
    %v10314 = vsub.s32 0, %v10312
    %v10315 = vsel %vm10313, %v10314, %v10312
    %v10316 = vclz %v10315
    %v10317 = vsub.s32 %v10316, 2
    %vm10318 = vcmp.gt.s32.totalorder 0, %v10317
    %v10319 = vsel %vm10318, 0, %v10317
    %v10320 = vsub.s32 32, %v10319
    %v10321 = vshll.u32 %v10312, %v10319
    %v10322 = vshrl.u32 %v10304, %v10320
    %v10323 = vor.u32 %v10321, %v10322
    %v10324 = vsub.s32 4294967266, %v10319
    %v10325 = vadd.s32 %v10324, 127
    %v10326 = vshll.u32 %v10325, 23
    %v10327 = vor.u32 4788187, %v10326
    %v10328 = vand.u32 2147483647, %v10327
    %v10330 = vcvt.s32.f32 %v10323
    %v10331 = vmul.f32 %v10330, %v10328
    %v10332 = vxor.u32 %v10331, 2147483648
    %v10333 = vsel %vm10250, %v10332, %v10331
    %v10334 = vsub.s32 4, %v10310
    %v10335 = vsel %vm10250, %v10334, %v10310
    %v10336 = vsel %vm10249, %v663, %v10333
    %v10337 = vsel %vm10249, 0, %v10335
    %v10338 = vcosq.f32.pop %v10336
    %v10339 = vsinq.f32.pop %v10336
    %vm10340 = vweird.f32 %v663
    %v10341 = vand.u32 %v10337, 3
    %vm10342 = vcmp.lt.s32.totalorder %v10341, 2
    %vm10343 = vcmp.eq.s32.totalorder %v10341, 0
    %v10344 = vxor.u32 %v10339, 2147483648
    %v10345 = vsel %vm10343, %v10338, %v10344
    %vm10346 = vcmp.eq.s32.totalorder %v10341, 2
    %v10347 = vxor.u32 %v10338, 2147483648
    %v10348 = vsel %vm10346, %v10347, %v10339
    %v10349 = vsel %vm10342, %v10345, %v10348
    %v10350 = vsel %vm10340, nan, %v10349
    %v10351 = vand.u32 2147483647, %v664
    %vm10352 = vcmp.le.f32.partialorder %v10351, 0.7853982
    %vm10353 = vcmp.lt.s32.totalorder %v664, 0
    %v10354 = vand.u32 %v664, 2139095040
    %v10355 = vshrl.u32 %v10354, 23
    %v10356 = vsub.s32 %v10355, 127
    %v10357 = vand.u32 2147483647, %v664
    %v10358 = vand.u32 %v10357, 8388607
    %v10359 = vor.u32 %v10358, 8388608
    %v10360 = vsub.s32 0, %v10359
    %v10361 = vadd.s32 %v10356, 1
    %vm10362 = vcmp.gt.s32.totalorder %v10361, 0
    %v10363 = vsel %vm10362, %v10361, 0
    %v10364 = vshrl.u32 %v10363, 5
    %v10365 = vand.u32 %v10363, 31
    %v10366 = vsub.s32 32, %v10365
    %v10367 = vshrl.u32 683565275, %v10366
    %v10368 = vshll.u32 683565275, %v10365
    %v10369 = vshrl.u32 2475754826, %v10366
    %v10370 = vor.u32 %v10368, %v10369
    %v10371 = vshll.u32 2475754826, %v10365
    %v10372 = vshrl.u32 2131351028, %v10366
    %v10373 = vor.u32 %v10371, %v10372
    %v10374 = vshll.u32 2131351028, %v10365
    %v10375 = vshrl.u32 2102212464, %v10366
    %v10376 = vor.u32 %v10374, %v10375
    %v10377 = vshll.u32 2102212464, %v10365
    %v10378 = vshrl.u32 920167782, %v10366
    %v10379 = vor.u32 %v10377, %v10378
    %v10380 = vshll.u32 920167782, %v10365
    %v10381 = vshrl.u32 1326507024, %v10366
    %v10382 = vor.u32 %v10380, %v10381
    %vm10383 = vcmp.lt.s32.totalorder %v10364, 1
    %vm10384 = vcmp.lt.s32.totalorder %v10364, 2
    %vm10385 = vcmp.lt.s32.totalorder %v10364, 3
    %vm10386 = vcmp.lt.s32.totalorder %v10364, 4
    %v10387 = vsel %vm10383, %v10367, %v10370
    %v10388 = vsel %vm10386, %v10376, 2102212464
    %v10389 = vsel %vm10385, %v10373, %v10388
    %v10390 = vsel %vm10384, %v10387, %v10389
    %v10391 = vsel %vm10383, %v10370, %v10373
    %v10392 = vsel %vm10386, %v10379, 920167782
    %v10393 = vsel %vm10385, %v10376, %v10392
    %v10394 = vsel %vm10384, %v10391, %v10393
    %v10395 = vsel %vm10383, %v10373, %v10376
    %v10396 = vsel %vm10386, %v10382, 1326507024
    %v10397 = vsel %vm10385, %v10379, %v10396
    %v10398 = vsel %vm10384, %v10395, %v10397
    %v10399 = vshll.u32 %v10359, 8
    %v10400 = vmul.u32.u64.compose %v10399, %v10398
    %v10401 = vextract.low.u32 %v10400
    %v10402 = vextract.high.u32 %v10400
    %v10403 = vmul.u32.u64.compose %v10399, %v10394
    %v10404 = vextract.low.u32 %v10403
    %v10405 = vextract.high.u32 %v10403
    %v10406 = vmul.u32 %v10399, %v10390
    %v10407 = vadd.s32 %v10402, %v10404
    %vm10408 = vc.u32 %v10402, %v10404
    %v10409 = vadd.s32 %v10405, 1
    %v10410 = vsel %vm10408, %v10409, %v10405
    %v10411 = vadd.s32 %v10406, %v10410
    %v10412 = vadd.s32 %v10411, 536870912
    %v10413 = vshrl.u32 %v10412, 30
    %v10414 = vshll.u32 %v10413, 30
    %v10415 = vsub.s32 %v10411, %v10414
    %vm10416 = vcmp.lt.s32.totalorder %v10415, 0
    %v10417 = vsub.s32 0, %v10415
    %v10418 = vsel %vm10416, %v10417, %v10415
    %v10419 = vclz %v10418
    %v10420 = vsub.s32 %v10419, 2
    %vm10421 = vcmp.gt.s32.totalorder 0, %v10420
    %v10422 = vsel %vm10421, 0, %v10420
    %v10423 = vsub.s32 32, %v10422
    %v10424 = vshll.u32 %v10415, %v10422
    %v10425 = vshrl.u32 %v10407, %v10423
    %v10426 = vor.u32 %v10424, %v10425
    %v10427 = vsub.s32 4294967266, %v10422
    %v10428 = vadd.s32 %v10427, 127
    %v10429 = vshll.u32 %v10428, 23
    %v10430 = vor.u32 4788187, %v10429
    %v10431 = vand.u32 2147483647, %v10430
    %v10433 = vcvt.s32.f32 %v10426
    %v10434 = vmul.f32 %v10433, %v10431
    %v10435 = vxor.u32 %v10434, 2147483648
    %v10436 = vsel %vm10353, %v10435, %v10434
    %v10437 = vsub.s32 4, %v10413
    %v10438 = vsel %vm10353, %v10437, %v10413
    %v10439 = vsel %vm10352, %v664, %v10436
    %v10440 = vsel %vm10352, 0, %v10438
    %v10441 = vcosq.f32.pop %v10439
    %v10442 = vsinq.f32.pop %v10439
    %vm10443 = vweird.f32 %v664
    %v10444 = vand.u32 %v10440, 3
    %vm10445 = vcmp.lt.s32.totalorder %v10444, 2
    %vm10446 = vcmp.eq.s32.totalorder %v10444, 0
    %v10447 = vxor.u32 %v10442, 2147483648
    %v10448 = vsel %vm10446, %v10441, %v10447
    %vm10449 = vcmp.eq.s32.totalorder %v10444, 2
    %v10450 = vxor.u32 %v10441, 2147483648
    %v10451 = vsel %vm10449, %v10450, %v10442
    %v10452 = vsel %vm10445, %v10448, %v10451
    %v10453 = vsel %vm10443, nan, %v10452
    %v10454 = vand.u32 2147483647, %v665
    %vm10455 = vcmp.le.f32.partialorder %v10454, 0.7853982
    %vm10456 = vcmp.lt.s32.totalorder %v665, 0
    %v10457 = vand.u32 %v665, 2139095040
    %v10458 = vshrl.u32 %v10457, 23
    %v10459 = vsub.s32 %v10458, 127
    %v10460 = vand.u32 2147483647, %v665
    %v10461 = vand.u32 %v10460, 8388607
    %v10462 = vor.u32 %v10461, 8388608
    %v10463 = vsub.s32 0, %v10462
    %v10464 = vadd.s32 %v10459, 1
    %vm10465 = vcmp.gt.s32.totalorder %v10464, 0
    %v10466 = vsel %vm10465, %v10464, 0
    %v10467 = vshrl.u32 %v10466, 5
    %v10468 = vand.u32 %v10466, 31
    %v10469 = vsub.s32 32, %v10468
    %v10470 = vshrl.u32 683565275, %v10469
    %v10471 = vshll.u32 683565275, %v10468
    %v10472 = vshrl.u32 2475754826, %v10469
    %v10473 = vor.u32 %v10471, %v10472
    %v10474 = vshll.u32 2475754826, %v10468
    %v10475 = vshrl.u32 2131351028, %v10469
    %v10476 = vor.u32 %v10474, %v10475
    %v10477 = vshll.u32 2131351028, %v10468
    %v10478 = vshrl.u32 2102212464, %v10469
    %v10479 = vor.u32 %v10477, %v10478
    %v10480 = vshll.u32 2102212464, %v10468
    %v10481 = vshrl.u32 920167782, %v10469
    %v10482 = vor.u32 %v10480, %v10481
    %v10483 = vshll.u32 920167782, %v10468
    %v10484 = vshrl.u32 1326507024, %v10469
    %v10485 = vor.u32 %v10483, %v10484
    %vm10486 = vcmp.lt.s32.totalorder %v10467, 1
    %vm10487 = vcmp.lt.s32.totalorder %v10467, 2
    %vm10488 = vcmp.lt.s32.totalorder %v10467, 3
    %vm10489 = vcmp.lt.s32.totalorder %v10467, 4
    %v10490 = vsel %vm10486, %v10470, %v10473
    %v10491 = vsel %vm10489, %v10479, 2102212464
    %v10492 = vsel %vm10488, %v10476, %v10491
    %v10493 = vsel %vm10487, %v10490, %v10492
    %v10494 = vsel %vm10486, %v10473, %v10476
    %v10495 = vsel %vm10489, %v10482, 920167782
    %v10496 = vsel %vm10488, %v10479, %v10495
    %v10497 = vsel %vm10487, %v10494, %v10496
    %v10498 = vsel %vm10486, %v10476, %v10479
    %v10499 = vsel %vm10489, %v10485, 1326507024
    %v10500 = vsel %vm10488, %v10482, %v10499
    %v10501 = vsel %vm10487, %v10498, %v10500
    %v10502 = vshll.u32 %v10462, 8
    %v10503 = vmul.u32.u64.compose %v10502, %v10501
    %v10504 = vextract.low.u32 %v10503
    %v10505 = vextract.high.u32 %v10503
    %v10506 = vmul.u32.u64.compose %v10502, %v10497
    %v10507 = vextract.low.u32 %v10506
    %v10508 = vextract.high.u32 %v10506
    %v10509 = vmul.u32 %v10502, %v10493
    %v10510 = vadd.s32 %v10505, %v10507
    %vm10511 = vc.u32 %v10505, %v10507
    %v10512 = vadd.s32 %v10508, 1
    %v10513 = vsel %vm10511, %v10512, %v10508
    %v10514 = vadd.s32 %v10509, %v10513
    %v10515 = vadd.s32 %v10514, 536870912
    %v10516 = vshrl.u32 %v10515, 30
    %v10517 = vshll.u32 %v10516, 30
    %v10518 = vsub.s32 %v10514, %v10517
    %vm10519 = vcmp.lt.s32.totalorder %v10518, 0
    %v10520 = vsub.s32 0, %v10518
    %v10521 = vsel %vm10519, %v10520, %v10518
    %v10522 = vclz %v10521
    %v10523 = vsub.s32 %v10522, 2
    %vm10524 = vcmp.gt.s32.totalorder 0, %v10523
    %v10525 = vsel %vm10524, 0, %v10523
    %v10526 = vsub.s32 32, %v10525
    %v10527 = vshll.u32 %v10518, %v10525
    %v10528 = vshrl.u32 %v10510, %v10526
    %v10529 = vor.u32 %v10527, %v10528
    %v10530 = vsub.s32 4294967266, %v10525
    %v10531 = vadd.s32 %v10530, 127
    %v10532 = vshll.u32 %v10531, 23
    %v10533 = vor.u32 4788187, %v10532
    %v10534 = vand.u32 2147483647, %v10533
    %v10536 = vcvt.s32.f32 %v10529
    %v10537 = vmul.f32 %v10536, %v10534
    %v10538 = vxor.u32 %v10537, 2147483648
    %v10539 = vsel %vm10456, %v10538, %v10537
    %v10540 = vsub.s32 4, %v10516
    %v10541 = vsel %vm10456, %v10540, %v10516
    %v10542 = vsel %vm10455, %v665, %v10539
    %v10543 = vsel %vm10455, 0, %v10541
    %v10544 = vcosq.f32.pop %v10542
    %v10545 = vsinq.f32.pop %v10542
    %vm10546 = vweird.f32 %v665
    %v10547 = vand.u32 %v10543, 3
    %vm10548 = vcmp.lt.s32.totalorder %v10547, 2
    %vm10549 = vcmp.eq.s32.totalorder %v10547, 0
    %v10550 = vxor.u32 %v10545, 2147483648
    %v10551 = vsel %vm10549, %v10544, %v10550
    %vm10552 = vcmp.eq.s32.totalorder %v10547, 2
    %v10553 = vxor.u32 %v10544, 2147483648
    %v10554 = vsel %vm10552, %v10553, %v10545
    %v10555 = vsel %vm10548, %v10551, %v10554
    %v10556 = vsel %vm10546, nan, %v10555
    %v10557 = vand.u32 2147483647, %v666
    %vm10558 = vcmp.le.f32.partialorder %v10557, 0.7853982
    %vm10559 = vcmp.lt.s32.totalorder %v666, 0
    %v10560 = vand.u32 %v666, 2139095040
    %v10561 = vshrl.u32 %v10560, 23
    %v10562 = vsub.s32 %v10561, 127
    %v10563 = vand.u32 2147483647, %v666
    %v10564 = vand.u32 %v10563, 8388607
    %v10565 = vor.u32 %v10564, 8388608
    %v10566 = vsub.s32 0, %v10565
    %v10567 = vadd.s32 %v10562, 1
    %vm10568 = vcmp.gt.s32.totalorder %v10567, 0
    %v10569 = vsel %vm10568, %v10567, 0
    %v10570 = vshrl.u32 %v10569, 5
    %v10571 = vand.u32 %v10569, 31
    %v10572 = vsub.s32 32, %v10571
    %v10573 = vshrl.u32 683565275, %v10572
    %v10574 = vshll.u32 683565275, %v10571
    %v10575 = vshrl.u32 2475754826, %v10572
    %v10576 = vor.u32 %v10574, %v10575
    %v10577 = vshll.u32 2475754826, %v10571
    %v10578 = vshrl.u32 2131351028, %v10572
    %v10579 = vor.u32 %v10577, %v10578
    %v10580 = vshll.u32 2131351028, %v10571
    %v10581 = vshrl.u32 2102212464, %v10572
    %v10582 = vor.u32 %v10580, %v10581
    %v10583 = vshll.u32 2102212464, %v10571
    %v10584 = vshrl.u32 920167782, %v10572
    %v10585 = vor.u32 %v10583, %v10584
    %v10586 = vshll.u32 920167782, %v10571
    %v10587 = vshrl.u32 1326507024, %v10572
    %v10588 = vor.u32 %v10586, %v10587
    %vm10589 = vcmp.lt.s32.totalorder %v10570, 1
    %vm10590 = vcmp.lt.s32.totalorder %v10570, 2
    %vm10591 = vcmp.lt.s32.totalorder %v10570, 3
    %vm10592 = vcmp.lt.s32.totalorder %v10570, 4
    %v10593 = vsel %vm10589, %v10573, %v10576
    %v10594 = vsel %vm10592, %v10582, 2102212464
    %v10595 = vsel %vm10591, %v10579, %v10594
    %v10596 = vsel %vm10590, %v10593, %v10595
    %v10597 = vsel %vm10589, %v10576, %v10579
    %v10598 = vsel %vm10592, %v10585, 920167782
    %v10599 = vsel %vm10591, %v10582, %v10598
    %v10600 = vsel %vm10590, %v10597, %v10599
    %v10601 = vsel %vm10589, %v10579, %v10582
    %v10602 = vsel %vm10592, %v10588, 1326507024
    %v10603 = vsel %vm10591, %v10585, %v10602
    %v10604 = vsel %vm10590, %v10601, %v10603
    %v10605 = vshll.u32 %v10565, 8
    %v10606 = vmul.u32.u64.compose %v10605, %v10604
    %v10607 = vextract.low.u32 %v10606
    %v10608 = vextract.high.u32 %v10606
    %v10609 = vmul.u32.u64.compose %v10605, %v10600
    %v10610 = vextract.low.u32 %v10609
    %v10611 = vextract.high.u32 %v10609
    %v10612 = vmul.u32 %v10605, %v10596
    %v10613 = vadd.s32 %v10608, %v10610
    %vm10614 = vc.u32 %v10608, %v10610
    %v10615 = vadd.s32 %v10611, 1
    %v10616 = vsel %vm10614, %v10615, %v10611
    %v10617 = vadd.s32 %v10612, %v10616
    %v10618 = vadd.s32 %v10617, 536870912
    %v10619 = vshrl.u32 %v10618, 30
    %v10620 = vshll.u32 %v10619, 30
    %v10621 = vsub.s32 %v10617, %v10620
    %vm10622 = vcmp.lt.s32.totalorder %v10621, 0
    %v10623 = vsub.s32 0, %v10621
    %v10624 = vsel %vm10622, %v10623, %v10621
    %v10625 = vclz %v10624
    %v10626 = vsub.s32 %v10625, 2
    %vm10627 = vcmp.gt.s32.totalorder 0, %v10626
    %v10628 = vsel %vm10627, 0, %v10626
    %v10629 = vsub.s32 32, %v10628
    %v10630 = vshll.u32 %v10621, %v10628
    %v10631 = vshrl.u32 %v10613, %v10629
    %v10632 = vor.u32 %v10630, %v10631
    %v10633 = vsub.s32 4294967266, %v10628
    %v10634 = vadd.s32 %v10633, 127
    %v10635 = vshll.u32 %v10634, 23
    %v10636 = vor.u32 4788187, %v10635
    %v10637 = vand.u32 2147483647, %v10636
    %v10639 = vcvt.s32.f32 %v10632
    %v10640 = vmul.f32 %v10639, %v10637
    %v10641 = vxor.u32 %v10640, 2147483648
    %v10642 = vsel %vm10559, %v10641, %v10640
    %v10643 = vsub.s32 4, %v10619
    %v10644 = vsel %vm10559, %v10643, %v10619
    %v10645 = vsel %vm10558, %v666, %v10642
    %v10646 = vsel %vm10558, 0, %v10644
    %v10647 = vcosq.f32.pop %v10645
    %v10648 = vsinq.f32.pop %v10645
    %vm10649 = vweird.f32 %v666
    %v10650 = vand.u32 %v10646, 3
    %vm10651 = vcmp.lt.s32.totalorder %v10650, 2
    %vm10652 = vcmp.eq.s32.totalorder %v10650, 0
    %v10653 = vxor.u32 %v10648, 2147483648
    %v10654 = vsel %vm10652, %v10647, %v10653
    %vm10655 = vcmp.eq.s32.totalorder %v10650, 2
    %v10656 = vxor.u32 %v10647, 2147483648
    %v10657 = vsel %vm10655, %v10656, %v10648
    %v10658 = vsel %vm10651, %v10654, %v10657
    %v10659 = vsel %vm10649, nan, %v10658
    %v10660 = vand.u32 2147483647, %v667
    %vm10661 = vcmp.le.f32.partialorder %v10660, 0.7853982
    %vm10662 = vcmp.lt.s32.totalorder %v667, 0
    %v10663 = vand.u32 %v667, 2139095040
    %v10664 = vshrl.u32 %v10663, 23
    %v10665 = vsub.s32 %v10664, 127
    %v10666 = vand.u32 2147483647, %v667
    %v10667 = vand.u32 %v10666, 8388607
    %v10668 = vor.u32 %v10667, 8388608
    %v10669 = vsub.s32 0, %v10668
    %v10670 = vadd.s32 %v10665, 1
    %vm10671 = vcmp.gt.s32.totalorder %v10670, 0
    %v10672 = vsel %vm10671, %v10670, 0
    %v10673 = vshrl.u32 %v10672, 5
    %v10674 = vand.u32 %v10672, 31
    %v10675 = vsub.s32 32, %v10674
    %v10676 = vshrl.u32 683565275, %v10675
    %v10677 = vshll.u32 683565275, %v10674
    %v10678 = vshrl.u32 2475754826, %v10675
    %v10679 = vor.u32 %v10677, %v10678
    %v10680 = vshll.u32 2475754826, %v10674
    %v10681 = vshrl.u32 2131351028, %v10675
    %v10682 = vor.u32 %v10680, %v10681
    %v10683 = vshll.u32 2131351028, %v10674
    %v10684 = vshrl.u32 2102212464, %v10675
    %v10685 = vor.u32 %v10683, %v10684
    %v10686 = vshll.u32 2102212464, %v10674
    %v10687 = vshrl.u32 920167782, %v10675
    %v10688 = vor.u32 %v10686, %v10687
    %v10689 = vshll.u32 920167782, %v10674
    %v10690 = vshrl.u32 1326507024, %v10675
    %v10691 = vor.u32 %v10689, %v10690
    %vm10692 = vcmp.lt.s32.totalorder %v10673, 1
    %vm10693 = vcmp.lt.s32.totalorder %v10673, 2
    %vm10694 = vcmp.lt.s32.totalorder %v10673, 3
    %vm10695 = vcmp.lt.s32.totalorder %v10673, 4
    %v10696 = vsel %vm10692, %v10676, %v10679
    %v10697 = vsel %vm10695, %v10685, 2102212464
    %v10698 = vsel %vm10694, %v10682, %v10697
    %v10699 = vsel %vm10693, %v10696, %v10698
    %v10700 = vsel %vm10692, %v10679, %v10682
    %v10701 = vsel %vm10695, %v10688, 920167782
    %v10702 = vsel %vm10694, %v10685, %v10701
    %v10703 = vsel %vm10693, %v10700, %v10702
    %v10704 = vsel %vm10692, %v10682, %v10685
    %v10705 = vsel %vm10695, %v10691, 1326507024
    %v10706 = vsel %vm10694, %v10688, %v10705
    %v10707 = vsel %vm10693, %v10704, %v10706
    %v10708 = vshll.u32 %v10668, 8
    %v10709 = vmul.u32.u64.compose %v10708, %v10707
    %v10710 = vextract.low.u32 %v10709
    %v10711 = vextract.high.u32 %v10709
    %v10712 = vmul.u32.u64.compose %v10708, %v10703
    %v10713 = vextract.low.u32 %v10712
    %v10714 = vextract.high.u32 %v10712
    %v10715 = vmul.u32 %v10708, %v10699
    %v10716 = vadd.s32 %v10711, %v10713
    %vm10717 = vc.u32 %v10711, %v10713
    %v10718 = vadd.s32 %v10714, 1
    %v10719 = vsel %vm10717, %v10718, %v10714
    %v10720 = vadd.s32 %v10715, %v10719
    %v10721 = vadd.s32 %v10720, 536870912
    %v10722 = vshrl.u32 %v10721, 30
    %v10723 = vshll.u32 %v10722, 30
    %v10724 = vsub.s32 %v10720, %v10723
    %vm10725 = vcmp.lt.s32.totalorder %v10724, 0
    %v10726 = vsub.s32 0, %v10724
    %v10727 = vsel %vm10725, %v10726, %v10724
    %v10728 = vclz %v10727
    %v10729 = vsub.s32 %v10728, 2
    %vm10730 = vcmp.gt.s32.totalorder 0, %v10729
    %v10731 = vsel %vm10730, 0, %v10729
    %v10732 = vsub.s32 32, %v10731
    %v10733 = vshll.u32 %v10724, %v10731
    %v10734 = vshrl.u32 %v10716, %v10732
    %v10735 = vor.u32 %v10733, %v10734
    %v10736 = vsub.s32 4294967266, %v10731
    %v10737 = vadd.s32 %v10736, 127
    %v10738 = vshll.u32 %v10737, 23
    %v10739 = vor.u32 4788187, %v10738
    %v10740 = vand.u32 2147483647, %v10739
    %v10742 = vcvt.s32.f32 %v10735
    %v10743 = vmul.f32 %v10742, %v10740
    %v10744 = vxor.u32 %v10743, 2147483648
    %v10745 = vsel %vm10662, %v10744, %v10743
    %v10746 = vsub.s32 4, %v10722
    %v10747 = vsel %vm10662, %v10746, %v10722
    %v10748 = vsel %vm10661, %v667, %v10745
    %v10749 = vsel %vm10661, 0, %v10747
    %v10750 = vcosq.f32.pop %v10748
    %v10751 = vsinq.f32.pop %v10748
    %vm10752 = vweird.f32 %v667
    %v10753 = vand.u32 %v10749, 3
    %vm10754 = vcmp.lt.s32.totalorder %v10753, 2
    %vm10755 = vcmp.eq.s32.totalorder %v10753, 0
    %v10756 = vxor.u32 %v10751, 2147483648
    %v10757 = vsel %vm10755, %v10750, %v10756
    %vm10758 = vcmp.eq.s32.totalorder %v10753, 2
    %v10759 = vxor.u32 %v10750, 2147483648
    %v10760 = vsel %vm10758, %v10759, %v10751
    %v10761 = vsel %vm10754, %v10757, %v10760
    %v10762 = vsel %vm10752, nan, %v10761
    %v10763 = vand.u32 2147483647, %v668
    %vm10764 = vcmp.le.f32.partialorder %v10763, 0.7853982
    %vm10765 = vcmp.lt.s32.totalorder %v668, 0
    %v10766 = vand.u32 %v668, 2139095040
    %v10767 = vshrl.u32 %v10766, 23
    %v10768 = vsub.s32 %v10767, 127
    %v10769 = vand.u32 2147483647, %v668
    %v10770 = vand.u32 %v10769, 8388607
    %v10771 = vor.u32 %v10770, 8388608
    %v10772 = vsub.s32 0, %v10771
    %v10773 = vadd.s32 %v10768, 1
    %vm10774 = vcmp.gt.s32.totalorder %v10773, 0
    %v10775 = vsel %vm10774, %v10773, 0
    %v10776 = vshrl.u32 %v10775, 5
    %v10777 = vand.u32 %v10775, 31
    %v10778 = vsub.s32 32, %v10777
    %v10779 = vshrl.u32 683565275, %v10778
    %v10780 = vshll.u32 683565275, %v10777
    %v10781 = vshrl.u32 2475754826, %v10778
    %v10782 = vor.u32 %v10780, %v10781
    %v10783 = vshll.u32 2475754826, %v10777
    %v10784 = vshrl.u32 2131351028, %v10778
    %v10785 = vor.u32 %v10783, %v10784
    %v10786 = vshll.u32 2131351028, %v10777
    %v10787 = vshrl.u32 2102212464, %v10778
    %v10788 = vor.u32 %v10786, %v10787
    %v10789 = vshll.u32 2102212464, %v10777
    %v10790 = vshrl.u32 920167782, %v10778
    %v10791 = vor.u32 %v10789, %v10790
    %v10792 = vshll.u32 920167782, %v10777
    %v10793 = vshrl.u32 1326507024, %v10778
    %v10794 = vor.u32 %v10792, %v10793
    %vm10795 = vcmp.lt.s32.totalorder %v10776, 1
    %vm10796 = vcmp.lt.s32.totalorder %v10776, 2
    %vm10797 = vcmp.lt.s32.totalorder %v10776, 3
    %vm10798 = vcmp.lt.s32.totalorder %v10776, 4
    %v10799 = vsel %vm10795, %v10779, %v10782
    %v10800 = vsel %vm10798, %v10788, 2102212464
    %v10801 = vsel %vm10797, %v10785, %v10800
    %v10802 = vsel %vm10796, %v10799, %v10801
    %v10803 = vsel %vm10795, %v10782, %v10785
    %v10804 = vsel %vm10798, %v10791, 920167782
    %v10805 = vsel %vm10797, %v10788, %v10804
    %v10806 = vsel %vm10796, %v10803, %v10805
    %v10807 = vsel %vm10795, %v10785, %v10788
    %v10808 = vsel %vm10798, %v10794, 1326507024
    %v10809 = vsel %vm10797, %v10791, %v10808
    %v10810 = vsel %vm10796, %v10807, %v10809
    %v10811 = vshll.u32 %v10771, 8
    %v10812 = vmul.u32.u64.compose %v10811, %v10810
    %v10813 = vextract.low.u32 %v10812
    %v10814 = vextract.high.u32 %v10812
    %v10815 = vmul.u32.u64.compose %v10811, %v10806
    %v10816 = vextract.low.u32 %v10815
    %v10817 = vextract.high.u32 %v10815
    %v10818 = vmul.u32 %v10811, %v10802
    %v10819 = vadd.s32 %v10814, %v10816
    %vm10820 = vc.u32 %v10814, %v10816
    %v10821 = vadd.s32 %v10817, 1
    %v10822 = vsel %vm10820, %v10821, %v10817
    %v10823 = vadd.s32 %v10818, %v10822
    %v10824 = vadd.s32 %v10823, 536870912
    %v10825 = vshrl.u32 %v10824, 30
    %v10826 = vshll.u32 %v10825, 30
    %v10827 = vsub.s32 %v10823, %v10826
    %vm10828 = vcmp.lt.s32.totalorder %v10827, 0
    %v10829 = vsub.s32 0, %v10827
    %v10830 = vsel %vm10828, %v10829, %v10827
    %v10831 = vclz %v10830
    %v10832 = vsub.s32 %v10831, 2
    %vm10833 = vcmp.gt.s32.totalorder 0, %v10832
    %v10834 = vsel %vm10833, 0, %v10832
    %v10835 = vsub.s32 32, %v10834
    %v10836 = vshll.u32 %v10827, %v10834
    %v10837 = vshrl.u32 %v10819, %v10835
    %v10838 = vor.u32 %v10836, %v10837
    %v10839 = vsub.s32 4294967266, %v10834
    %v10840 = vadd.s32 %v10839, 127
    %v10841 = vshll.u32 %v10840, 23
    %v10842 = vor.u32 4788187, %v10841
    %v10843 = vand.u32 2147483647, %v10842
    %v10845 = vcvt.s32.f32 %v10838
    %v10846 = vmul.f32 %v10845, %v10843
    %v10847 = vxor.u32 %v10846, 2147483648
    %v10848 = vsel %vm10765, %v10847, %v10846
    %v10849 = vsub.s32 4, %v10825
    %v10850 = vsel %vm10765, %v10849, %v10825
    %v10851 = vsel %vm10764, %v668, %v10848
    %v10852 = vsel %vm10764, 0, %v10850
    %v10853 = vcosq.f32.pop %v10851
    %v10854 = vsinq.f32.pop %v10851
    %vm10855 = vweird.f32 %v668
    %v10856 = vand.u32 %v10852, 3
    %vm10857 = vcmp.lt.s32.totalorder %v10856, 2
    %vm10858 = vcmp.eq.s32.totalorder %v10856, 0
    %v10859 = vxor.u32 %v10854, 2147483648
    %v10860 = vsel %vm10858, %v10853, %v10859
    %vm10861 = vcmp.eq.s32.totalorder %v10856, 2
    %v10862 = vxor.u32 %v10853, 2147483648
    %v10863 = vsel %vm10861, %v10862, %v10854
    %v10864 = vsel %vm10857, %v10860, %v10863
    %v10865 = vsel %vm10855, nan, %v10864
    %v10866 = vand.u32 2147483647, %v669
    %vm10867 = vcmp.le.f32.partialorder %v10866, 0.7853982
    %vm10868 = vcmp.lt.s32.totalorder %v669, 0
    %v10869 = vand.u32 %v669, 2139095040
    %v10870 = vshrl.u32 %v10869, 23
    %v10871 = vsub.s32 %v10870, 127
    %v10872 = vand.u32 2147483647, %v669
    %v10873 = vand.u32 %v10872, 8388607
    %v10874 = vor.u32 %v10873, 8388608
    %v10875 = vsub.s32 0, %v10874
    %v10876 = vadd.s32 %v10871, 1
    %vm10877 = vcmp.gt.s32.totalorder %v10876, 0
    %v10878 = vsel %vm10877, %v10876, 0
    %v10879 = vshrl.u32 %v10878, 5
    %v10880 = vand.u32 %v10878, 31
    %v10881 = vsub.s32 32, %v10880
    %v10882 = vshrl.u32 683565275, %v10881
    %v10883 = vshll.u32 683565275, %v10880
    %v10884 = vshrl.u32 2475754826, %v10881
    %v10885 = vor.u32 %v10883, %v10884
    %v10886 = vshll.u32 2475754826, %v10880
    %v10887 = vshrl.u32 2131351028, %v10881
    %v10888 = vor.u32 %v10886, %v10887
    %v10889 = vshll.u32 2131351028, %v10880
    %v10890 = vshrl.u32 2102212464, %v10881
    %v10891 = vor.u32 %v10889, %v10890
    %v10892 = vshll.u32 2102212464, %v10880
    %v10893 = vshrl.u32 920167782, %v10881
    %v10894 = vor.u32 %v10892, %v10893
    %v10895 = vshll.u32 920167782, %v10880
    %v10896 = vshrl.u32 1326507024, %v10881
    %v10897 = vor.u32 %v10895, %v10896
    %vm10898 = vcmp.lt.s32.totalorder %v10879, 1
    %vm10899 = vcmp.lt.s32.totalorder %v10879, 2
    %vm10900 = vcmp.lt.s32.totalorder %v10879, 3
    %vm10901 = vcmp.lt.s32.totalorder %v10879, 4
    %v10902 = vsel %vm10898, %v10882, %v10885
    %v10903 = vsel %vm10901, %v10891, 2102212464
    %v10904 = vsel %vm10900, %v10888, %v10903
    %v10905 = vsel %vm10899, %v10902, %v10904
    %v10906 = vsel %vm10898, %v10885, %v10888
    %v10907 = vsel %vm10901, %v10894, 920167782
    %v10908 = vsel %vm10900, %v10891, %v10907
    %v10909 = vsel %vm10899, %v10906, %v10908
    %v10910 = vsel %vm10898, %v10888, %v10891
    %v10911 = vsel %vm10901, %v10897, 1326507024
    %v10912 = vsel %vm10900, %v10894, %v10911
    %v10913 = vsel %vm10899, %v10910, %v10912
    %v10914 = vshll.u32 %v10874, 8
    %v10915 = vmul.u32.u64.compose %v10914, %v10913
    %v10916 = vextract.low.u32 %v10915
    %v10917 = vextract.high.u32 %v10915
    %v10918 = vmul.u32.u64.compose %v10914, %v10909
    %v10919 = vextract.low.u32 %v10918
    %v10920 = vextract.high.u32 %v10918
    %v10921 = vmul.u32 %v10914, %v10905
    %v10922 = vadd.s32 %v10917, %v10919
    %vm10923 = vc.u32 %v10917, %v10919
    %v10924 = vadd.s32 %v10920, 1
    %v10925 = vsel %vm10923, %v10924, %v10920
    %v10926 = vadd.s32 %v10921, %v10925
    %v10927 = vadd.s32 %v10926, 536870912
    %v10928 = vshrl.u32 %v10927, 30
    %v10929 = vshll.u32 %v10928, 30
    %v10930 = vsub.s32 %v10926, %v10929
    %vm10931 = vcmp.lt.s32.totalorder %v10930, 0
    %v10932 = vsub.s32 0, %v10930
    %v10933 = vsel %vm10931, %v10932, %v10930
    %v10934 = vclz %v10933
    %v10935 = vsub.s32 %v10934, 2
    %vm10936 = vcmp.gt.s32.totalorder 0, %v10935
    %v10937 = vsel %vm10936, 0, %v10935
    %v10938 = vsub.s32 32, %v10937
    %v10939 = vshll.u32 %v10930, %v10937
    %v10940 = vshrl.u32 %v10922, %v10938
    %v10941 = vor.u32 %v10939, %v10940
    %v10942 = vsub.s32 4294967266, %v10937
    %v10943 = vadd.s32 %v10942, 127
    %v10944 = vshll.u32 %v10943, 23
    %v10945 = vor.u32 4788187, %v10944
    %v10946 = vand.u32 2147483647, %v10945
    %v10948 = vcvt.s32.f32 %v10941
    %v10949 = vmul.f32 %v10948, %v10946
    %v10950 = vxor.u32 %v10949, 2147483648
    %v10951 = vsel %vm10868, %v10950, %v10949
    %v10952 = vsub.s32 4, %v10928
    %v10953 = vsel %vm10868, %v10952, %v10928
    %v10954 = vsel %vm10867, %v669, %v10951
    %v10955 = vsel %vm10867, 0, %v10953
    %v10956 = vcosq.f32.pop %v10954
    %v10957 = vsinq.f32.pop %v10954
    %vm10958 = vweird.f32 %v669
    %v10959 = vand.u32 %v10955, 3
    %vm10960 = vcmp.lt.s32.totalorder %v10959, 2
    %vm10961 = vcmp.eq.s32.totalorder %v10959, 0
    %v10962 = vxor.u32 %v10957, 2147483648
    %v10963 = vsel %vm10961, %v10956, %v10962
    %vm10964 = vcmp.eq.s32.totalorder %v10959, 2
    %v10965 = vxor.u32 %v10956, 2147483648
    %v10966 = vsel %vm10964, %v10965, %v10957
    %v10967 = vsel %vm10960, %v10963, %v10966
    %v10968 = vsel %vm10958, nan, %v10967
    %v10969 = vand.u32 2147483647, %v670
    %vm10970 = vcmp.le.f32.partialorder %v10969, 0.7853982
    %vm10971 = vcmp.lt.s32.totalorder %v670, 0
    %v10972 = vand.u32 %v670, 2139095040
    %v10973 = vshrl.u32 %v10972, 23
    %v10974 = vsub.s32 %v10973, 127
    %v10975 = vand.u32 2147483647, %v670
    %v10976 = vand.u32 %v10975, 8388607
    %v10977 = vor.u32 %v10976, 8388608
    %v10978 = vsub.s32 0, %v10977
    %v10979 = vadd.s32 %v10974, 1
    %vm10980 = vcmp.gt.s32.totalorder %v10979, 0
    %v10981 = vsel %vm10980, %v10979, 0
    %v10982 = vshrl.u32 %v10981, 5
    %v10983 = vand.u32 %v10981, 31
    %v10984 = vsub.s32 32, %v10983
    %v10985 = vshrl.u32 683565275, %v10984
    %v10986 = vshll.u32 683565275, %v10983
    %v10987 = vshrl.u32 2475754826, %v10984
    %v10988 = vor.u32 %v10986, %v10987
    %v10989 = vshll.u32 2475754826, %v10983
    %v10990 = vshrl.u32 2131351028, %v10984
    %v10991 = vor.u32 %v10989, %v10990
    %v10992 = vshll.u32 2131351028, %v10983
    %v10993 = vshrl.u32 2102212464, %v10984
    %v10994 = vor.u32 %v10992, %v10993
    %v10995 = vshll.u32 2102212464, %v10983
    %v10996 = vshrl.u32 920167782, %v10984
    %v10997 = vor.u32 %v10995, %v10996
    %v10998 = vshll.u32 920167782, %v10983
    %v10999 = vshrl.u32 1326507024, %v10984
    %v11000 = vor.u32 %v10998, %v10999
    %vm11001 = vcmp.lt.s32.totalorder %v10982, 1
    %vm11002 = vcmp.lt.s32.totalorder %v10982, 2
    %vm11003 = vcmp.lt.s32.totalorder %v10982, 3
    %vm11004 = vcmp.lt.s32.totalorder %v10982, 4
    %v11005 = vsel %vm11001, %v10985, %v10988
    %v11006 = vsel %vm11004, %v10994, 2102212464
    %v11007 = vsel %vm11003, %v10991, %v11006
    %v11008 = vsel %vm11002, %v11005, %v11007
    %v11009 = vsel %vm11001, %v10988, %v10991
    %v11010 = vsel %vm11004, %v10997, 920167782
    %v11011 = vsel %vm11003, %v10994, %v11010
    %v11012 = vsel %vm11002, %v11009, %v11011
    %v11013 = vsel %vm11001, %v10991, %v10994
    %v11014 = vsel %vm11004, %v11000, 1326507024
    %v11015 = vsel %vm11003, %v10997, %v11014
    %v11016 = vsel %vm11002, %v11013, %v11015
    %v11017 = vshll.u32 %v10977, 8
    %v11018 = vmul.u32.u64.compose %v11017, %v11016
    %v11019 = vextract.low.u32 %v11018
    %v11020 = vextract.high.u32 %v11018
    %v11021 = vmul.u32.u64.compose %v11017, %v11012
    %v11022 = vextract.low.u32 %v11021
    %v11023 = vextract.high.u32 %v11021
    %v11024 = vmul.u32 %v11017, %v11008
    %v11025 = vadd.s32 %v11020, %v11022
    %vm11026 = vc.u32 %v11020, %v11022
    %v11027 = vadd.s32 %v11023, 1
    %v11028 = vsel %vm11026, %v11027, %v11023
    %v11029 = vadd.s32 %v11024, %v11028
    %v11030 = vadd.s32 %v11029, 536870912
    %v11031 = vshrl.u32 %v11030, 30
    %v11032 = vshll.u32 %v11031, 30
    %v11033 = vsub.s32 %v11029, %v11032
    %vm11034 = vcmp.lt.s32.totalorder %v11033, 0
    %v11035 = vsub.s32 0, %v11033
    %v11036 = vsel %vm11034, %v11035, %v11033
    %v11037 = vclz %v11036
    %v11038 = vsub.s32 %v11037, 2
    %vm11039 = vcmp.gt.s32.totalorder 0, %v11038
    %v11040 = vsel %vm11039, 0, %v11038
    %v11041 = vsub.s32 32, %v11040
    %v11042 = vshll.u32 %v11033, %v11040
    %v11043 = vshrl.u32 %v11025, %v11041
    %v11044 = vor.u32 %v11042, %v11043
    %v11045 = vsub.s32 4294967266, %v11040
    %v11046 = vadd.s32 %v11045, 127
    %v11047 = vshll.u32 %v11046, 23
    %v11048 = vor.u32 4788187, %v11047
    %v11049 = vand.u32 2147483647, %v11048
    %v11051 = vcvt.s32.f32 %v11044
    %v11052 = vmul.f32 %v11051, %v11049
    %v11053 = vxor.u32 %v11052, 2147483648
    %v11054 = vsel %vm10971, %v11053, %v11052
    %v11055 = vsub.s32 4, %v11031
    %v11056 = vsel %vm10971, %v11055, %v11031
    %v11057 = vsel %vm10970, %v670, %v11054
    %v11058 = vsel %vm10970, 0, %v11056
    %v11059 = vcosq.f32.pop %v11057
    %v11060 = vsinq.f32.pop %v11057
    %vm11061 = vweird.f32 %v670
    %v11062 = vand.u32 %v11058, 3
    %vm11063 = vcmp.lt.s32.totalorder %v11062, 2
    %vm11064 = vcmp.eq.s32.totalorder %v11062, 0
    %v11065 = vxor.u32 %v11060, 2147483648
    %v11066 = vsel %vm11064, %v11059, %v11065
    %vm11067 = vcmp.eq.s32.totalorder %v11062, 2
    %v11068 = vxor.u32 %v11059, 2147483648
    %v11069 = vsel %vm11067, %v11068, %v11060
    %v11070 = vsel %vm11063, %v11066, %v11069
    %v11071 = vsel %vm11061, nan, %v11070
    %11122 = vrot.lane.b32.xlu0 %v6024, 64
    %v11123 = vpop.permute.xlu0 %11122
    %11124 = vrot.lane.b32.xlu0 %v6127, 64
    %v11125 = vpop.permute.xlu0 %11124
    %11126 = vrot.lane.b32.xlu0 %v6230, 64
    %v11127 = vpop.permute.xlu0 %11126
    %11128 = vrot.lane.b32.xlu0 %v6333, 64
    %v11129 = vpop.permute.xlu0 %11128
    %11130 = vrot.lane.b32.xlu0 %v6436, 64
    %v11131 = vpop.permute.xlu0 %11130
    %11132 = vrot.lane.b32.xlu0 %v6539, 64
    %v11133 = vpop.permute.xlu0 %11132
    %11134 = vrot.lane.b32.xlu0 %v6642, 64
    %v11135 = vpop.permute.xlu0 %11134
    %11136 = vrot.lane.b32.xlu0 %v6745, 64
    %v11137 = vpop.permute.xlu0 %11136
    %11138 = vrot.lane.b32.xlu0 %v6848, 64
    %v11139 = vpop.permute.xlu0 %11138
    %11140 = vrot.lane.b32.xlu0 %v6951, 64
    %v11141 = vpop.permute.xlu0 %11140
    %11142 = vrot.lane.b32.xlu0 %v7054, 64
    %v11143 = vpop.permute.xlu0 %11142
    %11144 = vrot.lane.b32.xlu0 %v7157, 64
    %v11145 = vpop.permute.xlu0 %11144
    %11146 = vrot.lane.b32.xlu0 %v7260, 64
    %v11147 = vpop.permute.xlu0 %11146
    %11148 = vrot.lane.b32.xlu0 %v7363, 64
    %v11149 = vpop.permute.xlu0 %11148
    %11150 = vrot.lane.b32.xlu0 %v7466, 64
    %v11151 = vpop.permute.xlu0 %11150
    %11152 = vrot.lane.b32.xlu0 %v7569, 64
    %v11153 = vpop.permute.xlu0 %11152
    %11154 = vrot.lane.b32.xlu0 %v7672, 64
    %v11155 = vpop.permute.xlu0 %11154
    %11156 = vrot.lane.b32.xlu0 %v7775, 64
    %v11157 = vpop.permute.xlu0 %11156
    %11158 = vrot.lane.b32.xlu0 %v7878, 64
    %v11159 = vpop.permute.xlu0 %11158
    %11160 = vrot.lane.b32.xlu0 %v7981, 64
    %v11161 = vpop.permute.xlu0 %11160
    %11162 = vrot.lane.b32.xlu0 %v8084, 64
    %v11163 = vpop.permute.xlu0 %11162
    %11164 = vrot.lane.b32.xlu0 %v8187, 64
    %v11165 = vpop.permute.xlu0 %11164
    %11166 = vrot.lane.b32.xlu0 %v8290, 64
    %v11167 = vpop.permute.xlu0 %11166
    %11168 = vrot.lane.b32.xlu0 %v8393, 64
    %v11169 = vpop.permute.xlu0 %11168
    %11170 = vrot.lane.b32.xlu0 %v8496, 64
    %v11171 = vpop.permute.xlu0 %11170
    %11172 = vrot.lane.b32.xlu0 %v8599, 64
    %v11173 = vpop.permute.xlu0 %11172
    %11174 = vrot.lane.b32.xlu0 %v8702, 64
    %v11175 = vpop.permute.xlu0 %11174
    %11176 = vrot.lane.b32.xlu0 %v8805, 64
    %v11177 = vpop.permute.xlu0 %11176
    %11178 = vrot.lane.b32.xlu0 %v8908, 64
    %v11179 = vpop.permute.xlu0 %11178
    %11180 = vrot.lane.b32.xlu0 %v9011, 64
    %v11181 = vpop.permute.xlu0 %11180
    %11182 = vrot.lane.b32.xlu0 %v9114, 64
    %v11183 = vpop.permute.xlu0 %11182
    %11184 = vrot.lane.b32.xlu0 %v9217, 64
    %v11185 = vpop.permute.xlu0 %11184
    %11186 = vrot.lane.b32.xlu0 %v9320, 64
    %v11187 = vpop.permute.xlu0 %11186
    %11188 = vrot.lane.b32.xlu0 %v9423, 64
    %v11189 = vpop.permute.xlu0 %11188
    %11190 = vrot.lane.b32.xlu0 %v9526, 64
    %v11191 = vpop.permute.xlu0 %11190
    %11192 = vrot.lane.b32.xlu0 %v9629, 64
    %v11193 = vpop.permute.xlu0 %11192
    %11194 = vrot.lane.b32.xlu0 %v9732, 64
    %v11195 = vpop.permute.xlu0 %11194
    %11196 = vrot.lane.b32.xlu0 %v9835, 64
    %v11197 = vpop.permute.xlu0 %11196
    %11198 = vrot.lane.b32.xlu0 %v9938, 64
    %v11199 = vpop.permute.xlu0 %11198
    %11200 = vrot.lane.b32.xlu0 %v10041, 64
    %v11201 = vpop.permute.xlu0 %11200
    %11202 = vrot.lane.b32.xlu0 %v10144, 64
    %v11203 = vpop.permute.xlu0 %11202
    %11204 = vrot.lane.b32.xlu0 %v10247, 64
    %v11205 = vpop.permute.xlu0 %11204
    %11206 = vrot.lane.b32.xlu0 %v10350, 64
    %v11207 = vpop.permute.xlu0 %11206
    %11208 = vrot.lane.b32.xlu0 %v10453, 64
    %v11209 = vpop.permute.xlu0 %11208
    %11210 = vrot.lane.b32.xlu0 %v10556, 64
    %v11211 = vpop.permute.xlu0 %11210
    %11212 = vrot.lane.b32.xlu0 %v10659, 64
    %v11213 = vpop.permute.xlu0 %11212
    %11214 = vrot.lane.b32.xlu0 %v10762, 64
    %v11215 = vpop.permute.xlu0 %11214
    %11216 = vrot.lane.b32.xlu0 %v10865, 64
    %v11217 = vpop.permute.xlu0 %11216
    %11218 = vrot.lane.b32.xlu0 %v10968, 64
    %v11219 = vpop.permute.xlu0 %11218
    %11220 = vrot.lane.b32.xlu0 %v11071, 64
    %v11221 = vpop.permute.xlu0 %11220
    %vm11272 = vcmask 1048064
    %11273 = vst.msk [vmem:[#allocation2] sm:$0xff] %vm11272, %v11123
    %11274 = vst.msk [vmem:[#allocation2 + $0x8] sm:$0xff] %vm11272, %v11125
    %11275 = vst.msk [vmem:[#allocation2 + $0x10] sm:$0xff] %vm11272, %v11127
    %11276 = vst.msk [vmem:[#allocation2 + $0x18] sm:$0xff] %vm11272, %v11129
    %11277 = vst.msk [vmem:[#allocation2 + $0x20] sm:$0xff] %vm11272, %v11131
    %11278 = vst.msk [vmem:[#allocation2 + $0x28] sm:$0xff] %vm11272, %v11133
    %11279 = vst.msk [vmem:[#allocation2 + $0x30] sm:$0xff] %vm11272, %v11135
    %11280 = vst.msk [vmem:[#allocation2 + $0x38] sm:$0xff] %vm11272, %v11137
    %11281 = vst.msk [vmem:[#allocation2 + $0x40] sm:$0xff] %vm11272, %v11139
    %11282 = vst.msk [vmem:[#allocation2 + $0x48] sm:$0xff] %vm11272, %v11141
    %11283 = vst.msk [vmem:[#allocation2 + $0x50] sm:$0xff] %vm11272, %v11143
    %11284 = vst.msk [vmem:[#allocation2 + $0x58] sm:$0xff] %vm11272, %v11145
    %11285 = vst.msk [vmem:[#allocation2 + $0x60] sm:$0xff] %vm11272, %v11147
    %11286 = vst.msk [vmem:[#allocation2 + $0x68] sm:$0xff] %vm11272, %v11149
    %11287 = vst.msk [vmem:[#allocation2 + $0x70] sm:$0xff] %vm11272, %v11151
    %11288 = vst.msk [vmem:[#allocation2 + $0x78] sm:$0xff] %vm11272, %v11153
    %11289 = vst.msk [vmem:[#allocation2 + $0x80] sm:$0xff] %vm11272, %v11155
    %11290 = vst.msk [vmem:[#allocation2 + $0x88] sm:$0xff] %vm11272, %v11157
    %11291 = vst.msk [vmem:[#allocation2 + $0x90] sm:$0xff] %vm11272, %v11159
    %11292 = vst.msk [vmem:[#allocation2 + $0x98] sm:$0xff] %vm11272, %v11161
    %11293 = vst.msk [vmem:[#allocation2 + $0xa0] sm:$0xff] %vm11272, %v11163
    %11294 = vst.msk [vmem:[#allocation2 + $0xa8] sm:$0xff] %vm11272, %v11165
    %11295 = vst.msk [vmem:[#allocation2 + $0xb0] sm:$0xff] %vm11272, %v11167
    %11296 = vst.msk [vmem:[#allocation2 + $0xb8] sm:$0xff] %vm11272, %v11169
    %11297 = vst.msk [vmem:[#allocation2 + $0xc0] sm:$0xff] %vm11272, %v11171
    %11298 = vst.msk [vmem:[#allocation2 + $0xc8] sm:$0xff] %vm11272, %v11173
    %11299 = vst.msk [vmem:[#allocation2 + $0xd0] sm:$0xff] %vm11272, %v11175
    %11300 = vst.msk [vmem:[#allocation2 + $0xd8] sm:$0xff] %vm11272, %v11177
    %11301 = vst.msk [vmem:[#allocation2 + $0xe0] sm:$0xff] %vm11272, %v11179
    %11302 = vst.msk [vmem:[#allocation2 + $0xe8] sm:$0xff] %vm11272, %v11181
    %11303 = vst.msk [vmem:[#allocation2 + $0xf0] sm:$0xff] %vm11272, %v11183
    %11304 = vst.msk [vmem:[#allocation2 + $0xf8] sm:$0xff] %vm11272, %v11185
    %11305 = vst.msk [vmem:[#allocation2 + $0x100] sm:$0xff] %vm11272, %v11187
    %11306 = vst.msk [vmem:[#allocation2 + $0x108] sm:$0xff] %vm11272, %v11189
    %11307 = vst.msk [vmem:[#allocation2 + $0x110] sm:$0xff] %vm11272, %v11191
    %11308 = vst.msk [vmem:[#allocation2 + $0x118] sm:$0xff] %vm11272, %v11193
    %11309 = vst.msk [vmem:[#allocation2 + $0x120] sm:$0xff] %vm11272, %v11195
    %11310 = vst.msk [vmem:[#allocation2 + $0x128] sm:$0xff] %vm11272, %v11197
    %11311 = vst.msk [vmem:[#allocation2 + $0x130] sm:$0xff] %vm11272, %v11199
    %11312 = vst.msk [vmem:[#allocation2 + $0x138] sm:$0xff] %vm11272, %v11201
    %11313 = vst.msk [vmem:[#allocation2 + $0x140] sm:$0xff] %vm11272, %v11203
    %11314 = vst.msk [vmem:[#allocation2 + $0x148] sm:$0xff] %vm11272, %v11205
    %11315 = vst.msk [vmem:[#allocation2 + $0x150] sm:$0xff] %vm11272, %v11207
    %11316 = vst.msk [vmem:[#allocation2 + $0x158] sm:$0xff] %vm11272, %v11209
    %11317 = vst.msk [vmem:[#allocation2 + $0x160] sm:$0xff] %vm11272, %v11211
    %11318 = vst.msk [vmem:[#allocation2 + $0x168] sm:$0xff] %vm11272, %v11213
    %11319 = vst.msk [vmem:[#allocation2 + $0x170] sm:$0xff] %vm11272, %v11215
    %11320 = vst.msk [vmem:[#allocation2 + $0x178] sm:$0xff] %vm11272, %v11217
    %11321 = vst.msk [vmem:[#allocation2 + $0x180] sm:$0xff] %vm11272, %v11219
    %11322 = vst.msk [vmem:[#allocation2 + $0x188] sm:$0xff] %vm11272, %v11221
    // Predicated region
    $region10: #{tpu_custom_call.1} parent=1 // pred_check
      _
    $region11: #{tpu_custom_call.1} parent=1 // pred_check_branch
      %11324 = sbr.rel (0) target = $region13
    $region12: #{tpu_custom_call.1} parent=1 // pred_region
      %s11326 = ssub.s32 6400, 6400
      %11327 = vsyncadd [#allocation3], %s11326
      %s11328 = sshll.u32 [#allocation2], 4
      %s11329 = int_to_ptr.vmem [resolvable:$true] %s11328
      %11334 = dma.vmem_to_hbm [thread:$0]  %s11329, 6400, %s2, [#allocation3], 128, 128, 8
    $region13: #{tpu_custom_call.1} parent=1 // pred_fallthru
      _
    // Predicated region
    $region14: #{tpu_custom_call.1} parent=1 // pred_check
      _
    $region15: #{tpu_custom_call.1} parent=1 // pred_check_branch
      %11336 = sbr.rel (0) target = $region17
    $region16: #{tpu_custom_call.1} parent=1 // pred_region
      %11337 = dma.done [#allocation3], 6400
    $region17: #{tpu_custom_call.1} parent=1 // pred_fallthru
      _
    %11338 = vsyncpa [#allocation3], 1

</llo_original>
